<compile_context>
chip_gen: v7x
topology: tpu7x:2x2x1
jax: 0.10.0
libtpu: 0.0.40
codegen_flags: <defaults>
</compile_context>

<pallas_src>
import functools

import jax
import jax.numpy as jnp
from jax.experimental import pallas as pl
from jax.experimental.pallas import tpu as pltpu

_LN_EPS = 1e-5  # torch.nn.LayerNorm default eps


def _layernorm_two_pass(x, gamma, beta):
    # Used only on the chunk-wide input path (off the serial critical path).
    mu = jnp.mean(x, axis=-1, keepdims=True)
    var = jnp.mean((x - mu) ** 2, axis=-1, keepdims=True)
    return (x - mu) * jax.lax.rsqrt(var + _LN_EPS) * gamma + beta


def spike_rnn_kernel(x_ref, mem0_ref,
                     w_in_ref, b_in_ref, g_in_ref, be_in_ref,
                     w_h_ref, b_h_ref, g_h_ref, be_h_ref,
                     alpha_ref, om_alpha_ref, sig_n_ref, om_sig_n_ref,
                     mem_out_ref, spk_out_ref,
                     mem_sc, d_sc, spk_sc, ic_sc,
                     *, hidden_dim, branch, vth, t_chunk, unroll):
    t_blk = pl.program_id(1)

    # Re-init recurrent state at the start of each batch-block's time sweep.
    # (Time axis is "arbitrary"/sequential; batch axis is "parallel" -- scratch is
    # per-core so this stays correct under megacore sharding.)
    @pl.when(t_blk == 0)
    def _():
        mem_sc[...] = mem0_ref[...]
        d_sc[...] = jnp.zeros_like(d_sc)
        spk_sc[...] = jnp.zeros_like(spk_sc)

    tb, bsz, d_in = x_ref.shape
    hb = hidden_dim * branch

    # ---- chunk-wide input path (independent of the recurrence): one big matmul ----
    x_all = x_ref[...].reshape(tb * bsz, d_in)          # free relabel when bsz % 8 == 0
    ic = jnp.dot(x_all, w_in_ref[...], preferred_element_type=jnp.float32)
    ic = ic + b_in_ref[...]
    ic = _layernorm_two_pass(ic, g_in_ref[...], be_in_ref[...])
    # Branch reduction hoisted out of the serial loop (columns are branch-major, see wrapper):
    # sum_br(ic + hc) == sum_br(ic) + sum_br(hc).
    ic_sum = ic[:, :hidden_dim]
    for br in range(1, branch):
        ic_sum = ic_sum + ic[:, br * hidden_dim:(br + 1) * hidden_dim]
    ic_sc[...] = ic_sum.reshape(tb, bsz, hidden_dim)

    # Loop-invariant constants, loaded once per chunk.
    alpha = alpha_ref[...]
    om_alpha = om_alpha_ref[...]
    sig_n = sig_n_ref[...]
    om_sig_n = om_sig_n_ref[...]
    w_h = w_h_ref[...]
    b_h = b_h_ref[...]
    g_h = g_h_ref[...]
    be_h = be_h_ref[...]
    inv_hb = 1.0 / float(hb)

    def step(tt, carry):
        prev_spike = spk_sc[...]                         # (bsz, H) bf16 spikes, no cast needed
        # Hidden path: depends on previous spikes -> inherently serial.
        hc = jnp.dot(prev_spike, w_h, preferred_element_type=jnp.float32) + b_h
        # One-pass LayerNorm stats: mean and mean-of-squares are independent reductions
        # (dual-issue on the XLUs) instead of a serial two-pass chain.
        mu = jnp.sum(hc, axis=-1, keepdims=True) * inv_hb
        ms = jnp.sum(hc * hc, axis=-1, keepdims=True) * inv_hb
        var = jnp.maximum(ms - mu * mu, 0.0)
        hc = (hc - mu) * jax.lax.rsqrt(var + _LN_EPS) * g_h + be_h
        h_sum = hc[:, :hidden_dim]
        for br in range(1, branch):
            h_sum = h_sum + hc[:, br * hidden_dim:(br + 1) * hidden_dim]

        combined = ic_sc[tt] + h_sum                     # (bsz, H)
        d_new = sig_n * d_sc[...] + om_sig_n * combined
        mem_new = alpha * mem_sc[...] + om_alpha * d_new
        # ActFun_adp forward: (mem - vth > 0).float(); 0/1 are exact in bf16.
        # No membrane reset, matching the PyTorch reference.
        spike = (mem_new > vth).astype(spk_sc.dtype)

        d_sc[...] = d_new
        mem_sc[...] = mem_new
        spk_sc[...] = spike
        mem_out_ref[tt] = mem_new.astype(mem_out_ref.dtype)
        spk_out_ref[tt] = spike.astype(spk_out_ref.dtype)
        return carry

    jax.lax.fori_loop(0, t_chunk, step, 0, unroll=unroll)


def spike_rnn_forward(x_seq, mem_init, params, *, hidden_dim, branch=1,
                      vth=0.5, dt=1.0, t_chunk=8, batch_block=None,
                      matmul_dtype=jnp.bfloat16, mem_dtype=jnp.float32,
                      spike_dtype=jnp.bfloat16, time_major_io=False,
                      vmem_limit_bytes=48 * 1024 * 1024,
                      single_buffer_params=True):
    """SpikeRNN forward.

    Default interface matches the PyTorch module: x_seq [B, seq, input_dim] ->
    (mem_seq, spike_seq), each [B, seq, hidden_dim].  Pass time_major_io=True to feed
    [seq, B, input_dim] and receive [seq, B, hidden_dim], skipping the wrapper-side
    HBM transpose passes entirely (recommended when the surrounding pipeline can be
    kept time-major).
    """
    if time_major_io:
        seq, B, d_in = x_seq.shape
        x_tm = x_seq
    else:
        B, seq, d_in = x_seq.shape
        x_tm = jnp.transpose(x_seq, (1, 0, 2))   # avoidable: see time_major_io
    hb = hidden_dim * branch

    if batch_block is None:
        if B >= 512:
            batch_block = 256            # fill the MXU M dimension on v6e/v7x
        elif B % 16 == 0:
            batch_block = B // 2         # >=2 batch blocks => "parallel" axis shards across TCs (v7x)
        else:
            batch_block = B
    assert seq % t_chunk == 0, "seq must be divisible by t_chunk"
    assert B % batch_block == 0, "batch must be divisible by batch_block"
    # NOTE: batch_block should be a multiple of 8 so in-kernel reshapes stay free relabels.
    n_b = B // batch_block
    n_t = seq // t_chunk

    (w_in, b_in, g_in, be_in, w_h, b_h, g_h, be_h, tau_m, tau_n) = params

    # Permute hb columns from hidden-major (PyTorch reshape(B, H, branch)) to branch-major
    # so the branch sum is a sum of contiguous (B, H) slices.  LayerNorm over hb is
    # permutation-invariant; per-column affine/bias follow the permutation.
    j = jnp.arange(hb)
    perm = (j % hidden_dim) * branch + (j // hidden_dim)

    w_in_t = jnp.transpose(w_in[perm, :]).astype(matmul_dtype)   # (d_in, hb)
    w_h_t = jnp.transpose(w_h[perm, :]).astype(matmul_dtype)     # (H, hb)
    b_in_p = b_in[:, perm].astype(jnp.float32)
    g_in_p = g_in[:, perm].astype(jnp.float32)
    be_in_p = be_in[:, perm].astype(jnp.float32)
    b_h_p = b_h[:, perm].astype(jnp.float32)
    g_h_p = g_h[:, perm].astype(jnp.float32)
    be_h_p = be_h[:, perm].astype(jnp.float32)

    # Hoist the tau transcendentals out of the serial recurrence (EUP work -> wrapper).
    alpha = jnp.exp(-dt / jnp.maximum(tau_m, 0.01)).astype(jnp.float32)   # (1, H)
    sig_n = jax.nn.sigmoid(tau_n).astype(jnp.float32)                     # (1, H)
    om_alpha = (1.0 - alpha).astype(jnp.float32)
    om_sig_n = (1.0 - sig_n).astype(jnp.float32)

    # Spike inputs are 0/1 -> exactly representable in bf16: halve x DMA traffic.
    x_tm = x_tm.astype(matmul_dtype)
    mem_init = mem_init.astype(jnp.float32)

    unroll = t_chunk if t_chunk <= 8 else 4   # cap unroll to bound vreg pressure/spills

    kernel = functools.partial(spike_rnn_kernel, hidden_dim=hidden_dim,
                               branch=branch, vth=float(vth), t_chunk=t_chunk,
                               unroll=unroll)

    def build(buffer_params_once):
        def const_spec(shape):
            idx = lambda b, t: (0,) * len(shape)
            if buffer_params_once:
                # Loop-invariant operand (constant index_map): single-buffer it to halve
                # its VMEM footprint -- frees headroom for larger t_chunk / batch_block.
                return pl.BlockSpec(shape, idx, pipeline_mode=pl.Buffered(1))
            return pl.BlockSpec(shape, idx)

        grid_spec = pltpu.PrefetchScalarGridSpec(
            num_scalar_prefetch=0,
            grid=(n_b, n_t),
            in_specs=[
                pl.BlockSpec((t_chunk, batch_block, d_in), lambda b, t: (t, b, 0)),  # x chunk
                pl.BlockSpec((batch_block, hidden_dim), lambda b, t: (b, 0)),        # mem init
                const_spec((d_in, hb)), const_spec((1, hb)),                         # input path
                const_spec((1, hb)), const_spec((1, hb)),
                const_spec((hidden_dim, hb)), const_spec((1, hb)),                   # hidden path
                const_spec((1, hb)), const_spec((1, hb)),
                const_spec((1, hidden_dim)), const_spec((1, hidden_dim)),            # alpha, 1-alpha
                const_spec((1, hidden_dim)), const_spec((1, hidden_dim)),            # sig_n, 1-sig_n
            ],
            out_specs=[
                pl.BlockSpec((t_chunk, batch_block, hidden_dim), lambda b, t: (t, b, 0)),
                pl.BlockSpec((t_chunk, batch_block, hidden_dim), lambda b, t: (t, b, 0)),
            ],
            scratch_shapes=[
                pltpu.VMEM((batch_block, hidden_dim), jnp.float32),    # mem state
                pltpu.VMEM((batch_block, hidden_dim), jnp.float32),    # d_input state
                pltpu.VMEM((batch_block, hidden_dim), matmul_dtype),   # prev_spike state (bf16)
                pltpu.VMEM((t_chunk, batch_block, hidden_dim), jnp.float32),  # branch-summed ic
            ],
        )
        return pl.pallas_call(
            kernel,
            out_shape=(jax.ShapeDtypeStruct((seq, B, hidden_dim), mem_dtype),
                       jax.ShapeDtypeStruct((seq, B, hidden_dim), spike_dtype)),
            grid_spec=grid_spec,
            compiler_params=pltpu.CompilerParams(
                dimension_semantics=("parallel", "arbitrary"),
                vmem_limit_bytes=vmem_limit_bytes),
        )

    operands = (x_tm, mem_init, w_in_t, b_in_p, g_in_p, be_in_p,
                w_h_t, b_h_p, g_h_p, be_h_p, alpha, om_alpha, sig_n, om_sig_n)

    if single_buffer_params and hasattr(pl, "Buffered"):
        try:
            mem_tm, spk_tm = build(True)(*operands)
        except Exception:
            # Fallback: installed Pallas does not accept pipeline_mode=Buffered(1) on
            # pallas_call operands; run with default double-buffering instead.
            mem_tm, spk_tm = build(False)(*operands)
    else:
        mem_tm, spk_tm = build(False)(*operands)

    if time_major_io:
        return mem_tm, spk_tm
    return jnp.transpose(mem_tm, (1, 0, 2)), jnp.transpose(spk_tm, (1, 0, 2))


def init_params(key, input_dim, hidden_dim, branch=1,
                low_m=2.0, high_m=6.0, low_n=2.0, high_n=6.0):
    """Deterministic synthetic init matching the module's __init__ shapes."""
    hb = hidden_dim * branch
    k1, k2, k3, k4 = jax.random.split(key, 4)
    std_in = (2.0 / (input_dim + hb)) ** 0.5      # xavier_normal_
    std_h = (2.0 / (hidden_dim + hb)) ** 0.5
    w_in = jax.random.normal(k1, (hb, input_dim), jnp.float32) * std_in
    w_h = jax.random.normal(k2, (hb, hidden_dim), jnp.float32) * std_h
    b_in = jnp.zeros((1, hb), jnp.float32)
    b_h = jnp.zeros((1, hb), jnp.float32)
    g_in = jnp.ones((1, hb), jnp.float32)
    be_in = jnp.zeros((1, hb), jnp.float32)
    g_h = jnp.ones((1, hb), jnp.float32)
    be_h = jnp.zeros((1, hb), jnp.float32)
    tau_m = jax.random.uniform(k3, (1, hidden_dim), jnp.float32, low_m, high_m)
    tau_n = jax.random.uniform(k4, (1, hidden_dim), jnp.float32, low_n, high_n)
    return (w_in, b_in, g_in, be_in, w_h, b_h, g_h, be_h, tau_m, tau_n)


if __name__ == "__main__":
    # Small but lane/sublane-dense shapes: H=128 fills lanes; B=16 with the default
    # batch_block=B//2=8 gives a 2-wide "parallel" batch grid axis (megacore-shardable),
    # and branch=2 exercises the hoisted branch reduction (hb=256).
    B, SEQ, D_IN, HIDDEN, BRANCH, T_CHUNK = 16, 32, 32, 128, 2, 8

    key = jax.random.PRNGKey(0)
    k_x, k_mem, k_p = jax.random.split(key, 3)

    # Binary input spike sequence (exactly representable in bf16 for the MXU path).
    x_seq = (jax.random.uniform(k_x, (B, SEQ, D_IN)) > 0.5).astype(jnp.float32)
    # PyTorch forward draws mem ~ U[0,1) each call; we pass an explicit init instead.
    mem_init = jax.random.uniform(k_mem, (B, HIDDEN), dtype=jnp.float32)

    params = init_params(k_p, D_IN, HIDDEN, branch=BRANCH)

    mem_seq, spike_seq = spike_rnn_forward(
        x_seq, mem_init, params, hidden_dim=HIDDEN, branch=BRANCH,
        vth=0.5, dt=1.0, t_chunk=T_CHUNK)
    jax.block_until_ready((mem_seq, spike_seq))

    assert mem_seq.shape == (B, SEQ, HIDDEN)
    assert spike_seq.shape == (B, SEQ, HIDDEN)
    assert bool(jnp.isfinite(mem_seq.astype(jnp.float32)).all())
    assert bool(jnp.isfinite(spike_seq.astype(jnp.float32)).all())
    print("KERNEL_OK")
</pallas_src>

<mosaic_0001>
module attributes {stable_mosaic.version = 11 : i64} {
  func.func @spike_rnn_kernel(%arg0: i32, %arg1: i32, %arg2: memref<8x8x32xbf16, #tpu.memory_space<vmem>>, %arg3: memref<8x128xf32, #tpu.memory_space<vmem>>, %arg4: memref<32x256xbf16, #tpu.memory_space<vmem>>, %arg5: memref<1x256xf32, #tpu.memory_space<vmem>>, %arg6: memref<1x256xf32, #tpu.memory_space<vmem>>, %arg7: memref<1x256xf32, #tpu.memory_space<vmem>>, %arg8: memref<128x256xbf16, #tpu.memory_space<vmem>>, %arg9: memref<1x256xf32, #tpu.memory_space<vmem>>, %arg10: memref<1x256xf32, #tpu.memory_space<vmem>>, %arg11: memref<1x256xf32, #tpu.memory_space<vmem>>, %arg12: memref<1x128xf32, #tpu.memory_space<vmem>>, %arg13: memref<1x128xf32, #tpu.memory_space<vmem>>, %arg14: memref<1x128xf32, #tpu.memory_space<vmem>>, %arg15: memref<1x128xf32, #tpu.memory_space<vmem>>, %arg16: memref<8x8x128xf32, #tpu.memory_space<vmem>>, %arg17: memref<8x8x128xbf16, #tpu.memory_space<vmem>>, %arg18: memref<8x128xf32, #tpu.memory_space<vmem>>, %arg19: memref<8x128xf32, #tpu.memory_space<vmem>>, %arg20: memref<8x128xbf16, #tpu.memory_space<vmem>>, %arg21: memref<8x8x128xf32, #tpu.memory_space<vmem>>) attributes {dimension_semantics = [#tpu.dimension_semantics<parallel>, #tpu.dimension_semantics<arbitrary>], iteration_bounds = array<i64: 2, 4>, scalar_prefetch = 0 : i64, scratch_operands = 4 : i64, tpu.core_type = #tpu.core_type<tc>, window_params = [{transform_indices = @transform_0, window_bounds = array<i64: 8, 8, 32>}, {transform_indices = @transform_1, window_bounds = array<i64: 8, 128>}, {pipeline_mode = #tpu.pipeline_mode<synchronous>, transform_indices = @transform_2, window_bounds = array<i64: 32, 256>}, {pipeline_mode = #tpu.pipeline_mode<synchronous>, transform_indices = @transform_3, window_bounds = array<i64: 1, 256>}, {pipeline_mode = #tpu.pipeline_mode<synchronous>, transform_indices = @transform_4, window_bounds = array<i64: 1, 256>}, {pipeline_mode = #tpu.pipeline_mode<synchronous>, transform_indices = @transform_5, window_bounds = array<i64: 1, 256>}, {pipeline_mode = #tpu.pipeline_mode<synchronous>, transform_indices = @transform_6, window_bounds = array<i64: 128, 256>}, {pipeline_mode = #tpu.pipeline_mode<synchronous>, transform_indices = @transform_7, window_bounds = array<i64: 1, 256>}, {pipeline_mode = #tpu.pipeline_mode<synchronous>, transform_indices = @transform_8, window_bounds = array<i64: 1, 256>}, {pipeline_mode = #tpu.pipeline_mode<synchronous>, transform_indices = @transform_9, window_bounds = array<i64: 1, 256>}, {pipeline_mode = #tpu.pipeline_mode<synchronous>, transform_indices = @transform_10, window_bounds = array<i64: 1, 128>}, {pipeline_mode = #tpu.pipeline_mode<synchronous>, transform_indices = @transform_11, window_bounds = array<i64: 1, 128>}, {pipeline_mode = #tpu.pipeline_mode<synchronous>, transform_indices = @transform_12, window_bounds = array<i64: 1, 128>}, {pipeline_mode = #tpu.pipeline_mode<synchronous>, transform_indices = @transform_13, window_bounds = array<i64: 1, 128>}, {transform_indices = @transform_14, window_bounds = array<i64: 8, 8, 128>}, {transform_indices = @transform_15, window_bounds = array<i64: 8, 8, 128>}]} {
    %c0_i32 = arith.constant 0 : i32
    %0 = arith.cmpi eq, %arg1, %c0_i32 : i32
    %1 = arith.extui %0 : i1 to i32
    %c0_i32_0 = arith.constant 0 : i32
    %2 = arith.cmpi ne, %1, %c0_i32_0 : i32
    scf.if %2 {
      %c0_244 = arith.constant 0 : index
      %c0_245 = arith.constant 0 : index
      %551 = vector.load %arg3[%c0_244, %c0_245] : memref<8x128xf32, #tpu.memory_space<vmem>>, vector<8x128xf32>
      %c0_246 = arith.constant 0 : index
      %c0_247 = arith.constant 0 : index
      %552 = vector.load %arg18[%c0_246, %c0_247] : memref<8x128xf32, #tpu.memory_space<vmem>>, vector<8x128xf32>
      tpu.vector_store %arg18[%c0_246, %c0_247], %551 {strides = array<i32>} : memref<8x128xf32, #tpu.memory_space<vmem>>, vector<8x128xf32>,
      %cst_248 = arith.constant 0.000000e+00 : f32
      %553 = vector.broadcast %cst_248 : f32 to vector<8x128xf32>
      %c0_249 = arith.constant 0 : index
      %c0_250 = arith.constant 0 : index
      %554 = vector.load %arg19[%c0_249, %c0_250] : memref<8x128xf32, #tpu.memory_space<vmem>>, vector<8x128xf32>
      tpu.vector_store %arg19[%c0_249, %c0_250], %553 {strides = array<i32>} : memref<8x128xf32, #tpu.memory_space<vmem>>, vector<8x128xf32>,
      %cst_251 = arith.constant 0.000000e+00 : bf16
      %555 = vector.broadcast %cst_251 : bf16 to vector<8x128xbf16>
      %c0_252 = arith.constant 0 : index
      %c0_253 = arith.constant 0 : index
      %556 = vector.load %arg20[%c0_252, %c0_253] : memref<8x128xbf16, #tpu.memory_space<vmem>>, vector<8x128xbf16>
      tpu.vector_store %arg20[%c0_252, %c0_253], %555 {strides = array<i32>} : memref<8x128xbf16, #tpu.memory_space<vmem>>, vector<8x128xbf16>,
    } else {
    }
    %c0 = arith.constant 0 : index
    %c0_1 = arith.constant 0 : index
    %c0_2 = arith.constant 0 : index
    %3 = vector.load %arg2[%c0, %c0_1, %c0_2] : memref<8x8x32xbf16, #tpu.memory_space<vmem>>, vector<8x8x32xbf16>
    %4 = vector.shape_cast %3 : vector<8x8x32xbf16> to vector<64x32xbf16>
    %c0_3 = arith.constant 0 : index
    %c0_4 = arith.constant 0 : index
    %5 = vector.load %arg4[%c0_3, %c0_4] : memref<32x256xbf16, #tpu.memory_space<vmem>>, vector<32x256xbf16>
    %cst = arith.constant dense<0.000000e+00> : vector<64x256xf32>
    %6 = tpu.matmul %4, %5, %cst {dimension_numbers = #tpu.dot_dimension_numbers<[1], [0], [0], [1], [0, 0, 1, 1], [], []>} : vector<64x32xbf16>, vector<32x256xbf16>, vector<64x256xf32> -> vector<64x256xf32>
    %c0_5 = arith.constant 0 : index
    %c0_6 = arith.constant 0 : index
    %7 = vector.load %arg5[%c0_5, %c0_6] : memref<1x256xf32, #tpu.memory_space<vmem>>, vector<1x256xf32>
    %8 = vector.broadcast %7 : vector<1x256xf32> to vector<64x256xf32>
    %9 = arith.addf %6, %8 : vector<64x256xf32>
    %c0_7 = arith.constant 0 : index
    %c0_8 = arith.constant 0 : index
    %10 = vector.load %arg6[%c0_7, %c0_8] : memref<1x256xf32, #tpu.memory_space<vmem>>, vector<1x256xf32>
    %c0_9 = arith.constant 0 : index
    %c0_10 = arith.constant 0 : index
    %11 = vector.load %arg7[%c0_9, %c0_10] : memref<1x256xf32, #tpu.memory_space<vmem>>, vector<1x256xf32>
    %cst_11 = arith.constant dense<0.000000e+00> : vector<64xf32>
    %12 = vector.multi_reduction <add>, %9, %cst_11 [1] : vector<64x256xf32> to vector<64xf32>
    %13 = vector.shape_cast %12 : vector<64xf32> to vector<64x1xf32>
    %cst_12 = arith.constant 2.560000e+02 : f32
    %14 = vector.broadcast %cst_12 : f32 to vector<64x1xf32>
    %15 = arith.divf %13, %14 : vector<64x1xf32>
    %16 = vector.broadcast %15 : vector<64x1xf32> to vector<64x256xf32>
    %17 = arith.subf %9, %16 : vector<64x256xf32>
    %18 = arith.mulf %17, %17 : vector<64x256xf32>
    %cst_13 = arith.constant dense<0.000000e+00> : vector<64xf32>
    %19 = vector.multi_reduction <add>, %18, %cst_13 [1] : vector<64x256xf32> to vector<64xf32>
    %20 = vector.shape_cast %19 : vector<64xf32> to vector<64x1xf32>
    %cst_14 = arith.constant 2.560000e+02 : f32
    %21 = vector.broadcast %cst_14 : f32 to vector<64x1xf32>
    %22 = arith.divf %20, %21 : vector<64x1xf32>
    %23 = vector.broadcast %15 : vector<64x1xf32> to vector<64x256xf32>
    %24 = arith.subf %9, %23 : vector<64x256xf32>
    %cst_15 = arith.constant 9.99999974E-6 : f32
    %25 = vector.broadcast %cst_15 : f32 to vector<64x1xf32>
    %26 = arith.addf %22, %25 : vector<64x1xf32>
    %27 = math.rsqrt %26 : vector<64x1xf32>
    %28 = vector.broadcast %27 : vector<64x1xf32> to vector<64x256xf32>
    %29 = arith.mulf %24, %28 : vector<64x256xf32>
    %30 = vector.broadcast %10 : vector<1x256xf32> to vector<64x256xf32>
    %31 = arith.mulf %29, %30 : vector<64x256xf32>
    %32 = vector.broadcast %11 : vector<1x256xf32> to vector<64x256xf32>
    %33 = arith.addf %31, %32 : vector<64x256xf32>
    %34 = vector.extract_strided_slice %33 {offsets = [0, 0], sizes = [64, 128], strides = [1, 1]} : vector<64x256xf32> to vector<64x128xf32>
    %35 = vector.extract_strided_slice %33 {offsets = [0, 128], sizes = [64, 128], strides = [1, 1]} : vector<64x256xf32> to vector<64x128xf32>
    %36 = arith.addf %34, %35 : vector<64x128xf32>
    %37 = vector.shape_cast %36 : vector<64x128xf32> to vector<8x8x128xf32>
    %c0_16 = arith.constant 0 : index
    %c0_17 = arith.constant 0 : index
    %c0_18 = arith.constant 0 : index
    %38 = vector.load %arg21[%c0_16, %c0_17, %c0_18] : memref<8x8x128xf32, #tpu.memory_space<vmem>>, vector<8x8x128xf32>
    tpu.vector_store %arg21[%c0_16, %c0_17, %c0_18], %37 {strides = array<i32>} : memref<8x8x128xf32, #tpu.memory_space<vmem>>, vector<8x8x128xf32>,
    %c0_19 = arith.constant 0 : index
    %c0_20 = arith.constant 0 : index
    %39 = vector.load %arg12[%c0_19, %c0_20] : memref<1x128xf32, #tpu.memory_space<vmem>>, vector<1x128xf32>
    %c0_21 = arith.constant 0 : index
    %c0_22 = arith.constant 0 : index
    %40 = vector.load %arg13[%c0_21, %c0_22] : memref<1x128xf32, #tpu.memory_space<vmem>>, vector<1x128xf32>
    %c0_23 = arith.constant 0 : index
    %c0_24 = arith.constant 0 : index
    %41 = vector.load %arg14[%c0_23, %c0_24] : memref<1x128xf32, #tpu.memory_space<vmem>>, vector<1x128xf32>
    %c0_25 = arith.constant 0 : index
    %c0_26 = arith.constant 0 : index
    %42 = vector.load %arg15[%c0_25, %c0_26] : memref<1x128xf32, #tpu.memory_space<vmem>>, vector<1x128xf32>
    %c0_27 = arith.constant 0 : index
    %c0_28 = arith.constant 0 : index
    %43 = vector.load %arg8[%c0_27, %c0_28] : memref<128x256xbf16, #tpu.memory_space<vmem>>, vector<128x256xbf16>
    %c0_29 = arith.constant 0 : index
    %c0_30 = arith.constant 0 : index
    %44 = vector.load %arg9[%c0_29, %c0_30] : memref<1x256xf32, #tpu.memory_space<vmem>>, vector<1x256xf32>
    %c0_31 = arith.constant 0 : index
    %c0_32 = arith.constant 0 : index
    %45 = vector.load %arg10[%c0_31, %c0_32] : memref<1x256xf32, #tpu.memory_space<vmem>>, vector<1x256xf32>
    %c0_33 = arith.constant 0 : index
    %c0_34 = arith.constant 0 : index
    %46 = vector.load %arg11[%c0_33, %c0_34] : memref<1x256xf32, #tpu.memory_space<vmem>>, vector<1x256xf32>
    %c0_i32_35 = arith.constant 0 : i32
    %c0_36 = arith.constant 0 : index
    %c0_37 = arith.constant 0 : index
    %47 = vector.load %arg20[%c0_36, %c0_37] : memref<8x128xbf16, #tpu.memory_space<vmem>>, vector<8x128xbf16>
    %cst_38 = arith.constant dense<0.000000e+00> : vector<8x256xf32>
    %48 = tpu.matmul %47, %43, %cst_38 {dimension_numbers = #tpu.dot_dimension_numbers<[1], [0], [0], [1], [0, 0, 1, 1], [], []>} : vector<8x128xbf16>, vector<128x256xbf16>, vector<8x256xf32> -> vector<8x256xf32>
    %49 = vector.broadcast %44 : vector<1x256xf32> to vector<8x256xf32>
    %50 = arith.addf %48, %49 : vector<8x256xf32>
    %cst_39 = arith.constant dense<0.000000e+00> : vector<8xf32>
    %51 = vector.multi_reduction <add>, %50, %cst_39 [1] : vector<8x256xf32> to vector<8xf32>
    %52 = vector.shape_cast %51 : vector<8xf32> to vector<8x1xf32>
    %cst_40 = arith.constant 3.906250e-03 : f32
    %53 = vector.broadcast %cst_40 : f32 to vector<8x1xf32>
    %54 = arith.mulf %52, %53 : vector<8x1xf32>
    %55 = arith.mulf %50, %50 : vector<8x256xf32>
    %cst_41 = arith.constant dense<0.000000e+00> : vector<8xf32>
    %56 = vector.multi_reduction <add>, %55, %cst_41 [1] : vector<8x256xf32> to vector<8xf32>
    %57 = vector.shape_cast %56 : vector<8xf32> to vector<8x1xf32>
    %cst_42 = arith.constant 3.906250e-03 : f32
    %58 = vector.broadcast %cst_42 : f32 to vector<8x1xf32>
    %59 = arith.mulf %57, %58 : vector<8x1xf32>
    %60 = arith.mulf %54, %54 : vector<8x1xf32>
    %61 = arith.subf %59, %60 : vector<8x1xf32>
    %cst_43 = arith.constant 0.000000e+00 : f32
    %62 = vector.broadcast %cst_43 : f32 to vector<8x1xf32>
    %63 = arith.maximumf %61, %62 : vector<8x1xf32>
    %64 = vector.broadcast %54 : vector<8x1xf32> to vector<8x256xf32>
    %65 = arith.subf %50, %64 : vector<8x256xf32>
    %cst_44 = arith.constant 9.99999974E-6 : f32
    %66 = vector.broadcast %cst_44 : f32 to vector<8x1xf32>
    %67 = arith.addf %63, %66 : vector<8x1xf32>
    %68 = math.rsqrt %67 : vector<8x1xf32>
    %69 = vector.broadcast %68 : vector<8x1xf32> to vector<8x256xf32>
    %70 = arith.mulf %65, %69 : vector<8x256xf32>
    %71 = vector.broadcast %45 : vector<1x256xf32> to vector<8x256xf32>
    %72 = arith.mulf %70, %71 : vector<8x256xf32>
    %73 = vector.broadcast %46 : vector<1x256xf32> to vector<8x256xf32>
    %74 = arith.addf %72, %73 : vector<8x256xf32>
    %75 = vector.extract_strided_slice %74 {offsets = [0, 0], sizes = [8, 128], strides = [1, 1]} : vector<8x256xf32> to vector<8x128xf32>
    %76 = vector.extract_strided_slice %74 {offsets = [0, 128], sizes = [8, 128], strides = [1, 1]} : vector<8x256xf32> to vector<8x128xf32>
    %77 = arith.addf %75, %76 : vector<8x128xf32>
    %78 = arith.index_cast %c0_i32_35 : i32 to index
    %c0_45 = arith.constant 0 : index
    %c0_46 = arith.constant 0 : index
    %79 = vector.load %arg21[%78, %c0_45, %c0_46] : memref<8x8x128xf32, #tpu.memory_space<vmem>>, vector<1x8x128xf32>
    %80 = vector.shape_cast %79 : vector<1x8x128xf32> to vector<8x128xf32>
    %81 = arith.addf %80, %77 : vector<8x128xf32>
    %c0_47 = arith.constant 0 : index
    %c0_48 = arith.constant 0 : index
    %82 = vector.load %arg19[%c0_47, %c0_48] : memref<8x128xf32, #tpu.memory_space<vmem>>, vector<8x128xf32>
    %83 = vector.broadcast %41 : vector<1x128xf32> to vector<8x128xf32>
    %84 = arith.mulf %83, %82 : vector<8x128xf32>
    %85 = vector.broadcast %42 : vector<1x128xf32> to vector<8x128xf32>
    %86 = arith.mulf %85, %81 : vector<8x128xf32>
    %87 = arith.addf %84, %86 : vector<8x128xf32>
    %c0_49 = arith.constant 0 : index
    %c0_50 = arith.constant 0 : index
    %88 = vector.load %arg18[%c0_49, %c0_50] : memref<8x128xf32, #tpu.memory_space<vmem>>, vector<8x128xf32>
    %89 = vector.broadcast %39 : vector<1x128xf32> to vector<8x128xf32>
    %90 = arith.mulf %89, %88 : vector<8x128xf32>
    %91 = vector.broadcast %40 : vector<1x128xf32> to vector<8x128xf32>
    %92 = arith.mulf %91, %87 : vector<8x128xf32>
    %93 = arith.addf %90, %92 : vector<8x128xf32>
    %cst_51 = arith.constant 5.000000e-01 : f32
    %94 = vector.broadcast %cst_51 : f32 to vector<8x128xf32>
    %95 = arith.cmpf ogt, %93, %94 : vector<8x128xf32>
    %96 = arith.extui %95 : vector<8x128xi1> to vector<8x128xi32>
    %97 = arith.sitofp %96 : vector<8x128xi32> to vector<8x128xf32>
    %98 = arith.truncf %97 : vector<8x128xf32> to vector<8x128xbf16>
    %c0_52 = arith.constant 0 : index
    %c0_53 = arith.constant 0 : index
    %99 = vector.load %arg19[%c0_52, %c0_53] : memref<8x128xf32, #tpu.memory_space<vmem>>, vector<8x128xf32>
    tpu.vector_store %arg19[%c0_52, %c0_53], %87 {strides = array<i32>} : memref<8x128xf32, #tpu.memory_space<vmem>>, vector<8x128xf32>,
    %c0_54 = arith.constant 0 : index
    %c0_55 = arith.constant 0 : index
    %100 = vector.load %arg18[%c0_54, %c0_55] : memref<8x128xf32, #tpu.memory_space<vmem>>, vector<8x128xf32>
    tpu.vector_store %arg18[%c0_54, %c0_55], %93 {strides = array<i32>} : memref<8x128xf32, #tpu.memory_space<vmem>>, vector<8x128xf32>,
    %c0_56 = arith.constant 0 : index
    %c0_57 = arith.constant 0 : index
    %101 = vector.load %arg20[%c0_56, %c0_57] : memref<8x128xbf16, #tpu.memory_space<vmem>>, vector<8x128xbf16>
    tpu.vector_store %arg20[%c0_56, %c0_57], %98 {strides = array<i32>} : memref<8x128xbf16, #tpu.memory_space<vmem>>, vector<8x128xbf16>,
    %102 = arith.index_cast %c0_i32_35 : i32 to index
    %c0_58 = arith.constant 0 : index
    %c0_59 = arith.constant 0 : index
    %103 = vector.load %arg16[%102, %c0_58, %c0_59] : memref<8x8x128xf32, #tpu.memory_space<vmem>>, vector<1x8x128xf32>
    %104 = vector.shape_cast %103 : vector<1x8x128xf32> to vector<8x128xf32>
    %105 = vector.shape_cast %93 : vector<8x128xf32> to vector<1x8x128xf32>
    tpu.vector_store %arg16[%102, %c0_58, %c0_59], %105 {strides = array<i32>} : memref<8x8x128xf32, #tpu.memory_space<vmem>>, vector<1x8x128xf32>,
    %106 = arith.index_cast %c0_i32_35 : i32 to index
    %c0_60 = arith.constant 0 : index
    %c0_61 = arith.constant 0 : index
    %107 = vector.load %arg17[%106, %c0_60, %c0_61] : memref<8x8x128xbf16, #tpu.memory_space<vmem>>, vector<1x8x128xbf16>
    %108 = vector.shape_cast %107 : vector<1x8x128xbf16> to vector<8x128xbf16>
    %109 = vector.shape_cast %98 : vector<8x128xbf16> to vector<1x8x128xbf16>
    tpu.vector_store %arg17[%106, %c0_60, %c0_61], %109 {strides = array<i32>} : memref<8x8x128xbf16, #tpu.memory_space<vmem>>, vector<1x8x128xbf16>,
    %c1_i32 = arith.constant 1 : i32
    %c0_62 = arith.constant 0 : index
    %c0_63 = arith.constant 0 : index
    %110 = vector.load %arg20[%c0_62, %c0_63] : memref<8x128xbf16, #tpu.memory_space<vmem>>, vector<8x128xbf16>
    %cst_64 = arith.constant dense<0.000000e+00> : vector<8x256xf32>
    %111 = tpu.matmul %110, %43, %cst_64 {dimension_numbers = #tpu.dot_dimension_numbers<[1], [0], [0], [1], [0, 0, 1, 1], [], []>} : vector<8x128xbf16>, vector<128x256xbf16>, vector<8x256xf32> -> vector<8x256xf32>
    %112 = vector.broadcast %44 : vector<1x256xf32> to vector<8x256xf32>
    %113 = arith.addf %111, %112 : vector<8x256xf32>
    %cst_65 = arith.constant dense<0.000000e+00> : vector<8xf32>
    %114 = vector.multi_reduction <add>, %113, %cst_65 [1] : vector<8x256xf32> to vector<8xf32>
    %115 = vector.shape_cast %114 : vector<8xf32> to vector<8x1xf32>
    %cst_66 = arith.constant 3.906250e-03 : f32
    %116 = vector.broadcast %cst_66 : f32 to vector<8x1xf32>
    %117 = arith.mulf %115, %116 : vector<8x1xf32>
    %118 = arith.mulf %113, %113 : vector<8x256xf32>
    %cst_67 = arith.constant dense<0.000000e+00> : vector<8xf32>
    %119 = vector.multi_reduction <add>, %118, %cst_67 [1] : vector<8x256xf32> to vector<8xf32>
    %120 = vector.shape_cast %119 : vector<8xf32> to vector<8x1xf32>
    %cst_68 = arith.constant 3.906250e-03 : f32
    %121 = vector.broadcast %cst_68 : f32 to vector<8x1xf32>
    %122 = arith.mulf %120, %121 : vector<8x1xf32>
    %123 = arith.mulf %117, %117 : vector<8x1xf32>
    %124 = arith.subf %122, %123 : vector<8x1xf32>
    %cst_69 = arith.constant 0.000000e+00 : f32
    %125 = vector.broadcast %cst_69 : f32 to vector<8x1xf32>
    %126 = arith.maximumf %124, %125 : vector<8x1xf32>
    %127 = vector.broadcast %117 : vector<8x1xf32> to vector<8x256xf32>
    %128 = arith.subf %113, %127 : vector<8x256xf32>
    %cst_70 = arith.constant 9.99999974E-6 : f32
    %129 = vector.broadcast %cst_70 : f32 to vector<8x1xf32>
    %130 = arith.addf %126, %129 : vector<8x1xf32>
    %131 = math.rsqrt %130 : vector<8x1xf32>
    %132 = vector.broadcast %131 : vector<8x1xf32> to vector<8x256xf32>
    %133 = arith.mulf %128, %132 : vector<8x256xf32>
    %134 = vector.broadcast %45 : vector<1x256xf32> to vector<8x256xf32>
    %135 = arith.mulf %133, %134 : vector<8x256xf32>
    %136 = vector.broadcast %46 : vector<1x256xf32> to vector<8x256xf32>
    %137 = arith.addf %135, %136 : vector<8x256xf32>
    %138 = vector.extract_strided_slice %137 {offsets = [0, 0], sizes = [8, 128], strides = [1, 1]} : vector<8x256xf32> to vector<8x128xf32>
    %139 = vector.extract_strided_slice %137 {offsets = [0, 128], sizes = [8, 128], strides = [1, 1]} : vector<8x256xf32> to vector<8x128xf32>
    %140 = arith.addf %138, %139 : vector<8x128xf32>
    %141 = arith.index_cast %c1_i32 : i32 to index
    %c0_71 = arith.constant 0 : index
    %c0_72 = arith.constant 0 : index
    %142 = vector.load %arg21[%141, %c0_71, %c0_72] : memref<8x8x128xf32, #tpu.memory_space<vmem>>, vector<1x8x128xf32>
    %143 = vector.shape_cast %142 : vector<1x8x128xf32> to vector<8x128xf32>
    %144 = arith.addf %143, %140 : vector<8x128xf32>
    %c0_73 = arith.constant 0 : index
    %c0_74 = arith.constant 0 : index
    %145 = vector.load %arg19[%c0_73, %c0_74] : memref<8x128xf32, #tpu.memory_space<vmem>>, vector<8x128xf32>
    %146 = vector.broadcast %41 : vector<1x128xf32> to vector<8x128xf32>
    %147 = arith.mulf %146, %145 : vector<8x128xf32>
    %148 = vector.broadcast %42 : vector<1x128xf32> to vector<8x128xf32>
    %149 = arith.mulf %148, %144 : vector<8x128xf32>
    %150 = arith.addf %147, %149 : vector<8x128xf32>
    %c0_75 = arith.constant 0 : index
    %c0_76 = arith.constant 0 : index
    %151 = vector.load %arg18[%c0_75, %c0_76] : memref<8x128xf32, #tpu.memory_space<vmem>>, vector<8x128xf32>
    %152 = vector.broadcast %39 : vector<1x128xf32> to vector<8x128xf32>
    %153 = arith.mulf %152, %151 : vector<8x128xf32>
    %154 = vector.broadcast %40 : vector<1x128xf32> to vector<8x128xf32>
    %155 = arith.mulf %154, %150 : vector<8x128xf32>
    %156 = arith.addf %153, %155 : vector<8x128xf32>
    %cst_77 = arith.constant 5.000000e-01 : f32
    %157 = vector.broadcast %cst_77 : f32 to vector<8x128xf32>
    %158 = arith.cmpf ogt, %156, %157 : vector<8x128xf32>
    %159 = arith.extui %158 : vector<8x128xi1> to vector<8x128xi32>
    %160 = arith.sitofp %159 : vector<8x128xi32> to vector<8x128xf32>
    %161 = arith.truncf %160 : vector<8x128xf32> to vector<8x128xbf16>
    %c0_78 = arith.constant 0 : index
    %c0_79 = arith.constant 0 : index
    %162 = vector.load %arg19[%c0_78, %c0_79] : memref<8x128xf32, #tpu.memory_space<vmem>>, vector<8x128xf32>
    tpu.vector_store %arg19[%c0_78, %c0_79], %150 {strides = array<i32>} : memref<8x128xf32, #tpu.memory_space<vmem>>, vector<8x128xf32>,
    %c0_80 = arith.constant 0 : index
    %c0_81 = arith.constant 0 : index
    %163 = vector.load %arg18[%c0_80, %c0_81] : memref<8x128xf32, #tpu.memory_space<vmem>>, vector<8x128xf32>
    tpu.vector_store %arg18[%c0_80, %c0_81], %156 {strides = array<i32>} : memref<8x128xf32, #tpu.memory_space<vmem>>, vector<8x128xf32>,
    %c0_82 = arith.constant 0 : index
    %c0_83 = arith.constant 0 : index
    %164 = vector.load %arg20[%c0_82, %c0_83] : memref<8x128xbf16, #tpu.memory_space<vmem>>, vector<8x128xbf16>
    tpu.vector_store %arg20[%c0_82, %c0_83], %161 {strides = array<i32>} : memref<8x128xbf16, #tpu.memory_space<vmem>>, vector<8x128xbf16>,
    %165 = arith.index_cast %c1_i32 : i32 to index
    %c0_84 = arith.constant 0 : index
    %c0_85 = arith.constant 0 : index
    %166 = vector.load %arg16[%165, %c0_84, %c0_85] : memref<8x8x128xf32, #tpu.memory_space<vmem>>, vector<1x8x128xf32>
    %167 = vector.shape_cast %166 : vector<1x8x128xf32> to vector<8x128xf32>
    %168 = vector.shape_cast %156 : vector<8x128xf32> to vector<1x8x128xf32>
    tpu.vector_store %arg16[%165, %c0_84, %c0_85], %168 {strides = array<i32>} : memref<8x8x128xf32, #tpu.memory_space<vmem>>, vector<1x8x128xf32>,
    %169 = arith.index_cast %c1_i32 : i32 to index
    %c0_86 = arith.constant 0 : index
    %c0_87 = arith.constant 0 : index
    %170 = vector.load %arg17[%169, %c0_86, %c0_87] : memref<8x8x128xbf16, #tpu.memory_space<vmem>>, vector<1x8x128xbf16>
    %171 = vector.shape_cast %170 : vector<1x8x128xbf16> to vector<8x128xbf16>
    %172 = vector.shape_cast %161 : vector<8x128xbf16> to vector<1x8x128xbf16>
    tpu.vector_store %arg17[%169, %c0_86, %c0_87], %172 {strides = array<i32>} : memref<8x8x128xbf16, #tpu.memory_space<vmem>>, vector<1x8x128xbf16>,
    %c2_i32 = arith.constant 2 : i32
    %c0_88 = arith.constant 0 : index
    %c0_89 = arith.constant 0 : index
    %173 = vector.load %arg20[%c0_88, %c0_89] : memref<8x128xbf16, #tpu.memory_space<vmem>>, vector<8x128xbf16>
    %cst_90 = arith.constant dense<0.000000e+00> : vector<8x256xf32>
    %174 = tpu.matmul %173, %43, %cst_90 {dimension_numbers = #tpu.dot_dimension_numbers<[1], [0], [0], [1], [0, 0, 1, 1], [], []>} : vector<8x128xbf16>, vector<128x256xbf16>, vector<8x256xf32> -> vector<8x256xf32>
    %175 = vector.broadcast %44 : vector<1x256xf32> to vector<8x256xf32>
    %176 = arith.addf %174, %175 : vector<8x256xf32>
    %cst_91 = arith.constant dense<0.000000e+00> : vector<8xf32>
    %177 = vector.multi_reduction <add>, %176, %cst_91 [1] : vector<8x256xf32> to vector<8xf32>
    %178 = vector.shape_cast %177 : vector<8xf32> to vector<8x1xf32>
    %cst_92 = arith.constant 3.906250e-03 : f32
    %179 = vector.broadcast %cst_92 : f32 to vector<8x1xf32>
    %180 = arith.mulf %178, %179 : vector<8x1xf32>
    %181 = arith.mulf %176, %176 : vector<8x256xf32>
    %cst_93 = arith.constant dense<0.000000e+00> : vector<8xf32>
    %182 = vector.multi_reduction <add>, %181, %cst_93 [1] : vector<8x256xf32> to vector<8xf32>
    %183 = vector.shape_cast %182 : vector<8xf32> to vector<8x1xf32>
    %cst_94 = arith.constant 3.906250e-03 : f32
    %184 = vector.broadcast %cst_94 : f32 to vector<8x1xf32>
    %185 = arith.mulf %183, %184 : vector<8x1xf32>
    %186 = arith.mulf %180, %180 : vector<8x1xf32>
    %187 = arith.subf %185, %186 : vector<8x1xf32>
    %cst_95 = arith.constant 0.000000e+00 : f32
    %188 = vector.broadcast %cst_95 : f32 to vector<8x1xf32>
    %189 = arith.maximumf %187, %188 : vector<8x1xf32>
    %190 = vector.broadcast %180 : vector<8x1xf32> to vector<8x256xf32>
    %191 = arith.subf %176, %190 : vector<8x256xf32>
    %cst_96 = arith.constant 9.99999974E-6 : f32
    %192 = vector.broadcast %cst_96 : f32 to vector<8x1xf32>
    %193 = arith.addf %189, %192 : vector<8x1xf32>
    %194 = math.rsqrt %193 : vector<8x1xf32>
    %195 = vector.broadcast %194 : vector<8x1xf32> to vector<8x256xf32>
    %196 = arith.mulf %191, %195 : vector<8x256xf32>
    %197 = vector.broadcast %45 : vector<1x256xf32> to vector<8x256xf32>
    %198 = arith.mulf %196, %197 : vector<8x256xf32>
    %199 = vector.broadcast %46 : vector<1x256xf32> to vector<8x256xf32>
    %200 = arith.addf %198, %199 : vector<8x256xf32>
    %201 = vector.extract_strided_slice %200 {offsets = [0, 0], sizes = [8, 128], strides = [1, 1]} : vector<8x256xf32> to vector<8x128xf32>
    %202 = vector.extract_strided_slice %200 {offsets = [0, 128], sizes = [8, 128], strides = [1, 1]} : vector<8x256xf32> to vector<8x128xf32>
    %203 = arith.addf %201, %202 : vector<8x128xf32>
    %204 = arith.index_cast %c2_i32 : i32 to index
    %c0_97 = arith.constant 0 : index
    %c0_98 = arith.constant 0 : index
    %205 = vector.load %arg21[%204, %c0_97, %c0_98] : memref<8x8x128xf32, #tpu.memory_space<vmem>>, vector<1x8x128xf32>
    %206 = vector.shape_cast %205 : vector<1x8x128xf32> to vector<8x128xf32>
    %207 = arith.addf %206, %203 : vector<8x128xf32>
    %c0_99 = arith.constant 0 : index
    %c0_100 = arith.constant 0 : index
    %208 = vector.load %arg19[%c0_99, %c0_100] : memref<8x128xf32, #tpu.memory_space<vmem>>, vector<8x128xf32>
    %209 = vector.broadcast %41 : vector<1x128xf32> to vector<8x128xf32>
    %210 = arith.mulf %209, %208 : vector<8x128xf32>
    %211 = vector.broadcast %42 : vector<1x128xf32> to vector<8x128xf32>
    %212 = arith.mulf %211, %207 : vector<8x128xf32>
    %213 = arith.addf %210, %212 : vector<8x128xf32>
    %c0_101 = arith.constant 0 : index
    %c0_102 = arith.constant 0 : index
    %214 = vector.load %arg18[%c0_101, %c0_102] : memref<8x128xf32, #tpu.memory_space<vmem>>, vector<8x128xf32>
    %215 = vector.broadcast %39 : vector<1x128xf32> to vector<8x128xf32>
    %216 = arith.mulf %215, %214 : vector<8x128xf32>
    %217 = vector.broadcast %40 : vector<1x128xf32> to vector<8x128xf32>
    %218 = arith.mulf %217, %213 : vector<8x128xf32>
    %219 = arith.addf %216, %218 : vector<8x128xf32>
    %cst_103 = arith.constant 5.000000e-01 : f32
    %220 = vector.broadcast %cst_103 : f32 to vector<8x128xf32>
    %221 = arith.cmpf ogt, %219, %220 : vector<8x128xf32>
    %222 = arith.extui %221 : vector<8x128xi1> to vector<8x128xi32>
    %223 = arith.sitofp %222 : vector<8x128xi32> to vector<8x128xf32>
    %224 = arith.truncf %223 : vector<8x128xf32> to vector<8x128xbf16>
    %c0_104 = arith.constant 0 : index
    %c0_105 = arith.constant 0 : index
    %225 = vector.load %arg19[%c0_104, %c0_105] : memref<8x128xf32, #tpu.memory_space<vmem>>, vector<8x128xf32>
    tpu.vector_store %arg19[%c0_104, %c0_105], %213 {strides = array<i32>} : memref<8x128xf32, #tpu.memory_space<vmem>>, vector<8x128xf32>,
    %c0_106 = arith.constant 0 : index
    %c0_107 = arith.constant 0 : index
    %226 = vector.load %arg18[%c0_106, %c0_107] : memref<8x128xf32, #tpu.memory_space<vmem>>, vector<8x128xf32>
    tpu.vector_store %arg18[%c0_106, %c0_107], %219 {strides = array<i32>} : memref<8x128xf32, #tpu.memory_space<vmem>>, vector<8x128xf32>,
    %c0_108 = arith.constant 0 : index
    %c0_109 = arith.constant 0 : index
    %227 = vector.load %arg20[%c0_108, %c0_109] : memref<8x128xbf16, #tpu.memory_space<vmem>>, vector<8x128xbf16>
    tpu.vector_store %arg20[%c0_108, %c0_109], %224 {strides = array<i32>} : memref<8x128xbf16, #tpu.memory_space<vmem>>, vector<8x128xbf16>,
    %228 = arith.index_cast %c2_i32 : i32 to index
    %c0_110 = arith.constant 0 : index
    %c0_111 = arith.constant 0 : index
    %229 = vector.load %arg16[%228, %c0_110, %c0_111] : memref<8x8x128xf32, #tpu.memory_space<vmem>>, vector<1x8x128xf32>
    %230 = vector.shape_cast %229 : vector<1x8x128xf32> to vector<8x128xf32>
    %231 = vector.shape_cast %219 : vector<8x128xf32> to vector<1x8x128xf32>
    tpu.vector_store %arg16[%228, %c0_110, %c0_111], %231 {strides = array<i32>} : memref<8x8x128xf32, #tpu.memory_space<vmem>>, vector<1x8x128xf32>,
    %232 = arith.index_cast %c2_i32 : i32 to index
    %c0_112 = arith.constant 0 : index
    %c0_113 = arith.constant 0 : index
    %233 = vector.load %arg17[%232, %c0_112, %c0_113] : memref<8x8x128xbf16, #tpu.memory_space<vmem>>, vector<1x8x128xbf16>
    %234 = vector.shape_cast %233 : vector<1x8x128xbf16> to vector<8x128xbf16>
    %235 = vector.shape_cast %224 : vector<8x128xbf16> to vector<1x8x128xbf16>
    tpu.vector_store %arg17[%232, %c0_112, %c0_113], %235 {strides = array<i32>} : memref<8x8x128xbf16, #tpu.memory_space<vmem>>, vector<1x8x128xbf16>,
    %c3_i32 = arith.constant 3 : i32
    %c0_114 = arith.constant 0 : index
    %c0_115 = arith.constant 0 : index
    %236 = vector.load %arg20[%c0_114, %c0_115] : memref<8x128xbf16, #tpu.memory_space<vmem>>, vector<8x128xbf16>
    %cst_116 = arith.constant dense<0.000000e+00> : vector<8x256xf32>
    %237 = tpu.matmul %236, %43, %cst_116 {dimension_numbers = #tpu.dot_dimension_numbers<[1], [0], [0], [1], [0, 0, 1, 1], [], []>} : vector<8x128xbf16>, vector<128x256xbf16>, vector<8x256xf32> -> vector<8x256xf32>
    %238 = vector.broadcast %44 : vector<1x256xf32> to vector<8x256xf32>
    %239 = arith.addf %237, %238 : vector<8x256xf32>
    %cst_117 = arith.constant dense<0.000000e+00> : vector<8xf32>
    %240 = vector.multi_reduction <add>, %239, %cst_117 [1] : vector<8x256xf32> to vector<8xf32>
    %241 = vector.shape_cast %240 : vector<8xf32> to vector<8x1xf32>
    %cst_118 = arith.constant 3.906250e-03 : f32
    %242 = vector.broadcast %cst_118 : f32 to vector<8x1xf32>
    %243 = arith.mulf %241, %242 : vector<8x1xf32>
    %244 = arith.mulf %239, %239 : vector<8x256xf32>
    %cst_119 = arith.constant dense<0.000000e+00> : vector<8xf32>
    %245 = vector.multi_reduction <add>, %244, %cst_119 [1] : vector<8x256xf32> to vector<8xf32>
    %246 = vector.shape_cast %245 : vector<8xf32> to vector<8x1xf32>
    %cst_120 = arith.constant 3.906250e-03 : f32
    %247 = vector.broadcast %cst_120 : f32 to vector<8x1xf32>
    %248 = arith.mulf %246, %247 : vector<8x1xf32>
    %249 = arith.mulf %243, %243 : vector<8x1xf32>
    %250 = arith.subf %248, %249 : vector<8x1xf32>
    %cst_121 = arith.constant 0.000000e+00 : f32
    %251 = vector.broadcast %cst_121 : f32 to vector<8x1xf32>
    %252 = arith.maximumf %250, %251 : vector<8x1xf32>
    %253 = vector.broadcast %243 : vector<8x1xf32> to vector<8x256xf32>
    %254 = arith.subf %239, %253 : vector<8x256xf32>
    %cst_122 = arith.constant 9.99999974E-6 : f32
    %255 = vector.broadcast %cst_122 : f32 to vector<8x1xf32>
    %256 = arith.addf %252, %255 : vector<8x1xf32>
    %257 = math.rsqrt %256 : vector<8x1xf32>
    %258 = vector.broadcast %257 : vector<8x1xf32> to vector<8x256xf32>
    %259 = arith.mulf %254, %258 : vector<8x256xf32>
    %260 = vector.broadcast %45 : vector<1x256xf32> to vector<8x256xf32>
    %261 = arith.mulf %259, %260 : vector<8x256xf32>
    %262 = vector.broadcast %46 : vector<1x256xf32> to vector<8x256xf32>
    %263 = arith.addf %261, %262 : vector<8x256xf32>
    %264 = vector.extract_strided_slice %263 {offsets = [0, 0], sizes = [8, 128], strides = [1, 1]} : vector<8x256xf32> to vector<8x128xf32>
    %265 = vector.extract_strided_slice %263 {offsets = [0, 128], sizes = [8, 128], strides = [1, 1]} : vector<8x256xf32> to vector<8x128xf32>
    %266 = arith.addf %264, %265 : vector<8x128xf32>
    %267 = arith.index_cast %c3_i32 : i32 to index
    %c0_123 = arith.constant 0 : index
    %c0_124 = arith.constant 0 : index
    %268 = vector.load %arg21[%267, %c0_123, %c0_124] : memref<8x8x128xf32, #tpu.memory_space<vmem>>, vector<1x8x128xf32>
    %269 = vector.shape_cast %268 : vector<1x8x128xf32> to vector<8x128xf32>
    %270 = arith.addf %269, %266 : vector<8x128xf32>
    %c0_125 = arith.constant 0 : index
    %c0_126 = arith.constant 0 : index
    %271 = vector.load %arg19[%c0_125, %c0_126] : memref<8x128xf32, #tpu.memory_space<vmem>>, vector<8x128xf32>
    %272 = vector.broadcast %41 : vector<1x128xf32> to vector<8x128xf32>
    %273 = arith.mulf %272, %271 : vector<8x128xf32>
    %274 = vector.broadcast %42 : vector<1x128xf32> to vector<8x128xf32>
    %275 = arith.mulf %274, %270 : vector<8x128xf32>
    %276 = arith.addf %273, %275 : vector<8x128xf32>
    %c0_127 = arith.constant 0 : index
    %c0_128 = arith.constant 0 : index
    %277 = vector.load %arg18[%c0_127, %c0_128] : memref<8x128xf32, #tpu.memory_space<vmem>>, vector<8x128xf32>
    %278 = vector.broadcast %39 : vector<1x128xf32> to vector<8x128xf32>
    %279 = arith.mulf %278, %277 : vector<8x128xf32>
    %280 = vector.broadcast %40 : vector<1x128xf32> to vector<8x128xf32>
    %281 = arith.mulf %280, %276 : vector<8x128xf32>
    %282 = arith.addf %279, %281 : vector<8x128xf32>
    %cst_129 = arith.constant 5.000000e-01 : f32
    %283 = vector.broadcast %cst_129 : f32 to vector<8x128xf32>
    %284 = arith.cmpf ogt, %282, %283 : vector<8x128xf32>
    %285 = arith.extui %284 : vector<8x128xi1> to vector<8x128xi32>
    %286 = arith.sitofp %285 : vector<8x128xi32> to vector<8x128xf32>
    %287 = arith.truncf %286 : vector<8x128xf32> to vector<8x128xbf16>
    %c0_130 = arith.constant 0 : index
    %c0_131 = arith.constant 0 : index
    %288 = vector.load %arg19[%c0_130, %c0_131] : memref<8x128xf32, #tpu.memory_space<vmem>>, vector<8x128xf32>
    tpu.vector_store %arg19[%c0_130, %c0_131], %276 {strides = array<i32>} : memref<8x128xf32, #tpu.memory_space<vmem>>, vector<8x128xf32>,
    %c0_132 = arith.constant 0 : index
    %c0_133 = arith.constant 0 : index
    %289 = vector.load %arg18[%c0_132, %c0_133] : memref<8x128xf32, #tpu.memory_space<vmem>>, vector<8x128xf32>
    tpu.vector_store %arg18[%c0_132, %c0_133], %282 {strides = array<i32>} : memref<8x128xf32, #tpu.memory_space<vmem>>, vector<8x128xf32>,
    %c0_134 = arith.constant 0 : index
    %c0_135 = arith.constant 0 : index
    %290 = vector.load %arg20[%c0_134, %c0_135] : memref<8x128xbf16, #tpu.memory_space<vmem>>, vector<8x128xbf16>
    tpu.vector_store %arg20[%c0_134, %c0_135], %287 {strides = array<i32>} : memref<8x128xbf16, #tpu.memory_space<vmem>>, vector<8x128xbf16>,
    %291 = arith.index_cast %c3_i32 : i32 to index
    %c0_136 = arith.constant 0 : index
    %c0_137 = arith.constant 0 : index
    %292 = vector.load %arg16[%291, %c0_136, %c0_137] : memref<8x8x128xf32, #tpu.memory_space<vmem>>, vector<1x8x128xf32>
    %293 = vector.shape_cast %292 : vector<1x8x128xf32> to vector<8x128xf32>
    %294 = vector.shape_cast %282 : vector<8x128xf32> to vector<1x8x128xf32>
    tpu.vector_store %arg16[%291, %c0_136, %c0_137], %294 {strides = array<i32>} : memref<8x8x128xf32, #tpu.memory_space<vmem>>, vector<1x8x128xf32>,
    %295 = arith.index_cast %c3_i32 : i32 to index
    %c0_138 = arith.constant 0 : index
    %c0_139 = arith.constant 0 : index
    %296 = vector.load %arg17[%295, %c0_138, %c0_139] : memref<8x8x128xbf16, #tpu.memory_space<vmem>>, vector<1x8x128xbf16>
    %297 = vector.shape_cast %296 : vector<1x8x128xbf16> to vector<8x128xbf16>
    %298 = vector.shape_cast %287 : vector<8x128xbf16> to vector<1x8x128xbf16>
    tpu.vector_store %arg17[%295, %c0_138, %c0_139], %298 {strides = array<i32>} : memref<8x8x128xbf16, #tpu.memory_space<vmem>>, vector<1x8x128xbf16>,
    %c4_i32 = arith.constant 4 : i32
    %c0_140 = arith.constant 0 : index
    %c0_141 = arith.constant 0 : index
    %299 = vector.load %arg20[%c0_140, %c0_141] : memref<8x128xbf16, #tpu.memory_space<vmem>>, vector<8x128xbf16>
    %cst_142 = arith.constant dense<0.000000e+00> : vector<8x256xf32>
    %300 = tpu.matmul %299, %43, %cst_142 {dimension_numbers = #tpu.dot_dimension_numbers<[1], [0], [0], [1], [0, 0, 1, 1], [], []>} : vector<8x128xbf16>, vector<128x256xbf16>, vector<8x256xf32> -> vector<8x256xf32>
    %301 = vector.broadcast %44 : vector<1x256xf32> to vector<8x256xf32>
    %302 = arith.addf %300, %301 : vector<8x256xf32>
    %cst_143 = arith.constant dense<0.000000e+00> : vector<8xf32>
    %303 = vector.multi_reduction <add>, %302, %cst_143 [1] : vector<8x256xf32> to vector<8xf32>
    %304 = vector.shape_cast %303 : vector<8xf32> to vector<8x1xf32>
    %cst_144 = arith.constant 3.906250e-03 : f32
    %305 = vector.broadcast %cst_144 : f32 to vector<8x1xf32>
    %306 = arith.mulf %304, %305 : vector<8x1xf32>
    %307 = arith.mulf %302, %302 : vector<8x256xf32>
    %cst_145 = arith.constant dense<0.000000e+00> : vector<8xf32>
    %308 = vector.multi_reduction <add>, %307, %cst_145 [1] : vector<8x256xf32> to vector<8xf32>
    %309 = vector.shape_cast %308 : vector<8xf32> to vector<8x1xf32>
    %cst_146 = arith.constant 3.906250e-03 : f32
    %310 = vector.broadcast %cst_146 : f32 to vector<8x1xf32>
    %311 = arith.mulf %309, %310 : vector<8x1xf32>
    %312 = arith.mulf %306, %306 : vector<8x1xf32>
    %313 = arith.subf %311, %312 : vector<8x1xf32>
    %cst_147 = arith.constant 0.000000e+00 : f32
    %314 = vector.broadcast %cst_147 : f32 to vector<8x1xf32>
    %315 = arith.maximumf %313, %314 : vector<8x1xf32>
    %316 = vector.broadcast %306 : vector<8x1xf32> to vector<8x256xf32>
    %317 = arith.subf %302, %316 : vector<8x256xf32>
    %cst_148 = arith.constant 9.99999974E-6 : f32
    %318 = vector.broadcast %cst_148 : f32 to vector<8x1xf32>
    %319 = arith.addf %315, %318 : vector<8x1xf32>
    %320 = math.rsqrt %319 : vector<8x1xf32>
    %321 = vector.broadcast %320 : vector<8x1xf32> to vector<8x256xf32>
    %322 = arith.mulf %317, %321 : vector<8x256xf32>
    %323 = vector.broadcast %45 : vector<1x256xf32> to vector<8x256xf32>
    %324 = arith.mulf %322, %323 : vector<8x256xf32>
    %325 = vector.broadcast %46 : vector<1x256xf32> to vector<8x256xf32>
    %326 = arith.addf %324, %325 : vector<8x256xf32>
    %327 = vector.extract_strided_slice %326 {offsets = [0, 0], sizes = [8, 128], strides = [1, 1]} : vector<8x256xf32> to vector<8x128xf32>
    %328 = vector.extract_strided_slice %326 {offsets = [0, 128], sizes = [8, 128], strides = [1, 1]} : vector<8x256xf32> to vector<8x128xf32>
    %329 = arith.addf %327, %328 : vector<8x128xf32>
    %330 = arith.index_cast %c4_i32 : i32 to index
    %c0_149 = arith.constant 0 : index
    %c0_150 = arith.constant 0 : index
    %331 = vector.load %arg21[%330, %c0_149, %c0_150] : memref<8x8x128xf32, #tpu.memory_space<vmem>>, vector<1x8x128xf32>
    %332 = vector.shape_cast %331 : vector<1x8x128xf32> to vector<8x128xf32>
    %333 = arith.addf %332, %329 : vector<8x128xf32>
    %c0_151 = arith.constant 0 : index
    %c0_152 = arith.constant 0 : index
    %334 = vector.load %arg19[%c0_151, %c0_152] : memref<8x128xf32, #tpu.memory_space<vmem>>, vector<8x128xf32>
    %335 = vector.broadcast %41 : vector<1x128xf32> to vector<8x128xf32>
    %336 = arith.mulf %335, %334 : vector<8x128xf32>
    %337 = vector.broadcast %42 : vector<1x128xf32> to vector<8x128xf32>
    %338 = arith.mulf %337, %333 : vector<8x128xf32>
    %339 = arith.addf %336, %338 : vector<8x128xf32>
    %c0_153 = arith.constant 0 : index
    %c0_154 = arith.constant 0 : index
    %340 = vector.load %arg18[%c0_153, %c0_154] : memref<8x128xf32, #tpu.memory_space<vmem>>, vector<8x128xf32>
    %341 = vector.broadcast %39 : vector<1x128xf32> to vector<8x128xf32>
    %342 = arith.mulf %341, %340 : vector<8x128xf32>
    %343 = vector.broadcast %40 : vector<1x128xf32> to vector<8x128xf32>
    %344 = arith.mulf %343, %339 : vector<8x128xf32>
    %345 = arith.addf %342, %344 : vector<8x128xf32>
    %cst_155 = arith.constant 5.000000e-01 : f32
    %346 = vector.broadcast %cst_155 : f32 to vector<8x128xf32>
    %347 = arith.cmpf ogt, %345, %346 : vector<8x128xf32>
    %348 = arith.extui %347 : vector<8x128xi1> to vector<8x128xi32>
    %349 = arith.sitofp %348 : vector<8x128xi32> to vector<8x128xf32>
    %350 = arith.truncf %349 : vector<8x128xf32> to vector<8x128xbf16>
    %c0_156 = arith.constant 0 : index
    %c0_157 = arith.constant 0 : index
    %351 = vector.load %arg19[%c0_156, %c0_157] : memref<8x128xf32, #tpu.memory_space<vmem>>, vector<8x128xf32>
    tpu.vector_store %arg19[%c0_156, %c0_157], %339 {strides = array<i32>} : memref<8x128xf32, #tpu.memory_space<vmem>>, vector<8x128xf32>,
    %c0_158 = arith.constant 0 : index
    %c0_159 = arith.constant 0 : index
    %352 = vector.load %arg18[%c0_158, %c0_159] : memref<8x128xf32, #tpu.memory_space<vmem>>, vector<8x128xf32>
    tpu.vector_store %arg18[%c0_158, %c0_159], %345 {strides = array<i32>} : memref<8x128xf32, #tpu.memory_space<vmem>>, vector<8x128xf32>,
    %c0_160 = arith.constant 0 : index
    %c0_161 = arith.constant 0 : index
    %353 = vector.load %arg20[%c0_160, %c0_161] : memref<8x128xbf16, #tpu.memory_space<vmem>>, vector<8x128xbf16>
    tpu.vector_store %arg20[%c0_160, %c0_161], %350 {strides = array<i32>} : memref<8x128xbf16, #tpu.memory_space<vmem>>, vector<8x128xbf16>,
    %354 = arith.index_cast %c4_i32 : i32 to index
    %c0_162 = arith.constant 0 : index
    %c0_163 = arith.constant 0 : index
    %355 = vector.load %arg16[%354, %c0_162, %c0_163] : memref<8x8x128xf32, #tpu.memory_space<vmem>>, vector<1x8x128xf32>
    %356 = vector.shape_cast %355 : vector<1x8x128xf32> to vector<8x128xf32>
    %357 = vector.shape_cast %345 : vector<8x128xf32> to vector<1x8x128xf32>
    tpu.vector_store %arg16[%354, %c0_162, %c0_163], %357 {strides = array<i32>} : memref<8x8x128xf32, #tpu.memory_space<vmem>>, vector<1x8x128xf32>,
    %358 = arith.index_cast %c4_i32 : i32 to index
    %c0_164 = arith.constant 0 : index
    %c0_165 = arith.constant 0 : index
    %359 = vector.load %arg17[%358, %c0_164, %c0_165] : memref<8x8x128xbf16, #tpu.memory_space<vmem>>, vector<1x8x128xbf16>
    %360 = vector.shape_cast %359 : vector<1x8x128xbf16> to vector<8x128xbf16>
    %361 = vector.shape_cast %350 : vector<8x128xbf16> to vector<1x8x128xbf16>
    tpu.vector_store %arg17[%358, %c0_164, %c0_165], %361 {strides = array<i32>} : memref<8x8x128xbf16, #tpu.memory_space<vmem>>, vector<1x8x128xbf16>,
    %c5_i32 = arith.constant 5 : i32
    %c0_166 = arith.constant 0 : index
    %c0_167 = arith.constant 0 : index
    %362 = vector.load %arg20[%c0_166, %c0_167] : memref<8x128xbf16, #tpu.memory_space<vmem>>, vector<8x128xbf16>
    %cst_168 = arith.constant dense<0.000000e+00> : vector<8x256xf32>
    %363 = tpu.matmul %362, %43, %cst_168 {dimension_numbers = #tpu.dot_dimension_numbers<[1], [0], [0], [1], [0, 0, 1, 1], [], []>} : vector<8x128xbf16>, vector<128x256xbf16>, vector<8x256xf32> -> vector<8x256xf32>
    %364 = vector.broadcast %44 : vector<1x256xf32> to vector<8x256xf32>
    %365 = arith.addf %363, %364 : vector<8x256xf32>
    %cst_169 = arith.constant dense<0.000000e+00> : vector<8xf32>
    %366 = vector.multi_reduction <add>, %365, %cst_169 [1] : vector<8x256xf32> to vector<8xf32>
    %367 = vector.shape_cast %366 : vector<8xf32> to vector<8x1xf32>
    %cst_170 = arith.constant 3.906250e-03 : f32
    %368 = vector.broadcast %cst_170 : f32 to vector<8x1xf32>
    %369 = arith.mulf %367, %368 : vector<8x1xf32>
    %370 = arith.mulf %365, %365 : vector<8x256xf32>
    %cst_171 = arith.constant dense<0.000000e+00> : vector<8xf32>
    %371 = vector.multi_reduction <add>, %370, %cst_171 [1] : vector<8x256xf32> to vector<8xf32>
    %372 = vector.shape_cast %371 : vector<8xf32> to vector<8x1xf32>
    %cst_172 = arith.constant 3.906250e-03 : f32
    %373 = vector.broadcast %cst_172 : f32 to vector<8x1xf32>
    %374 = arith.mulf %372, %373 : vector<8x1xf32>
    %375 = arith.mulf %369, %369 : vector<8x1xf32>
    %376 = arith.subf %374, %375 : vector<8x1xf32>
    %cst_173 = arith.constant 0.000000e+00 : f32
    %377 = vector.broadcast %cst_173 : f32 to vector<8x1xf32>
    %378 = arith.maximumf %376, %377 : vector<8x1xf32>
    %379 = vector.broadcast %369 : vector<8x1xf32> to vector<8x256xf32>
    %380 = arith.subf %365, %379 : vector<8x256xf32>
    %cst_174 = arith.constant 9.99999974E-6 : f32
    %381 = vector.broadcast %cst_174 : f32 to vector<8x1xf32>
    %382 = arith.addf %378, %381 : vector<8x1xf32>
    %383 = math.rsqrt %382 : vector<8x1xf32>
    %384 = vector.broadcast %383 : vector<8x1xf32> to vector<8x256xf32>
    %385 = arith.mulf %380, %384 : vector<8x256xf32>
    %386 = vector.broadcast %45 : vector<1x256xf32> to vector<8x256xf32>
    %387 = arith.mulf %385, %386 : vector<8x256xf32>
    %388 = vector.broadcast %46 : vector<1x256xf32> to vector<8x256xf32>
    %389 = arith.addf %387, %388 : vector<8x256xf32>
    %390 = vector.extract_strided_slice %389 {offsets = [0, 0], sizes = [8, 128], strides = [1, 1]} : vector<8x256xf32> to vector<8x128xf32>
    %391 = vector.extract_strided_slice %389 {offsets = [0, 128], sizes = [8, 128], strides = [1, 1]} : vector<8x256xf32> to vector<8x128xf32>
    %392 = arith.addf %390, %391 : vector<8x128xf32>
    %393 = arith.index_cast %c5_i32 : i32 to index
    %c0_175 = arith.constant 0 : index
    %c0_176 = arith.constant 0 : index
    %394 = vector.load %arg21[%393, %c0_175, %c0_176] : memref<8x8x128xf32, #tpu.memory_space<vmem>>, vector<1x8x128xf32>
    %395 = vector.shape_cast %394 : vector<1x8x128xf32> to vector<8x128xf32>
    %396 = arith.addf %395, %392 : vector<8x128xf32>
    %c0_177 = arith.constant 0 : index
    %c0_178 = arith.constant 0 : index
    %397 = vector.load %arg19[%c0_177, %c0_178] : memref<8x128xf32, #tpu.memory_space<vmem>>, vector<8x128xf32>
    %398 = vector.broadcast %41 : vector<1x128xf32> to vector<8x128xf32>
    %399 = arith.mulf %398, %397 : vector<8x128xf32>
    %400 = vector.broadcast %42 : vector<1x128xf32> to vector<8x128xf32>
    %401 = arith.mulf %400, %396 : vector<8x128xf32>
    %402 = arith.addf %399, %401 : vector<8x128xf32>
    %c0_179 = arith.constant 0 : index
    %c0_180 = arith.constant 0 : index
    %403 = vector.load %arg18[%c0_179, %c0_180] : memref<8x128xf32, #tpu.memory_space<vmem>>, vector<8x128xf32>
    %404 = vector.broadcast %39 : vector<1x128xf32> to vector<8x128xf32>
    %405 = arith.mulf %404, %403 : vector<8x128xf32>
    %406 = vector.broadcast %40 : vector<1x128xf32> to vector<8x128xf32>
    %407 = arith.mulf %406, %402 : vector<8x128xf32>
    %408 = arith.addf %405, %407 : vector<8x128xf32>
    %cst_181 = arith.constant 5.000000e-01 : f32
    %409 = vector.broadcast %cst_181 : f32 to vector<8x128xf32>
    %410 = arith.cmpf ogt, %408, %409 : vector<8x128xf32>
    %411 = arith.extui %410 : vector<8x128xi1> to vector<8x128xi32>
    %412 = arith.sitofp %411 : vector<8x128xi32> to vector<8x128xf32>
    %413 = arith.truncf %412 : vector<8x128xf32> to vector<8x128xbf16>
    %c0_182 = arith.constant 0 : index
    %c0_183 = arith.constant 0 : index
    %414 = vector.load %arg19[%c0_182, %c0_183] : memref<8x128xf32, #tpu.memory_space<vmem>>, vector<8x128xf32>
    tpu.vector_store %arg19[%c0_182, %c0_183], %402 {strides = array<i32>} : memref<8x128xf32, #tpu.memory_space<vmem>>, vector<8x128xf32>,
    %c0_184 = arith.constant 0 : index
    %c0_185 = arith.constant 0 : index
    %415 = vector.load %arg18[%c0_184, %c0_185] : memref<8x128xf32, #tpu.memory_space<vmem>>, vector<8x128xf32>
    tpu.vector_store %arg18[%c0_184, %c0_185], %408 {strides = array<i32>} : memref<8x128xf32, #tpu.memory_space<vmem>>, vector<8x128xf32>,
    %c0_186 = arith.constant 0 : index
    %c0_187 = arith.constant 0 : index
    %416 = vector.load %arg20[%c0_186, %c0_187] : memref<8x128xbf16, #tpu.memory_space<vmem>>, vector<8x128xbf16>
    tpu.vector_store %arg20[%c0_186, %c0_187], %413 {strides = array<i32>} : memref<8x128xbf16, #tpu.memory_space<vmem>>, vector<8x128xbf16>,
    %417 = arith.index_cast %c5_i32 : i32 to index
    %c0_188 = arith.constant 0 : index
    %c0_189 = arith.constant 0 : index
    %418 = vector.load %arg16[%417, %c0_188, %c0_189] : memref<8x8x128xf32, #tpu.memory_space<vmem>>, vector<1x8x128xf32>
    %419 = vector.shape_cast %418 : vector<1x8x128xf32> to vector<8x128xf32>
    %420 = vector.shape_cast %408 : vector<8x128xf32> to vector<1x8x128xf32>
    tpu.vector_store %arg16[%417, %c0_188, %c0_189], %420 {strides = array<i32>} : memref<8x8x128xf32, #tpu.memory_space<vmem>>, vector<1x8x128xf32>,
    %421 = arith.index_cast %c5_i32 : i32 to index
    %c0_190 = arith.constant 0 : index
    %c0_191 = arith.constant 0 : index
    %422 = vector.load %arg17[%421, %c0_190, %c0_191] : memref<8x8x128xbf16, #tpu.memory_space<vmem>>, vector<1x8x128xbf16>
    %423 = vector.shape_cast %422 : vector<1x8x128xbf16> to vector<8x128xbf16>
    %424 = vector.shape_cast %413 : vector<8x128xbf16> to vector<1x8x128xbf16>
    tpu.vector_store %arg17[%421, %c0_190, %c0_191], %424 {strides = array<i32>} : memref<8x8x128xbf16, #tpu.memory_space<vmem>>, vector<1x8x128xbf16>,
    %c6_i32 = arith.constant 6 : i32
    %c0_192 = arith.constant 0 : index
    %c0_193 = arith.constant 0 : index
    %425 = vector.load %arg20[%c0_192, %c0_193] : memref<8x128xbf16, #tpu.memory_space<vmem>>, vector<8x128xbf16>
    %cst_194 = arith.constant dense<0.000000e+00> : vector<8x256xf32>
    %426 = tpu.matmul %425, %43, %cst_194 {dimension_numbers = #tpu.dot_dimension_numbers<[1], [0], [0], [1], [0, 0, 1, 1], [], []>} : vector<8x128xbf16>, vector<128x256xbf16>, vector<8x256xf32> -> vector<8x256xf32>
    %427 = vector.broadcast %44 : vector<1x256xf32> to vector<8x256xf32>
    %428 = arith.addf %426, %427 : vector<8x256xf32>
    %cst_195 = arith.constant dense<0.000000e+00> : vector<8xf32>
    %429 = vector.multi_reduction <add>, %428, %cst_195 [1] : vector<8x256xf32> to vector<8xf32>
    %430 = vector.shape_cast %429 : vector<8xf32> to vector<8x1xf32>
    %cst_196 = arith.constant 3.906250e-03 : f32
    %431 = vector.broadcast %cst_196 : f32 to vector<8x1xf32>
    %432 = arith.mulf %430, %431 : vector<8x1xf32>
    %433 = arith.mulf %428, %428 : vector<8x256xf32>
    %cst_197 = arith.constant dense<0.000000e+00> : vector<8xf32>
    %434 = vector.multi_reduction <add>, %433, %cst_197 [1] : vector<8x256xf32> to vector<8xf32>
    %435 = vector.shape_cast %434 : vector<8xf32> to vector<8x1xf32>
    %cst_198 = arith.constant 3.906250e-03 : f32
    %436 = vector.broadcast %cst_198 : f32 to vector<8x1xf32>
    %437 = arith.mulf %435, %436 : vector<8x1xf32>
    %438 = arith.mulf %432, %432 : vector<8x1xf32>
    %439 = arith.subf %437, %438 : vector<8x1xf32>
    %cst_199 = arith.constant 0.000000e+00 : f32
    %440 = vector.broadcast %cst_199 : f32 to vector<8x1xf32>
    %441 = arith.maximumf %439, %440 : vector<8x1xf32>
    %442 = vector.broadcast %432 : vector<8x1xf32> to vector<8x256xf32>
    %443 = arith.subf %428, %442 : vector<8x256xf32>
    %cst_200 = arith.constant 9.99999974E-6 : f32
    %444 = vector.broadcast %cst_200 : f32 to vector<8x1xf32>
    %445 = arith.addf %441, %444 : vector<8x1xf32>
    %446 = math.rsqrt %445 : vector<8x1xf32>
    %447 = vector.broadcast %446 : vector<8x1xf32> to vector<8x256xf32>
    %448 = arith.mulf %443, %447 : vector<8x256xf32>
    %449 = vector.broadcast %45 : vector<1x256xf32> to vector<8x256xf32>
    %450 = arith.mulf %448, %449 : vector<8x256xf32>
    %451 = vector.broadcast %46 : vector<1x256xf32> to vector<8x256xf32>
    %452 = arith.addf %450, %451 : vector<8x256xf32>
    %453 = vector.extract_strided_slice %452 {offsets = [0, 0], sizes = [8, 128], strides = [1, 1]} : vector<8x256xf32> to vector<8x128xf32>
    %454 = vector.extract_strided_slice %452 {offsets = [0, 128], sizes = [8, 128], strides = [1, 1]} : vector<8x256xf32> to vector<8x128xf32>
    %455 = arith.addf %453, %454 : vector<8x128xf32>
    %456 = arith.index_cast %c6_i32 : i32 to index
    %c0_201 = arith.constant 0 : index
    %c0_202 = arith.constant 0 : index
    %457 = vector.load %arg21[%456, %c0_201, %c0_202] : memref<8x8x128xf32, #tpu.memory_space<vmem>>, vector<1x8x128xf32>
    %458 = vector.shape_cast %457 : vector<1x8x128xf32> to vector<8x128xf32>
    %459 = arith.addf %458, %455 : vector<8x128xf32>
    %c0_203 = arith.constant 0 : index
    %c0_204 = arith.constant 0 : index
    %460 = vector.load %arg19[%c0_203, %c0_204] : memref<8x128xf32, #tpu.memory_space<vmem>>, vector<8x128xf32>
    %461 = vector.broadcast %41 : vector<1x128xf32> to vector<8x128xf32>
    %462 = arith.mulf %461, %460 : vector<8x128xf32>
    %463 = vector.broadcast %42 : vector<1x128xf32> to vector<8x128xf32>
    %464 = arith.mulf %463, %459 : vector<8x128xf32>
    %465 = arith.addf %462, %464 : vector<8x128xf32>
    %c0_205 = arith.constant 0 : index
    %c0_206 = arith.constant 0 : index
    %466 = vector.load %arg18[%c0_205, %c0_206] : memref<8x128xf32, #tpu.memory_space<vmem>>, vector<8x128xf32>
    %467 = vector.broadcast %39 : vector<1x128xf32> to vector<8x128xf32>
    %468 = arith.mulf %467, %466 : vector<8x128xf32>
    %469 = vector.broadcast %40 : vector<1x128xf32> to vector<8x128xf32>
    %470 = arith.mulf %469, %465 : vector<8x128xf32>
    %471 = arith.addf %468, %470 : vector<8x128xf32>
    %cst_207 = arith.constant 5.000000e-01 : f32
    %472 = vector.broadcast %cst_207 : f32 to vector<8x128xf32>
    %473 = arith.cmpf ogt, %471, %472 : vector<8x128xf32>
    %474 = arith.extui %473 : vector<8x128xi1> to vector<8x128xi32>
    %475 = arith.sitofp %474 : vector<8x128xi32> to vector<8x128xf32>
    %476 = arith.truncf %475 : vector<8x128xf32> to vector<8x128xbf16>
    %c0_208 = arith.constant 0 : index
    %c0_209 = arith.constant 0 : index
    %477 = vector.load %arg19[%c0_208, %c0_209] : memref<8x128xf32, #tpu.memory_space<vmem>>, vector<8x128xf32>
    tpu.vector_store %arg19[%c0_208, %c0_209], %465 {strides = array<i32>} : memref<8x128xf32, #tpu.memory_space<vmem>>, vector<8x128xf32>,
    %c0_210 = arith.constant 0 : index
    %c0_211 = arith.constant 0 : index
    %478 = vector.load %arg18[%c0_210, %c0_211] : memref<8x128xf32, #tpu.memory_space<vmem>>, vector<8x128xf32>
    tpu.vector_store %arg18[%c0_210, %c0_211], %471 {strides = array<i32>} : memref<8x128xf32, #tpu.memory_space<vmem>>, vector<8x128xf32>,
    %c0_212 = arith.constant 0 : index
    %c0_213 = arith.constant 0 : index
    %479 = vector.load %arg20[%c0_212, %c0_213] : memref<8x128xbf16, #tpu.memory_space<vmem>>, vector<8x128xbf16>
    tpu.vector_store %arg20[%c0_212, %c0_213], %476 {strides = array<i32>} : memref<8x128xbf16, #tpu.memory_space<vmem>>, vector<8x128xbf16>,
    %480 = arith.index_cast %c6_i32 : i32 to index
    %c0_214 = arith.constant 0 : index
    %c0_215 = arith.constant 0 : index
    %481 = vector.load %arg16[%480, %c0_214, %c0_215] : memref<8x8x128xf32, #tpu.memory_space<vmem>>, vector<1x8x128xf32>
    %482 = vector.shape_cast %481 : vector<1x8x128xf32> to vector<8x128xf32>
    %483 = vector.shape_cast %471 : vector<8x128xf32> to vector<1x8x128xf32>
    tpu.vector_store %arg16[%480, %c0_214, %c0_215], %483 {strides = array<i32>} : memref<8x8x128xf32, #tpu.memory_space<vmem>>, vector<1x8x128xf32>,
    %484 = arith.index_cast %c6_i32 : i32 to index
    %c0_216 = arith.constant 0 : index
    %c0_217 = arith.constant 0 : index
    %485 = vector.load %arg17[%484, %c0_216, %c0_217] : memref<8x8x128xbf16, #tpu.memory_space<vmem>>, vector<1x8x128xbf16>
    %486 = vector.shape_cast %485 : vector<1x8x128xbf16> to vector<8x128xbf16>
    %487 = vector.shape_cast %476 : vector<8x128xbf16> to vector<1x8x128xbf16>
    tpu.vector_store %arg17[%484, %c0_216, %c0_217], %487 {strides = array<i32>} : memref<8x8x128xbf16, #tpu.memory_space<vmem>>, vector<1x8x128xbf16>,
    %c7_i32 = arith.constant 7 : i32
    %c0_218 = arith.constant 0 : index
    %c0_219 = arith.constant 0 : index
    %488 = vector.load %arg20[%c0_218, %c0_219] : memref<8x128xbf16, #tpu.memory_space<vmem>>, vector<8x128xbf16>
    %cst_220 = arith.constant dense<0.000000e+00> : vector<8x256xf32>
    %489 = tpu.matmul %488, %43, %cst_220 {dimension_numbers = #tpu.dot_dimension_numbers<[1], [0], [0], [1], [0, 0, 1, 1], [], []>} : vector<8x128xbf16>, vector<128x256xbf16>, vector<8x256xf32> -> vector<8x256xf32>
    %490 = vector.broadcast %44 : vector<1x256xf32> to vector<8x256xf32>
    %491 = arith.addf %489, %490 : vector<8x256xf32>
    %cst_221 = arith.constant dense<0.000000e+00> : vector<8xf32>
    %492 = vector.multi_reduction <add>, %491, %cst_221 [1] : vector<8x256xf32> to vector<8xf32>
    %493 = vector.shape_cast %492 : vector<8xf32> to vector<8x1xf32>
    %cst_222 = arith.constant 3.906250e-03 : f32
    %494 = vector.broadcast %cst_222 : f32 to vector<8x1xf32>
    %495 = arith.mulf %493, %494 : vector<8x1xf32>
    %496 = arith.mulf %491, %491 : vector<8x256xf32>
    %cst_223 = arith.constant dense<0.000000e+00> : vector<8xf32>
    %497 = vector.multi_reduction <add>, %496, %cst_223 [1] : vector<8x256xf32> to vector<8xf32>
    %498 = vector.shape_cast %497 : vector<8xf32> to vector<8x1xf32>
    %cst_224 = arith.constant 3.906250e-03 : f32
    %499 = vector.broadcast %cst_224 : f32 to vector<8x1xf32>
    %500 = arith.mulf %498, %499 : vector<8x1xf32>
    %501 = arith.mulf %495, %495 : vector<8x1xf32>
    %502 = arith.subf %500, %501 : vector<8x1xf32>
    %cst_225 = arith.constant 0.000000e+00 : f32
    %503 = vector.broadcast %cst_225 : f32 to vector<8x1xf32>
    %504 = arith.maximumf %502, %503 : vector<8x1xf32>
    %505 = vector.broadcast %495 : vector<8x1xf32> to vector<8x256xf32>
    %506 = arith.subf %491, %505 : vector<8x256xf32>
    %cst_226 = arith.constant 9.99999974E-6 : f32
    %507 = vector.broadcast %cst_226 : f32 to vector<8x1xf32>
    %508 = arith.addf %504, %507 : vector<8x1xf32>
    %509 = math.rsqrt %508 : vector<8x1xf32>
    %510 = vector.broadcast %509 : vector<8x1xf32> to vector<8x256xf32>
    %511 = arith.mulf %506, %510 : vector<8x256xf32>
    %512 = vector.broadcast %45 : vector<1x256xf32> to vector<8x256xf32>
    %513 = arith.mulf %511, %512 : vector<8x256xf32>
    %514 = vector.broadcast %46 : vector<1x256xf32> to vector<8x256xf32>
    %515 = arith.addf %513, %514 : vector<8x256xf32>
    %516 = vector.extract_strided_slice %515 {offsets = [0, 0], sizes = [8, 128], strides = [1, 1]} : vector<8x256xf32> to vector<8x128xf32>
    %517 = vector.extract_strided_slice %515 {offsets = [0, 128], sizes = [8, 128], strides = [1, 1]} : vector<8x256xf32> to vector<8x128xf32>
    %518 = arith.addf %516, %517 : vector<8x128xf32>
    %519 = arith.index_cast %c7_i32 : i32 to index
    %c0_227 = arith.constant 0 : index
    %c0_228 = arith.constant 0 : index
    %520 = vector.load %arg21[%519, %c0_227, %c0_228] : memref<8x8x128xf32, #tpu.memory_space<vmem>>, vector<1x8x128xf32>
    %521 = vector.shape_cast %520 : vector<1x8x128xf32> to vector<8x128xf32>
    %522 = arith.addf %521, %518 : vector<8x128xf32>
    %c0_229 = arith.constant 0 : index
    %c0_230 = arith.constant 0 : index
    %523 = vector.load %arg19[%c0_229, %c0_230] : memref<8x128xf32, #tpu.memory_space<vmem>>, vector<8x128xf32>
    %524 = vector.broadcast %41 : vector<1x128xf32> to vector<8x128xf32>
    %525 = arith.mulf %524, %523 : vector<8x128xf32>
    %526 = vector.broadcast %42 : vector<1x128xf32> to vector<8x128xf32>
    %527 = arith.mulf %526, %522 : vector<8x128xf32>
    %528 = arith.addf %525, %527 : vector<8x128xf32>
    %c0_231 = arith.constant 0 : index
    %c0_232 = arith.constant 0 : index
    %529 = vector.load %arg18[%c0_231, %c0_232] : memref<8x128xf32, #tpu.memory_space<vmem>>, vector<8x128xf32>
    %530 = vector.broadcast %39 : vector<1x128xf32> to vector<8x128xf32>
    %531 = arith.mulf %530, %529 : vector<8x128xf32>
    %532 = vector.broadcast %40 : vector<1x128xf32> to vector<8x128xf32>
    %533 = arith.mulf %532, %528 : vector<8x128xf32>
    %534 = arith.addf %531, %533 : vector<8x128xf32>
    %cst_233 = arith.constant 5.000000e-01 : f32
    %535 = vector.broadcast %cst_233 : f32 to vector<8x128xf32>
    %536 = arith.cmpf ogt, %534, %535 : vector<8x128xf32>
    %537 = arith.extui %536 : vector<8x128xi1> to vector<8x128xi32>
    %538 = arith.sitofp %537 : vector<8x128xi32> to vector<8x128xf32>
    %539 = arith.truncf %538 : vector<8x128xf32> to vector<8x128xbf16>
    %c0_234 = arith.constant 0 : index
    %c0_235 = arith.constant 0 : index
    %540 = vector.load %arg19[%c0_234, %c0_235] : memref<8x128xf32, #tpu.memory_space<vmem>>, vector<8x128xf32>
    tpu.vector_store %arg19[%c0_234, %c0_235], %528 {strides = array<i32>} : memref<8x128xf32, #tpu.memory_space<vmem>>, vector<8x128xf32>,
    %c0_236 = arith.constant 0 : index
    %c0_237 = arith.constant 0 : index
    %541 = vector.load %arg18[%c0_236, %c0_237] : memref<8x128xf32, #tpu.memory_space<vmem>>, vector<8x128xf32>
    tpu.vector_store %arg18[%c0_236, %c0_237], %534 {strides = array<i32>} : memref<8x128xf32, #tpu.memory_space<vmem>>, vector<8x128xf32>,
    %c0_238 = arith.constant 0 : index
    %c0_239 = arith.constant 0 : index
    %542 = vector.load %arg20[%c0_238, %c0_239] : memref<8x128xbf16, #tpu.memory_space<vmem>>, vector<8x128xbf16>
    tpu.vector_store %arg20[%c0_238, %c0_239], %539 {strides = array<i32>} : memref<8x128xbf16, #tpu.memory_space<vmem>>, vector<8x128xbf16>,
    %543 = arith.index_cast %c7_i32 : i32 to index
    %c0_240 = arith.constant 0 : index
    %c0_241 = arith.constant 0 : index
    %544 = vector.load %arg16[%543, %c0_240, %c0_241] : memref<8x8x128xf32, #tpu.memory_space<vmem>>, vector<1x8x128xf32>
    %545 = vector.shape_cast %544 : vector<1x8x128xf32> to vector<8x128xf32>
    %546 = vector.shape_cast %534 : vector<8x128xf32> to vector<1x8x128xf32>
    tpu.vector_store %arg16[%543, %c0_240, %c0_241], %546 {strides = array<i32>} : memref<8x8x128xf32, #tpu.memory_space<vmem>>, vector<1x8x128xf32>,
    %547 = arith.index_cast %c7_i32 : i32 to index
    %c0_242 = arith.constant 0 : index
    %c0_243 = arith.constant 0 : index
    %548 = vector.load %arg17[%547, %c0_242, %c0_243] : memref<8x8x128xbf16, #tpu.memory_space<vmem>>, vector<1x8x128xbf16>
    %549 = vector.shape_cast %548 : vector<1x8x128xbf16> to vector<8x128xbf16>
    %550 = vector.shape_cast %539 : vector<8x128xbf16> to vector<1x8x128xbf16>
    tpu.vector_store %arg17[%547, %c0_242, %c0_243], %550 {strides = array<i32>} : memref<8x8x128xbf16, #tpu.memory_space<vmem>>, vector<1x8x128xbf16>,
    %c8_i32 = arith.constant 8 : i32
    return
  }
  func.func @transform_0(%arg0: i32, %arg1: i32) -> (i32, i32, i32) {
    %c0_i32 = arith.constant 0 : i32
    %c0_i32_0 = arith.constant 0 : i32
    return %arg1, %arg0, %c0_i32 : i32, i32, i32
  }
  func.func @transform_1(%arg0: i32, %arg1: i32) -> (i32, i32) {
    %c0_i32 = arith.constant 0 : i32
    %c0_i32_0 = arith.constant 0 : i32
    return %arg0, %c0_i32 : i32, i32
  }
  func.func @transform_2(%arg0: i32, %arg1: i32) -> (i32, i32) {
    %c0_i32 = arith.constant 0 : i32
    %c0_i32_0 = arith.constant 0 : i32
    %c0_i32_1 = arith.constant 0 : i32
    return %c0_i32, %c0_i32_0 : i32, i32
  }
  func.func @transform_3(%arg0: i32, %arg1: i32) -> (i32, i32) {
    %c0_i32 = arith.constant 0 : i32
    %c0_i32_0 = arith.constant 0 : i32
    %c0_i32_1 = arith.constant 0 : i32
    return %c0_i32, %c0_i32_0 : i32, i32
  }
  func.func @transform_4(%arg0: i32, %arg1: i32) -> (i32, i32) {
    %c0_i32 = arith.constant 0 : i32
    %c0_i32_0 = arith.constant 0 : i32
    %c0_i32_1 = arith.constant 0 : i32
    return %c0_i32, %c0_i32_0 : i32, i32
  }
  func.func @transform_5(%arg0: i32, %arg1: i32) -> (i32, i32) {
    %c0_i32 = arith.constant 0 : i32
    %c0_i32_0 = arith.constant 0 : i32
    %c0_i32_1 = arith.constant 0 : i32
    return %c0_i32, %c0_i32_0 : i32, i32
  }
  func.func @transform_6(%arg0: i32, %arg1: i32) -> (i32, i32) {
    %c0_i32 = arith.constant 0 : i32
    %c0_i32_0 = arith.constant 0 : i32
    %c0_i32_1 = arith.constant 0 : i32
    return %c0_i32, %c0_i32_0 : i32, i32
  }
  func.func @transform_7(%arg0: i32, %arg1: i32) -> (i32, i32) {
    %c0_i32 = arith.constant 0 : i32
    %c0_i32_0 = arith.constant 0 : i32
    %c0_i32_1 = arith.constant 0 : i32
    return %c0_i32, %c0_i32_0 : i32, i32
  }
  func.func @transform_8(%arg0: i32, %arg1: i32) -> (i32, i32) {
    %c0_i32 = arith.constant 0 : i32
    %c0_i32_0 = arith.constant 0 : i32
    %c0_i32_1 = arith.constant 0 : i32
    return %c0_i32, %c0_i32_0 : i32, i32
  }
  func.func @transform_9(%arg0: i32, %arg1: i32) -> (i32, i32) {
    %c0_i32 = arith.constant 0 : i32
    %c0_i32_0 = arith.constant 0 : i32
    %c0_i32_1 = arith.constant 0 : i32
    return %c0_i32, %c0_i32_0 : i32, i32
  }
  func.func @transform_10(%arg0: i32, %arg1: i32) -> (i32, i32) {
    %c0_i32 = arith.constant 0 : i32
    %c0_i32_0 = arith.constant 0 : i32
    %c0_i32_1 = arith.constant 0 : i32
    return %c0_i32, %c0_i32_0 : i32, i32
  }
  func.func @transform_11(%arg0: i32, %arg1: i32) -> (i32, i32) {
    %c0_i32 = arith.constant 0 : i32
    %c0_i32_0 = arith.constant 0 : i32
    %c0_i32_1 = arith.constant 0 : i32
    return %c0_i32, %c0_i32_0 : i32, i32
  }
  func.func @transform_12(%arg0: i32, %arg1: i32) -> (i32, i32) {
    %c0_i32 = arith.constant 0 : i32
    %c0_i32_0 = arith.constant 0 : i32
    %c0_i32_1 = arith.constant 0 : i32
    return %c0_i32, %c0_i32_0 : i32, i32
  }
  func.func @transform_13(%arg0: i32, %arg1: i32) -> (i32, i32) {
    %c0_i32 = arith.constant 0 : i32
    %c0_i32_0 = arith.constant 0 : i32
    %c0_i32_1 = arith.constant 0 : i32
    return %c0_i32, %c0_i32_0 : i32, i32
  }
  func.func @transform_14(%arg0: i32, %arg1: i32) -> (i32, i32, i32) {
    %c0_i32 = arith.constant 0 : i32
    %c0_i32_0 = arith.constant 0 : i32
    return %arg1, %arg0, %c0_i32 : i32, i32, i32
  }
  func.func @transform_15(%arg0: i32, %arg1: i32) -> (i32, i32, i32) {
    %c0_i32 = arith.constant 0 : i32
    %c0_i32_0 = arith.constant 0 : i32
    return %arg1, %arg0, %c0_i32 : i32, i32, i32
  }
}

module attributes {stable_mosaic.version = 11 : i64} {
  func.func @spike_rnn_kernel(%arg0: i32, %arg1: i32, %arg2: memref<8x8x32xbf16, #tpu.memory_space<vmem>>, %arg3: memref<8x128xf32, #tpu.memory_space<vmem>>, %arg4: memref<32x256xbf16, #tpu.memory_space<vmem>>, %arg5: memref<1x256xf32, #tpu.memory_space<vmem>>, %arg6: memref<1x256xf32, #tpu.memory_space<vmem>>, %arg7: memref<1x256xf32, #tpu.memory_space<vmem>>, %arg8: memref<128x256xbf16, #tpu.memory_space<vmem>>, %arg9: memref<1x256xf32, #tpu.memory_space<vmem>>, %arg10: memref<1x256xf32, #tpu.memory_space<vmem>>, %arg11: memref<1x256xf32, #tpu.memory_space<vmem>>, %arg12: memref<1x128xf32, #tpu.memory_space<vmem>>, %arg13: memref<1x128xf32, #tpu.memory_space<vmem>>, %arg14: memref<1x128xf32, #tpu.memory_space<vmem>>, %arg15: memref<1x128xf32, #tpu.memory_space<vmem>>, %arg16: memref<8x8x128xf32, #tpu.memory_space<vmem>>, %arg17: memref<8x8x128xbf16, #tpu.memory_space<vmem>>, %arg18: memref<8x128xf32, #tpu.memory_space<vmem>>, %arg19: memref<8x128xf32, #tpu.memory_space<vmem>>, %arg20: memref<8x128xbf16, #tpu.memory_space<vmem>>, %arg21: memref<8x8x128xf32, #tpu.memory_space<vmem>>) attributes {dimension_semantics = [#tpu.dimension_semantics<parallel>, #tpu.dimension_semantics<arbitrary>], iteration_bounds = array<i64: 2, 4>, scalar_prefetch = 0 : i64, scratch_operands = 4 : i64, tpu.core_type = #tpu.core_type<tc>, window_params = [{transform_indices = @transform_0, window_bounds = array<i64: 8, 8, 32>}, {transform_indices = @transform_1, window_bounds = array<i64: 8, 128>}, {pipeline_mode = #tpu.pipeline_mode<synchronous>, transform_indices = @transform_2, window_bounds = array<i64: 32, 256>}, {pipeline_mode = #tpu.pipeline_mode<synchronous>, transform_indices = @transform_3, window_bounds = array<i64: 1, 256>}, {pipeline_mode = #tpu.pipeline_mode<synchronous>, transform_indices = @transform_4, window_bounds = array<i64: 1, 256>}, {pipeline_mode = #tpu.pipeline_mode<synchronous>, transform_indices = @transform_5, window_bounds = array<i64: 1, 256>}, {pipeline_mode = #tpu.pipeline_mode<synchronous>, transform_indices = @transform_6, window_bounds = array<i64: 128, 256>}, {pipeline_mode = #tpu.pipeline_mode<synchronous>, transform_indices = @transform_7, window_bounds = array<i64: 1, 256>}, {pipeline_mode = #tpu.pipeline_mode<synchronous>, transform_indices = @transform_8, window_bounds = array<i64: 1, 256>}, {pipeline_mode = #tpu.pipeline_mode<synchronous>, transform_indices = @transform_9, window_bounds = array<i64: 1, 256>}, {pipeline_mode = #tpu.pipeline_mode<synchronous>, transform_indices = @transform_10, window_bounds = array<i64: 1, 128>}, {pipeline_mode = #tpu.pipeline_mode<synchronous>, transform_indices = @transform_11, window_bounds = array<i64: 1, 128>}, {pipeline_mode = #tpu.pipeline_mode<synchronous>, transform_indices = @transform_12, window_bounds = array<i64: 1, 128>}, {pipeline_mode = #tpu.pipeline_mode<synchronous>, transform_indices = @transform_13, window_bounds = array<i64: 1, 128>}, {transform_indices = @transform_14, window_bounds = array<i64: 8, 8, 128>}, {transform_indices = @transform_15, window_bounds = array<i64: 8, 8, 128>}]} {
    %c0_i32 = arith.constant 0 : i32
    %0 = arith.cmpi eq, %arg1, %c0_i32 : i32
    %1 = arith.extui %0 : i1 to i32
    %c0_i32_0 = arith.constant 0 : i32
    %2 = arith.cmpi ne, %1, %c0_i32_0 : i32
    scf.if %2 {
      %c0_244 = arith.constant 0 : index
      %c0_245 = arith.constant 0 : index
      %551 = vector.load %arg3[%c0_244, %c0_245] : memref<8x128xf32, #tpu.memory_space<vmem>>, vector<8x128xf32>
      %c0_246 = arith.constant 0 : index
      %c0_247 = arith.constant 0 : index
      %552 = vector.load %arg18[%c0_246, %c0_247] : memref<8x128xf32, #tpu.memory_space<vmem>>, vector<8x128xf32>
      tpu.vector_store %arg18[%c0_246, %c0_247], %551 {strides = array<i32>} : memref<8x128xf32, #tpu.memory_space<vmem>>, vector<8x128xf32>,
      %cst_248 = arith.constant 0.000000e+00 : f32
      %553 = vector.broadcast %cst_248 : f32 to vector<8x128xf32>
      %c0_249 = arith.constant 0 : index
      %c0_250 = arith.constant 0 : index
      %554 = vector.load %arg19[%c0_249, %c0_250] : memref<8x128xf32, #tpu.memory_space<vmem>>, vector<8x128xf32>
      tpu.vector_store %arg19[%c0_249, %c0_250], %553 {strides = array<i32>} : memref<8x128xf32, #tpu.memory_space<vmem>>, vector<8x128xf32>,
      %cst_251 = arith.constant 0.000000e+00 : bf16
      %555 = vector.broadcast %cst_251 : bf16 to vector<8x128xbf16>
      %c0_252 = arith.constant 0 : index
      %c0_253 = arith.constant 0 : index
      %556 = vector.load %arg20[%c0_252, %c0_253] : memref<8x128xbf16, #tpu.memory_space<vmem>>, vector<8x128xbf16>
      tpu.vector_store %arg20[%c0_252, %c0_253], %555 {strides = array<i32>} : memref<8x128xbf16, #tpu.memory_space<vmem>>, vector<8x128xbf16>,
    } else {
    }
    %c0 = arith.constant 0 : index
    %c0_1 = arith.constant 0 : index
    %c0_2 = arith.constant 0 : index
    %3 = vector.load %arg2[%c0, %c0_1, %c0_2] : memref<8x8x32xbf16, #tpu.memory_space<vmem>>, vector<8x8x32xbf16>
    %4 = vector.shape_cast %3 : vector<8x8x32xbf16> to vector<64x32xbf16>
    %c0_3 = arith.constant 0 : index
    %c0_4 = arith.constant 0 : index
    %5 = vector.load %arg4[%c0_3, %c0_4] : memref<32x256xbf16, #tpu.memory_space<vmem>>, vector<32x256xbf16>
    %cst = arith.constant dense<0.000000e+00> : vector<64x256xf32>
    %6 = tpu.matmul %4, %5, %cst {dimension_numbers = #tpu.dot_dimension_numbers<[1], [0], [0], [1], [0, 0, 1, 1], [], []>} : vector<64x32xbf16>, vector<32x256xbf16>, vector<64x256xf32> -> vector<64x256xf32>
    %c0_5 = arith.constant 0 : index
    %c0_6 = arith.constant 0 : index
    %7 = vector.load %arg5[%c0_5, %c0_6] : memref<1x256xf32, #tpu.memory_space<vmem>>, vector<1x256xf32>
    %8 = vector.broadcast %7 : vector<1x256xf32> to vector<64x256xf32>
    %9 = arith.addf %6, %8 : vector<64x256xf32>
    %c0_7 = arith.constant 0 : index
    %c0_8 = arith.constant 0 : index
    %10 = vector.load %arg6[%c0_7, %c0_8] : memref<1x256xf32, #tpu.memory_space<vmem>>, vector<1x256xf32>
    %c0_9 = arith.constant 0 : index
    %c0_10 = arith.constant 0 : index
    %11 = vector.load %arg7[%c0_9, %c0_10] : memref<1x256xf32, #tpu.memory_space<vmem>>, vector<1x256xf32>
    %cst_11 = arith.constant dense<0.000000e+00> : vector<64xf32>
    %12 = vector.multi_reduction <add>, %9, %cst_11 [1] : vector<64x256xf32> to vector<64xf32>
    %13 = vector.shape_cast %12 : vector<64xf32> to vector<64x1xf32>
    %cst_12 = arith.constant 2.560000e+02 : f32
    %14 = vector.broadcast %cst_12 : f32 to vector<64x1xf32>
    %15 = arith.divf %13, %14 : vector<64x1xf32>
    %16 = vector.broadcast %15 : vector<64x1xf32> to vector<64x256xf32>
    %17 = arith.subf %9, %16 : vector<64x256xf32>
    %18 = arith.mulf %17, %17 : vector<64x256xf32>
    %cst_13 = arith.constant dense<0.000000e+00> : vector<64xf32>
    %19 = vector.multi_reduction <add>, %18, %cst_13 [1] : vector<64x256xf32> to vector<64xf32>
    %20 = vector.shape_cast %19 : vector<64xf32> to vector<64x1xf32>
    %cst_14 = arith.constant 2.560000e+02 : f32
    %21 = vector.broadcast %cst_14 : f32 to vector<64x1xf32>
    %22 = arith.divf %20, %21 : vector<64x1xf32>
    %23 = vector.broadcast %15 : vector<64x1xf32> to vector<64x256xf32>
    %24 = arith.subf %9, %23 : vector<64x256xf32>
    %cst_15 = arith.constant 9.99999974E-6 : f32
    %25 = vector.broadcast %cst_15 : f32 to vector<64x1xf32>
    %26 = arith.addf %22, %25 : vector<64x1xf32>
    %27 = math.rsqrt %26 : vector<64x1xf32>
    %28 = vector.broadcast %27 : vector<64x1xf32> to vector<64x256xf32>
    %29 = arith.mulf %24, %28 : vector<64x256xf32>
    %30 = vector.broadcast %10 : vector<1x256xf32> to vector<64x256xf32>
    %31 = arith.mulf %29, %30 : vector<64x256xf32>
    %32 = vector.broadcast %11 : vector<1x256xf32> to vector<64x256xf32>
    %33 = arith.addf %31, %32 : vector<64x256xf32>
    %34 = vector.extract_strided_slice %33 {offsets = [0, 0], sizes = [64, 128], strides = [1, 1]} : vector<64x256xf32> to vector<64x128xf32>
    %35 = vector.extract_strided_slice %33 {offsets = [0, 128], sizes = [64, 128], strides = [1, 1]} : vector<64x256xf32> to vector<64x128xf32>
    %36 = arith.addf %34, %35 : vector<64x128xf32>
    %37 = vector.shape_cast %36 : vector<64x128xf32> to vector<8x8x128xf32>
    %c0_16 = arith.constant 0 : index
    %c0_17 = arith.constant 0 : index
    %c0_18 = arith.constant 0 : index
    %38 = vector.load %arg21[%c0_16, %c0_17, %c0_18] : memref<8x8x128xf32, #tpu.memory_space<vmem>>, vector<8x8x128xf32>
    tpu.vector_store %arg21[%c0_16, %c0_17, %c0_18], %37 {strides = array<i32>} : memref<8x8x128xf32, #tpu.memory_space<vmem>>, vector<8x8x128xf32>,
    %c0_19 = arith.constant 0 : index
    %c0_20 = arith.constant 0 : index
    %39 = vector.load %arg12[%c0_19, %c0_20] : memref<1x128xf32, #tpu.memory_space<vmem>>, vector<1x128xf32>
    %c0_21 = arith.constant 0 : index
    %c0_22 = arith.constant 0 : index
    %40 = vector.load %arg13[%c0_21, %c0_22] : memref<1x128xf32, #tpu.memory_space<vmem>>, vector<1x128xf32>
    %c0_23 = arith.constant 0 : index
    %c0_24 = arith.constant 0 : index
    %41 = vector.load %arg14[%c0_23, %c0_24] : memref<1x128xf32, #tpu.memory_space<vmem>>, vector<1x128xf32>
    %c0_25 = arith.constant 0 : index
    %c0_26 = arith.constant 0 : index
    %42 = vector.load %arg15[%c0_25, %c0_26] : memref<1x128xf32, #tpu.memory_space<vmem>>, vector<1x128xf32>
    %c0_27 = arith.constant 0 : index
    %c0_28 = arith.constant 0 : index
    %43 = vector.load %arg8[%c0_27, %c0_28] : memref<128x256xbf16, #tpu.memory_space<vmem>>, vector<128x256xbf16>
    %c0_29 = arith.constant 0 : index
    %c0_30 = arith.constant 0 : index
    %44 = vector.load %arg9[%c0_29, %c0_30] : memref<1x256xf32, #tpu.memory_space<vmem>>, vector<1x256xf32>
    %c0_31 = arith.constant 0 : index
    %c0_32 = arith.constant 0 : index
    %45 = vector.load %arg10[%c0_31, %c0_32] : memref<1x256xf32, #tpu.memory_space<vmem>>, vector<1x256xf32>
    %c0_33 = arith.constant 0 : index
    %c0_34 = arith.constant 0 : index
    %46 = vector.load %arg11[%c0_33, %c0_34] : memref<1x256xf32, #tpu.memory_space<vmem>>, vector<1x256xf32>
    %c0_i32_35 = arith.constant 0 : i32
    %c0_36 = arith.constant 0 : index
    %c0_37 = arith.constant 0 : index
    %47 = vector.load %arg20[%c0_36, %c0_37] : memref<8x128xbf16, #tpu.memory_space<vmem>>, vector<8x128xbf16>
    %cst_38 = arith.constant dense<0.000000e+00> : vector<8x256xf32>
    %48 = tpu.matmul %47, %43, %cst_38 {dimension_numbers = #tpu.dot_dimension_numbers<[1], [0], [0], [1], [0, 0, 1, 1], [], []>} : vector<8x128xbf16>, vector<128x256xbf16>, vector<8x256xf32> -> vector<8x256xf32>
    %49 = vector.broadcast %44 : vector<1x256xf32> to vector<8x256xf32>
    %50 = arith.addf %48, %49 : vector<8x256xf32>
    %cst_39 = arith.constant dense<0.000000e+00> : vector<8xf32>
    %51 = vector.multi_reduction <add>, %50, %cst_39 [1] : vector<8x256xf32> to vector<8xf32>
    %52 = vector.shape_cast %51 : vector<8xf32> to vector<8x1xf32>
    %cst_40 = arith.constant 3.906250e-03 : f32
    %53 = vector.broadcast %cst_40 : f32 to vector<8x1xf32>
    %54 = arith.mulf %52, %53 : vector<8x1xf32>
    %55 = arith.mulf %50, %50 : vector<8x256xf32>
    %cst_41 = arith.constant dense<0.000000e+00> : vector<8xf32>
    %56 = vector.multi_reduction <add>, %55, %cst_41 [1] : vector<8x256xf32> to vector<8xf32>
    %57 = vector.shape_cast %56 : vector<8xf32> to vector<8x1xf32>
    %cst_42 = arith.constant 3.906250e-03 : f32
    %58 = vector.broadcast %cst_42 : f32 to vector<8x1xf32>
    %59 = arith.mulf %57, %58 : vector<8x1xf32>
    %60 = arith.mulf %54, %54 : vector<8x1xf32>
    %61 = arith.subf %59, %60 : vector<8x1xf32>
    %cst_43 = arith.constant 0.000000e+00 : f32
    %62 = vector.broadcast %cst_43 : f32 to vector<8x1xf32>
    %63 = arith.maximumf %61, %62 : vector<8x1xf32>
    %64 = vector.broadcast %54 : vector<8x1xf32> to vector<8x256xf32>
    %65 = arith.subf %50, %64 : vector<8x256xf32>
    %cst_44 = arith.constant 9.99999974E-6 : f32
    %66 = vector.broadcast %cst_44 : f32 to vector<8x1xf32>
    %67 = arith.addf %63, %66 : vector<8x1xf32>
    %68 = math.rsqrt %67 : vector<8x1xf32>
    %69 = vector.broadcast %68 : vector<8x1xf32> to vector<8x256xf32>
    %70 = arith.mulf %65, %69 : vector<8x256xf32>
    %71 = vector.broadcast %45 : vector<1x256xf32> to vector<8x256xf32>
    %72 = arith.mulf %70, %71 : vector<8x256xf32>
    %73 = vector.broadcast %46 : vector<1x256xf32> to vector<8x256xf32>
    %74 = arith.addf %72, %73 : vector<8x256xf32>
    %75 = vector.extract_strided_slice %74 {offsets = [0, 0], sizes = [8, 128], strides = [1, 1]} : vector<8x256xf32> to vector<8x128xf32>
    %76 = vector.extract_strided_slice %74 {offsets = [0, 128], sizes = [8, 128], strides = [1, 1]} : vector<8x256xf32> to vector<8x128xf32>
    %77 = arith.addf %75, %76 : vector<8x128xf32>
    %78 = arith.index_cast %c0_i32_35 : i32 to index
    %c0_45 = arith.constant 0 : index
    %c0_46 = arith.constant 0 : index
    %79 = vector.load %arg21[%78, %c0_45, %c0_46] : memref<8x8x128xf32, #tpu.memory_space<vmem>>, vector<1x8x128xf32>
    %80 = vector.shape_cast %79 : vector<1x8x128xf32> to vector<8x128xf32>
    %81 = arith.addf %80, %77 : vector<8x128xf32>
    %c0_47 = arith.constant 0 : index
    %c0_48 = arith.constant 0 : index
    %82 = vector.load %arg19[%c0_47, %c0_48] : memref<8x128xf32, #tpu.memory_space<vmem>>, vector<8x128xf32>
    %83 = vector.broadcast %41 : vector<1x128xf32> to vector<8x128xf32>
    %84 = arith.mulf %83, %82 : vector<8x128xf32>
    %85 = vector.broadcast %42 : vector<1x128xf32> to vector<8x128xf32>
    %86 = arith.mulf %85, %81 : vector<8x128xf32>
    %87 = arith.addf %84, %86 : vector<8x128xf32>
    %c0_49 = arith.constant 0 : index
    %c0_50 = arith.constant 0 : index
    %88 = vector.load %arg18[%c0_49, %c0_50] : memref<8x128xf32, #tpu.memory_space<vmem>>, vector<8x128xf32>
    %89 = vector.broadcast %39 : vector<1x128xf32> to vector<8x128xf32>
    %90 = arith.mulf %89, %88 : vector<8x128xf32>
    %91 = vector.broadcast %40 : vector<1x128xf32> to vector<8x128xf32>
    %92 = arith.mulf %91, %87 : vector<8x128xf32>
    %93 = arith.addf %90, %92 : vector<8x128xf32>
    %cst_51 = arith.constant 5.000000e-01 : f32
    %94 = vector.broadcast %cst_51 : f32 to vector<8x128xf32>
    %95 = arith.cmpf ogt, %93, %94 : vector<8x128xf32>
    %96 = arith.extui %95 : vector<8x128xi1> to vector<8x128xi32>
    %97 = arith.sitofp %96 : vector<8x128xi32> to vector<8x128xf32>
    %98 = arith.truncf %97 : vector<8x128xf32> to vector<8x128xbf16>
    %c0_52 = arith.constant 0 : index
    %c0_53 = arith.constant 0 : index
    %99 = vector.load %arg19[%c0_52, %c0_53] : memref<8x128xf32, #tpu.memory_space<vmem>>, vector<8x128xf32>
    tpu.vector_store %arg19[%c0_52, %c0_53], %87 {strides = array<i32>} : memref<8x128xf32, #tpu.memory_space<vmem>>, vector<8x128xf32>,
    %c0_54 = arith.constant 0 : index
    %c0_55 = arith.constant 0 : index
    %100 = vector.load %arg18[%c0_54, %c0_55] : memref<8x128xf32, #tpu.memory_space<vmem>>, vector<8x128xf32>
    tpu.vector_store %arg18[%c0_54, %c0_55], %93 {strides = array<i32>} : memref<8x128xf32, #tpu.memory_space<vmem>>, vector<8x128xf32>,
    %c0_56 = arith.constant 0 : index
    %c0_57 = arith.constant 0 : index
    %101 = vector.load %arg20[%c0_56, %c0_57] : memref<8x128xbf16, #tpu.memory_space<vmem>>, vector<8x128xbf16>
    tpu.vector_store %arg20[%c0_56, %c0_57], %98 {strides = array<i32>} : memref<8x128xbf16, #tpu.memory_space<vmem>>, vector<8x128xbf16>,
    %102 = arith.index_cast %c0_i32_35 : i32 to index
    %c0_58 = arith.constant 0 : index
    %c0_59 = arith.constant 0 : index
    %103 = vector.load %arg16[%102, %c0_58, %c0_59] : memref<8x8x128xf32, #tpu.memory_space<vmem>>, vector<1x8x128xf32>
    %104 = vector.shape_cast %103 : vector<1x8x128xf32> to vector<8x128xf32>
    %105 = vector.shape_cast %93 : vector<8x128xf32> to vector<1x8x128xf32>
    tpu.vector_store %arg16[%102, %c0_58, %c0_59], %105 {strides = array<i32>} : memref<8x8x128xf32, #tpu.memory_space<vmem>>, vector<1x8x128xf32>,
    %106 = arith.index_cast %c0_i32_35 : i32 to index
    %c0_60 = arith.constant 0 : index
    %c0_61 = arith.constant 0 : index
    %107 = vector.load %arg17[%106, %c0_60, %c0_61] : memref<8x8x128xbf16, #tpu.memory_space<vmem>>, vector<1x8x128xbf16>
    %108 = vector.shape_cast %107 : vector<1x8x128xbf16> to vector<8x128xbf16>
    %109 = vector.shape_cast %98 : vector<8x128xbf16> to vector<1x8x128xbf16>
    tpu.vector_store %arg17[%106, %c0_60, %c0_61], %109 {strides = array<i32>} : memref<8x8x128xbf16, #tpu.memory_space<vmem>>, vector<1x8x128xbf16>,
    %c1_i32 = arith.constant 1 : i32
    %c0_62 = arith.constant 0 : index
    %c0_63 = arith.constant 0 : index
    %110 = vector.load %arg20[%c0_62, %c0_63] : memref<8x128xbf16, #tpu.memory_space<vmem>>, vector<8x128xbf16>
    %cst_64 = arith.constant dense<0.000000e+00> : vector<8x256xf32>
    %111 = tpu.matmul %110, %43, %cst_64 {dimension_numbers = #tpu.dot_dimension_numbers<[1], [0], [0], [1], [0, 0, 1, 1], [], []>} : vector<8x128xbf16>, vector<128x256xbf16>, vector<8x256xf32> -> vector<8x256xf32>
    %112 = vector.broadcast %44 : vector<1x256xf32> to vector<8x256xf32>
    %113 = arith.addf %111, %112 : vector<8x256xf32>
    %cst_65 = arith.constant dense<0.000000e+00> : vector<8xf32>
    %114 = vector.multi_reduction <add>, %113, %cst_65 [1] : vector<8x256xf32> to vector<8xf32>
    %115 = vector.shape_cast %114 : vector<8xf32> to vector<8x1xf32>
    %cst_66 = arith.constant 3.906250e-03 : f32
    %116 = vector.broadcast %cst_66 : f32 to vector<8x1xf32>
    %117 = arith.mulf %115, %116 : vector<8x1xf32>
    %118 = arith.mulf %113, %113 : vector<8x256xf32>
    %cst_67 = arith.constant dense<0.000000e+00> : vector<8xf32>
    %119 = vector.multi_reduction <add>, %118, %cst_67 [1] : vector<8x256xf32> to vector<8xf32>
    %120 = vector.shape_cast %119 : vector<8xf32> to vector<8x1xf32>
    %cst_68 = arith.constant 3.906250e-03 : f32
    %121 = vector.broadcast %cst_68 : f32 to vector<8x1xf32>
    %122 = arith.mulf %120, %121 : vector<8x1xf32>
    %123 = arith.mulf %117, %117 : vector<8x1xf32>
    %124 = arith.subf %122, %123 : vector<8x1xf32>
    %cst_69 = arith.constant 0.000000e+00 : f32
    %125 = vector.broadcast %cst_69 : f32 to vector<8x1xf32>
    %126 = arith.maximumf %124, %125 : vector<8x1xf32>
    %127 = vector.broadcast %117 : vector<8x1xf32> to vector<8x256xf32>
    %128 = arith.subf %113, %127 : vector<8x256xf32>
    %cst_70 = arith.constant 9.99999974E-6 : f32
    %129 = vector.broadcast %cst_70 : f32 to vector<8x1xf32>
    %130 = arith.addf %126, %129 : vector<8x1xf32>
    %131 = math.rsqrt %130 : vector<8x1xf32>
    %132 = vector.broadcast %131 : vector<8x1xf32> to vector<8x256xf32>
    %133 = arith.mulf %128, %132 : vector<8x256xf32>
    %134 = vector.broadcast %45 : vector<1x256xf32> to vector<8x256xf32>
    %135 = arith.mulf %133, %134 : vector<8x256xf32>
    %136 = vector.broadcast %46 : vector<1x256xf32> to vector<8x256xf32>
    %137 = arith.addf %135, %136 : vector<8x256xf32>
    %138 = vector.extract_strided_slice %137 {offsets = [0, 0], sizes = [8, 128], strides = [1, 1]} : vector<8x256xf32> to vector<8x128xf32>
    %139 = vector.extract_strided_slice %137 {offsets = [0, 128], sizes = [8, 128], strides = [1, 1]} : vector<8x256xf32> to vector<8x128xf32>
    %140 = arith.addf %138, %139 : vector<8x128xf32>
    %141 = arith.index_cast %c1_i32 : i32 to index
    %c0_71 = arith.constant 0 : index
    %c0_72 = arith.constant 0 : index
    %142 = vector.load %arg21[%141, %c0_71, %c0_72] : memref<8x8x128xf32, #tpu.memory_space<vmem>>, vector<1x8x128xf32>
    %143 = vector.shape_cast %142 : vector<1x8x128xf32> to vector<8x128xf32>
    %144 = arith.addf %143, %140 : vector<8x128xf32>
    %c0_73 = arith.constant 0 : index
    %c0_74 = arith.constant 0 : index
    %145 = vector.load %arg19[%c0_73, %c0_74] : memref<8x128xf32, #tpu.memory_space<vmem>>, vector<8x128xf32>
    %146 = vector.broadcast %41 : vector<1x128xf32> to vector<8x128xf32>
    %147 = arith.mulf %146, %145 : vector<8x128xf32>
    %148 = vector.broadcast %42 : vector<1x128xf32> to vector<8x128xf32>
    %149 = arith.mulf %148, %144 : vector<8x128xf32>
    %150 = arith.addf %147, %149 : vector<8x128xf32>
    %c0_75 = arith.constant 0 : index
    %c0_76 = arith.constant 0 : index
    %151 = vector.load %arg18[%c0_75, %c0_76] : memref<8x128xf32, #tpu.memory_space<vmem>>, vector<8x128xf32>
    %152 = vector.broadcast %39 : vector<1x128xf32> to vector<8x128xf32>
    %153 = arith.mulf %152, %151 : vector<8x128xf32>
    %154 = vector.broadcast %40 : vector<1x128xf32> to vector<8x128xf32>
    %155 = arith.mulf %154, %150 : vector<8x128xf32>
    %156 = arith.addf %153, %155 : vector<8x128xf32>
    %cst_77 = arith.constant 5.000000e-01 : f32
    %157 = vector.broadcast %cst_77 : f32 to vector<8x128xf32>
    %158 = arith.cmpf ogt, %156, %157 : vector<8x128xf32>
    %159 = arith.extui %158 : vector<8x128xi1> to vector<8x128xi32>
    %160 = arith.sitofp %159 : vector<8x128xi32> to vector<8x128xf32>
    %161 = arith.truncf %160 : vector<8x128xf32> to vector<8x128xbf16>
    %c0_78 = arith.constant 0 : index
    %c0_79 = arith.constant 0 : index
    %162 = vector.load %arg19[%c0_78, %c0_79] : memref<8x128xf32, #tpu.memory_space<vmem>>, vector<8x128xf32>
    tpu.vector_store %arg19[%c0_78, %c0_79], %150 {strides = array<i32>} : memref<8x128xf32, #tpu.memory_space<vmem>>, vector<8x128xf32>,
    %c0_80 = arith.constant 0 : index
    %c0_81 = arith.constant 0 : index
    %163 = vector.load %arg18[%c0_80, %c0_81] : memref<8x128xf32, #tpu.memory_space<vmem>>, vector<8x128xf32>
    tpu.vector_store %arg18[%c0_80, %c0_81], %156 {strides = array<i32>} : memref<8x128xf32, #tpu.memory_space<vmem>>, vector<8x128xf32>,
    %c0_82 = arith.constant 0 : index
    %c0_83 = arith.constant 0 : index
    %164 = vector.load %arg20[%c0_82, %c0_83] : memref<8x128xbf16, #tpu.memory_space<vmem>>, vector<8x128xbf16>
    tpu.vector_store %arg20[%c0_82, %c0_83], %161 {strides = array<i32>} : memref<8x128xbf16, #tpu.memory_space<vmem>>, vector<8x128xbf16>,
    %165 = arith.index_cast %c1_i32 : i32 to index
    %c0_84 = arith.constant 0 : index
    %c0_85 = arith.constant 0 : index
    %166 = vector.load %arg16[%165, %c0_84, %c0_85] : memref<8x8x128xf32, #tpu.memory_space<vmem>>, vector<1x8x128xf32>
    %167 = vector.shape_cast %166 : vector<1x8x128xf32> to vector<8x128xf32>
    %168 = vector.shape_cast %156 : vector<8x128xf32> to vector<1x8x128xf32>
    tpu.vector_store %arg16[%165, %c0_84, %c0_85], %168 {strides = array<i32>} : memref<8x8x128xf32, #tpu.memory_space<vmem>>, vector<1x8x128xf32>,
    %169 = arith.index_cast %c1_i32 : i32 to index
    %c0_86 = arith.constant 0 : index
    %c0_87 = arith.constant 0 : index
    %170 = vector.load %arg17[%169, %c0_86, %c0_87] : memref<8x8x128xbf16, #tpu.memory_space<vmem>>, vector<1x8x128xbf16>
    %171 = vector.shape_cast %170 : vector<1x8x128xbf16> to vector<8x128xbf16>
    %172 = vector.shape_cast %161 : vector<8x128xbf16> to vector<1x8x128xbf16>
    tpu.vector_store %arg17[%169, %c0_86, %c0_87], %172 {strides = array<i32>} : memref<8x8x128xbf16, #tpu.memory_space<vmem>>, vector<1x8x128xbf16>,
    %c2_i32 = arith.constant 2 : i32
    %c0_88 = arith.constant 0 : index
    %c0_89 = arith.constant 0 : index
    %173 = vector.load %arg20[%c0_88, %c0_89] : memref<8x128xbf16, #tpu.memory_space<vmem>>, vector<8x128xbf16>
    %cst_90 = arith.constant dense<0.000000e+00> : vector<8x256xf32>
    %174 = tpu.matmul %173, %43, %cst_90 {dimension_numbers = #tpu.dot_dimension_numbers<[1], [0], [0], [1], [0, 0, 1, 1], [], []>} : vector<8x128xbf16>, vector<128x256xbf16>, vector<8x256xf32> -> vector<8x256xf32>
    %175 = vector.broadcast %44 : vector<1x256xf32> to vector<8x256xf32>
    %176 = arith.addf %174, %175 : vector<8x256xf32>
    %cst_91 = arith.constant dense<0.000000e+00> : vector<8xf32>
    %177 = vector.multi_reduction <add>, %176, %cst_91 [1] : vector<8x256xf32> to vector<8xf32>
    %178 = vector.shape_cast %177 : vector<8xf32> to vector<8x1xf32>
    %cst_92 = arith.constant 3.906250e-03 : f32
    %179 = vector.broadcast %cst_92 : f32 to vector<8x1xf32>
    %180 = arith.mulf %178, %179 : vector<8x1xf32>
    %181 = arith.mulf %176, %176 : vector<8x256xf32>
    %cst_93 = arith.constant dense<0.000000e+00> : vector<8xf32>
    %182 = vector.multi_reduction <add>, %181, %cst_93 [1] : vector<8x256xf32> to vector<8xf32>
    %183 = vector.shape_cast %182 : vector<8xf32> to vector<8x1xf32>
    %cst_94 = arith.constant 3.906250e-03 : f32
    %184 = vector.broadcast %cst_94 : f32 to vector<8x1xf32>
    %185 = arith.mulf %183, %184 : vector<8x1xf32>
    %186 = arith.mulf %180, %180 : vector<8x1xf32>
    %187 = arith.subf %185, %186 : vector<8x1xf32>
    %cst_95 = arith.constant 0.000000e+00 : f32
    %188 = vector.broadcast %cst_95 : f32 to vector<8x1xf32>
    %189 = arith.maximumf %187, %188 : vector<8x1xf32>
    %190 = vector.broadcast %180 : vector<8x1xf32> to vector<8x256xf32>
    %191 = arith.subf %176, %190 : vector<8x256xf32>
    %cst_96 = arith.constant 9.99999974E-6 : f32
    %192 = vector.broadcast %cst_96 : f32 to vector<8x1xf32>
    %193 = arith.addf %189, %192 : vector<8x1xf32>
    %194 = math.rsqrt %193 : vector<8x1xf32>
    %195 = vector.broadcast %194 : vector<8x1xf32> to vector<8x256xf32>
    %196 = arith.mulf %191, %195 : vector<8x256xf32>
    %197 = vector.broadcast %45 : vector<1x256xf32> to vector<8x256xf32>
    %198 = arith.mulf %196, %197 : vector<8x256xf32>
    %199 = vector.broadcast %46 : vector<1x256xf32> to vector<8x256xf32>
    %200 = arith.addf %198, %199 : vector<8x256xf32>
    %201 = vector.extract_strided_slice %200 {offsets = [0, 0], sizes = [8, 128], strides = [1, 1]} : vector<8x256xf32> to vector<8x128xf32>
    %202 = vector.extract_strided_slice %200 {offsets = [0, 128], sizes = [8, 128], strides = [1, 1]} : vector<8x256xf32> to vector<8x128xf32>
    %203 = arith.addf %201, %202 : vector<8x128xf32>
    %204 = arith.index_cast %c2_i32 : i32 to index
    %c0_97 = arith.constant 0 : index
    %c0_98 = arith.constant 0 : index
    %205 = vector.load %arg21[%204, %c0_97, %c0_98] : memref<8x8x128xf32, #tpu.memory_space<vmem>>, vector<1x8x128xf32>
    %206 = vector.shape_cast %205 : vector<1x8x128xf32> to vector<8x128xf32>
    %207 = arith.addf %206, %203 : vector<8x128xf32>
    %c0_99 = arith.constant 0 : index
    %c0_100 = arith.constant 0 : index
    %208 = vector.load %arg19[%c0_99, %c0_100] : memref<8x128xf32, #tpu.memory_space<vmem>>, vector<8x128xf32>
    %209 = vector.broadcast %41 : vector<1x128xf32> to vector<8x128xf32>
    %210 = arith.mulf %209, %208 : vector<8x128xf32>
    %211 = vector.broadcast %42 : vector<1x128xf32> to vector<8x128xf32>
    %212 = arith.mulf %211, %207 : vector<8x128xf32>
    %213 = arith.addf %210, %212 : vector<8x128xf32>
    %c0_101 = arith.constant 0 : index
    %c0_102 = arith.constant 0 : index
    %214 = vector.load %arg18[%c0_101, %c0_102] : memref<8x128xf32, #tpu.memory_space<vmem>>, vector<8x128xf32>
    %215 = vector.broadcast %39 : vector<1x128xf32> to vector<8x128xf32>
    %216 = arith.mulf %215, %214 : vector<8x128xf32>
    %217 = vector.broadcast %40 : vector<1x128xf32> to vector<8x128xf32>
    %218 = arith.mulf %217, %213 : vector<8x128xf32>
    %219 = arith.addf %216, %218 : vector<8x128xf32>
    %cst_103 = arith.constant 5.000000e-01 : f32
    %220 = vector.broadcast %cst_103 : f32 to vector<8x128xf32>
    %221 = arith.cmpf ogt, %219, %220 : vector<8x128xf32>
    %222 = arith.extui %221 : vector<8x128xi1> to vector<8x128xi32>
    %223 = arith.sitofp %222 : vector<8x128xi32> to vector<8x128xf32>
    %224 = arith.truncf %223 : vector<8x128xf32> to vector<8x128xbf16>
    %c0_104 = arith.constant 0 : index
    %c0_105 = arith.constant 0 : index
    %225 = vector.load %arg19[%c0_104, %c0_105] : memref<8x128xf32, #tpu.memory_space<vmem>>, vector<8x128xf32>
    tpu.vector_store %arg19[%c0_104, %c0_105], %213 {strides = array<i32>} : memref<8x128xf32, #tpu.memory_space<vmem>>, vector<8x128xf32>,
    %c0_106 = arith.constant 0 : index
    %c0_107 = arith.constant 0 : index
    %226 = vector.load %arg18[%c0_106, %c0_107] : memref<8x128xf32, #tpu.memory_space<vmem>>, vector<8x128xf32>
    tpu.vector_store %arg18[%c0_106, %c0_107], %219 {strides = array<i32>} : memref<8x128xf32, #tpu.memory_space<vmem>>, vector<8x128xf32>,
    %c0_108 = arith.constant 0 : index
    %c0_109 = arith.constant 0 : index
    %227 = vector.load %arg20[%c0_108, %c0_109] : memref<8x128xbf16, #tpu.memory_space<vmem>>, vector<8x128xbf16>
    tpu.vector_store %arg20[%c0_108, %c0_109], %224 {strides = array<i32>} : memref<8x128xbf16, #tpu.memory_space<vmem>>, vector<8x128xbf16>,
    %228 = arith.index_cast %c2_i32 : i32 to index
    %c0_110 = arith.constant 0 : index
    %c0_111 = arith.constant 0 : index
    %229 = vector.load %arg16[%228, %c0_110, %c0_111] : memref<8x8x128xf32, #tpu.memory_space<vmem>>, vector<1x8x128xf32>
    %230 = vector.shape_cast %229 : vector<1x8x128xf32> to vector<8x128xf32>
    %231 = vector.shape_cast %219 : vector<8x128xf32> to vector<1x8x128xf32>
    tpu.vector_store %arg16[%228, %c0_110, %c0_111], %231 {strides = array<i32>} : memref<8x8x128xf32, #tpu.memory_space<vmem>>, vector<1x8x128xf32>,
    %232 = arith.index_cast %c2_i32 : i32 to index
    %c0_112 = arith.constant 0 : index
    %c0_113 = arith.constant 0 : index
    %233 = vector.load %arg17[%232, %c0_112, %c0_113] : memref<8x8x128xbf16, #tpu.memory_space<vmem>>, vector<1x8x128xbf16>
    %234 = vector.shape_cast %233 : vector<1x8x128xbf16> to vector<8x128xbf16>
    %235 = vector.shape_cast %224 : vector<8x128xbf16> to vector<1x8x128xbf16>
    tpu.vector_store %arg17[%232, %c0_112, %c0_113], %235 {strides = array<i32>} : memref<8x8x128xbf16, #tpu.memory_space<vmem>>, vector<1x8x128xbf16>,
    %c3_i32 = arith.constant 3 : i32
    %c0_114 = arith.constant 0 : index
    %c0_115 = arith.constant 0 : index
    %236 = vector.load %arg20[%c0_114, %c0_115] : memref<8x128xbf16, #tpu.memory_space<vmem>>, vector<8x128xbf16>
    %cst_116 = arith.constant dense<0.000000e+00> : vector<8x256xf32>
    %237 = tpu.matmul %236, %43, %cst_116 {dimension_numbers = #tpu.dot_dimension_numbers<[1], [0], [0], [1], [0, 0, 1, 1], [], []>} : vector<8x128xbf16>, vector<128x256xbf16>, vector<8x256xf32> -> vector<8x256xf32>
    %238 = vector.broadcast %44 : vector<1x256xf32> to vector<8x256xf32>
    %239 = arith.addf %237, %238 : vector<8x256xf32>
    %cst_117 = arith.constant dense<0.000000e+00> : vector<8xf32>
    %240 = vector.multi_reduction <add>, %239, %cst_117 [1] : vector<8x256xf32> to vector<8xf32>
    %241 = vector.shape_cast %240 : vector<8xf32> to vector<8x1xf32>
    %cst_118 = arith.constant 3.906250e-03 : f32
    %242 = vector.broadcast %cst_118 : f32 to vector<8x1xf32>
    %243 = arith.mulf %241, %242 : vector<8x1xf32>
    %244 = arith.mulf %239, %239 : vector<8x256xf32>
    %cst_119 = arith.constant dense<0.000000e+00> : vector<8xf32>
    %245 = vector.multi_reduction <add>, %244, %cst_119 [1] : vector<8x256xf32> to vector<8xf32>
    %246 = vector.shape_cast %245 : vector<8xf32> to vector<8x1xf32>
    %cst_120 = arith.constant 3.906250e-03 : f32
    %247 = vector.broadcast %cst_120 : f32 to vector<8x1xf32>
    %248 = arith.mulf %246, %247 : vector<8x1xf32>
    %249 = arith.mulf %243, %243 : vector<8x1xf32>
    %250 = arith.subf %248, %249 : vector<8x1xf32>
    %cst_121 = arith.constant 0.000000e+00 : f32
    %251 = vector.broadcast %cst_121 : f32 to vector<8x1xf32>
    %252 = arith.maximumf %250, %251 : vector<8x1xf32>
    %253 = vector.broadcast %243 : vector<8x1xf32> to vector<8x256xf32>
    %254 = arith.subf %239, %253 : vector<8x256xf32>
    %cst_122 = arith.constant 9.99999974E-6 : f32
    %255 = vector.broadcast %cst_122 : f32 to vector<8x1xf32>
    %256 = arith.addf %252, %255 : vector<8x1xf32>
    %257 = math.rsqrt %256 : vector<8x1xf32>
    %258 = vector.broadcast %257 : vector<8x1xf32> to vector<8x256xf32>
    %259 = arith.mulf %254, %258 : vector<8x256xf32>
    %260 = vector.broadcast %45 : vector<1x256xf32> to vector<8x256xf32>
    %261 = arith.mulf %259, %260 : vector<8x256xf32>
    %262 = vector.broadcast %46 : vector<1x256xf32> to vector<8x256xf32>
    %263 = arith.addf %261, %262 : vector<8x256xf32>
    %264 = vector.extract_strided_slice %263 {offsets = [0, 0], sizes = [8, 128], strides = [1, 1]} : vector<8x256xf32> to vector<8x128xf32>
    %265 = vector.extract_strided_slice %263 {offsets = [0, 128], sizes = [8, 128], strides = [1, 1]} : vector<8x256xf32> to vector<8x128xf32>
    %266 = arith.addf %264, %265 : vector<8x128xf32>
    %267 = arith.index_cast %c3_i32 : i32 to index
    %c0_123 = arith.constant 0 : index
    %c0_124 = arith.constant 0 : index
    %268 = vector.load %arg21[%267, %c0_123, %c0_124] : memref<8x8x128xf32, #tpu.memory_space<vmem>>, vector<1x8x128xf32>
    %269 = vector.shape_cast %268 : vector<1x8x128xf32> to vector<8x128xf32>
    %270 = arith.addf %269, %266 : vector<8x128xf32>
    %c0_125 = arith.constant 0 : index
    %c0_126 = arith.constant 0 : index
    %271 = vector.load %arg19[%c0_125, %c0_126] : memref<8x128xf32, #tpu.memory_space<vmem>>, vector<8x128xf32>
    %272 = vector.broadcast %41 : vector<1x128xf32> to vector<8x128xf32>
    %273 = arith.mulf %272, %271 : vector<8x128xf32>
    %274 = vector.broadcast %42 : vector<1x128xf32> to vector<8x128xf32>
    %275 = arith.mulf %274, %270 : vector<8x128xf32>
    %276 = arith.addf %273, %275 : vector<8x128xf32>
    %c0_127 = arith.constant 0 : index
    %c0_128 = arith.constant 0 : index
    %277 = vector.load %arg18[%c0_127, %c0_128] : memref<8x128xf32, #tpu.memory_space<vmem>>, vector<8x128xf32>
    %278 = vector.broadcast %39 : vector<1x128xf32> to vector<8x128xf32>
    %279 = arith.mulf %278, %277 : vector<8x128xf32>
    %280 = vector.broadcast %40 : vector<1x128xf32> to vector<8x128xf32>
    %281 = arith.mulf %280, %276 : vector<8x128xf32>
    %282 = arith.addf %279, %281 : vector<8x128xf32>
    %cst_129 = arith.constant 5.000000e-01 : f32
    %283 = vector.broadcast %cst_129 : f32 to vector<8x128xf32>
    %284 = arith.cmpf ogt, %282, %283 : vector<8x128xf32>
    %285 = arith.extui %284 : vector<8x128xi1> to vector<8x128xi32>
    %286 = arith.sitofp %285 : vector<8x128xi32> to vector<8x128xf32>
    %287 = arith.truncf %286 : vector<8x128xf32> to vector<8x128xbf16>
    %c0_130 = arith.constant 0 : index
    %c0_131 = arith.constant 0 : index
    %288 = vector.load %arg19[%c0_130, %c0_131] : memref<8x128xf32, #tpu.memory_space<vmem>>, vector<8x128xf32>
    tpu.vector_store %arg19[%c0_130, %c0_131], %276 {strides = array<i32>} : memref<8x128xf32, #tpu.memory_space<vmem>>, vector<8x128xf32>,
    %c0_132 = arith.constant 0 : index
    %c0_133 = arith.constant 0 : index
    %289 = vector.load %arg18[%c0_132, %c0_133] : memref<8x128xf32, #tpu.memory_space<vmem>>, vector<8x128xf32>
    tpu.vector_store %arg18[%c0_132, %c0_133], %282 {strides = array<i32>} : memref<8x128xf32, #tpu.memory_space<vmem>>, vector<8x128xf32>,
    %c0_134 = arith.constant 0 : index
    %c0_135 = arith.constant 0 : index
    %290 = vector.load %arg20[%c0_134, %c0_135] : memref<8x128xbf16, #tpu.memory_space<vmem>>, vector<8x128xbf16>
    tpu.vector_store %arg20[%c0_134, %c0_135], %287 {strides = array<i32>} : memref<8x128xbf16, #tpu.memory_space<vmem>>, vector<8x128xbf16>,
    %291 = arith.index_cast %c3_i32 : i32 to index
    %c0_136 = arith.constant 0 : index
    %c0_137 = arith.constant 0 : index
    %292 = vector.load %arg16[%291, %c0_136, %c0_137] : memref<8x8x128xf32, #tpu.memory_space<vmem>>, vector<1x8x128xf32>
    %293 = vector.shape_cast %292 : vector<1x8x128xf32> to vector<8x128xf32>
    %294 = vector.shape_cast %282 : vector<8x128xf32> to vector<1x8x128xf32>
    tpu.vector_store %arg16[%291, %c0_136, %c0_137], %294 {strides = array<i32>} : memref<8x8x128xf32, #tpu.memory_space<vmem>>, vector<1x8x128xf32>,
    %295 = arith.index_cast %c3_i32 : i32 to index
    %c0_138 = arith.constant 0 : index
    %c0_139 = arith.constant 0 : index
    %296 = vector.load %arg17[%295, %c0_138, %c0_139] : memref<8x8x128xbf16, #tpu.memory_space<vmem>>, vector<1x8x128xbf16>
    %297 = vector.shape_cast %296 : vector<1x8x128xbf16> to vector<8x128xbf16>
    %298 = vector.shape_cast %287 : vector<8x128xbf16> to vector<1x8x128xbf16>
    tpu.vector_store %arg17[%295, %c0_138, %c0_139], %298 {strides = array<i32>} : memref<8x8x128xbf16, #tpu.memory_space<vmem>>, vector<1x8x128xbf16>,
    %c4_i32 = arith.constant 4 : i32
    %c0_140 = arith.constant 0 : index
    %c0_141 = arith.constant 0 : index
    %299 = vector.load %arg20[%c0_140, %c0_141] : memref<8x128xbf16, #tpu.memory_space<vmem>>, vector<8x128xbf16>
    %cst_142 = arith.constant dense<0.000000e+00> : vector<8x256xf32>
    %300 = tpu.matmul %299, %43, %cst_142 {dimension_numbers = #tpu.dot_dimension_numbers<[1], [0], [0], [1], [0, 0, 1, 1], [], []>} : vector<8x128xbf16>, vector<128x256xbf16>, vector<8x256xf32> -> vector<8x256xf32>
    %301 = vector.broadcast %44 : vector<1x256xf32> to vector<8x256xf32>
    %302 = arith.addf %300, %301 : vector<8x256xf32>
    %cst_143 = arith.constant dense<0.000000e+00> : vector<8xf32>
    %303 = vector.multi_reduction <add>, %302, %cst_143 [1] : vector<8x256xf32> to vector<8xf32>
    %304 = vector.shape_cast %303 : vector<8xf32> to vector<8x1xf32>
    %cst_144 = arith.constant 3.906250e-03 : f32
    %305 = vector.broadcast %cst_144 : f32 to vector<8x1xf32>
    %306 = arith.mulf %304, %305 : vector<8x1xf32>
    %307 = arith.mulf %302, %302 : vector<8x256xf32>
    %cst_145 = arith.constant dense<0.000000e+00> : vector<8xf32>
    %308 = vector.multi_reduction <add>, %307, %cst_145 [1] : vector<8x256xf32> to vector<8xf32>
    %309 = vector.shape_cast %308 : vector<8xf32> to vector<8x1xf32>
    %cst_146 = arith.constant 3.906250e-03 : f32
    %310 = vector.broadcast %cst_146 : f32 to vector<8x1xf32>
    %311 = arith.mulf %309, %310 : vector<8x1xf32>
    %312 = arith.mulf %306, %306 : vector<8x1xf32>
    %313 = arith.subf %311, %312 : vector<8x1xf32>
    %cst_147 = arith.constant 0.000000e+00 : f32
    %314 = vector.broadcast %cst_147 : f32 to vector<8x1xf32>
    %315 = arith.maximumf %313, %314 : vector<8x1xf32>
    %316 = vector.broadcast %306 : vector<8x1xf32> to vector<8x256xf32>
    %317 = arith.subf %302, %316 : vector<8x256xf32>
    %cst_148 = arith.constant 9.99999974E-6 : f32
    %318 = vector.broadcast %cst_148 : f32 to vector<8x1xf32>
    %319 = arith.addf %315, %318 : vector<8x1xf32>
    %320 = math.rsqrt %319 : vector<8x1xf32>
    %321 = vector.broadcast %320 : vector<8x1xf32> to vector<8x256xf32>
    %322 = arith.mulf %317, %321 : vector<8x256xf32>
    %323 = vector.broadcast %45 : vector<1x256xf32> to vector<8x256xf32>
    %324 = arith.mulf %322, %323 : vector<8x256xf32>
    %325 = vector.broadcast %46 : vector<1x256xf32> to vector<8x256xf32>
    %326 = arith.addf %324, %325 : vector<8x256xf32>
    %327 = vector.extract_strided_slice %326 {offsets = [0, 0], sizes = [8, 128], strides = [1, 1]} : vector<8x256xf32> to vector<8x128xf32>
    %328 = vector.extract_strided_slice %326 {offsets = [0, 128], sizes = [8, 128], strides = [1, 1]} : vector<8x256xf32> to vector<8x128xf32>
    %329 = arith.addf %327, %328 : vector<8x128xf32>
    %330 = arith.index_cast %c4_i32 : i32 to index
    %c0_149 = arith.constant 0 : index
    %c0_150 = arith.constant 0 : index
    %331 = vector.load %arg21[%330, %c0_149, %c0_150] : memref<8x8x128xf32, #tpu.memory_space<vmem>>, vector<1x8x128xf32>
    %332 = vector.shape_cast %331 : vector<1x8x128xf32> to vector<8x128xf32>
    %333 = arith.addf %332, %329 : vector<8x128xf32>
    %c0_151 = arith.constant 0 : index
    %c0_152 = arith.constant 0 : index
    %334 = vector.load %arg19[%c0_151, %c0_152] : memref<8x128xf32, #tpu.memory_space<vmem>>, vector<8x128xf32>
    %335 = vector.broadcast %41 : vector<1x128xf32> to vector<8x128xf32>
    %336 = arith.mulf %335, %334 : vector<8x128xf32>
    %337 = vector.broadcast %42 : vector<1x128xf32> to vector<8x128xf32>
    %338 = arith.mulf %337, %333 : vector<8x128xf32>
    %339 = arith.addf %336, %338 : vector<8x128xf32>
    %c0_153 = arith.constant 0 : index
    %c0_154 = arith.constant 0 : index
    %340 = vector.load %arg18[%c0_153, %c0_154] : memref<8x128xf32, #tpu.memory_space<vmem>>, vector<8x128xf32>
    %341 = vector.broadcast %39 : vector<1x128xf32> to vector<8x128xf32>
    %342 = arith.mulf %341, %340 : vector<8x128xf32>
    %343 = vector.broadcast %40 : vector<1x128xf32> to vector<8x128xf32>
    %344 = arith.mulf %343, %339 : vector<8x128xf32>
    %345 = arith.addf %342, %344 : vector<8x128xf32>
    %cst_155 = arith.constant 5.000000e-01 : f32
    %346 = vector.broadcast %cst_155 : f32 to vector<8x128xf32>
    %347 = arith.cmpf ogt, %345, %346 : vector<8x128xf32>
    %348 = arith.extui %347 : vector<8x128xi1> to vector<8x128xi32>
    %349 = arith.sitofp %348 : vector<8x128xi32> to vector<8x128xf32>
    %350 = arith.truncf %349 : vector<8x128xf32> to vector<8x128xbf16>
    %c0_156 = arith.constant 0 : index
    %c0_157 = arith.constant 0 : index
    %351 = vector.load %arg19[%c0_156, %c0_157] : memref<8x128xf32, #tpu.memory_space<vmem>>, vector<8x128xf32>
    tpu.vector_store %arg19[%c0_156, %c0_157], %339 {strides = array<i32>} : memref<8x128xf32, #tpu.memory_space<vmem>>, vector<8x128xf32>,
    %c0_158 = arith.constant 0 : index
    %c0_159 = arith.constant 0 : index
    %352 = vector.load %arg18[%c0_158, %c0_159] : memref<8x128xf32, #tpu.memory_space<vmem>>, vector<8x128xf32>
    tpu.vector_store %arg18[%c0_158, %c0_159], %345 {strides = array<i32>} : memref<8x128xf32, #tpu.memory_space<vmem>>, vector<8x128xf32>,
    %c0_160 = arith.constant 0 : index
    %c0_161 = arith.constant 0 : index
    %353 = vector.load %arg20[%c0_160, %c0_161] : memref<8x128xbf16, #tpu.memory_space<vmem>>, vector<8x128xbf16>
    tpu.vector_store %arg20[%c0_160, %c0_161], %350 {strides = array<i32>} : memref<8x128xbf16, #tpu.memory_space<vmem>>, vector<8x128xbf16>,
    %354 = arith.index_cast %c4_i32 : i32 to index
    %c0_162 = arith.constant 0 : index
    %c0_163 = arith.constant 0 : index
    %355 = vector.load %arg16[%354, %c0_162, %c0_163] : memref<8x8x128xf32, #tpu.memory_space<vmem>>, vector<1x8x128xf32>
    %356 = vector.shape_cast %355 : vector<1x8x128xf32> to vector<8x128xf32>
    %357 = vector.shape_cast %345 : vector<8x128xf32> to vector<1x8x128xf32>
    tpu.vector_store %arg16[%354, %c0_162, %c0_163], %357 {strides = array<i32>} : memref<8x8x128xf32, #tpu.memory_space<vmem>>, vector<1x8x128xf32>,
    %358 = arith.index_cast %c4_i32 : i32 to index
    %c0_164 = arith.constant 0 : index
    %c0_165 = arith.constant 0 : index
    %359 = vector.load %arg17[%358, %c0_164, %c0_165] : memref<8x8x128xbf16, #tpu.memory_space<vmem>>, vector<1x8x128xbf16>
    %360 = vector.shape_cast %359 : vector<1x8x128xbf16> to vector<8x128xbf16>
    %361 = vector.shape_cast %350 : vector<8x128xbf16> to vector<1x8x128xbf16>
    tpu.vector_store %arg17[%358, %c0_164, %c0_165], %361 {strides = array<i32>} : memref<8x8x128xbf16, #tpu.memory_space<vmem>>, vector<1x8x128xbf16>,
    %c5_i32 = arith.constant 5 : i32
    %c0_166 = arith.constant 0 : index
    %c0_167 = arith.constant 0 : index
    %362 = vector.load %arg20[%c0_166, %c0_167] : memref<8x128xbf16, #tpu.memory_space<vmem>>, vector<8x128xbf16>
    %cst_168 = arith.constant dense<0.000000e+00> : vector<8x256xf32>
    %363 = tpu.matmul %362, %43, %cst_168 {dimension_numbers = #tpu.dot_dimension_numbers<[1], [0], [0], [1], [0, 0, 1, 1], [], []>} : vector<8x128xbf16>, vector<128x256xbf16>, vector<8x256xf32> -> vector<8x256xf32>
    %364 = vector.broadcast %44 : vector<1x256xf32> to vector<8x256xf32>
    %365 = arith.addf %363, %364 : vector<8x256xf32>
    %cst_169 = arith.constant dense<0.000000e+00> : vector<8xf32>
    %366 = vector.multi_reduction <add>, %365, %cst_169 [1] : vector<8x256xf32> to vector<8xf32>
    %367 = vector.shape_cast %366 : vector<8xf32> to vector<8x1xf32>
    %cst_170 = arith.constant 3.906250e-03 : f32
    %368 = vector.broadcast %cst_170 : f32 to vector<8x1xf32>
    %369 = arith.mulf %367, %368 : vector<8x1xf32>
    %370 = arith.mulf %365, %365 : vector<8x256xf32>
    %cst_171 = arith.constant dense<0.000000e+00> : vector<8xf32>
    %371 = vector.multi_reduction <add>, %370, %cst_171 [1] : vector<8x256xf32> to vector<8xf32>
    %372 = vector.shape_cast %371 : vector<8xf32> to vector<8x1xf32>
    %cst_172 = arith.constant 3.906250e-03 : f32
    %373 = vector.broadcast %cst_172 : f32 to vector<8x1xf32>
    %374 = arith.mulf %372, %373 : vector<8x1xf32>
    %375 = arith.mulf %369, %369 : vector<8x1xf32>
    %376 = arith.subf %374, %375 : vector<8x1xf32>
    %cst_173 = arith.constant 0.000000e+00 : f32
    %377 = vector.broadcast %cst_173 : f32 to vector<8x1xf32>
    %378 = arith.maximumf %376, %377 : vector<8x1xf32>
    %379 = vector.broadcast %369 : vector<8x1xf32> to vector<8x256xf32>
    %380 = arith.subf %365, %379 : vector<8x256xf32>
    %cst_174 = arith.constant 9.99999974E-6 : f32
    %381 = vector.broadcast %cst_174 : f32 to vector<8x1xf32>
    %382 = arith.addf %378, %381 : vector<8x1xf32>
    %383 = math.rsqrt %382 : vector<8x1xf32>
    %384 = vector.broadcast %383 : vector<8x1xf32> to vector<8x256xf32>
    %385 = arith.mulf %380, %384 : vector<8x256xf32>
    %386 = vector.broadcast %45 : vector<1x256xf32> to vector<8x256xf32>
    %387 = arith.mulf %385, %386 : vector<8x256xf32>
    %388 = vector.broadcast %46 : vector<1x256xf32> to vector<8x256xf32>
    %389 = arith.addf %387, %388 : vector<8x256xf32>
    %390 = vector.extract_strided_slice %389 {offsets = [0, 0], sizes = [8, 128], strides = [1, 1]} : vector<8x256xf32> to vector<8x128xf32>
    %391 = vector.extract_strided_slice %389 {offsets = [0, 128], sizes = [8, 128], strides = [1, 1]} : vector<8x256xf32> to vector<8x128xf32>
    %392 = arith.addf %390, %391 : vector<8x128xf32>
    %393 = arith.index_cast %c5_i32 : i32 to index
    %c0_175 = arith.constant 0 : index
    %c0_176 = arith.constant 0 : index
    %394 = vector.load %arg21[%393, %c0_175, %c0_176] : memref<8x8x128xf32, #tpu.memory_space<vmem>>, vector<1x8x128xf32>
    %395 = vector.shape_cast %394 : vector<1x8x128xf32> to vector<8x128xf32>
    %396 = arith.addf %395, %392 : vector<8x128xf32>
    %c0_177 = arith.constant 0 : index
    %c0_178 = arith.constant 0 : index
    %397 = vector.load %arg19[%c0_177, %c0_178] : memref<8x128xf32, #tpu.memory_space<vmem>>, vector<8x128xf32>
    %398 = vector.broadcast %41 : vector<1x128xf32> to vector<8x128xf32>
    %399 = arith.mulf %398, %397 : vector<8x128xf32>
    %400 = vector.broadcast %42 : vector<1x128xf32> to vector<8x128xf32>
    %401 = arith.mulf %400, %396 : vector<8x128xf32>
    %402 = arith.addf %399, %401 : vector<8x128xf32>
    %c0_179 = arith.constant 0 : index
    %c0_180 = arith.constant 0 : index
    %403 = vector.load %arg18[%c0_179, %c0_180] : memref<8x128xf32, #tpu.memory_space<vmem>>, vector<8x128xf32>
    %404 = vector.broadcast %39 : vector<1x128xf32> to vector<8x128xf32>
    %405 = arith.mulf %404, %403 : vector<8x128xf32>
    %406 = vector.broadcast %40 : vector<1x128xf32> to vector<8x128xf32>
    %407 = arith.mulf %406, %402 : vector<8x128xf32>
    %408 = arith.addf %405, %407 : vector<8x128xf32>
    %cst_181 = arith.constant 5.000000e-01 : f32
    %409 = vector.broadcast %cst_181 : f32 to vector<8x128xf32>
    %410 = arith.cmpf ogt, %408, %409 : vector<8x128xf32>
    %411 = arith.extui %410 : vector<8x128xi1> to vector<8x128xi32>
    %412 = arith.sitofp %411 : vector<8x128xi32> to vector<8x128xf32>
    %413 = arith.truncf %412 : vector<8x128xf32> to vector<8x128xbf16>
    %c0_182 = arith.constant 0 : index
    %c0_183 = arith.constant 0 : index
    %414 = vector.load %arg19[%c0_182, %c0_183] : memref<8x128xf32, #tpu.memory_space<vmem>>, vector<8x128xf32>
    tpu.vector_store %arg19[%c0_182, %c0_183], %402 {strides = array<i32>} : memref<8x128xf32, #tpu.memory_space<vmem>>, vector<8x128xf32>,
    %c0_184 = arith.constant 0 : index
    %c0_185 = arith.constant 0 : index
    %415 = vector.load %arg18[%c0_184, %c0_185] : memref<8x128xf32, #tpu.memory_space<vmem>>, vector<8x128xf32>
    tpu.vector_store %arg18[%c0_184, %c0_185], %408 {strides = array<i32>} : memref<8x128xf32, #tpu.memory_space<vmem>>, vector<8x128xf32>,
    %c0_186 = arith.constant 0 : index
    %c0_187 = arith.constant 0 : index
    %416 = vector.load %arg20[%c0_186, %c0_187] : memref<8x128xbf16, #tpu.memory_space<vmem>>, vector<8x128xbf16>
    tpu.vector_store %arg20[%c0_186, %c0_187], %413 {strides = array<i32>} : memref<8x128xbf16, #tpu.memory_space<vmem>>, vector<8x128xbf16>,
    %417 = arith.index_cast %c5_i32 : i32 to index
    %c0_188 = arith.constant 0 : index
    %c0_189 = arith.constant 0 : index
    %418 = vector.load %arg16[%417, %c0_188, %c0_189] : memref<8x8x128xf32, #tpu.memory_space<vmem>>, vector<1x8x128xf32>
    %419 = vector.shape_cast %418 : vector<1x8x128xf32> to vector<8x128xf32>
    %420 = vector.shape_cast %408 : vector<8x128xf32> to vector<1x8x128xf32>
    tpu.vector_store %arg16[%417, %c0_188, %c0_189], %420 {strides = array<i32>} : memref<8x8x128xf32, #tpu.memory_space<vmem>>, vector<1x8x128xf32>,
    %421 = arith.index_cast %c5_i32 : i32 to index
    %c0_190 = arith.constant 0 : index
    %c0_191 = arith.constant 0 : index
    %422 = vector.load %arg17[%421, %c0_190, %c0_191] : memref<8x8x128xbf16, #tpu.memory_space<vmem>>, vector<1x8x128xbf16>
    %423 = vector.shape_cast %422 : vector<1x8x128xbf16> to vector<8x128xbf16>
    %424 = vector.shape_cast %413 : vector<8x128xbf16> to vector<1x8x128xbf16>
    tpu.vector_store %arg17[%421, %c0_190, %c0_191], %424 {strides = array<i32>} : memref<8x8x128xbf16, #tpu.memory_space<vmem>>, vector<1x8x128xbf16>,
    %c6_i32 = arith.constant 6 : i32
    %c0_192 = arith.constant 0 : index
    %c0_193 = arith.constant 0 : index
    %425 = vector.load %arg20[%c0_192, %c0_193] : memref<8x128xbf16, #tpu.memory_space<vmem>>, vector<8x128xbf16>
    %cst_194 = arith.constant dense<0.000000e+00> : vector<8x256xf32>
    %426 = tpu.matmul %425, %43, %cst_194 {dimension_numbers = #tpu.dot_dimension_numbers<[1], [0], [0], [1], [0, 0, 1, 1], [], []>} : vector<8x128xbf16>, vector<128x256xbf16>, vector<8x256xf32> -> vector<8x256xf32>
    %427 = vector.broadcast %44 : vector<1x256xf32> to vector<8x256xf32>
    %428 = arith.addf %426, %427 : vector<8x256xf32>
    %cst_195 = arith.constant dense<0.000000e+00> : vector<8xf32>
    %429 = vector.multi_reduction <add>, %428, %cst_195 [1] : vector<8x256xf32> to vector<8xf32>
    %430 = vector.shape_cast %429 : vector<8xf32> to vector<8x1xf32>
    %cst_196 = arith.constant 3.906250e-03 : f32
    %431 = vector.broadcast %cst_196 : f32 to vector<8x1xf32>
    %432 = arith.mulf %430, %431 : vector<8x1xf32>
    %433 = arith.mulf %428, %428 : vector<8x256xf32>
    %cst_197 = arith.constant dense<0.000000e+00> : vector<8xf32>
    %434 = vector.multi_reduction <add>, %433, %cst_197 [1] : vector<8x256xf32> to vector<8xf32>
    %435 = vector.shape_cast %434 : vector<8xf32> to vector<8x1xf32>
    %cst_198 = arith.constant 3.906250e-03 : f32
    %436 = vector.broadcast %cst_198 : f32 to vector<8x1xf32>
    %437 = arith.mulf %435, %436 : vector<8x1xf32>
    %438 = arith.mulf %432, %432 : vector<8x1xf32>
    %439 = arith.subf %437, %438 : vector<8x1xf32>
    %cst_199 = arith.constant 0.000000e+00 : f32
    %440 = vector.broadcast %cst_199 : f32 to vector<8x1xf32>
    %441 = arith.maximumf %439, %440 : vector<8x1xf32>
    %442 = vector.broadcast %432 : vector<8x1xf32> to vector<8x256xf32>
    %443 = arith.subf %428, %442 : vector<8x256xf32>
    %cst_200 = arith.constant 9.99999974E-6 : f32
    %444 = vector.broadcast %cst_200 : f32 to vector<8x1xf32>
    %445 = arith.addf %441, %444 : vector<8x1xf32>
    %446 = math.rsqrt %445 : vector<8x1xf32>
    %447 = vector.broadcast %446 : vector<8x1xf32> to vector<8x256xf32>
    %448 = arith.mulf %443, %447 : vector<8x256xf32>
    %449 = vector.broadcast %45 : vector<1x256xf32> to vector<8x256xf32>
    %450 = arith.mulf %448, %449 : vector<8x256xf32>
    %451 = vector.broadcast %46 : vector<1x256xf32> to vector<8x256xf32>
    %452 = arith.addf %450, %451 : vector<8x256xf32>
    %453 = vector.extract_strided_slice %452 {offsets = [0, 0], sizes = [8, 128], strides = [1, 1]} : vector<8x256xf32> to vector<8x128xf32>
    %454 = vector.extract_strided_slice %452 {offsets = [0, 128], sizes = [8, 128], strides = [1, 1]} : vector<8x256xf32> to vector<8x128xf32>
    %455 = arith.addf %453, %454 : vector<8x128xf32>
    %456 = arith.index_cast %c6_i32 : i32 to index
    %c0_201 = arith.constant 0 : index
    %c0_202 = arith.constant 0 : index
    %457 = vector.load %arg21[%456, %c0_201, %c0_202] : memref<8x8x128xf32, #tpu.memory_space<vmem>>, vector<1x8x128xf32>
    %458 = vector.shape_cast %457 : vector<1x8x128xf32> to vector<8x128xf32>
    %459 = arith.addf %458, %455 : vector<8x128xf32>
    %c0_203 = arith.constant 0 : index
    %c0_204 = arith.constant 0 : index
    %460 = vector.load %arg19[%c0_203, %c0_204] : memref<8x128xf32, #tpu.memory_space<vmem>>, vector<8x128xf32>
    %461 = vector.broadcast %41 : vector<1x128xf32> to vector<8x128xf32>
    %462 = arith.mulf %461, %460 : vector<8x128xf32>
    %463 = vector.broadcast %42 : vector<1x128xf32> to vector<8x128xf32>
    %464 = arith.mulf %463, %459 : vector<8x128xf32>
    %465 = arith.addf %462, %464 : vector<8x128xf32>
    %c0_205 = arith.constant 0 : index
    %c0_206 = arith.constant 0 : index
    %466 = vector.load %arg18[%c0_205, %c0_206] : memref<8x128xf32, #tpu.memory_space<vmem>>, vector<8x128xf32>
    %467 = vector.broadcast %39 : vector<1x128xf32> to vector<8x128xf32>
    %468 = arith.mulf %467, %466 : vector<8x128xf32>
    %469 = vector.broadcast %40 : vector<1x128xf32> to vector<8x128xf32>
    %470 = arith.mulf %469, %465 : vector<8x128xf32>
    %471 = arith.addf %468, %470 : vector<8x128xf32>
    %cst_207 = arith.constant 5.000000e-01 : f32
    %472 = vector.broadcast %cst_207 : f32 to vector<8x128xf32>
    %473 = arith.cmpf ogt, %471, %472 : vector<8x128xf32>
    %474 = arith.extui %473 : vector<8x128xi1> to vector<8x128xi32>
    %475 = arith.sitofp %474 : vector<8x128xi32> to vector<8x128xf32>
    %476 = arith.truncf %475 : vector<8x128xf32> to vector<8x128xbf16>
    %c0_208 = arith.constant 0 : index
    %c0_209 = arith.constant 0 : index
    %477 = vector.load %arg19[%c0_208, %c0_209] : memref<8x128xf32, #tpu.memory_space<vmem>>, vector<8x128xf32>
    tpu.vector_store %arg19[%c0_208, %c0_209], %465 {strides = array<i32>} : memref<8x128xf32, #tpu.memory_space<vmem>>, vector<8x128xf32>,
    %c0_210 = arith.constant 0 : index
    %c0_211 = arith.constant 0 : index
    %478 = vector.load %arg18[%c0_210, %c0_211] : memref<8x128xf32, #tpu.memory_space<vmem>>, vector<8x128xf32>
    tpu.vector_store %arg18[%c0_210, %c0_211], %471 {strides = array<i32>} : memref<8x128xf32, #tpu.memory_space<vmem>>, vector<8x128xf32>,
    %c0_212 = arith.constant 0 : index
    %c0_213 = arith.constant 0 : index
    %479 = vector.load %arg20[%c0_212, %c0_213] : memref<8x128xbf16, #tpu.memory_space<vmem>>, vector<8x128xbf16>
    tpu.vector_store %arg20[%c0_212, %c0_213], %476 {strides = array<i32>} : memref<8x128xbf16, #tpu.memory_space<vmem>>, vector<8x128xbf16>,
    %480 = arith.index_cast %c6_i32 : i32 to index
    %c0_214 = arith.constant 0 : index
    %c0_215 = arith.constant 0 : index
    %481 = vector.load %arg16[%480, %c0_214, %c0_215] : memref<8x8x128xf32, #tpu.memory_space<vmem>>, vector<1x8x128xf32>
    %482 = vector.shape_cast %481 : vector<1x8x128xf32> to vector<8x128xf32>
    %483 = vector.shape_cast %471 : vector<8x128xf32> to vector<1x8x128xf32>
    tpu.vector_store %arg16[%480, %c0_214, %c0_215], %483 {strides = array<i32>} : memref<8x8x128xf32, #tpu.memory_space<vmem>>, vector<1x8x128xf32>,
    %484 = arith.index_cast %c6_i32 : i32 to index
    %c0_216 = arith.constant 0 : index
    %c0_217 = arith.constant 0 : index
    %485 = vector.load %arg17[%484, %c0_216, %c0_217] : memref<8x8x128xbf16, #tpu.memory_space<vmem>>, vector<1x8x128xbf16>
    %486 = vector.shape_cast %485 : vector<1x8x128xbf16> to vector<8x128xbf16>
    %487 = vector.shape_cast %476 : vector<8x128xbf16> to vector<1x8x128xbf16>
    tpu.vector_store %arg17[%484, %c0_216, %c0_217], %487 {strides = array<i32>} : memref<8x8x128xbf16, #tpu.memory_space<vmem>>, vector<1x8x128xbf16>,
    %c7_i32 = arith.constant 7 : i32
    %c0_218 = arith.constant 0 : index
    %c0_219 = arith.constant 0 : index
    %488 = vector.load %arg20[%c0_218, %c0_219] : memref<8x128xbf16, #tpu.memory_space<vmem>>, vector<8x128xbf16>
    %cst_220 = arith.constant dense<0.000000e+00> : vector<8x256xf32>
    %489 = tpu.matmul %488, %43, %cst_220 {dimension_numbers = #tpu.dot_dimension_numbers<[1], [0], [0], [1], [0, 0, 1, 1], [], []>} : vector<8x128xbf16>, vector<128x256xbf16>, vector<8x256xf32> -> vector<8x256xf32>
    %490 = vector.broadcast %44 : vector<1x256xf32> to vector<8x256xf32>
    %491 = arith.addf %489, %490 : vector<8x256xf32>
    %cst_221 = arith.constant dense<0.000000e+00> : vector<8xf32>
    %492 = vector.multi_reduction <add>, %491, %cst_221 [1] : vector<8x256xf32> to vector<8xf32>
    %493 = vector.shape_cast %492 : vector<8xf32> to vector<8x1xf32>
    %cst_222 = arith.constant 3.906250e-03 : f32
    %494 = vector.broadcast %cst_222 : f32 to vector<8x1xf32>
    %495 = arith.mulf %493, %494 : vector<8x1xf32>
    %496 = arith.mulf %491, %491 : vector<8x256xf32>
    %cst_223 = arith.constant dense<0.000000e+00> : vector<8xf32>
    %497 = vector.multi_reduction <add>, %496, %cst_223 [1] : vector<8x256xf32> to vector<8xf32>
    %498 = vector.shape_cast %497 : vector<8xf32> to vector<8x1xf32>
    %cst_224 = arith.constant 3.906250e-03 : f32
    %499 = vector.broadcast %cst_224 : f32 to vector<8x1xf32>
    %500 = arith.mulf %498, %499 : vector<8x1xf32>
    %501 = arith.mulf %495, %495 : vector<8x1xf32>
    %502 = arith.subf %500, %501 : vector<8x1xf32>
    %cst_225 = arith.constant 0.000000e+00 : f32
    %503 = vector.broadcast %cst_225 : f32 to vector<8x1xf32>
    %504 = arith.maximumf %502, %503 : vector<8x1xf32>
    %505 = vector.broadcast %495 : vector<8x1xf32> to vector<8x256xf32>
    %506 = arith.subf %491, %505 : vector<8x256xf32>
    %cst_226 = arith.constant 9.99999974E-6 : f32
    %507 = vector.broadcast %cst_226 : f32 to vector<8x1xf32>
    %508 = arith.addf %504, %507 : vector<8x1xf32>
    %509 = math.rsqrt %508 : vector<8x1xf32>
    %510 = vector.broadcast %509 : vector<8x1xf32> to vector<8x256xf32>
    %511 = arith.mulf %506, %510 : vector<8x256xf32>
    %512 = vector.broadcast %45 : vector<1x256xf32> to vector<8x256xf32>
    %513 = arith.mulf %511, %512 : vector<8x256xf32>
    %514 = vector.broadcast %46 : vector<1x256xf32> to vector<8x256xf32>
    %515 = arith.addf %513, %514 : vector<8x256xf32>
    %516 = vector.extract_strided_slice %515 {offsets = [0, 0], sizes = [8, 128], strides = [1, 1]} : vector<8x256xf32> to vector<8x128xf32>
    %517 = vector.extract_strided_slice %515 {offsets = [0, 128], sizes = [8, 128], strides = [1, 1]} : vector<8x256xf32> to vector<8x128xf32>
    %518 = arith.addf %516, %517 : vector<8x128xf32>
    %519 = arith.index_cast %c7_i32 : i32 to index
    %c0_227 = arith.constant 0 : index
    %c0_228 = arith.constant 0 : index
    %520 = vector.load %arg21[%519, %c0_227, %c0_228] : memref<8x8x128xf32, #tpu.memory_space<vmem>>, vector<1x8x128xf32>
    %521 = vector.shape_cast %520 : vector<1x8x128xf32> to vector<8x128xf32>
    %522 = arith.addf %521, %518 : vector<8x128xf32>
    %c0_229 = arith.constant 0 : index
    %c0_230 = arith.constant 0 : index
    %523 = vector.load %arg19[%c0_229, %c0_230] : memref<8x128xf32, #tpu.memory_space<vmem>>, vector<8x128xf32>
    %524 = vector.broadcast %41 : vector<1x128xf32> to vector<8x128xf32>
    %525 = arith.mulf %524, %523 : vector<8x128xf32>
    %526 = vector.broadcast %42 : vector<1x128xf32> to vector<8x128xf32>
    %527 = arith.mulf %526, %522 : vector<8x128xf32>
    %528 = arith.addf %525, %527 : vector<8x128xf32>
    %c0_231 = arith.constant 0 : index
    %c0_232 = arith.constant 0 : index
    %529 = vector.load %arg18[%c0_231, %c0_232] : memref<8x128xf32, #tpu.memory_space<vmem>>, vector<8x128xf32>
    %530 = vector.broadcast %39 : vector<1x128xf32> to vector<8x128xf32>
    %531 = arith.mulf %530, %529 : vector<8x128xf32>
    %532 = vector.broadcast %40 : vector<1x128xf32> to vector<8x128xf32>
    %533 = arith.mulf %532, %528 : vector<8x128xf32>
    %534 = arith.addf %531, %533 : vector<8x128xf32>
    %cst_233 = arith.constant 5.000000e-01 : f32
    %535 = vector.broadcast %cst_233 : f32 to vector<8x128xf32>
    %536 = arith.cmpf ogt, %534, %535 : vector<8x128xf32>
    %537 = arith.extui %536 : vector<8x128xi1> to vector<8x128xi32>
    %538 = arith.sitofp %537 : vector<8x128xi32> to vector<8x128xf32>
    %539 = arith.truncf %538 : vector<8x128xf32> to vector<8x128xbf16>
    %c0_234 = arith.constant 0 : index
    %c0_235 = arith.constant 0 : index
    %540 = vector.load %arg19[%c0_234, %c0_235] : memref<8x128xf32, #tpu.memory_space<vmem>>, vector<8x128xf32>
    tpu.vector_store %arg19[%c0_234, %c0_235], %528 {strides = array<i32>} : memref<8x128xf32, #tpu.memory_space<vmem>>, vector<8x128xf32>,
    %c0_236 = arith.constant 0 : index
    %c0_237 = arith.constant 0 : index
    %541 = vector.load %arg18[%c0_236, %c0_237] : memref<8x128xf32, #tpu.memory_space<vmem>>, vector<8x128xf32>
    tpu.vector_store %arg18[%c0_236, %c0_237], %534 {strides = array<i32>} : memref<8x128xf32, #tpu.memory_space<vmem>>, vector<8x128xf32>,
    %c0_238 = arith.constant 0 : index
    %c0_239 = arith.constant 0 : index
    %542 = vector.load %arg20[%c0_238, %c0_239] : memref<8x128xbf16, #tpu.memory_space<vmem>>, vector<8x128xbf16>
    tpu.vector_store %arg20[%c0_238, %c0_239], %539 {strides = array<i32>} : memref<8x128xbf16, #tpu.memory_space<vmem>>, vector<8x128xbf16>,
    %543 = arith.index_cast %c7_i32 : i32 to index
    %c0_240 = arith.constant 0 : index
    %c0_241 = arith.constant 0 : index
    %544 = vector.load %arg16[%543, %c0_240, %c0_241] : memref<8x8x128xf32, #tpu.memory_space<vmem>>, vector<1x8x128xf32>
    %545 = vector.shape_cast %544 : vector<1x8x128xf32> to vector<8x128xf32>
    %546 = vector.shape_cast %534 : vector<8x128xf32> to vector<1x8x128xf32>
    tpu.vector_store %arg16[%543, %c0_240, %c0_241], %546 {strides = array<i32>} : memref<8x8x128xf32, #tpu.memory_space<vmem>>, vector<1x8x128xf32>,
    %547 = arith.index_cast %c7_i32 : i32 to index
    %c0_242 = arith.constant 0 : index
    %c0_243 = arith.constant 0 : index
    %548 = vector.load %arg17[%547, %c0_242, %c0_243] : memref<8x8x128xbf16, #tpu.memory_space<vmem>>, vector<1x8x128xbf16>
    %549 = vector.shape_cast %548 : vector<1x8x128xbf16> to vector<8x128xbf16>
    %550 = vector.shape_cast %539 : vector<8x128xbf16> to vector<1x8x128xbf16>
    tpu.vector_store %arg17[%547, %c0_242, %c0_243], %550 {strides = array<i32>} : memref<8x8x128xbf16, #tpu.memory_space<vmem>>, vector<1x8x128xbf16>,
    %c8_i32 = arith.constant 8 : i32
    return
  }
  func.func @transform_0(%arg0: i32, %arg1: i32) -> (i32, i32, i32) {
    %c0_i32 = arith.constant 0 : i32
    %c0_i32_0 = arith.constant 0 : i32
    return %arg1, %arg0, %c0_i32 : i32, i32, i32
  }
  func.func @transform_1(%arg0: i32, %arg1: i32) -> (i32, i32) {
    %c0_i32 = arith.constant 0 : i32
    %c0_i32_0 = arith.constant 0 : i32
    return %arg0, %c0_i32 : i32, i32
  }
  func.func @transform_2(%arg0: i32, %arg1: i32) -> (i32, i32) {
    %c0_i32 = arith.constant 0 : i32
    %c0_i32_0 = arith.constant 0 : i32
    %c0_i32_1 = arith.constant 0 : i32
    return %c0_i32, %c0_i32_0 : i32, i32
  }
  func.func @transform_3(%arg0: i32, %arg1: i32) -> (i32, i32) {
    %c0_i32 = arith.constant 0 : i32
    %c0_i32_0 = arith.constant 0 : i32
    %c0_i32_1 = arith.constant 0 : i32
    return %c0_i32, %c0_i32_0 : i32, i32
  }
  func.func @transform_4(%arg0: i32, %arg1: i32) -> (i32, i32) {
    %c0_i32 = arith.constant 0 : i32
    %c0_i32_0 = arith.constant 0 : i32
    %c0_i32_1 = arith.constant 0 : i32
    return %c0_i32, %c0_i32_0 : i32, i32
  }
  func.func @transform_5(%arg0: i32, %arg1: i32) -> (i32, i32) {
    %c0_i32 = arith.constant 0 : i32
    %c0_i32_0 = arith.constant 0 : i32
    %c0_i32_1 = arith.constant 0 : i32
    return %c0_i32, %c0_i32_0 : i32, i32
  }
  func.func @transform_6(%arg0: i32, %arg1: i32) -> (i32, i32) {
    %c0_i32 = arith.constant 0 : i32
    %c0_i32_0 = arith.constant 0 : i32
    %c0_i32_1 = arith.constant 0 : i32
    return %c0_i32, %c0_i32_0 : i32, i32
  }
  func.func @transform_7(%arg0: i32, %arg1: i32) -> (i32, i32) {
    %c0_i32 = arith.constant 0 : i32
    %c0_i32_0 = arith.constant 0 : i32
    %c0_i32_1 = arith.constant 0 : i32
    return %c0_i32, %c0_i32_0 : i32, i32
  }
  func.func @transform_8(%arg0: i32, %arg1: i32) -> (i32, i32) {
    %c0_i32 = arith.constant 0 : i32
    %c0_i32_0 = arith.constant 0 : i32
    %c0_i32_1 = arith.constant 0 : i32
    return %c0_i32, %c0_i32_0 : i32, i32
  }
  func.func @transform_9(%arg0: i32, %arg1: i32) -> (i32, i32) {
    %c0_i32 = arith.constant 0 : i32
    %c0_i32_0 = arith.constant 0 : i32
    %c0_i32_1 = arith.constant 0 : i32
    return %c0_i32, %c0_i32_0 : i32, i32
  }
  func.func @transform_10(%arg0: i32, %arg1: i32) -> (i32, i32) {
    %c0_i32 = arith.constant 0 : i32
    %c0_i32_0 = arith.constant 0 : i32
    %c0_i32_1 = arith.constant 0 : i32
    return %c0_i32, %c0_i32_0 : i32, i32
  }
  func.func @transform_11(%arg0: i32, %arg1: i32) -> (i32, i32) {
    %c0_i32 = arith.constant 0 : i32
    %c0_i32_0 = arith.constant 0 : i32
    %c0_i32_1 = arith.constant 0 : i32
    return %c0_i32, %c0_i32_0 : i32, i32
  }
  func.func @transform_12(%arg0: i32, %arg1: i32) -> (i32, i32) {
    %c0_i32 = arith.constant 0 : i32
    %c0_i32_0 = arith.constant 0 : i32
    %c0_i32_1 = arith.constant 0 : i32
    return %c0_i32, %c0_i32_0 : i32, i32
  }
  func.func @transform_13(%arg0: i32, %arg1: i32) -> (i32, i32) {
    %c0_i32 = arith.constant 0 : i32
    %c0_i32_0 = arith.constant 0 : i32
    %c0_i32_1 = arith.constant 0 : i32
    return %c0_i32, %c0_i32_0 : i32, i32
  }
  func.func @transform_14(%arg0: i32, %arg1: i32) -> (i32, i32, i32) {
    %c0_i32 = arith.constant 0 : i32
    %c0_i32_0 = arith.constant 0 : i32
    return %arg1, %arg0, %c0_i32 : i32, i32, i32
  }
  func.func @transform_15(%arg0: i32, %arg1: i32) -> (i32, i32, i32) {
    %c0_i32 = arith.constant 0 : i32
    %c0_i32_0 = arith.constant 0 : i32
    return %arg1, %arg0, %c0_i32 : i32, i32, i32
  }
}

</mosaic_0001>

<llo_original>
// kernel: tpu_custom_call.1
$region0: #{tpu_custom_call.1}
  #allocation0 [shape = 'u32[]', space=smem, size = 0x4, offset = 0x4, fixed_abs, tag = 'smem constant byte address 0x4 - core index']
  #allocation1 [shape = 'u32[144,128]{1,0:T(1,128)}', space=vmem, size = 0x12000, scoped, tag = 'internal scratch']
  #allocation2 [shape = 'f32[8,128]{1,0:T(8,128)}', space=vmem, size = 0x1000, scoped, tag = 'scratch operand']
  #allocation3 [shape = 'f32[8,128]{1,0:T(8,128)}', space=vmem, size = 0x1000, scoped, tag = 'scratch operand']
  #allocation4 [shape = 'bf16[8,128]{1,0:T(8,128)(2,1)}', space=vmem, size = 0x800, scoped, tag = 'scratch operand']
  #allocation5 [shape = 'f32[8,8,128]{2,1,0:T(8,128)}', space=vmem, size = 0x8000, scoped, tag = 'scratch operand']
  %s0 = inlined_call_operand.hbm [shape: bf16[32,16,32], index: 0, kind: input, shape index: {}]
  %s1 = inlined_call_operand.hbm [shape: f32[16,128], index: 1, kind: input, shape index: {}]
  %s2 = inlined_call_operand.hbm [shape: bf16[32,256], index: 2, kind: input, shape index: {}]
  %s3 = inlined_call_operand.vmem [shape: f32[1,256], index: 3, kind: input, shape index: {}]
  %s4 = inlined_call_operand.vmem [shape: f32[1,256], index: 4, kind: input, shape index: {}]
  %s5 = inlined_call_operand.vmem [shape: f32[1,256], index: 5, kind: input, shape index: {}]
  %s6 = inlined_call_operand.hbm [shape: bf16[128,256], index: 6, kind: input, shape index: {}]
  %s7 = inlined_call_operand.vmem [shape: f32[1,256], index: 7, kind: input, shape index: {}]
  %s8 = inlined_call_operand.vmem [shape: f32[1,256], index: 8, kind: input, shape index: {}]
  %s9 = inlined_call_operand.vmem [shape: f32[1,256], index: 9, kind: input, shape index: {}]
  %s10 = inlined_call_operand.vmem [shape: f32[1,128], index: 10, kind: input, shape index: {}]
  %s11 = inlined_call_operand.vmem [shape: f32[1,128], index: 11, kind: input, shape index: {}]
  %s12 = inlined_call_operand.vmem [shape: f32[1,128], index: 12, kind: input, shape index: {}]
  %s13 = inlined_call_operand.vmem [shape: f32[1,128], index: 13, kind: input, shape index: {}]
  %s14 = inlined_call_operand.hbm [shape: f32[32,16,128], index: 14, kind: output, shape index: {0}]
  %s15 = inlined_call_operand.hbm [shape: bf16[32,16,128], index: 15, kind: output, shape index: {1}]
  %16 = xla_tuple %s14, %s15
  %s17 = sld [smem:[#allocation0]]
  $region117: #{tpu_custom_call.1} parent=0
    _
  %s19 = ssub.s32 1, %s17
  %s20 = scalar_select 0, %s19, %s17
  $region1: #{tpu_custom_call.1} parent=0
    #allocation6 [shape = 'u8[32768]{0}', space=vmem, size = 0x8000, scoped, tag = 'input window, operand 0']
    #allocation7 [shape = 's32[2]{0}', space=sflag, size = 0x8, scoped, tag = 'scoped memory for tpu_custom_call.1']
    #allocation8 [shape = 's32[2]{0}', space=sflag, size = 0x8, scoped, tag = 'scoped memory for tpu_custom_call.1']
    #allocation9 [shape = 'u8[8192]{0}', space=vmem, size = 0x2000, scoped, tag = 'input window, operand 1']
    #allocation10 [shape = 's32[2]{0}', space=sflag, size = 0x8, scoped, tag = 'scoped memory for tpu_custom_call.1']
    #allocation11 [shape = 'u8[16384]{0}', space=vmem, size = 0x4000, scoped, tag = 'input window, operand 2, single buffered']
    #allocation12 [shape = 'u8[65536]{0}', space=vmem, size = 0x10000, scoped, tag = 'input window, operand 6, single buffered']
    #allocation13 [shape = 's32[1]{0}', space=sflag, size = 0x4, scoped, tag = 'scoped memory for tpu_custom_call.1']
    #allocation14 [shape = 'u8[65536]{0}', space=vmem, size = 0x10000, scoped, tag = 'output window, operand 0']
    #allocation15 [shape = 'u8[32768]{0}', space=vmem, size = 0x8000, scoped, tag = 'output window, operand 1']
    #allocation16 [shape = 's32[2]{0}', space=sflag, size = 0x8, scoped, tag = 'scoped memory for tpu_custom_call.1']
    %21 = vsyncpa [#allocation7], 0
    %s22 = scalar_lea.sflag [#allocation7], 1
    %23 = vsyncpa %s22, 0
    %24 = vsyncpa [#allocation10], 0
    %s25 = scalar_lea.sflag [#allocation10], 1
    %26 = vsyncpa %s25, 0
    %27 = vsyncpa [#allocation13], 0
    %28 = vsyncpa [#allocation8], 0
    %s29 = scalar_lea.sflag [#allocation8], 1
    %30 = vsyncpa %s29, 0
    %31 = vsyncpa [#allocation16], 0
    %s32 = scalar_lea.sflag [#allocation16], 1
    %33 = vsyncpa %s32, 0
    loop: start=0, step=1, limit=10
    $region2: #{tpu_custom_call.1} parent=1 // loop_pre_header
      _
    $region3: #{tpu_custom_call.1} parent=1 // loop_header
      %s35 = sphi 0, %s39
      %p36 = scmp.ge.s32.totalorder %s35, 10
      %s42 = sphi 0, %s54
      %s43 = sphi 0, %s50
      %s44 = sphi 0, %s42
      %s45 = sphi 0, %s43
      %s46 = sphi 0, %s44
      %s47 = sphi 0, %s45
      %s59 = sphi 0, %s61
      %s62 = sphi 0, %s59
      %s63 = sphi 0, %s62
      %s79 = sphi 0, %s63
      %s85 = sphi 0, %s87
      %s88 = sphi 0, %s85
      %s89 = sphi 0, %s88
      %s105 = sphi 0, %s89
      %s109 = sphi 0, %s109
      %s111 = sphi 0, %s109
      %s112 = sphi 0, %s111
      %s126 = sphi 0, %s112
      %s130 = sphi 0, %s130
      %s132 = sphi 0, %s130
      %s133 = sphi 0, %s132
      %s147 = sphi 0, %s133
      %s151 = sphi 0, %s151
      %s153 = sphi 0, %s151
      %s154 = sphi 0, %s153
      %s168 = sphi 0, %s154
      %s172 = sphi 0, %s172
      %s174 = sphi 0, %s172
      %s175 = sphi 0, %s174
      %s189 = sphi 0, %s175
      %s193 = sphi 0, %s193
      %s195 = sphi 0, %s193
      %s196 = sphi 0, %s195
      %s210 = sphi 0, %s196
      %s214 = sphi 0, %s214
      %s216 = sphi 0, %s214
      %s217 = sphi 0, %s216
      %s231 = sphi 0, %s217
      %s235 = sphi 0, %s235
      %s237 = sphi 0, %s235
      %s238 = sphi 0, %s237
      %s252 = sphi 0, %s238
      %s256 = sphi 0, %s256
      %s258 = sphi 0, %s256
      %s259 = sphi 0, %s258
      %s273 = sphi 0, %s259
      %s277 = sphi 0, %s277
      %s279 = sphi 0, %s277
      %s280 = sphi 0, %s279
      %s294 = sphi 0, %s280
      %s298 = sphi 0, %s298
      %s300 = sphi 0, %s298
      %s301 = sphi 0, %s300
      %s315 = sphi 0, %s301
      %s319 = sphi 0, %s319
      %s321 = sphi 0, %s319
      %s322 = sphi 0, %s321
      %s336 = sphi 0, %s322
      %s340 = sphi 0, %s340
      %s342 = sphi 0, %s340
      %s343 = sphi 0, %s342
      %s357 = sphi 0, %s343
      %s365 = sphi 0, %s367
      %s368 = sphi 0, %s365
      %s369 = sphi 0, %s368
      %s385 = sphi 0, %s369
      %s393 = sphi 0, %s395
      %s396 = sphi 0, %s393
      %s397 = sphi 0, %s396
      %s413 = sphi 0, %s397
    $region4: #{tpu_custom_call.1} parent=1 // loop_header_branch
      %38 = sbr.rel (%p36) target = $region8
    $region5: #{tpu_custom_call.1} parent=1 // loop_body
      %s40 = ssub.s32 %s35, 1
      %s41 = ssub.s32 %s35, 2
      %s48 = sadd.s32 1, %s43
      %p49 = scmp.ge.s32.totalorder %s48, 4
      %s50 = scalar_select %p49, 0, %s48
      %s51 = sadd.s32 1, %s42
      %s52 = scalar_select %p49, %s51, %s42
      %p53 = scmp.ge.s32.totalorder %s52, 2
      %s54 = scalar_select %p53, 0, %s52
      %s55 = ssub.s32 %s43, %s50
      %s56 = ssub.s32 %s42, %s54
      %s57 = sor.u32 %s55, %s56
      %p58 = scmp.eq.s32.totalorder %s57, 0
      %s60 = sadd.s32 %s59, 1
      %s61 = scalar_select %p58, %s59, %s60
      %p64 = pneg %p58
      %p65 = scmp.eq.s32.totalorder %s35, 7
      %p66 = por %p64, %p65
      %p67 = scmp.ne.s32.totalorder %s59, %s62
      %p68 = scmp.eq.s32.totalorder %s35, 0
      %p69 = por %p67, %p68
      %p70 = scmp.ne.s32.totalorder %s59, %s62
      %p71 = scmp.eq.s32.totalorder %s40, 7
      %p72 = por %p70, %p71
      %p73 = scmp.ne.s32.totalorder %s62, %s63
      %p74 = scmp.eq.s32.totalorder %s40, 0
      %p75 = por %p73, %p74
      %p76 = scmp.ne.s32.totalorder %s62, %s63
      %p77 = scmp.eq.s32.totalorder %s41, 7
      %p78 = por %p76, %p77
      %p80 = scmp.ne.s32.totalorder %s63, %s79
      %p81 = scmp.eq.s32.totalorder %s41, 0
      %p82 = por %p80, %p81
      %s83 = ssub.s32 %s42, %s54
      %p84 = scmp.eq.s32.totalorder %s83, 0
      %s86 = sadd.s32 %s85, 1
      %s87 = scalar_select %p84, %s85, %s86
      %p90 = pneg %p84
      %p91 = scmp.eq.s32.totalorder %s35, 7
      %p92 = por %p90, %p91
      %p93 = scmp.ne.s32.totalorder %s85, %s88
      %p94 = scmp.eq.s32.totalorder %s35, 0
      %p95 = por %p93, %p94
      %p96 = scmp.ne.s32.totalorder %s85, %s88
      %p97 = scmp.eq.s32.totalorder %s40, 7
      %p98 = por %p96, %p97
      %p99 = scmp.ne.s32.totalorder %s88, %s89
      %p100 = scmp.eq.s32.totalorder %s40, 0
      %p101 = por %p99, %p100
      %p102 = scmp.ne.s32.totalorder %s88, %s89
      %p103 = scmp.eq.s32.totalorder %s41, 7
      %p104 = por %p102, %p103
      %p106 = scmp.ne.s32.totalorder %s89, %s105
      %p107 = scmp.eq.s32.totalorder %s41, 0
      %p108 = por %p106, %p107
      %s110 = sadd.s32 %s109, 1
      %p113 = scmp.eq.s32.totalorder %s35, 7
      %p114 = scmp.ne.s32.totalorder %s109, %s111
      %p115 = scmp.eq.s32.totalorder %s35, 0
      %p116 = por %p114, %p115
      %p117 = scmp.ne.s32.totalorder %s109, %s111
      %p118 = scmp.eq.s32.totalorder %s40, 7
      %p119 = por %p117, %p118
      %p120 = scmp.ne.s32.totalorder %s111, %s112
      %p121 = scmp.eq.s32.totalorder %s40, 0
      %p122 = por %p120, %p121
      %p123 = scmp.ne.s32.totalorder %s111, %s112
      %p124 = scmp.eq.s32.totalorder %s41, 7
      %p125 = por %p123, %p124
      %p127 = scmp.ne.s32.totalorder %s112, %s126
      %p128 = scmp.eq.s32.totalorder %s41, 0
      %p129 = por %p127, %p128
      %s131 = sadd.s32 %s130, 1
      %p134 = scmp.eq.s32.totalorder %s35, 7
      %p135 = scmp.ne.s32.totalorder %s130, %s132
      %p136 = scmp.eq.s32.totalorder %s35, 0
      %p137 = por %p135, %p136
      %p138 = scmp.ne.s32.totalorder %s130, %s132
      %p139 = scmp.eq.s32.totalorder %s40, 7
      %p140 = por %p138, %p139
      %p141 = scmp.ne.s32.totalorder %s132, %s133
      %p142 = scmp.eq.s32.totalorder %s40, 0
      %p143 = por %p141, %p142
      %p144 = scmp.ne.s32.totalorder %s132, %s133
      %p145 = scmp.eq.s32.totalorder %s41, 7
      %p146 = por %p144, %p145
      %p148 = scmp.ne.s32.totalorder %s133, %s147
      %p149 = scmp.eq.s32.totalorder %s41, 0
      %p150 = por %p148, %p149
      %s152 = sadd.s32 %s151, 1
      %p155 = scmp.eq.s32.totalorder %s35, 7
      %p156 = scmp.ne.s32.totalorder %s151, %s153
      %p157 = scmp.eq.s32.totalorder %s35, 0
      %p158 = por %p156, %p157
      %p159 = scmp.ne.s32.totalorder %s151, %s153
      %p160 = scmp.eq.s32.totalorder %s40, 7
      %p161 = por %p159, %p160
      %p162 = scmp.ne.s32.totalorder %s153, %s154
      %p163 = scmp.eq.s32.totalorder %s40, 0
      %p164 = por %p162, %p163
      %p165 = scmp.ne.s32.totalorder %s153, %s154
      %p166 = scmp.eq.s32.totalorder %s41, 7
      %p167 = por %p165, %p166
      %p169 = scmp.ne.s32.totalorder %s154, %s168
      %p170 = scmp.eq.s32.totalorder %s41, 0
      %p171 = por %p169, %p170
      %s173 = sadd.s32 %s172, 1
      %p176 = scmp.eq.s32.totalorder %s35, 7
      %p177 = scmp.ne.s32.totalorder %s172, %s174
      %p178 = scmp.eq.s32.totalorder %s35, 0
      %p179 = por %p177, %p178
      %p180 = scmp.ne.s32.totalorder %s172, %s174
      %p181 = scmp.eq.s32.totalorder %s40, 7
      %p182 = por %p180, %p181
      %p183 = scmp.ne.s32.totalorder %s174, %s175
      %p184 = scmp.eq.s32.totalorder %s40, 0
      %p185 = por %p183, %p184
      %p186 = scmp.ne.s32.totalorder %s174, %s175
      %p187 = scmp.eq.s32.totalorder %s41, 7
      %p188 = por %p186, %p187
      %p190 = scmp.ne.s32.totalorder %s175, %s189
      %p191 = scmp.eq.s32.totalorder %s41, 0
      %p192 = por %p190, %p191
      %s194 = sadd.s32 %s193, 1
      %p197 = scmp.eq.s32.totalorder %s35, 7
      %p198 = scmp.ne.s32.totalorder %s193, %s195
      %p199 = scmp.eq.s32.totalorder %s35, 0
      %p200 = por %p198, %p199
      %p201 = scmp.ne.s32.totalorder %s193, %s195
      %p202 = scmp.eq.s32.totalorder %s40, 7
      %p203 = por %p201, %p202
      %p204 = scmp.ne.s32.totalorder %s195, %s196
      %p205 = scmp.eq.s32.totalorder %s40, 0
      %p206 = por %p204, %p205
      %p207 = scmp.ne.s32.totalorder %s195, %s196
      %p208 = scmp.eq.s32.totalorder %s41, 7
      %p209 = por %p207, %p208
      %p211 = scmp.ne.s32.totalorder %s196, %s210
      %p212 = scmp.eq.s32.totalorder %s41, 0
      %p213 = por %p211, %p212
      %s215 = sadd.s32 %s214, 1
      %p218 = scmp.eq.s32.totalorder %s35, 7
      %p219 = scmp.ne.s32.totalorder %s214, %s216
      %p220 = scmp.eq.s32.totalorder %s35, 0
      %p221 = por %p219, %p220
      %p222 = scmp.ne.s32.totalorder %s214, %s216
      %p223 = scmp.eq.s32.totalorder %s40, 7
      %p224 = por %p222, %p223
      %p225 = scmp.ne.s32.totalorder %s216, %s217
      %p226 = scmp.eq.s32.totalorder %s40, 0
      %p227 = por %p225, %p226
      %p228 = scmp.ne.s32.totalorder %s216, %s217
      %p229 = scmp.eq.s32.totalorder %s41, 7
      %p230 = por %p228, %p229
      %p232 = scmp.ne.s32.totalorder %s217, %s231
      %p233 = scmp.eq.s32.totalorder %s41, 0
      %p234 = por %p232, %p233
      %s236 = sadd.s32 %s235, 1
      %p239 = scmp.eq.s32.totalorder %s35, 7
      %p240 = scmp.ne.s32.totalorder %s235, %s237
      %p241 = scmp.eq.s32.totalorder %s35, 0
      %p242 = por %p240, %p241
      %p243 = scmp.ne.s32.totalorder %s235, %s237
      %p244 = scmp.eq.s32.totalorder %s40, 7
      %p245 = por %p243, %p244
      %p246 = scmp.ne.s32.totalorder %s237, %s238
      %p247 = scmp.eq.s32.totalorder %s40, 0
      %p248 = por %p246, %p247
      %p249 = scmp.ne.s32.totalorder %s237, %s238
      %p250 = scmp.eq.s32.totalorder %s41, 7
      %p251 = por %p249, %p250
      %p253 = scmp.ne.s32.totalorder %s238, %s252
      %p254 = scmp.eq.s32.totalorder %s41, 0
      %p255 = por %p253, %p254
      %s257 = sadd.s32 %s256, 1
      %p260 = scmp.eq.s32.totalorder %s35, 7
      %p261 = scmp.ne.s32.totalorder %s256, %s258
      %p262 = scmp.eq.s32.totalorder %s35, 0
      %p263 = por %p261, %p262
      %p264 = scmp.ne.s32.totalorder %s256, %s258
      %p265 = scmp.eq.s32.totalorder %s40, 7
      %p266 = por %p264, %p265
      %p267 = scmp.ne.s32.totalorder %s258, %s259
      %p268 = scmp.eq.s32.totalorder %s40, 0
      %p269 = por %p267, %p268
      %p270 = scmp.ne.s32.totalorder %s258, %s259
      %p271 = scmp.eq.s32.totalorder %s41, 7
      %p272 = por %p270, %p271
      %p274 = scmp.ne.s32.totalorder %s259, %s273
      %p275 = scmp.eq.s32.totalorder %s41, 0
      %p276 = por %p274, %p275
      %s278 = sadd.s32 %s277, 1
      %p281 = scmp.eq.s32.totalorder %s35, 7
      %p282 = scmp.ne.s32.totalorder %s277, %s279
      %p283 = scmp.eq.s32.totalorder %s35, 0
      %p284 = por %p282, %p283
      %p285 = scmp.ne.s32.totalorder %s277, %s279
      %p286 = scmp.eq.s32.totalorder %s40, 7
      %p287 = por %p285, %p286
      %p288 = scmp.ne.s32.totalorder %s279, %s280
      %p289 = scmp.eq.s32.totalorder %s40, 0
      %p290 = por %p288, %p289
      %p291 = scmp.ne.s32.totalorder %s279, %s280
      %p292 = scmp.eq.s32.totalorder %s41, 7
      %p293 = por %p291, %p292
      %p295 = scmp.ne.s32.totalorder %s280, %s294
      %p296 = scmp.eq.s32.totalorder %s41, 0
      %p297 = por %p295, %p296
      %s299 = sadd.s32 %s298, 1
      %p302 = scmp.eq.s32.totalorder %s35, 7
      %p303 = scmp.ne.s32.totalorder %s298, %s300
      %p304 = scmp.eq.s32.totalorder %s35, 0
      %p305 = por %p303, %p304
      %p306 = scmp.ne.s32.totalorder %s298, %s300
      %p307 = scmp.eq.s32.totalorder %s40, 7
      %p308 = por %p306, %p307
      %p309 = scmp.ne.s32.totalorder %s300, %s301
      %p310 = scmp.eq.s32.totalorder %s40, 0
      %p311 = por %p309, %p310
      %p312 = scmp.ne.s32.totalorder %s300, %s301
      %p313 = scmp.eq.s32.totalorder %s41, 7
      %p314 = por %p312, %p313
      %p316 = scmp.ne.s32.totalorder %s301, %s315
      %p317 = scmp.eq.s32.totalorder %s41, 0
      %p318 = por %p316, %p317
      %s320 = sadd.s32 %s319, 1
      %p323 = scmp.eq.s32.totalorder %s35, 7
      %p324 = scmp.ne.s32.totalorder %s319, %s321
      %p325 = scmp.eq.s32.totalorder %s35, 0
      %p326 = por %p324, %p325
      %p327 = scmp.ne.s32.totalorder %s319, %s321
      %p328 = scmp.eq.s32.totalorder %s40, 7
      %p329 = por %p327, %p328
      %p330 = scmp.ne.s32.totalorder %s321, %s322
      %p331 = scmp.eq.s32.totalorder %s40, 0
      %p332 = por %p330, %p331
      %p333 = scmp.ne.s32.totalorder %s321, %s322
      %p334 = scmp.eq.s32.totalorder %s41, 7
      %p335 = por %p333, %p334
      %p337 = scmp.ne.s32.totalorder %s322, %s336
      %p338 = scmp.eq.s32.totalorder %s41, 0
      %p339 = por %p337, %p338
      %s341 = sadd.s32 %s340, 1
      %p344 = scmp.eq.s32.totalorder %s35, 7
      %p345 = scmp.ne.s32.totalorder %s340, %s342
      %p346 = scmp.eq.s32.totalorder %s35, 0
      %p347 = por %p345, %p346
      %p348 = scmp.ne.s32.totalorder %s340, %s342
      %p349 = scmp.eq.s32.totalorder %s40, 7
      %p350 = por %p348, %p349
      %p351 = scmp.ne.s32.totalorder %s342, %s343
      %p352 = scmp.eq.s32.totalorder %s40, 0
      %p353 = por %p351, %p352
      %p354 = scmp.ne.s32.totalorder %s342, %s343
      %p355 = scmp.eq.s32.totalorder %s41, 7
      %p356 = por %p354, %p355
      %p358 = scmp.ne.s32.totalorder %s343, %s357
      %p359 = scmp.eq.s32.totalorder %s41, 0
      %p360 = por %p358, %p359
      %s361 = ssub.s32 %s43, %s50
      %s362 = ssub.s32 %s42, %s54
      %s363 = sor.u32 %s361, %s362
      %p364 = scmp.eq.s32.totalorder %s363, 0
      %s366 = sadd.s32 %s365, 1
      %s367 = scalar_select %p364, %s365, %s366
      %p370 = pneg %p364
      %p371 = scmp.eq.s32.totalorder %s35, 7
      %p372 = por %p370, %p371
      %p373 = scmp.ne.s32.totalorder %s365, %s368
      %p374 = scmp.eq.s32.totalorder %s35, 0
      %p375 = por %p373, %p374
      %p376 = scmp.ne.s32.totalorder %s365, %s368
      %p377 = scmp.eq.s32.totalorder %s40, 7
      %p378 = por %p376, %p377
      %p379 = scmp.ne.s32.totalorder %s368, %s369
      %p380 = scmp.eq.s32.totalorder %s40, 0
      %p381 = por %p379, %p380
      %p382 = scmp.ne.s32.totalorder %s368, %s369
      %p383 = scmp.eq.s32.totalorder %s41, 7
      %p384 = por %p382, %p383
      %p386 = scmp.ne.s32.totalorder %s369, %s385
      %p387 = scmp.eq.s32.totalorder %s41, 0
      %p388 = por %p386, %p387
      %s389 = ssub.s32 %s43, %s50
      %s390 = ssub.s32 %s42, %s54
      %s391 = sor.u32 %s389, %s390
      %p392 = scmp.eq.s32.totalorder %s391, 0
      %s394 = sadd.s32 %s393, 1
      %s395 = scalar_select %p392, %s393, %s394
      %p398 = pneg %p392
      %p399 = scmp.eq.s32.totalorder %s35, 7
      %p400 = por %p398, %p399
      %p401 = scmp.ne.s32.totalorder %s393, %s396
      %p402 = scmp.eq.s32.totalorder %s35, 0
      %p403 = por %p401, %p402
      %p404 = scmp.ne.s32.totalorder %s393, %s396
      %p405 = scmp.eq.s32.totalorder %s40, 7
      %p406 = por %p404, %p405
      %p407 = scmp.ne.s32.totalorder %s396, %s397
      %p408 = scmp.eq.s32.totalorder %s40, 0
      %p409 = por %p407, %p408
      %p410 = scmp.ne.s32.totalorder %s396, %s397
      %p411 = scmp.eq.s32.totalorder %s41, 7
      %p412 = por %p410, %p411
      %p414 = scmp.ne.s32.totalorder %s397, %s413
      %p415 = scmp.eq.s32.totalorder %s41, 0
      %p416 = por %p414, %p415
      %p417 = scmp.le.s32.totalorder 1, %s35
      %p418 = scmp.lt.s32.totalorder %s35, 9
      %p419 = pnand %p417, %p418
      %p420 = pneg %p419
      // Predicated region
      $region9: #{tpu_custom_call.1} parent=5 // pred_check
        _
      $region10: #{tpu_custom_call.1} parent=5 // pred_check_branch
        %422 = sbr.rel (%p419) target = $region12
      $region11: #{tpu_custom_call.1} parent=5 // pred_region
        %s423 = ssub.s32 %s35, 1
        // Predicated region
        $region13: #{tpu_custom_call.1} parent=11 // pred_check
          %p424 = pneg %p122
        $region14: #{tpu_custom_call.1} parent=11 // pred_check_branch
          %426 = sbr.rel (%p424) target = $region16
        $region15: #{tpu_custom_call.1} parent=11 // pred_region
          %s428 = ssub.s32 512, 512
          %429 = vsyncadd [#allocation10], %s428
          %s430 = sshll.u32 [#allocation11], 4
          %s431 = int_to_ptr.vmem [resolvable:$true] %s430
          %436 = dma.hbm_to_vmem [thread:$0]  %s2, 512, %s431, [#allocation10], 128, 128, 8
        $region16: #{tpu_custom_call.1} parent=11 // pred_fallthru
          _
        // Predicated region
        $region17: #{tpu_custom_call.1} parent=11 // pred_check
          %p437 = pneg %p143
        $region18: #{tpu_custom_call.1} parent=11 // pred_check_branch
          %439 = sbr.rel (%p437) target = $region20
        $region19: #{tpu_custom_call.1} parent=11 // pred_region
          _
        $region20: #{tpu_custom_call.1} parent=11 // pred_fallthru
          _
        // Predicated region
        $region21: #{tpu_custom_call.1} parent=11 // pred_check
          %p440 = pneg %p164
        $region22: #{tpu_custom_call.1} parent=11 // pred_check_branch
          %442 = sbr.rel (%p440) target = $region24
        $region23: #{tpu_custom_call.1} parent=11 // pred_region
          _
        $region24: #{tpu_custom_call.1} parent=11 // pred_fallthru
          _
        // Predicated region
        $region25: #{tpu_custom_call.1} parent=11 // pred_check
          %p443 = pneg %p185
        $region26: #{tpu_custom_call.1} parent=11 // pred_check_branch
          %445 = sbr.rel (%p443) target = $region28
        $region27: #{tpu_custom_call.1} parent=11 // pred_region
          _
        $region28: #{tpu_custom_call.1} parent=11 // pred_fallthru
          _
        // Predicated region
        $region29: #{tpu_custom_call.1} parent=11 // pred_check
          %p446 = pneg %p206
        $region30: #{tpu_custom_call.1} parent=11 // pred_check_branch
          %448 = sbr.rel (%p446) target = $region32
        $region31: #{tpu_custom_call.1} parent=11 // pred_region
          %s450 = ssub.s32 2048, 2048
          %451 = vsyncadd [#allocation13], %s450
          %s452 = sshll.u32 [#allocation12], 4
          %s453 = int_to_ptr.vmem [resolvable:$true] %s452
          %458 = dma.hbm_to_vmem [thread:$0]  %s6, 2048, %s453, [#allocation13], 128, 128, 8
        $region32: #{tpu_custom_call.1} parent=11 // pred_fallthru
          _
        // Predicated region
        $region33: #{tpu_custom_call.1} parent=11 // pred_check
          %p459 = pneg %p227
        $region34: #{tpu_custom_call.1} parent=11 // pred_check_branch
          %461 = sbr.rel (%p459) target = $region36
        $region35: #{tpu_custom_call.1} parent=11 // pred_region
          _
        $region36: #{tpu_custom_call.1} parent=11 // pred_fallthru
          _
        // Predicated region
        $region37: #{tpu_custom_call.1} parent=11 // pred_check
          %p462 = pneg %p248
        $region38: #{tpu_custom_call.1} parent=11 // pred_check_branch
          %464 = sbr.rel (%p462) target = $region40
        $region39: #{tpu_custom_call.1} parent=11 // pred_region
          _
        $region40: #{tpu_custom_call.1} parent=11 // pred_fallthru
          _
        // Predicated region
        $region41: #{tpu_custom_call.1} parent=11 // pred_check
          %p465 = pneg %p269
        $region42: #{tpu_custom_call.1} parent=11 // pred_check_branch
          %467 = sbr.rel (%p465) target = $region44
        $region43: #{tpu_custom_call.1} parent=11 // pred_region
          _
        $region44: #{tpu_custom_call.1} parent=11 // pred_fallthru
          _
        // Predicated region
        $region45: #{tpu_custom_call.1} parent=11 // pred_check
          %p468 = pneg %p290
        $region46: #{tpu_custom_call.1} parent=11 // pred_check_branch
          %470 = sbr.rel (%p468) target = $region48
        $region47: #{tpu_custom_call.1} parent=11 // pred_region
          _
        $region48: #{tpu_custom_call.1} parent=11 // pred_fallthru
          _
        // Predicated region
        $region49: #{tpu_custom_call.1} parent=11 // pred_check
          %p471 = pneg %p311
        $region50: #{tpu_custom_call.1} parent=11 // pred_check_branch
          %473 = sbr.rel (%p471) target = $region52
        $region51: #{tpu_custom_call.1} parent=11 // pred_region
          _
        $region52: #{tpu_custom_call.1} parent=11 // pred_fallthru
          _
        // Predicated region
        $region53: #{tpu_custom_call.1} parent=11 // pred_check
          %p474 = pneg %p332
        $region54: #{tpu_custom_call.1} parent=11 // pred_check_branch
          %476 = sbr.rel (%p474) target = $region56
        $region55: #{tpu_custom_call.1} parent=11 // pred_region
          _
        $region56: #{tpu_custom_call.1} parent=11 // pred_fallthru
          _
        // Predicated region
        $region57: #{tpu_custom_call.1} parent=11 // pred_check
          %p477 = pneg %p353
        $region58: #{tpu_custom_call.1} parent=11 // pred_check_branch
          %479 = sbr.rel (%p477) target = $region60
        $region59: #{tpu_custom_call.1} parent=11 // pred_region
          _
        $region60: #{tpu_custom_call.1} parent=11 // pred_fallthru
          _
      $region12: #{tpu_custom_call.1} parent=5 // pred_fallthru
        _
      %p480 = scmp.lt.s32.totalorder %s35, 8
      // Predicated region
      $region61: #{tpu_custom_call.1} parent=5 // pred_check
        %p481 = pneg %p480
      $region62: #{tpu_custom_call.1} parent=5 // pred_check_branch
        %483 = sbr.rel (%p481) target = $region64
      $region63: #{tpu_custom_call.1} parent=5 // pred_region
        // Predicated region
        $region65: #{tpu_custom_call.1} parent=63 // pred_check
          %p484 = pneg %p69
        $region66: #{tpu_custom_call.1} parent=63 // pred_check_branch
          %486 = sbr.rel (%p484) target = $region68
        $region67: #{tpu_custom_call.1} parent=63 // pred_region
          %s487 = sand.u32 %s59, 1
          %s488 = scalar_lea.sflag [#allocation7], %s487
          %s489 = sand.u32 %s59, 1
          %s490 = smul.addr %s489, 32
          %s491 = scalar_lea.vmem [#allocation6], %s490
          %s492 = smul.u32 8, %s43
          %s494 = ssub.s32 512, 512
          %495 = vsyncadd %s488, %s494
          %s496 = smul.addr %s492, 2
          %s497 = sadd.s32 %s42, %s496
          %s498 = smul.addr %s497, 64
          %s499 = scalar_lea.hbm %s0, %s498
          %s500 = sshll.u32 %s491, 4
          %s501 = int_to_ptr.vmem [resolvable:$true] %s500
          %506 = dma.hbm_to_vmem [thread:$0]  %s499, 512, %s501, %s488, 128, 64, 4
        $region68: #{tpu_custom_call.1} parent=63 // pred_fallthru
          _
        // Predicated region
        $region69: #{tpu_custom_call.1} parent=63 // pred_check
          %p507 = pneg %p95
        $region70: #{tpu_custom_call.1} parent=63 // pred_check_branch
          %509 = sbr.rel (%p507) target = $region72
        $region71: #{tpu_custom_call.1} parent=63 // pred_region
          %s510 = sand.u32 %s35, 1
          %s511 = scalar_lea.sflag [#allocation10], %s510
          %s512 = sand.u32 %s85, 1
          %s513 = smul.addr %s512, 8
          %s514 = scalar_lea.vmem [#allocation9], %s513
          %s516 = ssub.s32 128, 128
          %517 = vsyncadd %s511, %s516
          %s518 = smul.addr %s42, 128
          %s519 = scalar_lea.hbm %s1, %s518
          %s521 = sshll.u32 %s514, 4
          %s522 = int_to_ptr.vmem [resolvable:$true] %s521
          %524 = dma.hbm_to_vmem [thread:$0]  %s519, 128, %s522, %s511
        $region72: #{tpu_custom_call.1} parent=63 // pred_fallthru
          _
      $region64: #{tpu_custom_call.1} parent=5 // pred_fallthru
        _
      %p525 = scmp.le.s32.totalorder 1, %s35
      %p526 = scmp.lt.s32.totalorder %s35, 9
      %p527 = pnand %p525, %p526
      %p528 = pneg %p527
      // Predicated region
      $region73: #{tpu_custom_call.1} parent=5 // pred_check
        _
      $region74: #{tpu_custom_call.1} parent=5 // pred_check_branch
        %530 = sbr.rel (%p527) target = $region76
      $region75: #{tpu_custom_call.1} parent=5 // pred_region
        %s531 = ssub.s32 %s35, 1
        %s532 = sand.u32 %s62, 1
        %s533 = scalar_lea.sflag [#allocation7], %s532
        %s534 = sand.u32 %s62, 1
        %s535 = smul.addr %s534, 32
        %s536 = scalar_lea.vmem [#allocation6], %s535
        // Predicated region
        $region77: #{tpu_custom_call.1} parent=75 // pred_check
          %p537 = pneg %p75
        $region78: #{tpu_custom_call.1} parent=75 // pred_check_branch
          %539 = sbr.rel (%p537) target = $region80
        $region79: #{tpu_custom_call.1} parent=75 // pred_region
          %540 = dma.done %s533, 512
        $region80: #{tpu_custom_call.1} parent=75 // pred_fallthru
          _
        %s541 = sand.u32 %s40, 1
        %s542 = scalar_lea.sflag [#allocation10], %s541
        %s543 = sand.u32 %s88, 1
        %s544 = smul.addr %s543, 8
        %s545 = scalar_lea.vmem [#allocation9], %s544
        // Predicated region
        $region81: #{tpu_custom_call.1} parent=75 // pred_check
          %p546 = pneg %p101
        $region82: #{tpu_custom_call.1} parent=75 // pred_check_branch
          %548 = sbr.rel (%p546) target = $region84
        $region83: #{tpu_custom_call.1} parent=75 // pred_region
          %549 = dma.done %s542, 128
        $region84: #{tpu_custom_call.1} parent=75 // pred_fallthru
          _
        // Predicated region
        $region85: #{tpu_custom_call.1} parent=75 // pred_check
          %p550 = pneg %p122
        $region86: #{tpu_custom_call.1} parent=75 // pred_check_branch
          %552 = sbr.rel (%p550) target = $region88
        $region87: #{tpu_custom_call.1} parent=75 // pred_region
          %553 = dma.done [#allocation10], 512
        $region88: #{tpu_custom_call.1} parent=75 // pred_fallthru
          _
        // Predicated region
        $region89: #{tpu_custom_call.1} parent=75 // pred_check
          %p554 = pneg %p206
        $region90: #{tpu_custom_call.1} parent=75 // pred_check_branch
          %556 = sbr.rel (%p554) target = $region92
        $region91: #{tpu_custom_call.1} parent=75 // pred_region
          %557 = dma.done [#allocation13], 2048
        $region92: #{tpu_custom_call.1} parent=75 // pred_fallthru
          _
        %s558 = sand.u32 %s62, 1
        %s559 = scalar_lea.sflag [#allocation7], %s558
        %s560 = sand.u32 %s62, 1
        %s561 = smul.addr %s560, 32
        %s562 = scalar_lea.vmem [#allocation6], %s561
        %p563 = pneg %p75
        %p564 = pneg %p72
        %s565 = sand.u32 %s40, 1
        %s566 = scalar_lea.sflag [#allocation10], %s565
        %s567 = sand.u32 %s88, 1
        %s568 = smul.addr %s567, 8
        %s569 = scalar_lea.vmem [#allocation9], %s568
        %p570 = pneg %p101
        %p571 = pneg %p98
        %p572 = pneg %p122
        %p573 = pneg %p119
        %p574 = pneg %p143
        %p575 = pneg %p140
        %p576 = pneg %p164
        %p577 = pneg %p161
        %p578 = pneg %p185
        %p579 = pneg %p182
        %p580 = pneg %p206
        %p581 = pneg %p203
        %p582 = pneg %p227
        %p583 = pneg %p224
        %p584 = pneg %p248
        %p585 = pneg %p245
        %p586 = pneg %p269
        %p587 = pneg %p266
        %p588 = pneg %p290
        %p589 = pneg %p287
        %p590 = pneg %p311
        %p591 = pneg %p308
        %p592 = pneg %p332
        %p593 = pneg %p329
        %p594 = pneg %p353
        %p595 = pneg %p350
        %p596 = pneg %p381
        %p597 = pneg %p378
        %s598 = sand.u32 %s368, 1
        %s599 = scalar_lea.sflag [#allocation8], %s598
        %s600 = sand.u32 %s368, 1
        %s601 = smul.addr %s600, 64
        %s602 = scalar_lea.vmem [#allocation14], %s601
        %p603 = pneg %p409
        %p604 = pneg %p406
        %s605 = sand.u32 %s396, 1
        %s606 = scalar_lea.sflag [#allocation16], %s605
        %s607 = sand.u32 %s396, 1
        %s608 = smul.addr %s607, 32
        %s609 = scalar_lea.vmem [#allocation15], %s608
        %s610 = smul.u32 8, %s45
        %s611 = smul.u32 8, %s45
        %s612 = smul.u32 8, %s45
        %p614 = scmp.eq.s32.totalorder %s45, 0
        // Predicated region
        $region93: #{tpu_custom_call.1} parent=75 // pred_check
          %p615 = pneg %p614
        $region94: #{tpu_custom_call.1} parent=75 // pred_check_branch
          %617 = sbr.rel (%p615) target = $region96
        $region95: #{tpu_custom_call.1} parent=75 // pred_region
          %v618 = vld [vmem:[%s545] sm:$0xff]
          %619 = vst [vmem:[#allocation2] sm:$0xff] %v618
          %620 = vst [vmem:[#allocation3] sm:$0xff] 0.0
          %621 = vst [vmem:[#allocation4] sm:$0xf] 0
        $region96: #{tpu_custom_call.1} parent=75 // pred_fallthru
          _
        %v622 = vld [vmem:[%s536] sm:$0xf]
        %v623 = vld [vmem:[%s536 + $0x4] sm:$0xf]
        %v624 = vld [vmem:[%s536 + $0x8] sm:$0xf]
        %v625 = vld [vmem:[%s536 + $0xc] sm:$0xf]
        %v626 = vld [vmem:[%s536 + $0x10] sm:$0xf]
        %v627 = vld [vmem:[%s536 + $0x14] sm:$0xf]
        %v628 = vld [vmem:[%s536 + $0x18] sm:$0xf]
        %v629 = vld [vmem:[%s536 + $0x1c] sm:$0xf]
        %v630 = vld [vmem:[#allocation11] sm:$0xff]
        %v631 = vld [vmem:[#allocation11 + $0x8] sm:$0xff]
        %v632 = vld [vmem:[#allocation11 + $0x10] sm:$0xff]
        %v633 = vld [vmem:[#allocation11 + $0x18] sm:$0xff]
        %v634 = vld [vmem:[%s3] sm:$0x3]
        %v636 = vlaneseq
        %v637 = vshrl.u32 %v636, 7
        %v638 = vsub.s32 0, %v637
        %v639 = vrot.slane %v634, %v638
        %v640 = vlaneseq
        %v641 = vshrl.u32 %v640, 7
        %v642 = vsub.s32 1, %v641
        %v643 = vrot.slane %v634, %v642
        %v654 = vunpack.c.l.b16 %v622
        %v655 = vunpack.c.l.b16 %v623
        %v656 = vunpack.c.l.b16 %v624
        %v657 = vunpack.c.l.b16 %v625
        %v658 = vunpack.c.l.b16 %v626
        %v659 = vunpack.c.l.b16 %v627
        %v660 = vunpack.c.l.b16 %v628
        %v661 = vunpack.c.l.b16 %v629
        %v662 = vpack.c.b16 %v655, %v654
        %v663 = vpack.c.b16 %v657, %v656
        %v664 = vpack.c.b16 %v659, %v658
        %v665 = vpack.c.b16 %v661, %v660
        %v670 = vunpack.c.l.b16 %v630
        %v671 = vunpack.c.h.b16 %v630
        %v672 = vunpack.c.l.b16 %v631
        %v673 = vunpack.c.h.b16 %v631
        %v674 = vunpack.c.l.b16 %v632
        %v675 = vunpack.c.h.b16 %v632
        %v676 = vunpack.c.l.b16 %v633
        %v677 = vunpack.c.h.b16 %v633
        %v678 = vpack.c.b16 %v672, %v670
        %v679 = vpack.c.b16 %v673, %v671
        %v680 = vpack.c.b16 %v676, %v674
        %v681 = vpack.c.b16 %v677, %v675
        %vm686 = vcmask 261120
        %v688 = vsel %vm686, %v662, 0
        %v691 = vsel %vm686, %v663, 0
        %v694 = vsel %vm686, %v664, 0
        %v697 = vsel %vm686, %v665, 0
        %699 = vmatprep.subr.bf16.mxu0 %v679
        %700 = vmatpush1.bf16.msra.mxu0 %v678
        %701 = vmatprep.subr.bf16.mxu0 %v681
        %702 = vmatpush1.bf16.msra.mxu0 %v680
        %703 = vmatprep.subr.bf16.mxu0 0
        %704 = vmatpush1.bf16.msra.mxu0 0
        %705 = vmatprep.subr.bf16.mxu0 0
        %706 = vmatpush1.bf16.msra.mxu0 0
        %707 = vmatprep.subr.bf16.mxu0 0
        %708 = vmatpush1.bf16.msra.mxu0 0
        %709 = vmatprep.subr.bf16.mxu0 0
        %710 = vmatpush1.bf16.msra.mxu0 0
        %711 = vmatprep.subr.bf16.mxu0 0
        %712 = vmatpush1.bf16.msra.mxu0 0
        %713 = vmatprep.subr.bf16.mxu0 0
        %714 = vmatpush1.bf16.msra.mxu0 0
        %715 = vmatprep.subr.bf16.mxu0 0
        %716 = vmatpush1.bf16.msra.mxu0 0
        %717 = vmatprep.subr.bf16.mxu0 0
        %718 = vmatpush1.bf16.msra.mxu0 0
        %719 = vmatprep.subr.bf16.mxu0 0
        %720 = vmatpush1.bf16.msra.mxu0 0
        %721 = vmatprep.subr.bf16.mxu0 0
        %722 = vmatpush1.bf16.msra.mxu0 0
        %723 = vmatprep.subr.bf16.mxu0 0
        %724 = vmatpush1.bf16.msra.mxu0 0
        %725 = vmatprep.subr.bf16.mxu0 0
        %726 = vmatpush1.bf16.msra.mxu0 0
        %727 = vmatprep.subr.bf16.mxu0 0
        %728 = vmatpush1.bf16.msra.mxu0 0
        %729 = vmatprep.subr.bf16.mxu0 0
        %730 = vmatpush1.bf16.msra.mxu0 0
        %731 = vmatprep.mubr.bf16.mxu0 0
        %732 = vmatmul.mubr.bf16.gmra.mrb[0].mxu0 %v688
        %v733 = vpop.f32.mrb[0].mxu0
        %v734 = vadd.f32 %v639, %v733
        %v735 = vpop.f32.mrb[0].mxu0
        %v736 = vadd.f32 %v643, %v735
        %v737 = vpop.f32.mrb[0].mxu0
        %v738 = vadd.f32 %v639, %v737
        %v739 = vpop.f32.mrb[0].mxu0
        %v740 = vadd.f32 %v643, %v739
        %741 = vmatprep.mubr.bf16.mxu0 0
        %742 = vmatmul.mubr.bf16.gmra.mrb[0].mxu0 %v691
        %v743 = vpop.f32.mrb[0].mxu0
        %v744 = vadd.f32 %v639, %v743
        %v745 = vpop.f32.mrb[0].mxu0
        %v746 = vadd.f32 %v643, %v745
        %v747 = vpop.f32.mrb[0].mxu0
        %v748 = vadd.f32 %v639, %v747
        %v749 = vpop.f32.mrb[0].mxu0
        %v750 = vadd.f32 %v643, %v749
        %751 = vmatprep.mubr.bf16.mxu0 0
        %752 = vmatmul.mubr.bf16.gmra.mrb[0].mxu0 %v694
        %v753 = vpop.f32.mrb[0].mxu0
        %v754 = vadd.f32 %v639, %v753
        %v755 = vpop.f32.mrb[0].mxu0
        %v756 = vadd.f32 %v643, %v755
        %v757 = vpop.f32.mrb[0].mxu0
        %v758 = vadd.f32 %v639, %v757
        %v759 = vpop.f32.mrb[0].mxu0
        %v760 = vadd.f32 %v643, %v759
        %761 = vmatprep.mubr.bf16.mxu0 0
        %762 = vmatmul.mubr.bf16.gmra.mrb[0].mxu0 %v697
        %v763 = vpop.f32.mrb[0].mxu0
        %v764 = vadd.f32 %v639, %v763
        %v765 = vpop.f32.mrb[0].mxu0
        %v766 = vadd.f32 %v643, %v765
        %v767 = vpop.f32.mrb[0].mxu0
        %v768 = vadd.f32 %v639, %v767
        %v769 = vpop.f32.mrb[0].mxu0
        %v770 = vadd.f32 %v643, %v769
        %771 = vdwg.mxu0
        %v772 = vld [vmem:[%s4] sm:$0x3]
        %v773 = vld [vmem:[%s5] sm:$0x3]
        %v774 = vadd.f32 %v734, %v736
        %775 = vadd.xlane.f32.xlu0 %v774
        %v776 = vpop.xlane.xlu0 %775
        %v777 = vadd.f32 %v738, %v740
        %778 = vadd.xlane.f32.xlu0 %v777
        %v779 = vpop.xlane.xlu0 %778
        %v780 = vadd.f32 %v744, %v746
        %781 = vadd.xlane.f32.xlu0 %v780
        %v782 = vpop.xlane.xlu0 %781
        %v783 = vadd.f32 %v748, %v750
        %784 = vadd.xlane.f32.xlu0 %v783
        %v785 = vpop.xlane.xlu0 %784
        %v786 = vadd.f32 %v754, %v756
        %787 = vadd.xlane.f32.xlu0 %v786
        %v788 = vpop.xlane.xlu0 %787
        %v789 = vadd.f32 %v758, %v760
        %790 = vadd.xlane.f32.xlu0 %v789
        %v791 = vpop.xlane.xlu0 %790
        %v792 = vadd.f32 %v764, %v766
        %793 = vadd.xlane.f32.xlu0 %v792
        %v794 = vpop.xlane.xlu0 %793
        %v795 = vadd.f32 %v768, %v770
        %796 = vadd.xlane.f32.xlu0 %v795
        %v797 = vpop.xlane.xlu0 %796
        %v798 = vrcp.pop 256.0
        %v799 = vmul.f32 %v776, %v798
        %v800 = vmul.f32 %v779, %v798
        %v801 = vmul.f32 %v782, %v798
        %v802 = vmul.f32 %v785, %v798
        %v803 = vmul.f32 %v788, %v798
        %v804 = vmul.f32 %v791, %v798
        %v805 = vmul.f32 %v794, %v798
        %v806 = vmul.f32 %v797, %v798
        %v807 = vsub.f32 %v734, %v799
        %v808 = vsub.f32 %v736, %v799
        %v809 = vsub.f32 %v738, %v800
        %v810 = vsub.f32 %v740, %v800
        %v811 = vsub.f32 %v744, %v801
        %v812 = vsub.f32 %v746, %v801
        %v813 = vsub.f32 %v748, %v802
        %v814 = vsub.f32 %v750, %v802
        %v815 = vsub.f32 %v754, %v803
        %v816 = vsub.f32 %v756, %v803
        %v817 = vsub.f32 %v758, %v804
        %v818 = vsub.f32 %v760, %v804
        %v819 = vsub.f32 %v764, %v805
        %v820 = vsub.f32 %v766, %v805
        %v821 = vsub.f32 %v768, %v806
        %v822 = vsub.f32 %v770, %v806
        %v823 = vmul.f32 %v807, %v807
        %v824 = vmul.f32 %v808, %v808
        %v825 = vmul.f32 %v809, %v809
        %v826 = vmul.f32 %v810, %v810
        %v827 = vmul.f32 %v811, %v811
        %v828 = vmul.f32 %v812, %v812
        %v829 = vmul.f32 %v813, %v813
        %v830 = vmul.f32 %v814, %v814
        %v831 = vmul.f32 %v815, %v815
        %v832 = vmul.f32 %v816, %v816
        %v833 = vmul.f32 %v817, %v817
        %v834 = vmul.f32 %v818, %v818
        %v835 = vmul.f32 %v819, %v819
        %v836 = vmul.f32 %v820, %v820
        %v837 = vmul.f32 %v821, %v821
        %v838 = vmul.f32 %v822, %v822
        %v839 = vadd.f32 %v823, %v824
        %840 = vadd.xlane.f32.xlu0 %v839
        %v841 = vpop.xlane.xlu0 %840
        %v842 = vadd.f32 %v825, %v826
        %843 = vadd.xlane.f32.xlu0 %v842
        %v844 = vpop.xlane.xlu0 %843
        %v845 = vadd.f32 %v827, %v828
        %846 = vadd.xlane.f32.xlu0 %v845
        %v847 = vpop.xlane.xlu0 %846
        %v848 = vadd.f32 %v829, %v830
        %849 = vadd.xlane.f32.xlu0 %v848
        %v850 = vpop.xlane.xlu0 %849
        %v851 = vadd.f32 %v831, %v832
        %852 = vadd.xlane.f32.xlu0 %v851
        %v853 = vpop.xlane.xlu0 %852
        %v854 = vadd.f32 %v833, %v834
        %855 = vadd.xlane.f32.xlu0 %v854
        %v856 = vpop.xlane.xlu0 %855
        %v857 = vadd.f32 %v835, %v836
        %858 = vadd.xlane.f32.xlu0 %v857
        %v859 = vpop.xlane.xlu0 %858
        %v860 = vadd.f32 %v837, %v838
        %861 = vadd.xlane.f32.xlu0 %v860
        %v862 = vpop.xlane.xlu0 %861
        %v863 = vmul.f32 %v841, %v798
        %v864 = vmul.f32 %v844, %v798
        %v865 = vmul.f32 %v847, %v798
        %v866 = vmul.f32 %v850, %v798
        %v867 = vmul.f32 %v853, %v798
        %v868 = vmul.f32 %v856, %v798
        %v869 = vmul.f32 %v859, %v798
        %v870 = vmul.f32 %v862, %v798
        %v871 = vadd.f32 %v863, 1e-05
        %v872 = vadd.f32 %v864, 1e-05
        %v873 = vadd.f32 %v865, 1e-05
        %v874 = vadd.f32 %v866, 1e-05
        %v875 = vadd.f32 %v867, 1e-05
        %v876 = vadd.f32 %v868, 1e-05
        %v877 = vadd.f32 %v869, 1e-05
        %v878 = vadd.f32 %v870, 1e-05
        %v879 = vrsqrt.pop %v871
        %v880 = vrsqrt.pop %v872
        %v881 = vrsqrt.pop %v873
        %v882 = vrsqrt.pop %v874
        %v883 = vrsqrt.pop %v875
        %v884 = vrsqrt.pop %v876
        %v885 = vrsqrt.pop %v877
        %v886 = vrsqrt.pop %v878
        %v887 = vmul.f32 %v807, %v879
        %v888 = vmul.f32 %v808, %v879
        %v889 = vmul.f32 %v809, %v880
        %v890 = vmul.f32 %v810, %v880
        %v891 = vmul.f32 %v811, %v881
        %v892 = vmul.f32 %v812, %v881
        %v893 = vmul.f32 %v813, %v882
        %v894 = vmul.f32 %v814, %v882
        %v895 = vmul.f32 %v815, %v883
        %v896 = vmul.f32 %v816, %v883
        %v897 = vmul.f32 %v817, %v884
        %v898 = vmul.f32 %v818, %v884
        %v899 = vmul.f32 %v819, %v885
        %v900 = vmul.f32 %v820, %v885
        %v901 = vmul.f32 %v821, %v886
        %v902 = vmul.f32 %v822, %v886
        %v904 = vlaneseq
        %v905 = vshrl.u32 %v904, 7
        %v906 = vsub.s32 0, %v905
        %v907 = vrot.slane %v772, %v906
        %v908 = vlaneseq
        %v909 = vshrl.u32 %v908, 7
        %v910 = vsub.s32 1, %v909
        %v911 = vrot.slane %v772, %v910
        %v914 = vmul.f32 %v887, %v907
        %v915 = vmul.f32 %v888, %v911
        %v916 = vmul.f32 %v889, %v907
        %v917 = vmul.f32 %v890, %v911
        %v918 = vmul.f32 %v891, %v907
        %v919 = vmul.f32 %v892, %v911
        %v920 = vmul.f32 %v893, %v907
        %v921 = vmul.f32 %v894, %v911
        %v922 = vmul.f32 %v895, %v907
        %v923 = vmul.f32 %v896, %v911
        %v924 = vmul.f32 %v897, %v907
        %v925 = vmul.f32 %v898, %v911
        %v926 = vmul.f32 %v899, %v907
        %v927 = vmul.f32 %v900, %v911
        %v928 = vmul.f32 %v901, %v907
        %v929 = vmul.f32 %v902, %v911
        %v931 = vlaneseq
        %v932 = vshrl.u32 %v931, 7
        %v933 = vsub.s32 0, %v932
        %v934 = vrot.slane %v773, %v933
        %v935 = vlaneseq
        %v936 = vshrl.u32 %v935, 7
        %v937 = vsub.s32 1, %v936
        %v938 = vrot.slane %v773, %v937
        %v941 = vadd.f32 %v914, %v934
        %v942 = vadd.f32 %v915, %v938
        %v943 = vadd.f32 %v916, %v934
        %v944 = vadd.f32 %v917, %v938
        %v945 = vadd.f32 %v918, %v934
        %v946 = vadd.f32 %v919, %v938
        %v947 = vadd.f32 %v920, %v934
        %v948 = vadd.f32 %v921, %v938
        %v949 = vadd.f32 %v922, %v934
        %v950 = vadd.f32 %v923, %v938
        %v951 = vadd.f32 %v924, %v934
        %v952 = vadd.f32 %v925, %v938
        %v953 = vadd.f32 %v926, %v934
        %v954 = vadd.f32 %v927, %v938
        %v955 = vadd.f32 %v928, %v934
        %v956 = vadd.f32 %v929, %v938
        %v957 = vadd.f32 %v941, %v942
        %v958 = vadd.f32 %v943, %v944
        %v959 = vadd.f32 %v945, %v946
        %v960 = vadd.f32 %v947, %v948
        %v961 = vadd.f32 %v949, %v950
        %v962 = vadd.f32 %v951, %v952
        %v963 = vadd.f32 %v953, %v954
        %v964 = vadd.f32 %v955, %v956
        %965 = vst [vmem:[#allocation5] sm:$0xff] %v957
        %966 = vst [vmem:[#allocation5 + $0x8] sm:$0xff] %v958
        %967 = vst [vmem:[#allocation5 + $0x10] sm:$0xff] %v959
        %968 = vst [vmem:[#allocation5 + $0x18] sm:$0xff] %v960
        %969 = vst [vmem:[#allocation5 + $0x20] sm:$0xff] %v961
        %970 = vst [vmem:[#allocation5 + $0x28] sm:$0xff] %v962
        %971 = vst [vmem:[#allocation5 + $0x30] sm:$0xff] %v963
        %972 = vst [vmem:[#allocation5 + $0x38] sm:$0xff] %v964
        %v973 = vld [vmem:[%s10] sm:$0x1]
        %v974 = vld [vmem:[%s11] sm:$0x1]
        %v975 = vld [vmem:[%s12] sm:$0x1]
        %v976 = vld [vmem:[%s13] sm:$0x1]
        %v977 = vld [vmem:[#allocation12] sm:$0xff]
        %v978 = vld [vmem:[#allocation12 + $0x8] sm:$0xff]
        %v979 = vld [vmem:[#allocation12 + $0x10] sm:$0xff]
        %v980 = vld [vmem:[#allocation12 + $0x18] sm:$0xff]
        %v981 = vld [vmem:[#allocation12 + $0x20] sm:$0xff]
        %v982 = vld [vmem:[#allocation12 + $0x28] sm:$0xff]
        %v983 = vld [vmem:[#allocation12 + $0x30] sm:$0xff]
        %v984 = vld [vmem:[#allocation12 + $0x38] sm:$0xff]
        %v985 = vld [vmem:[#allocation12 + $0x40] sm:$0xff]
        %v986 = vld [vmem:[#allocation12 + $0x48] sm:$0xff]
        %v987 = vld [vmem:[#allocation12 + $0x50] sm:$0xff]
        %v988 = vld [vmem:[#allocation12 + $0x58] sm:$0xff]
        %v989 = vld [vmem:[#allocation12 + $0x60] sm:$0xff]
        %v990 = vld [vmem:[#allocation12 + $0x68] sm:$0xff]
        %v991 = vld [vmem:[#allocation12 + $0x70] sm:$0xff]
        %v992 = vld [vmem:[#allocation12 + $0x78] sm:$0xff]
        %v993 = vld [vmem:[%s7] sm:$0x3]
        %v994 = vld [vmem:[%s8] sm:$0x3]
        %v995 = vld [vmem:[%s9] sm:$0x3]
        %v996 = vld [vmem:[#allocation4] sm:$0xf]
        %v998 = vlaneseq
        %v999 = vshrl.u32 %v998, 7
        %v1000 = vsub.s32 0, %v999
        %v1001 = vrot.slane %v993, %v1000
        %v1002 = vlaneseq
        %v1003 = vshrl.u32 %v1002, 7
        %v1004 = vsub.s32 1, %v1003
        %v1005 = vrot.slane %v993, %v1004
        %v1024 = vunpack.c.l.b16 %v977
        %v1025 = vunpack.c.h.b16 %v977
        %v1026 = vunpack.c.l.b16 %v978
        %v1027 = vunpack.c.h.b16 %v978
        %v1028 = vunpack.c.l.b16 %v979
        %v1029 = vunpack.c.h.b16 %v979
        %v1030 = vunpack.c.l.b16 %v980
        %v1031 = vunpack.c.h.b16 %v980
        %v1032 = vunpack.c.l.b16 %v981
        %v1033 = vunpack.c.h.b16 %v981
        %v1034 = vunpack.c.l.b16 %v982
        %v1035 = vunpack.c.h.b16 %v982
        %v1036 = vunpack.c.l.b16 %v983
        %v1037 = vunpack.c.h.b16 %v983
        %v1038 = vunpack.c.l.b16 %v984
        %v1039 = vunpack.c.h.b16 %v984
        %v1040 = vunpack.c.l.b16 %v985
        %v1041 = vunpack.c.h.b16 %v985
        %v1042 = vunpack.c.l.b16 %v986
        %v1043 = vunpack.c.h.b16 %v986
        %v1044 = vunpack.c.l.b16 %v987
        %v1045 = vunpack.c.h.b16 %v987
        %v1046 = vunpack.c.l.b16 %v988
        %v1047 = vunpack.c.h.b16 %v988
        %v1048 = vunpack.c.l.b16 %v989
        %v1049 = vunpack.c.h.b16 %v989
        %v1050 = vunpack.c.l.b16 %v990
        %v1051 = vunpack.c.h.b16 %v990
        %v1052 = vunpack.c.l.b16 %v991
        %v1053 = vunpack.c.h.b16 %v991
        %v1054 = vunpack.c.l.b16 %v992
        %v1055 = vunpack.c.h.b16 %v992
        %v1056 = vpack.c.b16 %v1026, %v1024
        %v1057 = vpack.c.b16 %v1027, %v1025
        %v1058 = vpack.c.b16 %v1030, %v1028
        %v1059 = vpack.c.b16 %v1031, %v1029
        %v1060 = vpack.c.b16 %v1034, %v1032
        %v1061 = vpack.c.b16 %v1035, %v1033
        %v1062 = vpack.c.b16 %v1038, %v1036
        %v1063 = vpack.c.b16 %v1039, %v1037
        %v1064 = vpack.c.b16 %v1042, %v1040
        %v1065 = vpack.c.b16 %v1043, %v1041
        %v1066 = vpack.c.b16 %v1046, %v1044
        %v1067 = vpack.c.b16 %v1047, %v1045
        %v1068 = vpack.c.b16 %v1050, %v1048
        %v1069 = vpack.c.b16 %v1051, %v1049
        %v1070 = vpack.c.b16 %v1054, %v1052
        %v1071 = vpack.c.b16 %v1055, %v1053
        %1088 = vmatprep.subr.bf16.mxu0 %v1057
        %1089 = vmatpush1.bf16.msra.mxu0 %v1056
        %1090 = vmatprep.subr.bf16.mxu0 %v1059
        %1091 = vmatpush1.bf16.msra.mxu0 %v1058
        %1092 = vmatprep.subr.bf16.mxu0 %v1061
        %1093 = vmatpush1.bf16.msra.mxu0 %v1060
        %1094 = vmatprep.subr.bf16.mxu0 %v1063
        %1095 = vmatpush1.bf16.msra.mxu0 %v1062
        %1096 = vmatprep.subr.bf16.mxu0 %v1065
        %1097 = vmatpush1.bf16.msra.mxu0 %v1064
        %1098 = vmatprep.subr.bf16.mxu0 %v1067
        %1099 = vmatpush1.bf16.msra.mxu0 %v1066
        %1100 = vmatprep.subr.bf16.mxu0 %v1069
        %1101 = vmatpush1.bf16.msra.mxu0 %v1068
        %1102 = vmatprep.subr.bf16.mxu0 %v1071
        %1103 = vmatpush1.bf16.msra.mxu0 %v1070
        %1104 = vmatprep.subr.bf16.mxu0 0
        %1105 = vmatpush1.bf16.msra.mxu0 0
        %1106 = vmatprep.subr.bf16.mxu0 0
        %1107 = vmatpush1.bf16.msra.mxu0 0
        %1108 = vmatprep.subr.bf16.mxu0 0
        %1109 = vmatpush1.bf16.msra.mxu0 0
        %1110 = vmatprep.subr.bf16.mxu0 0
        %1111 = vmatpush1.bf16.msra.mxu0 0
        %1112 = vmatprep.subr.bf16.mxu0 0
        %1113 = vmatpush1.bf16.msra.mxu0 0
        %1114 = vmatprep.subr.bf16.mxu0 0
        %1115 = vmatpush1.bf16.msra.mxu0 0
        %1116 = vmatprep.subr.bf16.mxu0 0
        %1117 = vmatpush1.bf16.msra.mxu0 0
        %1118 = vmatprep.subr.bf16.mxu0 0
        %1119 = vmatpush1.bf16.msra.mxu0 0
        %1120 = vmatprep.mubr.bf16.mxu0 0
        %1121 = vmatmul.mubr.bf16.gmra.mrb[0].mxu0 %v996
        %v1122 = vpop.f32.mrb[0].mxu0
        %v1123 = vadd.f32 %v1001, %v1122
        %v1124 = vpop.f32.mrb[0].mxu0
        %v1125 = vadd.f32 %v1005, %v1124
        %v1126 = vpop.f32.mrb[0].mxu0
        %v1127 = vpop.f32.mrb[0].mxu0
        %1128 = vdwg.mxu0
        %v1129 = vadd.f32 %v1123, %v1125
        %1130 = vadd.xlane.f32.xlu0 %v1129
        %v1131 = vpop.xlane.xlu0 %1130
        %v1132 = vmul.f32 %v1131, 0.00390625
        %v1133 = vmul.f32 %v1123, %v1123
        %v1134 = vmul.f32 %v1125, %v1125
        %v1135 = vadd.f32 %v1133, %v1134
        %1136 = vadd.xlane.f32.xlu0 %v1135
        %v1137 = vpop.xlane.xlu0 %1136
        %v1138 = vmul.f32 %v1137, 0.00390625
        %v1139 = vmul.f32 %v1132, %v1132
        %v1140 = vsub.f32 %v1138, %v1139
        %v1141 = vmax.f32 %v1140, 0.0
        %v1142 = vsub.f32 %v1123, %v1132
        %v1143 = vsub.f32 %v1125, %v1132
        %v1144 = vadd.f32 %v1141, 1e-05
        %v1145 = vrsqrt.pop %v1144
        %v1146 = vmul.f32 %v1142, %v1145
        %v1147 = vmul.f32 %v1143, %v1145
        %v1149 = vlaneseq
        %v1150 = vshrl.u32 %v1149, 7
        %v1151 = vsub.s32 0, %v1150
        %v1152 = vrot.slane %v994, %v1151
        %v1153 = vlaneseq
        %v1154 = vshrl.u32 %v1153, 7
        %v1155 = vsub.s32 1, %v1154
        %v1156 = vrot.slane %v994, %v1155
        %v1159 = vmul.f32 %v1146, %v1152
        %v1160 = vmul.f32 %v1147, %v1156
        %v1162 = vlaneseq
        %v1163 = vshrl.u32 %v1162, 7
        %v1164 = vsub.s32 0, %v1163
        %v1165 = vrot.slane %v995, %v1164
        %v1166 = vlaneseq
        %v1167 = vshrl.u32 %v1166, 7
        %v1168 = vsub.s32 1, %v1167
        %v1169 = vrot.slane %v995, %v1168
        %v1172 = vadd.f32 %v1159, %v1165
        %v1173 = vadd.f32 %v1160, %v1169
        %v1174 = vadd.f32 %v1172, %v1173
        %v1175 = vld [vmem:[#allocation5] sm:$0xff]
        %v1176 = vadd.f32 %v1175, %v1174
        %v1177 = vld [vmem:[#allocation3] sm:$0xff]
        %v1179 = vlaneseq
        %v1180 = vshrl.u32 %v1179, 7
        %v1181 = vsub.s32 0, %v1180
        %v1182 = vrot.slane %v975, %v1181
        %v1184 = vmul.f32 %v1182, %v1177
        %v1186 = vlaneseq
        %v1187 = vshrl.u32 %v1186, 7
        %v1188 = vsub.s32 0, %v1187
        %v1189 = vrot.slane %v976, %v1188
        %v1191 = vmul.f32 %v1189, %v1176
        %v1192 = vadd.f32 %v1184, %v1191
        %v1193 = vld [vmem:[#allocation2] sm:$0xff]
        %v1195 = vlaneseq
        %v1196 = vshrl.u32 %v1195, 7
        %v1197 = vsub.s32 0, %v1196
        %v1198 = vrot.slane %v973, %v1197
        %v1200 = vmul.f32 %v1198, %v1193
        %v1202 = vlaneseq
        %v1203 = vshrl.u32 %v1202, 7
        %v1204 = vsub.s32 0, %v1203
        %v1205 = vrot.slane %v974, %v1204
        %v1207 = vmul.f32 %v1205, %v1192
        %v1208 = vadd.f32 %v1200, %v1207
        %vm1209 = vcmp.gt.f32.partialorder %v1208, 0.5
        %v1210 = vsel %vm1209, 1, 0
        %v1211 = vcvt.s32.f32 %v1210
        %v1212 = vpack.c.bf16 %v1211, %v1211
        %1213 = vst [vmem:[#allocation3] sm:$0xff] %v1192
        %1214 = vst [vmem:[#allocation2] sm:$0xff] %v1208
        %1215 = vst [vmem:[#allocation4] sm:$0xf] %v1212
        %1216 = vst [vmem:[%s602] sm:$0xff] %v1208
        %1217 = vst [vmem:[%s609] sm:$0xf] %v1212
        %v1218 = vld [vmem:[#allocation4] sm:$0xf]
        %1219 = vmatprep.subr.bf16.mxu0 %v1057
        %1220 = vmatpush1.bf16.msra.mxu0 %v1056
        %1221 = vmatprep.subr.bf16.mxu0 %v1059
        %1222 = vmatpush1.bf16.msra.mxu0 %v1058
        %1223 = vmatprep.subr.bf16.mxu0 %v1061
        %1224 = vmatpush1.bf16.msra.mxu0 %v1060
        %1225 = vmatprep.subr.bf16.mxu0 %v1063
        %1226 = vmatpush1.bf16.msra.mxu0 %v1062
        %1227 = vmatprep.subr.bf16.mxu0 %v1065
        %1228 = vmatpush1.bf16.msra.mxu0 %v1064
        %1229 = vmatprep.subr.bf16.mxu0 %v1067
        %1230 = vmatpush1.bf16.msra.mxu0 %v1066
        %1231 = vmatprep.subr.bf16.mxu0 %v1069
        %1232 = vmatpush1.bf16.msra.mxu0 %v1068
        %1233 = vmatprep.subr.bf16.mxu0 %v1071
        %1234 = vmatpush1.bf16.msra.mxu0 %v1070
        %1235 = vmatprep.subr.bf16.mxu0 0
        %1236 = vmatpush1.bf16.msra.mxu0 0
        %1237 = vmatprep.subr.bf16.mxu0 0
        %1238 = vmatpush1.bf16.msra.mxu0 0
        %1239 = vmatprep.subr.bf16.mxu0 0
        %1240 = vmatpush1.bf16.msra.mxu0 0
        %1241 = vmatprep.subr.bf16.mxu0 0
        %1242 = vmatpush1.bf16.msra.mxu0 0
        %1243 = vmatprep.subr.bf16.mxu0 0
        %1244 = vmatpush1.bf16.msra.mxu0 0
        %1245 = vmatprep.subr.bf16.mxu0 0
        %1246 = vmatpush1.bf16.msra.mxu0 0
        %1247 = vmatprep.subr.bf16.mxu0 0
        %1248 = vmatpush1.bf16.msra.mxu0 0
        %1249 = vmatprep.subr.bf16.mxu0 0
        %1250 = vmatpush1.bf16.msra.mxu0 0
        %1251 = vmatprep.mubr.bf16.mxu0 0
        %1252 = vmatmul.mubr.bf16.gmra.mrb[0].mxu0 %v1218
        %v1253 = vpop.f32.mrb[0].mxu0
        %v1254 = vadd.f32 %v1001, %v1253
        %v1255 = vpop.f32.mrb[0].mxu0
        %v1256 = vadd.f32 %v1005, %v1255
        %v1257 = vpop.f32.mrb[0].mxu0
        %v1258 = vpop.f32.mrb[0].mxu0
        %1259 = vdwg.mxu0
        %v1260 = vadd.f32 %v1254, %v1256
        %1261 = vadd.xlane.f32.xlu0 %v1260
        %v1262 = vpop.xlane.xlu0 %1261
        %v1263 = vmul.f32 %v1262, 0.00390625
        %v1264 = vmul.f32 %v1254, %v1254
        %v1265 = vmul.f32 %v1256, %v1256
        %v1266 = vadd.f32 %v1264, %v1265
        %1267 = vadd.xlane.f32.xlu0 %v1266
        %v1268 = vpop.xlane.xlu0 %1267
        %v1269 = vmul.f32 %v1268, 0.00390625
        %v1270 = vmul.f32 %v1263, %v1263
        %v1271 = vsub.f32 %v1269, %v1270
        %v1272 = vmax.f32 %v1271, 0.0
        %v1273 = vsub.f32 %v1254, %v1263
        %v1274 = vsub.f32 %v1256, %v1263
        %v1275 = vadd.f32 %v1272, 1e-05
        %v1276 = vrsqrt.pop %v1275
        %v1277 = vmul.f32 %v1273, %v1276
        %v1278 = vmul.f32 %v1274, %v1276
        %v1279 = vmul.f32 %v1277, %v1152
        %v1280 = vmul.f32 %v1278, %v1156
        %v1281 = vadd.f32 %v1279, %v1165
        %v1282 = vadd.f32 %v1280, %v1169
        %v1283 = vadd.f32 %v1281, %v1282
        %s1284 = scalar_lea.vmem [#allocation5], 8
        %v1285 = vld [vmem:[%s1284] sm:$0xff]
        %v1286 = vadd.f32 %v1285, %v1283
        %v1287 = vld [vmem:[#allocation3] sm:$0xff]
        %v1288 = vmul.f32 %v1182, %v1287
        %v1289 = vmul.f32 %v1189, %v1286
        %v1290 = vadd.f32 %v1288, %v1289
        %v1291 = vld [vmem:[#allocation2] sm:$0xff]
        %v1292 = vmul.f32 %v1198, %v1291
        %v1293 = vmul.f32 %v1205, %v1290
        %v1294 = vadd.f32 %v1292, %v1293
        %vm1295 = vcmp.gt.f32.partialorder %v1294, 0.5
        %v1296 = vsel %vm1295, 1, 0
        %v1297 = vcvt.s32.f32 %v1296
        %v1298 = vpack.c.bf16 %v1297, %v1297
        %1299 = vst [vmem:[#allocation3] sm:$0xff] %v1290
        %1300 = vst [vmem:[#allocation2] sm:$0xff] %v1294
        %1301 = vst [vmem:[#allocation4] sm:$0xf] %v1298
        %s1302 = scalar_lea.vmem %s602, 8 [#allocation14]
        %1303 = vst [vmem:[%s1302] sm:$0xff] %v1294
        %s1304 = scalar_lea.vmem %s609, 4 [#allocation15]
        %1305 = vst [vmem:[%s1304] sm:$0xf] %v1298
        %v1306 = vld [vmem:[#allocation4] sm:$0xf]
        %1307 = vmatprep.subr.bf16.mxu0 %v1057
        %1308 = vmatpush1.bf16.msra.mxu0 %v1056
        %1309 = vmatprep.subr.bf16.mxu0 %v1059
        %1310 = vmatpush1.bf16.msra.mxu0 %v1058
        %1311 = vmatprep.subr.bf16.mxu0 %v1061
        %1312 = vmatpush1.bf16.msra.mxu0 %v1060
        %1313 = vmatprep.subr.bf16.mxu0 %v1063
        %1314 = vmatpush1.bf16.msra.mxu0 %v1062
        %1315 = vmatprep.subr.bf16.mxu0 %v1065
        %1316 = vmatpush1.bf16.msra.mxu0 %v1064
        %1317 = vmatprep.subr.bf16.mxu0 %v1067
        %1318 = vmatpush1.bf16.msra.mxu0 %v1066
        %1319 = vmatprep.subr.bf16.mxu0 %v1069
        %1320 = vmatpush1.bf16.msra.mxu0 %v1068
        %1321 = vmatprep.subr.bf16.mxu0 %v1071
        %1322 = vmatpush1.bf16.msra.mxu0 %v1070
        %1323 = vmatprep.subr.bf16.mxu0 0
        %1324 = vmatpush1.bf16.msra.mxu0 0
        %1325 = vmatprep.subr.bf16.mxu0 0
        %1326 = vmatpush1.bf16.msra.mxu0 0
        %1327 = vmatprep.subr.bf16.mxu0 0
        %1328 = vmatpush1.bf16.msra.mxu0 0
        %1329 = vmatprep.subr.bf16.mxu0 0
        %1330 = vmatpush1.bf16.msra.mxu0 0
        %1331 = vmatprep.subr.bf16.mxu0 0
        %1332 = vmatpush1.bf16.msra.mxu0 0
        %1333 = vmatprep.subr.bf16.mxu0 0
        %1334 = vmatpush1.bf16.msra.mxu0 0
        %1335 = vmatprep.subr.bf16.mxu0 0
        %1336 = vmatpush1.bf16.msra.mxu0 0
        %1337 = vmatprep.subr.bf16.mxu0 0
        %1338 = vmatpush1.bf16.msra.mxu0 0
        %1339 = vmatprep.mubr.bf16.mxu0 0
        %1340 = vmatmul.mubr.bf16.gmra.mrb[0].mxu0 %v1306
        %v1341 = vpop.f32.mrb[0].mxu0
        %v1342 = vadd.f32 %v1001, %v1341
        %v1343 = vpop.f32.mrb[0].mxu0
        %v1344 = vadd.f32 %v1005, %v1343
        %v1345 = vpop.f32.mrb[0].mxu0
        %v1346 = vpop.f32.mrb[0].mxu0
        %1347 = vdwg.mxu0
        %v1348 = vadd.f32 %v1342, %v1344
        %1349 = vadd.xlane.f32.xlu0 %v1348
        %v1350 = vpop.xlane.xlu0 %1349
        %v1351 = vmul.f32 %v1350, 0.00390625
        %v1352 = vmul.f32 %v1342, %v1342
        %v1353 = vmul.f32 %v1344, %v1344
        %v1354 = vadd.f32 %v1352, %v1353
        %1355 = vadd.xlane.f32.xlu0 %v1354
        %v1356 = vpop.xlane.xlu0 %1355
        %v1357 = vmul.f32 %v1356, 0.00390625
        %v1358 = vmul.f32 %v1351, %v1351
        %v1359 = vsub.f32 %v1357, %v1358
        %v1360 = vmax.f32 %v1359, 0.0
        %v1361 = vsub.f32 %v1342, %v1351
        %v1362 = vsub.f32 %v1344, %v1351
        %v1363 = vadd.f32 %v1360, 1e-05
        %v1364 = vrsqrt.pop %v1363
        %v1365 = vmul.f32 %v1361, %v1364
        %v1366 = vmul.f32 %v1362, %v1364
        %v1367 = vmul.f32 %v1365, %v1152
        %v1368 = vmul.f32 %v1366, %v1156
        %v1369 = vadd.f32 %v1367, %v1165
        %v1370 = vadd.f32 %v1368, %v1169
        %v1371 = vadd.f32 %v1369, %v1370
        %s1372 = scalar_lea.vmem [#allocation5], 16
        %v1373 = vld [vmem:[%s1372] sm:$0xff]
        %v1374 = vadd.f32 %v1373, %v1371
        %v1375 = vld [vmem:[#allocation3] sm:$0xff]
        %v1376 = vmul.f32 %v1182, %v1375
        %v1377 = vmul.f32 %v1189, %v1374
        %v1378 = vadd.f32 %v1376, %v1377
        %v1379 = vld [vmem:[#allocation2] sm:$0xff]
        %v1380 = vmul.f32 %v1198, %v1379
        %v1381 = vmul.f32 %v1205, %v1378
        %v1382 = vadd.f32 %v1380, %v1381
        %vm1383 = vcmp.gt.f32.partialorder %v1382, 0.5
        %v1384 = vsel %vm1383, 1, 0
        %v1385 = vcvt.s32.f32 %v1384
        %v1386 = vpack.c.bf16 %v1385, %v1385
        %1387 = vst [vmem:[#allocation3] sm:$0xff] %v1378
        %1388 = vst [vmem:[#allocation2] sm:$0xff] %v1382
        %1389 = vst [vmem:[#allocation4] sm:$0xf] %v1386
        %s1390 = scalar_lea.vmem %s602, 16 [#allocation14]
        %1391 = vst [vmem:[%s1390] sm:$0xff] %v1382
        %s1392 = scalar_lea.vmem %s609, 8 [#allocation15]
        %1393 = vst [vmem:[%s1392] sm:$0xf] %v1386
        %v1394 = vld [vmem:[#allocation4] sm:$0xf]
        %1395 = vmatprep.subr.bf16.mxu0 %v1057
        %1396 = vmatpush1.bf16.msra.mxu0 %v1056
        %1397 = vmatprep.subr.bf16.mxu0 %v1059
        %1398 = vmatpush1.bf16.msra.mxu0 %v1058
        %1399 = vmatprep.subr.bf16.mxu0 %v1061
        %1400 = vmatpush1.bf16.msra.mxu0 %v1060
        %1401 = vmatprep.subr.bf16.mxu0 %v1063
        %1402 = vmatpush1.bf16.msra.mxu0 %v1062
        %1403 = vmatprep.subr.bf16.mxu0 %v1065
        %1404 = vmatpush1.bf16.msra.mxu0 %v1064
        %1405 = vmatprep.subr.bf16.mxu0 %v1067
        %1406 = vmatpush1.bf16.msra.mxu0 %v1066
        %1407 = vmatprep.subr.bf16.mxu0 %v1069
        %1408 = vmatpush1.bf16.msra.mxu0 %v1068
        %1409 = vmatprep.subr.bf16.mxu0 %v1071
        %1410 = vmatpush1.bf16.msra.mxu0 %v1070
        %1411 = vmatprep.subr.bf16.mxu0 0
        %1412 = vmatpush1.bf16.msra.mxu0 0
        %1413 = vmatprep.subr.bf16.mxu0 0
        %1414 = vmatpush1.bf16.msra.mxu0 0
        %1415 = vmatprep.subr.bf16.mxu0 0
        %1416 = vmatpush1.bf16.msra.mxu0 0
        %1417 = vmatprep.subr.bf16.mxu0 0
        %1418 = vmatpush1.bf16.msra.mxu0 0
        %1419 = vmatprep.subr.bf16.mxu0 0
        %1420 = vmatpush1.bf16.msra.mxu0 0
        %1421 = vmatprep.subr.bf16.mxu0 0
        %1422 = vmatpush1.bf16.msra.mxu0 0
        %1423 = vmatprep.subr.bf16.mxu0 0
        %1424 = vmatpush1.bf16.msra.mxu0 0
        %1425 = vmatprep.subr.bf16.mxu0 0
        %1426 = vmatpush1.bf16.msra.mxu0 0
        %1427 = vmatprep.mubr.bf16.mxu0 0
        %1428 = vmatmul.mubr.bf16.gmra.mrb[0].mxu0 %v1394
        %v1429 = vpop.f32.mrb[0].mxu0
        %v1430 = vadd.f32 %v1001, %v1429
        %v1431 = vpop.f32.mrb[0].mxu0
        %v1432 = vadd.f32 %v1005, %v1431
        %v1433 = vpop.f32.mrb[0].mxu0
        %v1434 = vpop.f32.mrb[0].mxu0
        %1435 = vdwg.mxu0
        %v1436 = vadd.f32 %v1430, %v1432
        %1437 = vadd.xlane.f32.xlu0 %v1436
        %v1438 = vpop.xlane.xlu0 %1437
        %v1439 = vmul.f32 %v1438, 0.00390625
        %v1440 = vmul.f32 %v1430, %v1430
        %v1441 = vmul.f32 %v1432, %v1432
        %v1442 = vadd.f32 %v1440, %v1441
        %1443 = vadd.xlane.f32.xlu0 %v1442
        %v1444 = vpop.xlane.xlu0 %1443
        %v1445 = vmul.f32 %v1444, 0.00390625
        %v1446 = vmul.f32 %v1439, %v1439
        %v1447 = vsub.f32 %v1445, %v1446
        %v1448 = vmax.f32 %v1447, 0.0
        %v1449 = vsub.f32 %v1430, %v1439
        %v1450 = vsub.f32 %v1432, %v1439
        %v1451 = vadd.f32 %v1448, 1e-05
        %v1452 = vrsqrt.pop %v1451
        %v1453 = vmul.f32 %v1449, %v1452
        %v1454 = vmul.f32 %v1450, %v1452
        %v1455 = vmul.f32 %v1453, %v1152
        %v1456 = vmul.f32 %v1454, %v1156
        %v1457 = vadd.f32 %v1455, %v1165
        %v1458 = vadd.f32 %v1456, %v1169
        %v1459 = vadd.f32 %v1457, %v1458
        %s1460 = scalar_lea.vmem [#allocation5], 24
        %v1461 = vld [vmem:[%s1460] sm:$0xff]
        %v1462 = vadd.f32 %v1461, %v1459
        %v1463 = vld [vmem:[#allocation3] sm:$0xff]
        %v1464 = vmul.f32 %v1182, %v1463
        %v1465 = vmul.f32 %v1189, %v1462
        %v1466 = vadd.f32 %v1464, %v1465
        %v1467 = vld [vmem:[#allocation2] sm:$0xff]
        %v1468 = vmul.f32 %v1198, %v1467
        %v1469 = vmul.f32 %v1205, %v1466
        %v1470 = vadd.f32 %v1468, %v1469
        %vm1471 = vcmp.gt.f32.partialorder %v1470, 0.5
        %v1472 = vsel %vm1471, 1, 0
        %v1473 = vcvt.s32.f32 %v1472
        %v1474 = vpack.c.bf16 %v1473, %v1473
        %1475 = vst [vmem:[#allocation3] sm:$0xff] %v1466
        %1476 = vst [vmem:[#allocation2] sm:$0xff] %v1470
        %1477 = vst [vmem:[#allocation4] sm:$0xf] %v1474
        %s1478 = scalar_lea.vmem %s602, 24 [#allocation14]
        %1479 = vst [vmem:[%s1478] sm:$0xff] %v1470
        %s1480 = scalar_lea.vmem %s609, 12 [#allocation15]
        %1481 = vst [vmem:[%s1480] sm:$0xf] %v1474
        %v1482 = vld [vmem:[#allocation4] sm:$0xf]
        %1483 = vmatprep.subr.bf16.mxu0 %v1057
        %1484 = vmatpush1.bf16.msra.mxu0 %v1056
        %1485 = vmatprep.subr.bf16.mxu0 %v1059
        %1486 = vmatpush1.bf16.msra.mxu0 %v1058
        %1487 = vmatprep.subr.bf16.mxu0 %v1061
        %1488 = vmatpush1.bf16.msra.mxu0 %v1060
        %1489 = vmatprep.subr.bf16.mxu0 %v1063
        %1490 = vmatpush1.bf16.msra.mxu0 %v1062
        %1491 = vmatprep.subr.bf16.mxu0 %v1065
        %1492 = vmatpush1.bf16.msra.mxu0 %v1064
        %1493 = vmatprep.subr.bf16.mxu0 %v1067
        %1494 = vmatpush1.bf16.msra.mxu0 %v1066
        %1495 = vmatprep.subr.bf16.mxu0 %v1069
        %1496 = vmatpush1.bf16.msra.mxu0 %v1068
        %1497 = vmatprep.subr.bf16.mxu0 %v1071
        %1498 = vmatpush1.bf16.msra.mxu0 %v1070
        %1499 = vmatprep.subr.bf16.mxu0 0
        %1500 = vmatpush1.bf16.msra.mxu0 0
        %1501 = vmatprep.subr.bf16.mxu0 0
        %1502 = vmatpush1.bf16.msra.mxu0 0
        %1503 = vmatprep.subr.bf16.mxu0 0
        %1504 = vmatpush1.bf16.msra.mxu0 0
        %1505 = vmatprep.subr.bf16.mxu0 0
        %1506 = vmatpush1.bf16.msra.mxu0 0
        %1507 = vmatprep.subr.bf16.mxu0 0
        %1508 = vmatpush1.bf16.msra.mxu0 0
        %1509 = vmatprep.subr.bf16.mxu0 0
        %1510 = vmatpush1.bf16.msra.mxu0 0
        %1511 = vmatprep.subr.bf16.mxu0 0
        %1512 = vmatpush1.bf16.msra.mxu0 0
        %1513 = vmatprep.subr.bf16.mxu0 0
        %1514 = vmatpush1.bf16.msra.mxu0 0
        %1515 = vmatprep.mubr.bf16.mxu0 0
        %1516 = vmatmul.mubr.bf16.gmra.mrb[0].mxu0 %v1482
        %v1517 = vpop.f32.mrb[0].mxu0
        %v1518 = vadd.f32 %v1001, %v1517
        %v1519 = vpop.f32.mrb[0].mxu0
        %v1520 = vadd.f32 %v1005, %v1519
        %v1521 = vpop.f32.mrb[0].mxu0
        %v1522 = vpop.f32.mrb[0].mxu0
        %1523 = vdwg.mxu0
        %v1524 = vadd.f32 %v1518, %v1520
        %1525 = vadd.xlane.f32.xlu0 %v1524
        %v1526 = vpop.xlane.xlu0 %1525
        %v1527 = vmul.f32 %v1526, 0.00390625
        %v1528 = vmul.f32 %v1518, %v1518
        %v1529 = vmul.f32 %v1520, %v1520
        %v1530 = vadd.f32 %v1528, %v1529
        %1531 = vadd.xlane.f32.xlu0 %v1530
        %v1532 = vpop.xlane.xlu0 %1531
        %v1533 = vmul.f32 %v1532, 0.00390625
        %v1534 = vmul.f32 %v1527, %v1527
        %v1535 = vsub.f32 %v1533, %v1534
        %v1536 = vmax.f32 %v1535, 0.0
        %v1537 = vsub.f32 %v1518, %v1527
        %v1538 = vsub.f32 %v1520, %v1527
        %v1539 = vadd.f32 %v1536, 1e-05
        %v1540 = vrsqrt.pop %v1539
        %v1541 = vmul.f32 %v1537, %v1540
        %v1542 = vmul.f32 %v1538, %v1540
        %v1543 = vmul.f32 %v1541, %v1152
        %v1544 = vmul.f32 %v1542, %v1156
        %v1545 = vadd.f32 %v1543, %v1165
        %v1546 = vadd.f32 %v1544, %v1169
        %v1547 = vadd.f32 %v1545, %v1546
        %s1548 = scalar_lea.vmem [#allocation5], 32
        %v1549 = vld [vmem:[%s1548] sm:$0xff]
        %v1550 = vadd.f32 %v1549, %v1547
        %v1551 = vld [vmem:[#allocation3] sm:$0xff]
        %v1552 = vmul.f32 %v1182, %v1551
        %v1553 = vmul.f32 %v1189, %v1550
        %v1554 = vadd.f32 %v1552, %v1553
        %v1555 = vld [vmem:[#allocation2] sm:$0xff]
        %v1556 = vmul.f32 %v1198, %v1555
        %v1557 = vmul.f32 %v1205, %v1554
        %v1558 = vadd.f32 %v1556, %v1557
        %vm1559 = vcmp.gt.f32.partialorder %v1558, 0.5
        %v1560 = vsel %vm1559, 1, 0
        %v1561 = vcvt.s32.f32 %v1560
        %v1562 = vpack.c.bf16 %v1561, %v1561
        %1563 = vst [vmem:[#allocation3] sm:$0xff] %v1554
        %1564 = vst [vmem:[#allocation2] sm:$0xff] %v1558
        %1565 = vst [vmem:[#allocation4] sm:$0xf] %v1562
        %s1566 = scalar_lea.vmem %s602, 32 [#allocation14]
        %1567 = vst [vmem:[%s1566] sm:$0xff] %v1558
        %s1568 = scalar_lea.vmem %s609, 16 [#allocation15]
        %1569 = vst [vmem:[%s1568] sm:$0xf] %v1562
        %v1570 = vld [vmem:[#allocation4] sm:$0xf]
        %1571 = vmatprep.subr.bf16.mxu0 %v1057
        %1572 = vmatpush1.bf16.msra.mxu0 %v1056
        %1573 = vmatprep.subr.bf16.mxu0 %v1059
        %1574 = vmatpush1.bf16.msra.mxu0 %v1058
        %1575 = vmatprep.subr.bf16.mxu0 %v1061
        %1576 = vmatpush1.bf16.msra.mxu0 %v1060
        %1577 = vmatprep.subr.bf16.mxu0 %v1063
        %1578 = vmatpush1.bf16.msra.mxu0 %v1062
        %1579 = vmatprep.subr.bf16.mxu0 %v1065
        %1580 = vmatpush1.bf16.msra.mxu0 %v1064
        %1581 = vmatprep.subr.bf16.mxu0 %v1067
        %1582 = vmatpush1.bf16.msra.mxu0 %v1066
        %1583 = vmatprep.subr.bf16.mxu0 %v1069
        %1584 = vmatpush1.bf16.msra.mxu0 %v1068
        %1585 = vmatprep.subr.bf16.mxu0 %v1071
        %1586 = vmatpush1.bf16.msra.mxu0 %v1070
        %1587 = vmatprep.subr.bf16.mxu0 0
        %1588 = vmatpush1.bf16.msra.mxu0 0
        %1589 = vmatprep.subr.bf16.mxu0 0
        %1590 = vmatpush1.bf16.msra.mxu0 0
        %1591 = vmatprep.subr.bf16.mxu0 0
        %1592 = vmatpush1.bf16.msra.mxu0 0
        %1593 = vmatprep.subr.bf16.mxu0 0
        %1594 = vmatpush1.bf16.msra.mxu0 0
        %1595 = vmatprep.subr.bf16.mxu0 0
        %1596 = vmatpush1.bf16.msra.mxu0 0
        %1597 = vmatprep.subr.bf16.mxu0 0
        %1598 = vmatpush1.bf16.msra.mxu0 0
        %1599 = vmatprep.subr.bf16.mxu0 0
        %1600 = vmatpush1.bf16.msra.mxu0 0
        %1601 = vmatprep.subr.bf16.mxu0 0
        %1602 = vmatpush1.bf16.msra.mxu0 0
        %1603 = vmatprep.mubr.bf16.mxu0 0
        %1604 = vmatmul.mubr.bf16.gmra.mrb[0].mxu0 %v1570
        %v1605 = vpop.f32.mrb[0].mxu0
        %v1606 = vadd.f32 %v1001, %v1605
        %v1607 = vpop.f32.mrb[0].mxu0
        %v1608 = vadd.f32 %v1005, %v1607
        %v1609 = vpop.f32.mrb[0].mxu0
        %v1610 = vpop.f32.mrb[0].mxu0
        %1611 = vdwg.mxu0
        %v1612 = vadd.f32 %v1606, %v1608
        %1613 = vadd.xlane.f32.xlu0 %v1612
        %v1614 = vpop.xlane.xlu0 %1613
        %v1615 = vmul.f32 %v1614, 0.00390625
        %v1616 = vmul.f32 %v1606, %v1606
        %v1617 = vmul.f32 %v1608, %v1608
        %v1618 = vadd.f32 %v1616, %v1617
        %1619 = vadd.xlane.f32.xlu0 %v1618
        %v1620 = vpop.xlane.xlu0 %1619
        %v1621 = vmul.f32 %v1620, 0.00390625
        %v1622 = vmul.f32 %v1615, %v1615
        %v1623 = vsub.f32 %v1621, %v1622
        %v1624 = vmax.f32 %v1623, 0.0
        %v1625 = vsub.f32 %v1606, %v1615
        %v1626 = vsub.f32 %v1608, %v1615
        %v1627 = vadd.f32 %v1624, 1e-05
        %v1628 = vrsqrt.pop %v1627
        %v1629 = vmul.f32 %v1625, %v1628
        %v1630 = vmul.f32 %v1626, %v1628
        %v1631 = vmul.f32 %v1629, %v1152
        %v1632 = vmul.f32 %v1630, %v1156
        %v1633 = vadd.f32 %v1631, %v1165
        %v1634 = vadd.f32 %v1632, %v1169
        %v1635 = vadd.f32 %v1633, %v1634
        %s1636 = scalar_lea.vmem [#allocation5], 40
        %v1637 = vld [vmem:[%s1636] sm:$0xff]
        %v1638 = vadd.f32 %v1637, %v1635
        %v1639 = vld [vmem:[#allocation3] sm:$0xff]
        %v1640 = vmul.f32 %v1182, %v1639
        %v1641 = vmul.f32 %v1189, %v1638
        %v1642 = vadd.f32 %v1640, %v1641
        %v1643 = vld [vmem:[#allocation2] sm:$0xff]
        %v1644 = vmul.f32 %v1198, %v1643
        %v1645 = vmul.f32 %v1205, %v1642
        %v1646 = vadd.f32 %v1644, %v1645
        %vm1647 = vcmp.gt.f32.partialorder %v1646, 0.5
        %v1648 = vsel %vm1647, 1, 0
        %v1649 = vcvt.s32.f32 %v1648
        %v1650 = vpack.c.bf16 %v1649, %v1649
        %1651 = vst [vmem:[#allocation3] sm:$0xff] %v1642
        %1652 = vst [vmem:[#allocation2] sm:$0xff] %v1646
        %1653 = vst [vmem:[#allocation4] sm:$0xf] %v1650
        %s1654 = scalar_lea.vmem %s602, 40 [#allocation14]
        %1655 = vst [vmem:[%s1654] sm:$0xff] %v1646
        %s1656 = scalar_lea.vmem %s609, 20 [#allocation15]
        %1657 = vst [vmem:[%s1656] sm:$0xf] %v1650
        %v1658 = vld [vmem:[#allocation4] sm:$0xf]
        %1659 = vmatprep.subr.bf16.mxu0 %v1057
        %1660 = vmatpush1.bf16.msra.mxu0 %v1056
        %1661 = vmatprep.subr.bf16.mxu0 %v1059
        %1662 = vmatpush1.bf16.msra.mxu0 %v1058
        %1663 = vmatprep.subr.bf16.mxu0 %v1061
        %1664 = vmatpush1.bf16.msra.mxu0 %v1060
        %1665 = vmatprep.subr.bf16.mxu0 %v1063
        %1666 = vmatpush1.bf16.msra.mxu0 %v1062
        %1667 = vmatprep.subr.bf16.mxu0 %v1065
        %1668 = vmatpush1.bf16.msra.mxu0 %v1064
        %1669 = vmatprep.subr.bf16.mxu0 %v1067
        %1670 = vmatpush1.bf16.msra.mxu0 %v1066
        %1671 = vmatprep.subr.bf16.mxu0 %v1069
        %1672 = vmatpush1.bf16.msra.mxu0 %v1068
        %1673 = vmatprep.subr.bf16.mxu0 %v1071
        %1674 = vmatpush1.bf16.msra.mxu0 %v1070
        %1675 = vmatprep.subr.bf16.mxu0 0
        %1676 = vmatpush1.bf16.msra.mxu0 0
        %1677 = vmatprep.subr.bf16.mxu0 0
        %1678 = vmatpush1.bf16.msra.mxu0 0
        %1679 = vmatprep.subr.bf16.mxu0 0
        %1680 = vmatpush1.bf16.msra.mxu0 0
        %1681 = vmatprep.subr.bf16.mxu0 0
        %1682 = vmatpush1.bf16.msra.mxu0 0
        %1683 = vmatprep.subr.bf16.mxu0 0
        %1684 = vmatpush1.bf16.msra.mxu0 0
        %1685 = vmatprep.subr.bf16.mxu0 0
        %1686 = vmatpush1.bf16.msra.mxu0 0
        %1687 = vmatprep.subr.bf16.mxu0 0
        %1688 = vmatpush1.bf16.msra.mxu0 0
        %1689 = vmatprep.subr.bf16.mxu0 0
        %1690 = vmatpush1.bf16.msra.mxu0 0
        %1691 = vmatprep.mubr.bf16.mxu0 0
        %1692 = vmatmul.mubr.bf16.gmra.mrb[0].mxu0 %v1658
        %v1693 = vpop.f32.mrb[0].mxu0
        %v1694 = vadd.f32 %v1001, %v1693
        %v1695 = vpop.f32.mrb[0].mxu0
        %v1696 = vadd.f32 %v1005, %v1695
        %v1697 = vpop.f32.mrb[0].mxu0
        %v1698 = vpop.f32.mrb[0].mxu0
        %1699 = vdwg.mxu0
        %v1700 = vadd.f32 %v1694, %v1696
        %1701 = vadd.xlane.f32.xlu0 %v1700
        %v1702 = vpop.xlane.xlu0 %1701
        %v1703 = vmul.f32 %v1702, 0.00390625
        %v1704 = vmul.f32 %v1694, %v1694
        %v1705 = vmul.f32 %v1696, %v1696
        %v1706 = vadd.f32 %v1704, %v1705
        %1707 = vadd.xlane.f32.xlu0 %v1706
        %v1708 = vpop.xlane.xlu0 %1707
        %v1709 = vmul.f32 %v1708, 0.00390625
        %v1710 = vmul.f32 %v1703, %v1703
        %v1711 = vsub.f32 %v1709, %v1710
        %v1712 = vmax.f32 %v1711, 0.0
        %v1713 = vsub.f32 %v1694, %v1703
        %v1714 = vsub.f32 %v1696, %v1703
        %v1715 = vadd.f32 %v1712, 1e-05
        %v1716 = vrsqrt.pop %v1715
        %v1717 = vmul.f32 %v1713, %v1716
        %v1718 = vmul.f32 %v1714, %v1716
        %v1719 = vmul.f32 %v1717, %v1152
        %v1720 = vmul.f32 %v1718, %v1156
        %v1721 = vadd.f32 %v1719, %v1165
        %v1722 = vadd.f32 %v1720, %v1169
        %v1723 = vadd.f32 %v1721, %v1722
        %s1724 = scalar_lea.vmem [#allocation5], 48
        %v1725 = vld [vmem:[%s1724] sm:$0xff]
        %v1726 = vadd.f32 %v1725, %v1723
        %v1727 = vld [vmem:[#allocation3] sm:$0xff]
        %v1728 = vmul.f32 %v1182, %v1727
        %v1729 = vmul.f32 %v1189, %v1726
        %v1730 = vadd.f32 %v1728, %v1729
        %v1731 = vld [vmem:[#allocation2] sm:$0xff]
        %v1732 = vmul.f32 %v1198, %v1731
        %v1733 = vmul.f32 %v1205, %v1730
        %v1734 = vadd.f32 %v1732, %v1733
        %vm1735 = vcmp.gt.f32.partialorder %v1734, 0.5
        %v1736 = vsel %vm1735, 1, 0
        %v1737 = vcvt.s32.f32 %v1736
        %v1738 = vpack.c.bf16 %v1737, %v1737
        %1739 = vst [vmem:[#allocation3] sm:$0xff] %v1730
        %1740 = vst [vmem:[#allocation2] sm:$0xff] %v1734
        %1741 = vst [vmem:[#allocation4] sm:$0xf] %v1738
        %s1742 = scalar_lea.vmem %s602, 48 [#allocation14]
        %1743 = vst [vmem:[%s1742] sm:$0xff] %v1734
        %s1744 = scalar_lea.vmem %s609, 24 [#allocation15]
        %1745 = vst [vmem:[%s1744] sm:$0xf] %v1738
        %v1746 = vld [vmem:[#allocation4] sm:$0xf]
        %1747 = vmatprep.subr.bf16.mxu0 %v1057
        %1748 = vmatpush1.bf16.msra.mxu0 %v1056
        %1749 = vmatprep.subr.bf16.mxu0 %v1059
        %1750 = vmatpush1.bf16.msra.mxu0 %v1058
        %1751 = vmatprep.subr.bf16.mxu0 %v1061
        %1752 = vmatpush1.bf16.msra.mxu0 %v1060
        %1753 = vmatprep.subr.bf16.mxu0 %v1063
        %1754 = vmatpush1.bf16.msra.mxu0 %v1062
        %1755 = vmatprep.subr.bf16.mxu0 %v1065
        %1756 = vmatpush1.bf16.msra.mxu0 %v1064
        %1757 = vmatprep.subr.bf16.mxu0 %v1067
        %1758 = vmatpush1.bf16.msra.mxu0 %v1066
        %1759 = vmatprep.subr.bf16.mxu0 %v1069
        %1760 = vmatpush1.bf16.msra.mxu0 %v1068
        %1761 = vmatprep.subr.bf16.mxu0 %v1071
        %1762 = vmatpush1.bf16.msra.mxu0 %v1070
        %1763 = vmatprep.subr.bf16.mxu0 0
        %1764 = vmatpush1.bf16.msra.mxu0 0
        %1765 = vmatprep.subr.bf16.mxu0 0
        %1766 = vmatpush1.bf16.msra.mxu0 0
        %1767 = vmatprep.subr.bf16.mxu0 0
        %1768 = vmatpush1.bf16.msra.mxu0 0
        %1769 = vmatprep.subr.bf16.mxu0 0
        %1770 = vmatpush1.bf16.msra.mxu0 0
        %1771 = vmatprep.subr.bf16.mxu0 0
        %1772 = vmatpush1.bf16.msra.mxu0 0
        %1773 = vmatprep.subr.bf16.mxu0 0
        %1774 = vmatpush1.bf16.msra.mxu0 0
        %1775 = vmatprep.subr.bf16.mxu0 0
        %1776 = vmatpush1.bf16.msra.mxu0 0
        %1777 = vmatprep.subr.bf16.mxu0 0
        %1778 = vmatpush1.bf16.msra.mxu0 0
        %1779 = vmatprep.mubr.bf16.mxu0 0
        %1780 = vmatmul.mubr.bf16.gmra.mrb[0].mxu0 %v1746
        %v1781 = vpop.f32.mrb[0].mxu0
        %v1782 = vadd.f32 %v1001, %v1781
        %v1783 = vpop.f32.mrb[0].mxu0
        %v1784 = vadd.f32 %v1005, %v1783
        %v1785 = vpop.f32.mrb[0].mxu0
        %v1786 = vpop.f32.mrb[0].mxu0
        %1787 = vdwg.mxu0
        %v1788 = vadd.f32 %v1782, %v1784
        %1789 = vadd.xlane.f32.xlu0 %v1788
        %v1790 = vpop.xlane.xlu0 %1789
        %v1791 = vmul.f32 %v1790, 0.00390625
        %v1792 = vmul.f32 %v1782, %v1782
        %v1793 = vmul.f32 %v1784, %v1784
        %v1794 = vadd.f32 %v1792, %v1793
        %1795 = vadd.xlane.f32.xlu0 %v1794
        %v1796 = vpop.xlane.xlu0 %1795
        %v1797 = vmul.f32 %v1796, 0.00390625
        %v1798 = vmul.f32 %v1791, %v1791
        %v1799 = vsub.f32 %v1797, %v1798
        %v1800 = vmax.f32 %v1799, 0.0
        %v1801 = vsub.f32 %v1782, %v1791
        %v1802 = vsub.f32 %v1784, %v1791
        %v1803 = vadd.f32 %v1800, 1e-05
        %v1804 = vrsqrt.pop %v1803
        %v1805 = vmul.f32 %v1801, %v1804
        %v1806 = vmul.f32 %v1802, %v1804
        %v1807 = vmul.f32 %v1805, %v1152
        %v1808 = vmul.f32 %v1806, %v1156
        %v1809 = vadd.f32 %v1807, %v1165
        %v1810 = vadd.f32 %v1808, %v1169
        %v1811 = vadd.f32 %v1809, %v1810
        %s1812 = scalar_lea.vmem [#allocation5], 56
        %v1813 = vld [vmem:[%s1812] sm:$0xff]
        %v1814 = vadd.f32 %v1813, %v1811
        %v1815 = vld [vmem:[#allocation3] sm:$0xff]
        %v1816 = vmul.f32 %v1182, %v1815
        %v1817 = vmul.f32 %v1189, %v1814
        %v1818 = vadd.f32 %v1816, %v1817
        %v1819 = vld [vmem:[#allocation2] sm:$0xff]
        %v1820 = vmul.f32 %v1198, %v1819
        %v1821 = vmul.f32 %v1205, %v1818
        %v1822 = vadd.f32 %v1820, %v1821
        %vm1823 = vcmp.gt.f32.partialorder %v1822, 0.5
        %v1824 = vsel %vm1823, 1, 0
        %v1825 = vcvt.s32.f32 %v1824
        %v1826 = vpack.c.bf16 %v1825, %v1825
        %1827 = vst [vmem:[#allocation3] sm:$0xff] %v1818
        %1828 = vst [vmem:[#allocation2] sm:$0xff] %v1822
        %1829 = vst [vmem:[#allocation4] sm:$0xf] %v1826
        %s1830 = scalar_lea.vmem %s602, 56 [#allocation14]
        %1831 = vst [vmem:[%s1830] sm:$0xff] %v1822
        %s1832 = scalar_lea.vmem %s609, 28 [#allocation15]
        %1833 = vst [vmem:[%s1832] sm:$0xf] %v1826
        %s1834 = sand.u32 %s368, 1
        %s1835 = scalar_lea.sflag [#allocation8], %s1834
        %s1836 = sand.u32 %s368, 1
        %s1837 = smul.addr %s1836, 64
        %s1838 = scalar_lea.vmem [#allocation14], %s1837
        %s1839 = sand.u32 %s396, 1
        %s1840 = scalar_lea.sflag [#allocation16], %s1839
        %s1841 = sand.u32 %s396, 1
        %s1842 = smul.addr %s1841, 32
        %s1843 = scalar_lea.vmem [#allocation15], %s1842
        // Predicated region
        $region97: #{tpu_custom_call.1} parent=75 // pred_check
          %p1844 = pneg %p378
        $region98: #{tpu_custom_call.1} parent=75 // pred_check_branch
          %1846 = sbr.rel (%p1844) target = $region100
        $region99: #{tpu_custom_call.1} parent=75 // pred_region
          %s1847 = smul.u32 8, %s45
          %s1849 = ssub.s32 1024, 1024
          %1850 = vsyncadd %s1835, %s1849
          %s1851 = smul.addr %s1847, 2
          %s1852 = sadd.s32 %s44, %s1851
          %s1853 = smul.addr %s1852, 128
          %s1854 = scalar_lea.hbm %s14, %s1853
          %s1855 = sshll.u32 %s1838, 4
          %s1856 = int_to_ptr.vmem [resolvable:$true] %s1855
          %1861 = dma.vmem_to_hbm [thread:$0]  %s1856, 1024, %s1854, %s1835, 128, 256, 8
        $region100: #{tpu_custom_call.1} parent=75 // pred_fallthru
          _
        // Predicated region
        $region101: #{tpu_custom_call.1} parent=75 // pred_check
          %p1862 = pneg %p406
        $region102: #{tpu_custom_call.1} parent=75 // pred_check_branch
          %1864 = sbr.rel (%p1862) target = $region104
        $region103: #{tpu_custom_call.1} parent=75 // pred_region
          %s1865 = smul.u32 8, %s45
          %s1867 = ssub.s32 512, 512
          %1868 = vsyncadd %s1840, %s1867
          %s1869 = smul.addr %s1865, 2
          %s1870 = sadd.s32 %s44, %s1869
          %s1871 = smul.addr %s1870, 64
          %s1872 = scalar_lea.hbm %s15, %s1871
          %s1873 = sshll.u32 %s1843, 4
          %s1874 = int_to_ptr.vmem [resolvable:$true] %s1873
          %1879 = dma.vmem_to_hbm [thread:$0]  %s1874, 512, %s1872, %s1840, 64, 128, 4
        $region104: #{tpu_custom_call.1} parent=75 // pred_fallthru
          _
      $region76: #{tpu_custom_call.1} parent=5 // pred_fallthru
        _
      %p1880 = scmp.le.s32.totalorder 2, %s35
      // Predicated region
      $region105: #{tpu_custom_call.1} parent=5 // pred_check
        %p1881 = pneg %p1880
      $region106: #{tpu_custom_call.1} parent=5 // pred_check_branch
        %1883 = sbr.rel (%p1881) target = $region108
      $region107: #{tpu_custom_call.1} parent=5 // pred_region
        %s1884 = ssub.s32 %s35, 2
        // Predicated region
        $region109: #{tpu_custom_call.1} parent=107 // pred_check
          %p1885 = pneg %p384
        $region110: #{tpu_custom_call.1} parent=107 // pred_check_branch
          %1887 = sbr.rel (%p1885) target = $region112
        $region111: #{tpu_custom_call.1} parent=107 // pred_region
          %s1888 = sand.u32 %s369, 1
          %s1889 = scalar_lea.sflag [#allocation8], %s1888
          %s1890 = sand.u32 %s369, 1
          %s1891 = smul.addr %s1890, 64
          %s1892 = scalar_lea.vmem [#allocation14], %s1891
          %1893 = dma.done %s1889, 1024
        $region112: #{tpu_custom_call.1} parent=107 // pred_fallthru
          _
        // Predicated region
        $region113: #{tpu_custom_call.1} parent=107 // pred_check
          %p1894 = pneg %p412
        $region114: #{tpu_custom_call.1} parent=107 // pred_check_branch
          %1896 = sbr.rel (%p1894) target = $region116
        $region115: #{tpu_custom_call.1} parent=107 // pred_region
          %s1897 = sand.u32 %s397, 1
          %s1898 = scalar_lea.sflag [#allocation16], %s1897
          %s1899 = sand.u32 %s397, 1
          %s1900 = smul.addr %s1899, 32
          %s1901 = scalar_lea.vmem [#allocation15], %s1900
          %1902 = dma.done %s1898, 512
        $region116: #{tpu_custom_call.1} parent=107 // pred_fallthru
          _
      $region108: #{tpu_custom_call.1} parent=5 // pred_fallthru
        _
    $region6: #{tpu_custom_call.1} parent=1 // loop_footer
      %s39 = sadd.s32 1, %s35
    $region7: #{tpu_custom_call.1} parent=1 // loop_footer_branch
      %34 = sbr.rel target = $region3
    $region8: #{tpu_custom_call.1} parent=1 // loop_exit
      _
    %1903 = vsyncpa [#allocation7], 1
    %s1904 = scalar_lea.sflag [#allocation7], 1
    %1905 = vsyncpa %s1904, 1
    %1906 = vsyncpa [#allocation10], 1
    %s1907 = scalar_lea.sflag [#allocation10], 1
    %1908 = vsyncpa %s1907, 1
    %1909 = vsyncpa [#allocation13], 1
    %1910 = vsyncpa [#allocation8], 1
    %s1911 = scalar_lea.sflag [#allocation8], 1
    %1912 = vsyncpa %s1911, 1
    %1913 = vsyncpa [#allocation16], 1
    %s1914 = scalar_lea.sflag [#allocation16], 1
    %1915 = vsyncpa %s1914, 1

// kernel: tpu_custom_call.1
$region0: #{tpu_custom_call.1}
  #allocation0 [shape = 'u32[]', space=smem, size = 0x4, offset = 0x4, fixed_abs, tag = 'smem constant byte address 0x4 - core index']
  #allocation1 [shape = 'u32[144,128]{1,0:T(1,128)}', space=vmem, size = 0x12000, scoped, tag = 'internal scratch']
  #allocation2 [shape = 'f32[8,128]{1,0:T(8,128)}', space=vmem, size = 0x1000, scoped, tag = 'scratch operand']
  #allocation3 [shape = 'f32[8,128]{1,0:T(8,128)}', space=vmem, size = 0x1000, scoped, tag = 'scratch operand']
  #allocation4 [shape = 'bf16[8,128]{1,0:T(8,128)(2,1)}', space=vmem, size = 0x800, scoped, tag = 'scratch operand']
  #allocation5 [shape = 'f32[8,8,128]{2,1,0:T(8,128)}', space=vmem, size = 0x8000, scoped, tag = 'scratch operand']
  %s0 = inlined_call_operand.hbm [shape: bf16[32,16,32], index: 0, kind: input, shape index: {}]
  %s1 = inlined_call_operand.hbm [shape: f32[16,128], index: 1, kind: input, shape index: {}]
  %s2 = inlined_call_operand.hbm [shape: bf16[32,256], index: 2, kind: input, shape index: {}]
  %s3 = inlined_call_operand.vmem [shape: f32[1,256], index: 3, kind: input, shape index: {}]
  %s4 = inlined_call_operand.vmem [shape: f32[1,256], index: 4, kind: input, shape index: {}]
  %s5 = inlined_call_operand.vmem [shape: f32[1,256], index: 5, kind: input, shape index: {}]
  %s6 = inlined_call_operand.hbm [shape: bf16[128,256], index: 6, kind: input, shape index: {}]
  %s7 = inlined_call_operand.vmem [shape: f32[1,256], index: 7, kind: input, shape index: {}]
  %s8 = inlined_call_operand.vmem [shape: f32[1,256], index: 8, kind: input, shape index: {}]
  %s9 = inlined_call_operand.vmem [shape: f32[1,256], index: 9, kind: input, shape index: {}]
  %s10 = inlined_call_operand.vmem [shape: f32[1,128], index: 10, kind: input, shape index: {}]
  %s11 = inlined_call_operand.vmem [shape: f32[1,128], index: 11, kind: input, shape index: {}]
  %s12 = inlined_call_operand.vmem [shape: f32[1,128], index: 12, kind: input, shape index: {}]
  %s13 = inlined_call_operand.vmem [shape: f32[1,128], index: 13, kind: input, shape index: {}]
  %s14 = inlined_call_operand.hbm [shape: f32[32,16,128], index: 14, kind: output, shape index: {0}]
  %s15 = inlined_call_operand.hbm [shape: bf16[32,16,128], index: 15, kind: output, shape index: {1}]
  %16 = xla_tuple %s14, %s15
  %s17 = sld [smem:[#allocation0]]
  $region117: #{tpu_custom_call.1} parent=0
    _
  %s19 = ssub.s32 1, %s17
  %s20 = scalar_select 0, %s19, %s17
  $region1: #{tpu_custom_call.1} parent=0
    #allocation6 [shape = 'u8[32768]{0}', space=vmem, size = 0x8000, scoped, tag = 'input window, operand 0']
    #allocation7 [shape = 's32[2]{0}', space=sflag, size = 0x8, scoped, tag = 'scoped memory for tpu_custom_call.1']
    #allocation8 [shape = 's32[2]{0}', space=sflag, size = 0x8, scoped, tag = 'scoped memory for tpu_custom_call.1']
    #allocation9 [shape = 'u8[8192]{0}', space=vmem, size = 0x2000, scoped, tag = 'input window, operand 1']
    #allocation10 [shape = 's32[2]{0}', space=sflag, size = 0x8, scoped, tag = 'scoped memory for tpu_custom_call.1']
    #allocation11 [shape = 'u8[16384]{0}', space=vmem, size = 0x4000, scoped, tag = 'input window, operand 2, single buffered']
    #allocation12 [shape = 'u8[65536]{0}', space=vmem, size = 0x10000, scoped, tag = 'input window, operand 6, single buffered']
    #allocation13 [shape = 's32[1]{0}', space=sflag, size = 0x4, scoped, tag = 'scoped memory for tpu_custom_call.1']
    #allocation14 [shape = 'u8[65536]{0}', space=vmem, size = 0x10000, scoped, tag = 'output window, operand 0']
    #allocation15 [shape = 'u8[32768]{0}', space=vmem, size = 0x8000, scoped, tag = 'output window, operand 1']
    #allocation16 [shape = 's32[2]{0}', space=sflag, size = 0x8, scoped, tag = 'scoped memory for tpu_custom_call.1']
    %21 = vsyncpa [#allocation7], 0
    %s22 = scalar_lea.sflag [#allocation7], 1
    %23 = vsyncpa %s22, 0
    %24 = vsyncpa [#allocation10], 0
    %s25 = scalar_lea.sflag [#allocation10], 1
    %26 = vsyncpa %s25, 0
    %27 = vsyncpa [#allocation13], 0
    %28 = vsyncpa [#allocation8], 0
    %s29 = scalar_lea.sflag [#allocation8], 1
    %30 = vsyncpa %s29, 0
    %31 = vsyncpa [#allocation16], 0
    %s32 = scalar_lea.sflag [#allocation16], 1
    %33 = vsyncpa %s32, 0
    loop: start=0, step=1, limit=10
    $region2: #{tpu_custom_call.1} parent=1 // loop_pre_header
      _
    $region3: #{tpu_custom_call.1} parent=1 // loop_header
      %s35 = sphi 0, %s39
      %p36 = scmp.ge.s32.totalorder %s35, 10
      %s42 = sphi 0, %s54
      %s43 = sphi 0, %s50
      %s44 = sphi 0, %s42
      %s45 = sphi 0, %s43
      %s46 = sphi 0, %s44
      %s47 = sphi 0, %s45
      %s59 = sphi 0, %s61
      %s62 = sphi 0, %s59
      %s63 = sphi 0, %s62
      %s79 = sphi 0, %s63
      %s85 = sphi 0, %s87
      %s88 = sphi 0, %s85
      %s89 = sphi 0, %s88
      %s105 = sphi 0, %s89
      %s109 = sphi 0, %s109
      %s111 = sphi 0, %s109
      %s112 = sphi 0, %s111
      %s126 = sphi 0, %s112
      %s130 = sphi 0, %s130
      %s132 = sphi 0, %s130
      %s133 = sphi 0, %s132
      %s147 = sphi 0, %s133
      %s151 = sphi 0, %s151
      %s153 = sphi 0, %s151
      %s154 = sphi 0, %s153
      %s168 = sphi 0, %s154
      %s172 = sphi 0, %s172
      %s174 = sphi 0, %s172
      %s175 = sphi 0, %s174
      %s189 = sphi 0, %s175
      %s193 = sphi 0, %s193
      %s195 = sphi 0, %s193
      %s196 = sphi 0, %s195
      %s210 = sphi 0, %s196
      %s214 = sphi 0, %s214
      %s216 = sphi 0, %s214
      %s217 = sphi 0, %s216
      %s231 = sphi 0, %s217
      %s235 = sphi 0, %s235
      %s237 = sphi 0, %s235
      %s238 = sphi 0, %s237
      %s252 = sphi 0, %s238
      %s256 = sphi 0, %s256
      %s258 = sphi 0, %s256
      %s259 = sphi 0, %s258
      %s273 = sphi 0, %s259
      %s277 = sphi 0, %s277
      %s279 = sphi 0, %s277
      %s280 = sphi 0, %s279
      %s294 = sphi 0, %s280
      %s298 = sphi 0, %s298
      %s300 = sphi 0, %s298
      %s301 = sphi 0, %s300
      %s315 = sphi 0, %s301
      %s319 = sphi 0, %s319
      %s321 = sphi 0, %s319
      %s322 = sphi 0, %s321
      %s336 = sphi 0, %s322
      %s340 = sphi 0, %s340
      %s342 = sphi 0, %s340
      %s343 = sphi 0, %s342
      %s357 = sphi 0, %s343
      %s365 = sphi 0, %s367
      %s368 = sphi 0, %s365
      %s369 = sphi 0, %s368
      %s385 = sphi 0, %s369
      %s393 = sphi 0, %s395
      %s396 = sphi 0, %s393
      %s397 = sphi 0, %s396
      %s413 = sphi 0, %s397
    $region4: #{tpu_custom_call.1} parent=1 // loop_header_branch
      %38 = sbr.rel (%p36) target = $region8
    $region5: #{tpu_custom_call.1} parent=1 // loop_body
      %s40 = ssub.s32 %s35, 1
      %s41 = ssub.s32 %s35, 2
      %s48 = sadd.s32 1, %s43
      %p49 = scmp.ge.s32.totalorder %s48, 4
      %s50 = scalar_select %p49, 0, %s48
      %s51 = sadd.s32 1, %s42
      %s52 = scalar_select %p49, %s51, %s42
      %p53 = scmp.ge.s32.totalorder %s52, 2
      %s54 = scalar_select %p53, 0, %s52
      %s55 = ssub.s32 %s43, %s50
      %s56 = ssub.s32 %s42, %s54
      %s57 = sor.u32 %s55, %s56
      %p58 = scmp.eq.s32.totalorder %s57, 0
      %s60 = sadd.s32 %s59, 1
      %s61 = scalar_select %p58, %s59, %s60
      %p64 = pneg %p58
      %p65 = scmp.eq.s32.totalorder %s35, 7
      %p66 = por %p64, %p65
      %p67 = scmp.ne.s32.totalorder %s59, %s62
      %p68 = scmp.eq.s32.totalorder %s35, 0
      %p69 = por %p67, %p68
      %p70 = scmp.ne.s32.totalorder %s59, %s62
      %p71 = scmp.eq.s32.totalorder %s40, 7
      %p72 = por %p70, %p71
      %p73 = scmp.ne.s32.totalorder %s62, %s63
      %p74 = scmp.eq.s32.totalorder %s40, 0
      %p75 = por %p73, %p74
      %p76 = scmp.ne.s32.totalorder %s62, %s63
      %p77 = scmp.eq.s32.totalorder %s41, 7
      %p78 = por %p76, %p77
      %p80 = scmp.ne.s32.totalorder %s63, %s79
      %p81 = scmp.eq.s32.totalorder %s41, 0
      %p82 = por %p80, %p81
      %s83 = ssub.s32 %s42, %s54
      %p84 = scmp.eq.s32.totalorder %s83, 0
      %s86 = sadd.s32 %s85, 1
      %s87 = scalar_select %p84, %s85, %s86
      %p90 = pneg %p84
      %p91 = scmp.eq.s32.totalorder %s35, 7
      %p92 = por %p90, %p91
      %p93 = scmp.ne.s32.totalorder %s85, %s88
      %p94 = scmp.eq.s32.totalorder %s35, 0
      %p95 = por %p93, %p94
      %p96 = scmp.ne.s32.totalorder %s85, %s88
      %p97 = scmp.eq.s32.totalorder %s40, 7
      %p98 = por %p96, %p97
      %p99 = scmp.ne.s32.totalorder %s88, %s89
      %p100 = scmp.eq.s32.totalorder %s40, 0
      %p101 = por %p99, %p100
      %p102 = scmp.ne.s32.totalorder %s88, %s89
      %p103 = scmp.eq.s32.totalorder %s41, 7
      %p104 = por %p102, %p103
      %p106 = scmp.ne.s32.totalorder %s89, %s105
      %p107 = scmp.eq.s32.totalorder %s41, 0
      %p108 = por %p106, %p107
      %s110 = sadd.s32 %s109, 1
      %p113 = scmp.eq.s32.totalorder %s35, 7
      %p114 = scmp.ne.s32.totalorder %s109, %s111
      %p115 = scmp.eq.s32.totalorder %s35, 0
      %p116 = por %p114, %p115
      %p117 = scmp.ne.s32.totalorder %s109, %s111
      %p118 = scmp.eq.s32.totalorder %s40, 7
      %p119 = por %p117, %p118
      %p120 = scmp.ne.s32.totalorder %s111, %s112
      %p121 = scmp.eq.s32.totalorder %s40, 0
      %p122 = por %p120, %p121
      %p123 = scmp.ne.s32.totalorder %s111, %s112
      %p124 = scmp.eq.s32.totalorder %s41, 7
      %p125 = por %p123, %p124
      %p127 = scmp.ne.s32.totalorder %s112, %s126
      %p128 = scmp.eq.s32.totalorder %s41, 0
      %p129 = por %p127, %p128
      %s131 = sadd.s32 %s130, 1
      %p134 = scmp.eq.s32.totalorder %s35, 7
      %p135 = scmp.ne.s32.totalorder %s130, %s132
      %p136 = scmp.eq.s32.totalorder %s35, 0
      %p137 = por %p135, %p136
      %p138 = scmp.ne.s32.totalorder %s130, %s132
      %p139 = scmp.eq.s32.totalorder %s40, 7
      %p140 = por %p138, %p139
      %p141 = scmp.ne.s32.totalorder %s132, %s133
      %p142 = scmp.eq.s32.totalorder %s40, 0
      %p143 = por %p141, %p142
      %p144 = scmp.ne.s32.totalorder %s132, %s133
      %p145 = scmp.eq.s32.totalorder %s41, 7
      %p146 = por %p144, %p145
      %p148 = scmp.ne.s32.totalorder %s133, %s147
      %p149 = scmp.eq.s32.totalorder %s41, 0
      %p150 = por %p148, %p149
      %s152 = sadd.s32 %s151, 1
      %p155 = scmp.eq.s32.totalorder %s35, 7
      %p156 = scmp.ne.s32.totalorder %s151, %s153
      %p157 = scmp.eq.s32.totalorder %s35, 0
      %p158 = por %p156, %p157
      %p159 = scmp.ne.s32.totalorder %s151, %s153
      %p160 = scmp.eq.s32.totalorder %s40, 7
      %p161 = por %p159, %p160
      %p162 = scmp.ne.s32.totalorder %s153, %s154
      %p163 = scmp.eq.s32.totalorder %s40, 0
      %p164 = por %p162, %p163
      %p165 = scmp.ne.s32.totalorder %s153, %s154
      %p166 = scmp.eq.s32.totalorder %s41, 7
      %p167 = por %p165, %p166
      %p169 = scmp.ne.s32.totalorder %s154, %s168
      %p170 = scmp.eq.s32.totalorder %s41, 0
      %p171 = por %p169, %p170
      %s173 = sadd.s32 %s172, 1
      %p176 = scmp.eq.s32.totalorder %s35, 7
      %p177 = scmp.ne.s32.totalorder %s172, %s174
      %p178 = scmp.eq.s32.totalorder %s35, 0
      %p179 = por %p177, %p178
      %p180 = scmp.ne.s32.totalorder %s172, %s174
      %p181 = scmp.eq.s32.totalorder %s40, 7
      %p182 = por %p180, %p181
      %p183 = scmp.ne.s32.totalorder %s174, %s175
      %p184 = scmp.eq.s32.totalorder %s40, 0
      %p185 = por %p183, %p184
      %p186 = scmp.ne.s32.totalorder %s174, %s175
      %p187 = scmp.eq.s32.totalorder %s41, 7
      %p188 = por %p186, %p187
      %p190 = scmp.ne.s32.totalorder %s175, %s189
      %p191 = scmp.eq.s32.totalorder %s41, 0
      %p192 = por %p190, %p191
      %s194 = sadd.s32 %s193, 1
      %p197 = scmp.eq.s32.totalorder %s35, 7
      %p198 = scmp.ne.s32.totalorder %s193, %s195
      %p199 = scmp.eq.s32.totalorder %s35, 0
      %p200 = por %p198, %p199
      %p201 = scmp.ne.s32.totalorder %s193, %s195
      %p202 = scmp.eq.s32.totalorder %s40, 7
      %p203 = por %p201, %p202
      %p204 = scmp.ne.s32.totalorder %s195, %s196
      %p205 = scmp.eq.s32.totalorder %s40, 0
      %p206 = por %p204, %p205
      %p207 = scmp.ne.s32.totalorder %s195, %s196
      %p208 = scmp.eq.s32.totalorder %s41, 7
      %p209 = por %p207, %p208
      %p211 = scmp.ne.s32.totalorder %s196, %s210
      %p212 = scmp.eq.s32.totalorder %s41, 0
      %p213 = por %p211, %p212
      %s215 = sadd.s32 %s214, 1
      %p218 = scmp.eq.s32.totalorder %s35, 7
      %p219 = scmp.ne.s32.totalorder %s214, %s216
      %p220 = scmp.eq.s32.totalorder %s35, 0
      %p221 = por %p219, %p220
      %p222 = scmp.ne.s32.totalorder %s214, %s216
      %p223 = scmp.eq.s32.totalorder %s40, 7
      %p224 = por %p222, %p223
      %p225 = scmp.ne.s32.totalorder %s216, %s217
      %p226 = scmp.eq.s32.totalorder %s40, 0
      %p227 = por %p225, %p226
      %p228 = scmp.ne.s32.totalorder %s216, %s217
      %p229 = scmp.eq.s32.totalorder %s41, 7
      %p230 = por %p228, %p229
      %p232 = scmp.ne.s32.totalorder %s217, %s231
      %p233 = scmp.eq.s32.totalorder %s41, 0
      %p234 = por %p232, %p233
      %s236 = sadd.s32 %s235, 1
      %p239 = scmp.eq.s32.totalorder %s35, 7
      %p240 = scmp.ne.s32.totalorder %s235, %s237
      %p241 = scmp.eq.s32.totalorder %s35, 0
      %p242 = por %p240, %p241
      %p243 = scmp.ne.s32.totalorder %s235, %s237
      %p244 = scmp.eq.s32.totalorder %s40, 7
      %p245 = por %p243, %p244
      %p246 = scmp.ne.s32.totalorder %s237, %s238
      %p247 = scmp.eq.s32.totalorder %s40, 0
      %p248 = por %p246, %p247
      %p249 = scmp.ne.s32.totalorder %s237, %s238
      %p250 = scmp.eq.s32.totalorder %s41, 7
      %p251 = por %p249, %p250
      %p253 = scmp.ne.s32.totalorder %s238, %s252
      %p254 = scmp.eq.s32.totalorder %s41, 0
      %p255 = por %p253, %p254
      %s257 = sadd.s32 %s256, 1
      %p260 = scmp.eq.s32.totalorder %s35, 7
      %p261 = scmp.ne.s32.totalorder %s256, %s258
      %p262 = scmp.eq.s32.totalorder %s35, 0
      %p263 = por %p261, %p262
      %p264 = scmp.ne.s32.totalorder %s256, %s258
      %p265 = scmp.eq.s32.totalorder %s40, 7
      %p266 = por %p264, %p265
      %p267 = scmp.ne.s32.totalorder %s258, %s259
      %p268 = scmp.eq.s32.totalorder %s40, 0
      %p269 = por %p267, %p268
      %p270 = scmp.ne.s32.totalorder %s258, %s259
      %p271 = scmp.eq.s32.totalorder %s41, 7
      %p272 = por %p270, %p271
      %p274 = scmp.ne.s32.totalorder %s259, %s273
      %p275 = scmp.eq.s32.totalorder %s41, 0
      %p276 = por %p274, %p275
      %s278 = sadd.s32 %s277, 1
      %p281 = scmp.eq.s32.totalorder %s35, 7
      %p282 = scmp.ne.s32.totalorder %s277, %s279
      %p283 = scmp.eq.s32.totalorder %s35, 0
      %p284 = por %p282, %p283
      %p285 = scmp.ne.s32.totalorder %s277, %s279
      %p286 = scmp.eq.s32.totalorder %s40, 7
      %p287 = por %p285, %p286
      %p288 = scmp.ne.s32.totalorder %s279, %s280
      %p289 = scmp.eq.s32.totalorder %s40, 0
      %p290 = por %p288, %p289
      %p291 = scmp.ne.s32.totalorder %s279, %s280
      %p292 = scmp.eq.s32.totalorder %s41, 7
      %p293 = por %p291, %p292
      %p295 = scmp.ne.s32.totalorder %s280, %s294
      %p296 = scmp.eq.s32.totalorder %s41, 0
      %p297 = por %p295, %p296
      %s299 = sadd.s32 %s298, 1
      %p302 = scmp.eq.s32.totalorder %s35, 7
      %p303 = scmp.ne.s32.totalorder %s298, %s300
      %p304 = scmp.eq.s32.totalorder %s35, 0
      %p305 = por %p303, %p304
      %p306 = scmp.ne.s32.totalorder %s298, %s300
      %p307 = scmp.eq.s32.totalorder %s40, 7
      %p308 = por %p306, %p307
      %p309 = scmp.ne.s32.totalorder %s300, %s301
      %p310 = scmp.eq.s32.totalorder %s40, 0
      %p311 = por %p309, %p310
      %p312 = scmp.ne.s32.totalorder %s300, %s301
      %p313 = scmp.eq.s32.totalorder %s41, 7
      %p314 = por %p312, %p313
      %p316 = scmp.ne.s32.totalorder %s301, %s315
      %p317 = scmp.eq.s32.totalorder %s41, 0
      %p318 = por %p316, %p317
      %s320 = sadd.s32 %s319, 1
      %p323 = scmp.eq.s32.totalorder %s35, 7
      %p324 = scmp.ne.s32.totalorder %s319, %s321
      %p325 = scmp.eq.s32.totalorder %s35, 0
      %p326 = por %p324, %p325
      %p327 = scmp.ne.s32.totalorder %s319, %s321
      %p328 = scmp.eq.s32.totalorder %s40, 7
      %p329 = por %p327, %p328
      %p330 = scmp.ne.s32.totalorder %s321, %s322
      %p331 = scmp.eq.s32.totalorder %s40, 0
      %p332 = por %p330, %p331
      %p333 = scmp.ne.s32.totalorder %s321, %s322
      %p334 = scmp.eq.s32.totalorder %s41, 7
      %p335 = por %p333, %p334
      %p337 = scmp.ne.s32.totalorder %s322, %s336
      %p338 = scmp.eq.s32.totalorder %s41, 0
      %p339 = por %p337, %p338
      %s341 = sadd.s32 %s340, 1
      %p344 = scmp.eq.s32.totalorder %s35, 7
      %p345 = scmp.ne.s32.totalorder %s340, %s342
      %p346 = scmp.eq.s32.totalorder %s35, 0
      %p347 = por %p345, %p346
      %p348 = scmp.ne.s32.totalorder %s340, %s342
      %p349 = scmp.eq.s32.totalorder %s40, 7
      %p350 = por %p348, %p349
      %p351 = scmp.ne.s32.totalorder %s342, %s343
      %p352 = scmp.eq.s32.totalorder %s40, 0
      %p353 = por %p351, %p352
      %p354 = scmp.ne.s32.totalorder %s342, %s343
      %p355 = scmp.eq.s32.totalorder %s41, 7
      %p356 = por %p354, %p355
      %p358 = scmp.ne.s32.totalorder %s343, %s357
      %p359 = scmp.eq.s32.totalorder %s41, 0
      %p360 = por %p358, %p359
      %s361 = ssub.s32 %s43, %s50
      %s362 = ssub.s32 %s42, %s54
      %s363 = sor.u32 %s361, %s362
      %p364 = scmp.eq.s32.totalorder %s363, 0
      %s366 = sadd.s32 %s365, 1
      %s367 = scalar_select %p364, %s365, %s366
      %p370 = pneg %p364
      %p371 = scmp.eq.s32.totalorder %s35, 7
      %p372 = por %p370, %p371
      %p373 = scmp.ne.s32.totalorder %s365, %s368
      %p374 = scmp.eq.s32.totalorder %s35, 0
      %p375 = por %p373, %p374
      %p376 = scmp.ne.s32.totalorder %s365, %s368
      %p377 = scmp.eq.s32.totalorder %s40, 7
      %p378 = por %p376, %p377
      %p379 = scmp.ne.s32.totalorder %s368, %s369
      %p380 = scmp.eq.s32.totalorder %s40, 0
      %p381 = por %p379, %p380
      %p382 = scmp.ne.s32.totalorder %s368, %s369
      %p383 = scmp.eq.s32.totalorder %s41, 7
      %p384 = por %p382, %p383
      %p386 = scmp.ne.s32.totalorder %s369, %s385
      %p387 = scmp.eq.s32.totalorder %s41, 0
      %p388 = por %p386, %p387
      %s389 = ssub.s32 %s43, %s50
      %s390 = ssub.s32 %s42, %s54
      %s391 = sor.u32 %s389, %s390
      %p392 = scmp.eq.s32.totalorder %s391, 0
      %s394 = sadd.s32 %s393, 1
      %s395 = scalar_select %p392, %s393, %s394
      %p398 = pneg %p392
      %p399 = scmp.eq.s32.totalorder %s35, 7
      %p400 = por %p398, %p399
      %p401 = scmp.ne.s32.totalorder %s393, %s396
      %p402 = scmp.eq.s32.totalorder %s35, 0
      %p403 = por %p401, %p402
      %p404 = scmp.ne.s32.totalorder %s393, %s396
      %p405 = scmp.eq.s32.totalorder %s40, 7
      %p406 = por %p404, %p405
      %p407 = scmp.ne.s32.totalorder %s396, %s397
      %p408 = scmp.eq.s32.totalorder %s40, 0
      %p409 = por %p407, %p408
      %p410 = scmp.ne.s32.totalorder %s396, %s397
      %p411 = scmp.eq.s32.totalorder %s41, 7
      %p412 = por %p410, %p411
      %p414 = scmp.ne.s32.totalorder %s397, %s413
      %p415 = scmp.eq.s32.totalorder %s41, 0
      %p416 = por %p414, %p415
      %p417 = scmp.le.s32.totalorder 1, %s35
      %p418 = scmp.lt.s32.totalorder %s35, 9
      %p419 = pnand %p417, %p418
      %p420 = pneg %p419
      // Predicated region
      $region9: #{tpu_custom_call.1} parent=5 // pred_check
        _
      $region10: #{tpu_custom_call.1} parent=5 // pred_check_branch
        %422 = sbr.rel (%p419) target = $region12
      $region11: #{tpu_custom_call.1} parent=5 // pred_region
        %s423 = ssub.s32 %s35, 1
        // Predicated region
        $region13: #{tpu_custom_call.1} parent=11 // pred_check
          %p424 = pneg %p122
        $region14: #{tpu_custom_call.1} parent=11 // pred_check_branch
          %426 = sbr.rel (%p424) target = $region16
        $region15: #{tpu_custom_call.1} parent=11 // pred_region
          %s428 = ssub.s32 512, 512
          %429 = vsyncadd [#allocation10], %s428
          %s430 = sshll.u32 [#allocation11], 4
          %s431 = int_to_ptr.vmem [resolvable:$true] %s430
          %436 = dma.hbm_to_vmem [thread:$0]  %s2, 512, %s431, [#allocation10], 128, 128, 8
        $region16: #{tpu_custom_call.1} parent=11 // pred_fallthru
          _
        // Predicated region
        $region17: #{tpu_custom_call.1} parent=11 // pred_check
          %p437 = pneg %p143
        $region18: #{tpu_custom_call.1} parent=11 // pred_check_branch
          %439 = sbr.rel (%p437) target = $region20
        $region19: #{tpu_custom_call.1} parent=11 // pred_region
          _
        $region20: #{tpu_custom_call.1} parent=11 // pred_fallthru
          _
        // Predicated region
        $region21: #{tpu_custom_call.1} parent=11 // pred_check
          %p440 = pneg %p164
        $region22: #{tpu_custom_call.1} parent=11 // pred_check_branch
          %442 = sbr.rel (%p440) target = $region24
        $region23: #{tpu_custom_call.1} parent=11 // pred_region
          _
        $region24: #{tpu_custom_call.1} parent=11 // pred_fallthru
          _
        // Predicated region
        $region25: #{tpu_custom_call.1} parent=11 // pred_check
          %p443 = pneg %p185
        $region26: #{tpu_custom_call.1} parent=11 // pred_check_branch
          %445 = sbr.rel (%p443) target = $region28
        $region27: #{tpu_custom_call.1} parent=11 // pred_region
          _
        $region28: #{tpu_custom_call.1} parent=11 // pred_fallthru
          _
        // Predicated region
        $region29: #{tpu_custom_call.1} parent=11 // pred_check
          %p446 = pneg %p206
        $region30: #{tpu_custom_call.1} parent=11 // pred_check_branch
          %448 = sbr.rel (%p446) target = $region32
        $region31: #{tpu_custom_call.1} parent=11 // pred_region
          %s450 = ssub.s32 2048, 2048
          %451 = vsyncadd [#allocation13], %s450
          %s452 = sshll.u32 [#allocation12], 4
          %s453 = int_to_ptr.vmem [resolvable:$true] %s452
          %458 = dma.hbm_to_vmem [thread:$0]  %s6, 2048, %s453, [#allocation13], 128, 128, 8
        $region32: #{tpu_custom_call.1} parent=11 // pred_fallthru
          _
        // Predicated region
        $region33: #{tpu_custom_call.1} parent=11 // pred_check
          %p459 = pneg %p227
        $region34: #{tpu_custom_call.1} parent=11 // pred_check_branch
          %461 = sbr.rel (%p459) target = $region36
        $region35: #{tpu_custom_call.1} parent=11 // pred_region
          _
        $region36: #{tpu_custom_call.1} parent=11 // pred_fallthru
          _
        // Predicated region
        $region37: #{tpu_custom_call.1} parent=11 // pred_check
          %p462 = pneg %p248
        $region38: #{tpu_custom_call.1} parent=11 // pred_check_branch
          %464 = sbr.rel (%p462) target = $region40
        $region39: #{tpu_custom_call.1} parent=11 // pred_region
          _
        $region40: #{tpu_custom_call.1} parent=11 // pred_fallthru
          _
        // Predicated region
        $region41: #{tpu_custom_call.1} parent=11 // pred_check
          %p465 = pneg %p269
        $region42: #{tpu_custom_call.1} parent=11 // pred_check_branch
          %467 = sbr.rel (%p465) target = $region44
        $region43: #{tpu_custom_call.1} parent=11 // pred_region
          _
        $region44: #{tpu_custom_call.1} parent=11 // pred_fallthru
          _
        // Predicated region
        $region45: #{tpu_custom_call.1} parent=11 // pred_check
          %p468 = pneg %p290
        $region46: #{tpu_custom_call.1} parent=11 // pred_check_branch
          %470 = sbr.rel (%p468) target = $region48
        $region47: #{tpu_custom_call.1} parent=11 // pred_region
          _
        $region48: #{tpu_custom_call.1} parent=11 // pred_fallthru
          _
        // Predicated region
        $region49: #{tpu_custom_call.1} parent=11 // pred_check
          %p471 = pneg %p311
        $region50: #{tpu_custom_call.1} parent=11 // pred_check_branch
          %473 = sbr.rel (%p471) target = $region52
        $region51: #{tpu_custom_call.1} parent=11 // pred_region
          _
        $region52: #{tpu_custom_call.1} parent=11 // pred_fallthru
          _
        // Predicated region
        $region53: #{tpu_custom_call.1} parent=11 // pred_check
          %p474 = pneg %p332
        $region54: #{tpu_custom_call.1} parent=11 // pred_check_branch
          %476 = sbr.rel (%p474) target = $region56
        $region55: #{tpu_custom_call.1} parent=11 // pred_region
          _
        $region56: #{tpu_custom_call.1} parent=11 // pred_fallthru
          _
        // Predicated region
        $region57: #{tpu_custom_call.1} parent=11 // pred_check
          %p477 = pneg %p353
        $region58: #{tpu_custom_call.1} parent=11 // pred_check_branch
          %479 = sbr.rel (%p477) target = $region60
        $region59: #{tpu_custom_call.1} parent=11 // pred_region
          _
        $region60: #{tpu_custom_call.1} parent=11 // pred_fallthru
          _
      $region12: #{tpu_custom_call.1} parent=5 // pred_fallthru
        _
      %p480 = scmp.lt.s32.totalorder %s35, 8
      // Predicated region
      $region61: #{tpu_custom_call.1} parent=5 // pred_check
        %p481 = pneg %p480
      $region62: #{tpu_custom_call.1} parent=5 // pred_check_branch
        %483 = sbr.rel (%p481) target = $region64
      $region63: #{tpu_custom_call.1} parent=5 // pred_region
        // Predicated region
        $region65: #{tpu_custom_call.1} parent=63 // pred_check
          %p484 = pneg %p69
        $region66: #{tpu_custom_call.1} parent=63 // pred_check_branch
          %486 = sbr.rel (%p484) target = $region68
        $region67: #{tpu_custom_call.1} parent=63 // pred_region
          %s487 = sand.u32 %s59, 1
          %s488 = scalar_lea.sflag [#allocation7], %s487
          %s489 = sand.u32 %s59, 1
          %s490 = smul.addr %s489, 32
          %s491 = scalar_lea.vmem [#allocation6], %s490
          %s492 = smul.u32 8, %s43
          %s494 = ssub.s32 512, 512
          %495 = vsyncadd %s488, %s494
          %s496 = smul.addr %s492, 2
          %s497 = sadd.s32 %s42, %s496
          %s498 = smul.addr %s497, 64
          %s499 = scalar_lea.hbm %s0, %s498
          %s500 = sshll.u32 %s491, 4
          %s501 = int_to_ptr.vmem [resolvable:$true] %s500
          %506 = dma.hbm_to_vmem [thread:$0]  %s499, 512, %s501, %s488, 128, 64, 4
        $region68: #{tpu_custom_call.1} parent=63 // pred_fallthru
          _
        // Predicated region
        $region69: #{tpu_custom_call.1} parent=63 // pred_check
          %p507 = pneg %p95
        $region70: #{tpu_custom_call.1} parent=63 // pred_check_branch
          %509 = sbr.rel (%p507) target = $region72
        $region71: #{tpu_custom_call.1} parent=63 // pred_region
          %s510 = sand.u32 %s35, 1
          %s511 = scalar_lea.sflag [#allocation10], %s510
          %s512 = sand.u32 %s85, 1
          %s513 = smul.addr %s512, 8
          %s514 = scalar_lea.vmem [#allocation9], %s513
          %s516 = ssub.s32 128, 128
          %517 = vsyncadd %s511, %s516
          %s518 = smul.addr %s42, 128
          %s519 = scalar_lea.hbm %s1, %s518
          %s521 = sshll.u32 %s514, 4
          %s522 = int_to_ptr.vmem [resolvable:$true] %s521
          %524 = dma.hbm_to_vmem [thread:$0]  %s519, 128, %s522, %s511
        $region72: #{tpu_custom_call.1} parent=63 // pred_fallthru
          _
      $region64: #{tpu_custom_call.1} parent=5 // pred_fallthru
        _
      %p525 = scmp.le.s32.totalorder 1, %s35
      %p526 = scmp.lt.s32.totalorder %s35, 9
      %p527 = pnand %p525, %p526
      %p528 = pneg %p527
      // Predicated region
      $region73: #{tpu_custom_call.1} parent=5 // pred_check
        _
      $region74: #{tpu_custom_call.1} parent=5 // pred_check_branch
        %530 = sbr.rel (%p527) target = $region76
      $region75: #{tpu_custom_call.1} parent=5 // pred_region
        %s531 = ssub.s32 %s35, 1
        %s532 = sand.u32 %s62, 1
        %s533 = scalar_lea.sflag [#allocation7], %s532
        %s534 = sand.u32 %s62, 1
        %s535 = smul.addr %s534, 32
        %s536 = scalar_lea.vmem [#allocation6], %s535
        // Predicated region
        $region77: #{tpu_custom_call.1} parent=75 // pred_check
          %p537 = pneg %p75
        $region78: #{tpu_custom_call.1} parent=75 // pred_check_branch
          %539 = sbr.rel (%p537) target = $region80
        $region79: #{tpu_custom_call.1} parent=75 // pred_region
          %540 = dma.done %s533, 512
        $region80: #{tpu_custom_call.1} parent=75 // pred_fallthru
          _
        %s541 = sand.u32 %s40, 1
        %s542 = scalar_lea.sflag [#allocation10], %s541
        %s543 = sand.u32 %s88, 1
        %s544 = smul.addr %s543, 8
        %s545 = scalar_lea.vmem [#allocation9], %s544
        // Predicated region
        $region81: #{tpu_custom_call.1} parent=75 // pred_check
          %p546 = pneg %p101
        $region82: #{tpu_custom_call.1} parent=75 // pred_check_branch
          %548 = sbr.rel (%p546) target = $region84
        $region83: #{tpu_custom_call.1} parent=75 // pred_region
          %549 = dma.done %s542, 128
        $region84: #{tpu_custom_call.1} parent=75 // pred_fallthru
          _
        // Predicated region
        $region85: #{tpu_custom_call.1} parent=75 // pred_check
          %p550 = pneg %p122
        $region86: #{tpu_custom_call.1} parent=75 // pred_check_branch
          %552 = sbr.rel (%p550) target = $region88
        $region87: #{tpu_custom_call.1} parent=75 // pred_region
          %553 = dma.done [#allocation10], 512
        $region88: #{tpu_custom_call.1} parent=75 // pred_fallthru
          _
        // Predicated region
        $region89: #{tpu_custom_call.1} parent=75 // pred_check
          %p554 = pneg %p206
        $region90: #{tpu_custom_call.1} parent=75 // pred_check_branch
          %556 = sbr.rel (%p554) target = $region92
        $region91: #{tpu_custom_call.1} parent=75 // pred_region
          %557 = dma.done [#allocation13], 2048
        $region92: #{tpu_custom_call.1} parent=75 // pred_fallthru
          _
        %s558 = sand.u32 %s62, 1
        %s559 = scalar_lea.sflag [#allocation7], %s558
        %s560 = sand.u32 %s62, 1
        %s561 = smul.addr %s560, 32
        %s562 = scalar_lea.vmem [#allocation6], %s561
        %p563 = pneg %p75
        %p564 = pneg %p72
        %s565 = sand.u32 %s40, 1
        %s566 = scalar_lea.sflag [#allocation10], %s565
        %s567 = sand.u32 %s88, 1
        %s568 = smul.addr %s567, 8
        %s569 = scalar_lea.vmem [#allocation9], %s568
        %p570 = pneg %p101
        %p571 = pneg %p98
        %p572 = pneg %p122
        %p573 = pneg %p119
        %p574 = pneg %p143
        %p575 = pneg %p140
        %p576 = pneg %p164
        %p577 = pneg %p161
        %p578 = pneg %p185
        %p579 = pneg %p182
        %p580 = pneg %p206
        %p581 = pneg %p203
        %p582 = pneg %p227
        %p583 = pneg %p224
        %p584 = pneg %p248
        %p585 = pneg %p245
        %p586 = pneg %p269
        %p587 = pneg %p266
        %p588 = pneg %p290
        %p589 = pneg %p287
        %p590 = pneg %p311
        %p591 = pneg %p308
        %p592 = pneg %p332
        %p593 = pneg %p329
        %p594 = pneg %p353
        %p595 = pneg %p350
        %p596 = pneg %p381
        %p597 = pneg %p378
        %s598 = sand.u32 %s368, 1
        %s599 = scalar_lea.sflag [#allocation8], %s598
        %s600 = sand.u32 %s368, 1
        %s601 = smul.addr %s600, 64
        %s602 = scalar_lea.vmem [#allocation14], %s601
        %p603 = pneg %p409
        %p604 = pneg %p406
        %s605 = sand.u32 %s396, 1
        %s606 = scalar_lea.sflag [#allocation16], %s605
        %s607 = sand.u32 %s396, 1
        %s608 = smul.addr %s607, 32
        %s609 = scalar_lea.vmem [#allocation15], %s608
        %s610 = smul.u32 8, %s45
        %s611 = smul.u32 8, %s45
        %s612 = smul.u32 8, %s45
        %p614 = scmp.eq.s32.totalorder %s45, 0
        // Predicated region
        $region93: #{tpu_custom_call.1} parent=75 // pred_check
          %p615 = pneg %p614
        $region94: #{tpu_custom_call.1} parent=75 // pred_check_branch
          %617 = sbr.rel (%p615) target = $region96
        $region95: #{tpu_custom_call.1} parent=75 // pred_region
          %v618 = vld [vmem:[%s545] sm:$0xff]
          %619 = vst [vmem:[#allocation2] sm:$0xff] %v618
          %620 = vst [vmem:[#allocation3] sm:$0xff] 0.0
          %621 = vst [vmem:[#allocation4] sm:$0xf] 0
        $region96: #{tpu_custom_call.1} parent=75 // pred_fallthru
          _
        %v622 = vld [vmem:[%s536] sm:$0xf]
        %v623 = vld [vmem:[%s536 + $0x4] sm:$0xf]
        %v624 = vld [vmem:[%s536 + $0x8] sm:$0xf]
        %v625 = vld [vmem:[%s536 + $0xc] sm:$0xf]
        %v626 = vld [vmem:[%s536 + $0x10] sm:$0xf]
        %v627 = vld [vmem:[%s536 + $0x14] sm:$0xf]
        %v628 = vld [vmem:[%s536 + $0x18] sm:$0xf]
        %v629 = vld [vmem:[%s536 + $0x1c] sm:$0xf]
        %v630 = vld [vmem:[#allocation11] sm:$0xff]
        %v631 = vld [vmem:[#allocation11 + $0x8] sm:$0xff]
        %v632 = vld [vmem:[#allocation11 + $0x10] sm:$0xff]
        %v633 = vld [vmem:[#allocation11 + $0x18] sm:$0xff]
        %v634 = vld [vmem:[%s3] sm:$0x3]
        %v636 = vlaneseq
        %v637 = vshrl.u32 %v636, 7
        %v638 = vsub.s32 0, %v637
        %v639 = vrot.slane %v634, %v638
        %v640 = vlaneseq
        %v641 = vshrl.u32 %v640, 7
        %v642 = vsub.s32 1, %v641
        %v643 = vrot.slane %v634, %v642
        %v654 = vunpack.c.l.b16 %v622
        %v655 = vunpack.c.l.b16 %v623
        %v656 = vunpack.c.l.b16 %v624
        %v657 = vunpack.c.l.b16 %v625
        %v658 = vunpack.c.l.b16 %v626
        %v659 = vunpack.c.l.b16 %v627
        %v660 = vunpack.c.l.b16 %v628
        %v661 = vunpack.c.l.b16 %v629
        %v662 = vpack.c.b16 %v655, %v654
        %v663 = vpack.c.b16 %v657, %v656
        %v664 = vpack.c.b16 %v659, %v658
        %v665 = vpack.c.b16 %v661, %v660
        %v670 = vunpack.c.l.b16 %v630
        %v671 = vunpack.c.h.b16 %v630
        %v672 = vunpack.c.l.b16 %v631
        %v673 = vunpack.c.h.b16 %v631
        %v674 = vunpack.c.l.b16 %v632
        %v675 = vunpack.c.h.b16 %v632
        %v676 = vunpack.c.l.b16 %v633
        %v677 = vunpack.c.h.b16 %v633
        %v678 = vpack.c.b16 %v672, %v670
        %v679 = vpack.c.b16 %v673, %v671
        %v680 = vpack.c.b16 %v676, %v674
        %v681 = vpack.c.b16 %v677, %v675
        %vm686 = vcmask 261120
        %v688 = vsel %vm686, %v662, 0
        %v691 = vsel %vm686, %v663, 0
        %v694 = vsel %vm686, %v664, 0
        %v697 = vsel %vm686, %v665, 0
        %699 = vmatprep.subr.bf16.mxu0 %v679
        %700 = vmatpush1.bf16.msra.mxu0 %v678
        %701 = vmatprep.subr.bf16.mxu0 %v681
        %702 = vmatpush1.bf16.msra.mxu0 %v680
        %703 = vmatprep.subr.bf16.mxu0 0
        %704 = vmatpush1.bf16.msra.mxu0 0
        %705 = vmatprep.subr.bf16.mxu0 0
        %706 = vmatpush1.bf16.msra.mxu0 0
        %707 = vmatprep.subr.bf16.mxu0 0
        %708 = vmatpush1.bf16.msra.mxu0 0
        %709 = vmatprep.subr.bf16.mxu0 0
        %710 = vmatpush1.bf16.msra.mxu0 0
        %711 = vmatprep.subr.bf16.mxu0 0
        %712 = vmatpush1.bf16.msra.mxu0 0
        %713 = vmatprep.subr.bf16.mxu0 0
        %714 = vmatpush1.bf16.msra.mxu0 0
        %715 = vmatprep.subr.bf16.mxu0 0
        %716 = vmatpush1.bf16.msra.mxu0 0
        %717 = vmatprep.subr.bf16.mxu0 0
        %718 = vmatpush1.bf16.msra.mxu0 0
        %719 = vmatprep.subr.bf16.mxu0 0
        %720 = vmatpush1.bf16.msra.mxu0 0
        %721 = vmatprep.subr.bf16.mxu0 0
        %722 = vmatpush1.bf16.msra.mxu0 0
        %723 = vmatprep.subr.bf16.mxu0 0
        %724 = vmatpush1.bf16.msra.mxu0 0
        %725 = vmatprep.subr.bf16.mxu0 0
        %726 = vmatpush1.bf16.msra.mxu0 0
        %727 = vmatprep.subr.bf16.mxu0 0
        %728 = vmatpush1.bf16.msra.mxu0 0
        %729 = vmatprep.subr.bf16.mxu0 0
        %730 = vmatpush1.bf16.msra.mxu0 0
        %731 = vmatprep.mubr.bf16.mxu0 0
        %732 = vmatmul.mubr.bf16.gmra.mrb[0].mxu0 %v688
        %v733 = vpop.f32.mrb[0].mxu0
        %v734 = vadd.f32 %v639, %v733
        %v735 = vpop.f32.mrb[0].mxu0
        %v736 = vadd.f32 %v643, %v735
        %v737 = vpop.f32.mrb[0].mxu0
        %v738 = vadd.f32 %v639, %v737
        %v739 = vpop.f32.mrb[0].mxu0
        %v740 = vadd.f32 %v643, %v739
        %741 = vmatprep.mubr.bf16.mxu0 0
        %742 = vmatmul.mubr.bf16.gmra.mrb[0].mxu0 %v691
        %v743 = vpop.f32.mrb[0].mxu0
        %v744 = vadd.f32 %v639, %v743
        %v745 = vpop.f32.mrb[0].mxu0
        %v746 = vadd.f32 %v643, %v745
        %v747 = vpop.f32.mrb[0].mxu0
        %v748 = vadd.f32 %v639, %v747
        %v749 = vpop.f32.mrb[0].mxu0
        %v750 = vadd.f32 %v643, %v749
        %751 = vmatprep.mubr.bf16.mxu0 0
        %752 = vmatmul.mubr.bf16.gmra.mrb[0].mxu0 %v694
        %v753 = vpop.f32.mrb[0].mxu0
        %v754 = vadd.f32 %v639, %v753
        %v755 = vpop.f32.mrb[0].mxu0
        %v756 = vadd.f32 %v643, %v755
        %v757 = vpop.f32.mrb[0].mxu0
        %v758 = vadd.f32 %v639, %v757
        %v759 = vpop.f32.mrb[0].mxu0
        %v760 = vadd.f32 %v643, %v759
        %761 = vmatprep.mubr.bf16.mxu0 0
        %762 = vmatmul.mubr.bf16.gmra.mrb[0].mxu0 %v697
        %v763 = vpop.f32.mrb[0].mxu0
        %v764 = vadd.f32 %v639, %v763
        %v765 = vpop.f32.mrb[0].mxu0
        %v766 = vadd.f32 %v643, %v765
        %v767 = vpop.f32.mrb[0].mxu0
        %v768 = vadd.f32 %v639, %v767
        %v769 = vpop.f32.mrb[0].mxu0
        %v770 = vadd.f32 %v643, %v769
        %771 = vdwg.mxu0
        %v772 = vld [vmem:[%s4] sm:$0x3]
        %v773 = vld [vmem:[%s5] sm:$0x3]
        %v774 = vadd.f32 %v734, %v736
        %775 = vadd.xlane.f32.xlu0 %v774
        %v776 = vpop.xlane.xlu0 %775
        %v777 = vadd.f32 %v738, %v740
        %778 = vadd.xlane.f32.xlu0 %v777
        %v779 = vpop.xlane.xlu0 %778
        %v780 = vadd.f32 %v744, %v746
        %781 = vadd.xlane.f32.xlu0 %v780
        %v782 = vpop.xlane.xlu0 %781
        %v783 = vadd.f32 %v748, %v750
        %784 = vadd.xlane.f32.xlu0 %v783
        %v785 = vpop.xlane.xlu0 %784
        %v786 = vadd.f32 %v754, %v756
        %787 = vadd.xlane.f32.xlu0 %v786
        %v788 = vpop.xlane.xlu0 %787
        %v789 = vadd.f32 %v758, %v760
        %790 = vadd.xlane.f32.xlu0 %v789
        %v791 = vpop.xlane.xlu0 %790
        %v792 = vadd.f32 %v764, %v766
        %793 = vadd.xlane.f32.xlu0 %v792
        %v794 = vpop.xlane.xlu0 %793
        %v795 = vadd.f32 %v768, %v770
        %796 = vadd.xlane.f32.xlu0 %v795
        %v797 = vpop.xlane.xlu0 %796
        %v798 = vrcp.pop 256.0
        %v799 = vmul.f32 %v776, %v798
        %v800 = vmul.f32 %v779, %v798
        %v801 = vmul.f32 %v782, %v798
        %v802 = vmul.f32 %v785, %v798
        %v803 = vmul.f32 %v788, %v798
        %v804 = vmul.f32 %v791, %v798
        %v805 = vmul.f32 %v794, %v798
        %v806 = vmul.f32 %v797, %v798
        %v807 = vsub.f32 %v734, %v799
        %v808 = vsub.f32 %v736, %v799
        %v809 = vsub.f32 %v738, %v800
        %v810 = vsub.f32 %v740, %v800
        %v811 = vsub.f32 %v744, %v801
        %v812 = vsub.f32 %v746, %v801
        %v813 = vsub.f32 %v748, %v802
        %v814 = vsub.f32 %v750, %v802
        %v815 = vsub.f32 %v754, %v803
        %v816 = vsub.f32 %v756, %v803
        %v817 = vsub.f32 %v758, %v804
        %v818 = vsub.f32 %v760, %v804
        %v819 = vsub.f32 %v764, %v805
        %v820 = vsub.f32 %v766, %v805
        %v821 = vsub.f32 %v768, %v806
        %v822 = vsub.f32 %v770, %v806
        %v823 = vmul.f32 %v807, %v807
        %v824 = vmul.f32 %v808, %v808
        %v825 = vmul.f32 %v809, %v809
        %v826 = vmul.f32 %v810, %v810
        %v827 = vmul.f32 %v811, %v811
        %v828 = vmul.f32 %v812, %v812
        %v829 = vmul.f32 %v813, %v813
        %v830 = vmul.f32 %v814, %v814
        %v831 = vmul.f32 %v815, %v815
        %v832 = vmul.f32 %v816, %v816
        %v833 = vmul.f32 %v817, %v817
        %v834 = vmul.f32 %v818, %v818
        %v835 = vmul.f32 %v819, %v819
        %v836 = vmul.f32 %v820, %v820
        %v837 = vmul.f32 %v821, %v821
        %v838 = vmul.f32 %v822, %v822
        %v839 = vadd.f32 %v823, %v824
        %840 = vadd.xlane.f32.xlu0 %v839
        %v841 = vpop.xlane.xlu0 %840
        %v842 = vadd.f32 %v825, %v826
        %843 = vadd.xlane.f32.xlu0 %v842
        %v844 = vpop.xlane.xlu0 %843
        %v845 = vadd.f32 %v827, %v828
        %846 = vadd.xlane.f32.xlu0 %v845
        %v847 = vpop.xlane.xlu0 %846
        %v848 = vadd.f32 %v829, %v830
        %849 = vadd.xlane.f32.xlu0 %v848
        %v850 = vpop.xlane.xlu0 %849
        %v851 = vadd.f32 %v831, %v832
        %852 = vadd.xlane.f32.xlu0 %v851
        %v853 = vpop.xlane.xlu0 %852
        %v854 = vadd.f32 %v833, %v834
        %855 = vadd.xlane.f32.xlu0 %v854
        %v856 = vpop.xlane.xlu0 %855
        %v857 = vadd.f32 %v835, %v836
        %858 = vadd.xlane.f32.xlu0 %v857
        %v859 = vpop.xlane.xlu0 %858
        %v860 = vadd.f32 %v837, %v838
        %861 = vadd.xlane.f32.xlu0 %v860
        %v862 = vpop.xlane.xlu0 %861
        %v863 = vmul.f32 %v841, %v798
        %v864 = vmul.f32 %v844, %v798
        %v865 = vmul.f32 %v847, %v798
        %v866 = vmul.f32 %v850, %v798
        %v867 = vmul.f32 %v853, %v798
        %v868 = vmul.f32 %v856, %v798
        %v869 = vmul.f32 %v859, %v798
        %v870 = vmul.f32 %v862, %v798
        %v871 = vadd.f32 %v863, 1e-05
        %v872 = vadd.f32 %v864, 1e-05
        %v873 = vadd.f32 %v865, 1e-05
        %v874 = vadd.f32 %v866, 1e-05
        %v875 = vadd.f32 %v867, 1e-05
        %v876 = vadd.f32 %v868, 1e-05
        %v877 = vadd.f32 %v869, 1e-05
        %v878 = vadd.f32 %v870, 1e-05
        %v879 = vrsqrt.pop %v871
        %v880 = vrsqrt.pop %v872
        %v881 = vrsqrt.pop %v873
        %v882 = vrsqrt.pop %v874
        %v883 = vrsqrt.pop %v875
        %v884 = vrsqrt.pop %v876
        %v885 = vrsqrt.pop %v877
        %v886 = vrsqrt.pop %v878
        %v887 = vmul.f32 %v807, %v879
        %v888 = vmul.f32 %v808, %v879
        %v889 = vmul.f32 %v809, %v880
        %v890 = vmul.f32 %v810, %v880
        %v891 = vmul.f32 %v811, %v881
        %v892 = vmul.f32 %v812, %v881
        %v893 = vmul.f32 %v813, %v882
        %v894 = vmul.f32 %v814, %v882
        %v895 = vmul.f32 %v815, %v883
        %v896 = vmul.f32 %v816, %v883
        %v897 = vmul.f32 %v817, %v884
        %v898 = vmul.f32 %v818, %v884
        %v899 = vmul.f32 %v819, %v885
        %v900 = vmul.f32 %v820, %v885
        %v901 = vmul.f32 %v821, %v886
        %v902 = vmul.f32 %v822, %v886
        %v904 = vlaneseq
        %v905 = vshrl.u32 %v904, 7
        %v906 = vsub.s32 0, %v905
        %v907 = vrot.slane %v772, %v906
        %v908 = vlaneseq
        %v909 = vshrl.u32 %v908, 7
        %v910 = vsub.s32 1, %v909
        %v911 = vrot.slane %v772, %v910
        %v914 = vmul.f32 %v887, %v907
        %v915 = vmul.f32 %v888, %v911
        %v916 = vmul.f32 %v889, %v907
        %v917 = vmul.f32 %v890, %v911
        %v918 = vmul.f32 %v891, %v907
        %v919 = vmul.f32 %v892, %v911
        %v920 = vmul.f32 %v893, %v907
        %v921 = vmul.f32 %v894, %v911
        %v922 = vmul.f32 %v895, %v907
        %v923 = vmul.f32 %v896, %v911
        %v924 = vmul.f32 %v897, %v907
        %v925 = vmul.f32 %v898, %v911
        %v926 = vmul.f32 %v899, %v907
        %v927 = vmul.f32 %v900, %v911
        %v928 = vmul.f32 %v901, %v907
        %v929 = vmul.f32 %v902, %v911
        %v931 = vlaneseq
        %v932 = vshrl.u32 %v931, 7
        %v933 = vsub.s32 0, %v932
        %v934 = vrot.slane %v773, %v933
        %v935 = vlaneseq
        %v936 = vshrl.u32 %v935, 7
        %v937 = vsub.s32 1, %v936
        %v938 = vrot.slane %v773, %v937
        %v941 = vadd.f32 %v914, %v934
        %v942 = vadd.f32 %v915, %v938
        %v943 = vadd.f32 %v916, %v934
        %v944 = vadd.f32 %v917, %v938
        %v945 = vadd.f32 %v918, %v934
        %v946 = vadd.f32 %v919, %v938
        %v947 = vadd.f32 %v920, %v934
        %v948 = vadd.f32 %v921, %v938
        %v949 = vadd.f32 %v922, %v934
        %v950 = vadd.f32 %v923, %v938
        %v951 = vadd.f32 %v924, %v934
        %v952 = vadd.f32 %v925, %v938
        %v953 = vadd.f32 %v926, %v934
        %v954 = vadd.f32 %v927, %v938
        %v955 = vadd.f32 %v928, %v934
        %v956 = vadd.f32 %v929, %v938
        %v957 = vadd.f32 %v941, %v942
        %v958 = vadd.f32 %v943, %v944
        %v959 = vadd.f32 %v945, %v946
        %v960 = vadd.f32 %v947, %v948
        %v961 = vadd.f32 %v949, %v950
        %v962 = vadd.f32 %v951, %v952
        %v963 = vadd.f32 %v953, %v954
        %v964 = vadd.f32 %v955, %v956
        %965 = vst [vmem:[#allocation5] sm:$0xff] %v957
        %966 = vst [vmem:[#allocation5 + $0x8] sm:$0xff] %v958
        %967 = vst [vmem:[#allocation5 + $0x10] sm:$0xff] %v959
        %968 = vst [vmem:[#allocation5 + $0x18] sm:$0xff] %v960
        %969 = vst [vmem:[#allocation5 + $0x20] sm:$0xff] %v961
        %970 = vst [vmem:[#allocation5 + $0x28] sm:$0xff] %v962
        %971 = vst [vmem:[#allocation5 + $0x30] sm:$0xff] %v963
        %972 = vst [vmem:[#allocation5 + $0x38] sm:$0xff] %v964
        %v973 = vld [vmem:[%s10] sm:$0x1]
        %v974 = vld [vmem:[%s11] sm:$0x1]
        %v975 = vld [vmem:[%s12] sm:$0x1]
        %v976 = vld [vmem:[%s13] sm:$0x1]
        %v977 = vld [vmem:[#allocation12] sm:$0xff]
        %v978 = vld [vmem:[#allocation12 + $0x8] sm:$0xff]
        %v979 = vld [vmem:[#allocation12 + $0x10] sm:$0xff]
        %v980 = vld [vmem:[#allocation12 + $0x18] sm:$0xff]
        %v981 = vld [vmem:[#allocation12 + $0x20] sm:$0xff]
        %v982 = vld [vmem:[#allocation12 + $0x28] sm:$0xff]
        %v983 = vld [vmem:[#allocation12 + $0x30] sm:$0xff]
        %v984 = vld [vmem:[#allocation12 + $0x38] sm:$0xff]
        %v985 = vld [vmem:[#allocation12 + $0x40] sm:$0xff]
        %v986 = vld [vmem:[#allocation12 + $0x48] sm:$0xff]
        %v987 = vld [vmem:[#allocation12 + $0x50] sm:$0xff]
        %v988 = vld [vmem:[#allocation12 + $0x58] sm:$0xff]
        %v989 = vld [vmem:[#allocation12 + $0x60] sm:$0xff]
        %v990 = vld [vmem:[#allocation12 + $0x68] sm:$0xff]
        %v991 = vld [vmem:[#allocation12 + $0x70] sm:$0xff]
        %v992 = vld [vmem:[#allocation12 + $0x78] sm:$0xff]
        %v993 = vld [vmem:[%s7] sm:$0x3]
        %v994 = vld [vmem:[%s8] sm:$0x3]
        %v995 = vld [vmem:[%s9] sm:$0x3]
        %v996 = vld [vmem:[#allocation4] sm:$0xf]
        %v998 = vlaneseq
        %v999 = vshrl.u32 %v998, 7
        %v1000 = vsub.s32 0, %v999
        %v1001 = vrot.slane %v993, %v1000
        %v1002 = vlaneseq
        %v1003 = vshrl.u32 %v1002, 7
        %v1004 = vsub.s32 1, %v1003
        %v1005 = vrot.slane %v993, %v1004
        %v1024 = vunpack.c.l.b16 %v977
        %v1025 = vunpack.c.h.b16 %v977
        %v1026 = vunpack.c.l.b16 %v978
        %v1027 = vunpack.c.h.b16 %v978
        %v1028 = vunpack.c.l.b16 %v979
        %v1029 = vunpack.c.h.b16 %v979
        %v1030 = vunpack.c.l.b16 %v980
        %v1031 = vunpack.c.h.b16 %v980
        %v1032 = vunpack.c.l.b16 %v981
        %v1033 = vunpack.c.h.b16 %v981
        %v1034 = vunpack.c.l.b16 %v982
        %v1035 = vunpack.c.h.b16 %v982
        %v1036 = vunpack.c.l.b16 %v983
        %v1037 = vunpack.c.h.b16 %v983
        %v1038 = vunpack.c.l.b16 %v984
        %v1039 = vunpack.c.h.b16 %v984
        %v1040 = vunpack.c.l.b16 %v985
        %v1041 = vunpack.c.h.b16 %v985
        %v1042 = vunpack.c.l.b16 %v986
        %v1043 = vunpack.c.h.b16 %v986
        %v1044 = vunpack.c.l.b16 %v987
        %v1045 = vunpack.c.h.b16 %v987
        %v1046 = vunpack.c.l.b16 %v988
        %v1047 = vunpack.c.h.b16 %v988
        %v1048 = vunpack.c.l.b16 %v989
        %v1049 = vunpack.c.h.b16 %v989
        %v1050 = vunpack.c.l.b16 %v990
        %v1051 = vunpack.c.h.b16 %v990
        %v1052 = vunpack.c.l.b16 %v991
        %v1053 = vunpack.c.h.b16 %v991
        %v1054 = vunpack.c.l.b16 %v992
        %v1055 = vunpack.c.h.b16 %v992
        %v1056 = vpack.c.b16 %v1026, %v1024
        %v1057 = vpack.c.b16 %v1027, %v1025
        %v1058 = vpack.c.b16 %v1030, %v1028
        %v1059 = vpack.c.b16 %v1031, %v1029
        %v1060 = vpack.c.b16 %v1034, %v1032
        %v1061 = vpack.c.b16 %v1035, %v1033
        %v1062 = vpack.c.b16 %v1038, %v1036
        %v1063 = vpack.c.b16 %v1039, %v1037
        %v1064 = vpack.c.b16 %v1042, %v1040
        %v1065 = vpack.c.b16 %v1043, %v1041
        %v1066 = vpack.c.b16 %v1046, %v1044
        %v1067 = vpack.c.b16 %v1047, %v1045
        %v1068 = vpack.c.b16 %v1050, %v1048
        %v1069 = vpack.c.b16 %v1051, %v1049
        %v1070 = vpack.c.b16 %v1054, %v1052
        %v1071 = vpack.c.b16 %v1055, %v1053
        %1088 = vmatprep.subr.bf16.mxu0 %v1057
        %1089 = vmatpush1.bf16.msra.mxu0 %v1056
        %1090 = vmatprep.subr.bf16.mxu0 %v1059
        %1091 = vmatpush1.bf16.msra.mxu0 %v1058
        %1092 = vmatprep.subr.bf16.mxu0 %v1061
        %1093 = vmatpush1.bf16.msra.mxu0 %v1060
        %1094 = vmatprep.subr.bf16.mxu0 %v1063
        %1095 = vmatpush1.bf16.msra.mxu0 %v1062
        %1096 = vmatprep.subr.bf16.mxu0 %v1065
        %1097 = vmatpush1.bf16.msra.mxu0 %v1064
        %1098 = vmatprep.subr.bf16.mxu0 %v1067
        %1099 = vmatpush1.bf16.msra.mxu0 %v1066
        %1100 = vmatprep.subr.bf16.mxu0 %v1069
        %1101 = vmatpush1.bf16.msra.mxu0 %v1068
        %1102 = vmatprep.subr.bf16.mxu0 %v1071
        %1103 = vmatpush1.bf16.msra.mxu0 %v1070
        %1104 = vmatprep.subr.bf16.mxu0 0
        %1105 = vmatpush1.bf16.msra.mxu0 0
        %1106 = vmatprep.subr.bf16.mxu0 0
        %1107 = vmatpush1.bf16.msra.mxu0 0
        %1108 = vmatprep.subr.bf16.mxu0 0
        %1109 = vmatpush1.bf16.msra.mxu0 0
        %1110 = vmatprep.subr.bf16.mxu0 0
        %1111 = vmatpush1.bf16.msra.mxu0 0
        %1112 = vmatprep.subr.bf16.mxu0 0
        %1113 = vmatpush1.bf16.msra.mxu0 0
        %1114 = vmatprep.subr.bf16.mxu0 0
        %1115 = vmatpush1.bf16.msra.mxu0 0
        %1116 = vmatprep.subr.bf16.mxu0 0
        %1117 = vmatpush1.bf16.msra.mxu0 0
        %1118 = vmatprep.subr.bf16.mxu0 0
        %1119 = vmatpush1.bf16.msra.mxu0 0
        %1120 = vmatprep.mubr.bf16.mxu0 0
        %1121 = vmatmul.mubr.bf16.gmra.mrb[0].mxu0 %v996
        %v1122 = vpop.f32.mrb[0].mxu0
        %v1123 = vadd.f32 %v1001, %v1122
        %v1124 = vpop.f32.mrb[0].mxu0
        %v1125 = vadd.f32 %v1005, %v1124
        %v1126 = vpop.f32.mrb[0].mxu0
        %v1127 = vpop.f32.mrb[0].mxu0
        %1128 = vdwg.mxu0
        %v1129 = vadd.f32 %v1123, %v1125
        %1130 = vadd.xlane.f32.xlu0 %v1129
        %v1131 = vpop.xlane.xlu0 %1130
        %v1132 = vmul.f32 %v1131, 0.00390625
        %v1133 = vmul.f32 %v1123, %v1123
        %v1134 = vmul.f32 %v1125, %v1125
        %v1135 = vadd.f32 %v1133, %v1134
        %1136 = vadd.xlane.f32.xlu0 %v1135
        %v1137 = vpop.xlane.xlu0 %1136
        %v1138 = vmul.f32 %v1137, 0.00390625
        %v1139 = vmul.f32 %v1132, %v1132
        %v1140 = vsub.f32 %v1138, %v1139
        %v1141 = vmax.f32 %v1140, 0.0
        %v1142 = vsub.f32 %v1123, %v1132
        %v1143 = vsub.f32 %v1125, %v1132
        %v1144 = vadd.f32 %v1141, 1e-05
        %v1145 = vrsqrt.pop %v1144
        %v1146 = vmul.f32 %v1142, %v1145
        %v1147 = vmul.f32 %v1143, %v1145
        %v1149 = vlaneseq
        %v1150 = vshrl.u32 %v1149, 7
        %v1151 = vsub.s32 0, %v1150
        %v1152 = vrot.slane %v994, %v1151
        %v1153 = vlaneseq
        %v1154 = vshrl.u32 %v1153, 7
        %v1155 = vsub.s32 1, %v1154
        %v1156 = vrot.slane %v994, %v1155
        %v1159 = vmul.f32 %v1146, %v1152
        %v1160 = vmul.f32 %v1147, %v1156
        %v1162 = vlaneseq
        %v1163 = vshrl.u32 %v1162, 7
        %v1164 = vsub.s32 0, %v1163
        %v1165 = vrot.slane %v995, %v1164
        %v1166 = vlaneseq
        %v1167 = vshrl.u32 %v1166, 7
        %v1168 = vsub.s32 1, %v1167
        %v1169 = vrot.slane %v995, %v1168
        %v1172 = vadd.f32 %v1159, %v1165
        %v1173 = vadd.f32 %v1160, %v1169
        %v1174 = vadd.f32 %v1172, %v1173
        %v1175 = vld [vmem:[#allocation5] sm:$0xff]
        %v1176 = vadd.f32 %v1175, %v1174
        %v1177 = vld [vmem:[#allocation3] sm:$0xff]
        %v1179 = vlaneseq
        %v1180 = vshrl.u32 %v1179, 7
        %v1181 = vsub.s32 0, %v1180
        %v1182 = vrot.slane %v975, %v1181
        %v1184 = vmul.f32 %v1182, %v1177
        %v1186 = vlaneseq
        %v1187 = vshrl.u32 %v1186, 7
        %v1188 = vsub.s32 0, %v1187
        %v1189 = vrot.slane %v976, %v1188
        %v1191 = vmul.f32 %v1189, %v1176
        %v1192 = vadd.f32 %v1184, %v1191
        %v1193 = vld [vmem:[#allocation2] sm:$0xff]
        %v1195 = vlaneseq
        %v1196 = vshrl.u32 %v1195, 7
        %v1197 = vsub.s32 0, %v1196
        %v1198 = vrot.slane %v973, %v1197
        %v1200 = vmul.f32 %v1198, %v1193
        %v1202 = vlaneseq
        %v1203 = vshrl.u32 %v1202, 7
        %v1204 = vsub.s32 0, %v1203
        %v1205 = vrot.slane %v974, %v1204
        %v1207 = vmul.f32 %v1205, %v1192
        %v1208 = vadd.f32 %v1200, %v1207
        %vm1209 = vcmp.gt.f32.partialorder %v1208, 0.5
        %v1210 = vsel %vm1209, 1, 0
        %v1211 = vcvt.s32.f32 %v1210
        %v1212 = vpack.c.bf16 %v1211, %v1211
        %1213 = vst [vmem:[#allocation3] sm:$0xff] %v1192
        %1214 = vst [vmem:[#allocation2] sm:$0xff] %v1208
        %1215 = vst [vmem:[#allocation4] sm:$0xf] %v1212
        %1216 = vst [vmem:[%s602] sm:$0xff] %v1208
        %1217 = vst [vmem:[%s609] sm:$0xf] %v1212
        %v1218 = vld [vmem:[#allocation4] sm:$0xf]
        %1219 = vmatprep.subr.bf16.mxu0 %v1057
        %1220 = vmatpush1.bf16.msra.mxu0 %v1056
        %1221 = vmatprep.subr.bf16.mxu0 %v1059
        %1222 = vmatpush1.bf16.msra.mxu0 %v1058
        %1223 = vmatprep.subr.bf16.mxu0 %v1061
        %1224 = vmatpush1.bf16.msra.mxu0 %v1060
        %1225 = vmatprep.subr.bf16.mxu0 %v1063
        %1226 = vmatpush1.bf16.msra.mxu0 %v1062
        %1227 = vmatprep.subr.bf16.mxu0 %v1065
        %1228 = vmatpush1.bf16.msra.mxu0 %v1064
        %1229 = vmatprep.subr.bf16.mxu0 %v1067
        %1230 = vmatpush1.bf16.msra.mxu0 %v1066
        %1231 = vmatprep.subr.bf16.mxu0 %v1069
        %1232 = vmatpush1.bf16.msra.mxu0 %v1068
        %1233 = vmatprep.subr.bf16.mxu0 %v1071
        %1234 = vmatpush1.bf16.msra.mxu0 %v1070
        %1235 = vmatprep.subr.bf16.mxu0 0
        %1236 = vmatpush1.bf16.msra.mxu0 0
        %1237 = vmatprep.subr.bf16.mxu0 0
        %1238 = vmatpush1.bf16.msra.mxu0 0
        %1239 = vmatprep.subr.bf16.mxu0 0
        %1240 = vmatpush1.bf16.msra.mxu0 0
        %1241 = vmatprep.subr.bf16.mxu0 0
        %1242 = vmatpush1.bf16.msra.mxu0 0
        %1243 = vmatprep.subr.bf16.mxu0 0
        %1244 = vmatpush1.bf16.msra.mxu0 0
        %1245 = vmatprep.subr.bf16.mxu0 0
        %1246 = vmatpush1.bf16.msra.mxu0 0
        %1247 = vmatprep.subr.bf16.mxu0 0
        %1248 = vmatpush1.bf16.msra.mxu0 0
        %1249 = vmatprep.subr.bf16.mxu0 0
        %1250 = vmatpush1.bf16.msra.mxu0 0
        %1251 = vmatprep.mubr.bf16.mxu0 0
        %1252 = vmatmul.mubr.bf16.gmra.mrb[0].mxu0 %v1218
        %v1253 = vpop.f32.mrb[0].mxu0
        %v1254 = vadd.f32 %v1001, %v1253
        %v1255 = vpop.f32.mrb[0].mxu0
        %v1256 = vadd.f32 %v1005, %v1255
        %v1257 = vpop.f32.mrb[0].mxu0
        %v1258 = vpop.f32.mrb[0].mxu0
        %1259 = vdwg.mxu0
        %v1260 = vadd.f32 %v1254, %v1256
        %1261 = vadd.xlane.f32.xlu0 %v1260
        %v1262 = vpop.xlane.xlu0 %1261
        %v1263 = vmul.f32 %v1262, 0.00390625
        %v1264 = vmul.f32 %v1254, %v1254
        %v1265 = vmul.f32 %v1256, %v1256
        %v1266 = vadd.f32 %v1264, %v1265
        %1267 = vadd.xlane.f32.xlu0 %v1266
        %v1268 = vpop.xlane.xlu0 %1267
        %v1269 = vmul.f32 %v1268, 0.00390625
        %v1270 = vmul.f32 %v1263, %v1263
        %v1271 = vsub.f32 %v1269, %v1270
        %v1272 = vmax.f32 %v1271, 0.0
        %v1273 = vsub.f32 %v1254, %v1263
        %v1274 = vsub.f32 %v1256, %v1263
        %v1275 = vadd.f32 %v1272, 1e-05
        %v1276 = vrsqrt.pop %v1275
        %v1277 = vmul.f32 %v1273, %v1276
        %v1278 = vmul.f32 %v1274, %v1276
        %v1279 = vmul.f32 %v1277, %v1152
        %v1280 = vmul.f32 %v1278, %v1156
        %v1281 = vadd.f32 %v1279, %v1165
        %v1282 = vadd.f32 %v1280, %v1169
        %v1283 = vadd.f32 %v1281, %v1282
        %s1284 = scalar_lea.vmem [#allocation5], 8
        %v1285 = vld [vmem:[%s1284] sm:$0xff]
        %v1286 = vadd.f32 %v1285, %v1283
        %v1287 = vld [vmem:[#allocation3] sm:$0xff]
        %v1288 = vmul.f32 %v1182, %v1287
        %v1289 = vmul.f32 %v1189, %v1286
        %v1290 = vadd.f32 %v1288, %v1289
        %v1291 = vld [vmem:[#allocation2] sm:$0xff]
        %v1292 = vmul.f32 %v1198, %v1291
        %v1293 = vmul.f32 %v1205, %v1290
        %v1294 = vadd.f32 %v1292, %v1293
        %vm1295 = vcmp.gt.f32.partialorder %v1294, 0.5
        %v1296 = vsel %vm1295, 1, 0
        %v1297 = vcvt.s32.f32 %v1296
        %v1298 = vpack.c.bf16 %v1297, %v1297
        %1299 = vst [vmem:[#allocation3] sm:$0xff] %v1290
        %1300 = vst [vmem:[#allocation2] sm:$0xff] %v1294
        %1301 = vst [vmem:[#allocation4] sm:$0xf] %v1298
        %s1302 = scalar_lea.vmem %s602, 8 [#allocation14]
        %1303 = vst [vmem:[%s1302] sm:$0xff] %v1294
        %s1304 = scalar_lea.vmem %s609, 4 [#allocation15]
        %1305 = vst [vmem:[%s1304] sm:$0xf] %v1298
        %v1306 = vld [vmem:[#allocation4] sm:$0xf]
        %1307 = vmatprep.subr.bf16.mxu0 %v1057
        %1308 = vmatpush1.bf16.msra.mxu0 %v1056
        %1309 = vmatprep.subr.bf16.mxu0 %v1059
        %1310 = vmatpush1.bf16.msra.mxu0 %v1058
        %1311 = vmatprep.subr.bf16.mxu0 %v1061
        %1312 = vmatpush1.bf16.msra.mxu0 %v1060
        %1313 = vmatprep.subr.bf16.mxu0 %v1063
        %1314 = vmatpush1.bf16.msra.mxu0 %v1062
        %1315 = vmatprep.subr.bf16.mxu0 %v1065
        %1316 = vmatpush1.bf16.msra.mxu0 %v1064
        %1317 = vmatprep.subr.bf16.mxu0 %v1067
        %1318 = vmatpush1.bf16.msra.mxu0 %v1066
        %1319 = vmatprep.subr.bf16.mxu0 %v1069
        %1320 = vmatpush1.bf16.msra.mxu0 %v1068
        %1321 = vmatprep.subr.bf16.mxu0 %v1071
        %1322 = vmatpush1.bf16.msra.mxu0 %v1070
        %1323 = vmatprep.subr.bf16.mxu0 0
        %1324 = vmatpush1.bf16.msra.mxu0 0
        %1325 = vmatprep.subr.bf16.mxu0 0
        %1326 = vmatpush1.bf16.msra.mxu0 0
        %1327 = vmatprep.subr.bf16.mxu0 0
        %1328 = vmatpush1.bf16.msra.mxu0 0
        %1329 = vmatprep.subr.bf16.mxu0 0
        %1330 = vmatpush1.bf16.msra.mxu0 0
        %1331 = vmatprep.subr.bf16.mxu0 0
        %1332 = vmatpush1.bf16.msra.mxu0 0
        %1333 = vmatprep.subr.bf16.mxu0 0
        %1334 = vmatpush1.bf16.msra.mxu0 0
        %1335 = vmatprep.subr.bf16.mxu0 0
        %1336 = vmatpush1.bf16.msra.mxu0 0
        %1337 = vmatprep.subr.bf16.mxu0 0
        %1338 = vmatpush1.bf16.msra.mxu0 0
        %1339 = vmatprep.mubr.bf16.mxu0 0
        %1340 = vmatmul.mubr.bf16.gmra.mrb[0].mxu0 %v1306
        %v1341 = vpop.f32.mrb[0].mxu0
        %v1342 = vadd.f32 %v1001, %v1341
        %v1343 = vpop.f32.mrb[0].mxu0
        %v1344 = vadd.f32 %v1005, %v1343
        %v1345 = vpop.f32.mrb[0].mxu0
        %v1346 = vpop.f32.mrb[0].mxu0
        %1347 = vdwg.mxu0
        %v1348 = vadd.f32 %v1342, %v1344
        %1349 = vadd.xlane.f32.xlu0 %v1348
        %v1350 = vpop.xlane.xlu0 %1349
        %v1351 = vmul.f32 %v1350, 0.00390625
        %v1352 = vmul.f32 %v1342, %v1342
        %v1353 = vmul.f32 %v1344, %v1344
        %v1354 = vadd.f32 %v1352, %v1353
        %1355 = vadd.xlane.f32.xlu0 %v1354
        %v1356 = vpop.xlane.xlu0 %1355
        %v1357 = vmul.f32 %v1356, 0.00390625
        %v1358 = vmul.f32 %v1351, %v1351
        %v1359 = vsub.f32 %v1357, %v1358
        %v1360 = vmax.f32 %v1359, 0.0
        %v1361 = vsub.f32 %v1342, %v1351
        %v1362 = vsub.f32 %v1344, %v1351
        %v1363 = vadd.f32 %v1360, 1e-05
        %v1364 = vrsqrt.pop %v1363
        %v1365 = vmul.f32 %v1361, %v1364
        %v1366 = vmul.f32 %v1362, %v1364
        %v1367 = vmul.f32 %v1365, %v1152
        %v1368 = vmul.f32 %v1366, %v1156
        %v1369 = vadd.f32 %v1367, %v1165
        %v1370 = vadd.f32 %v1368, %v1169
        %v1371 = vadd.f32 %v1369, %v1370
        %s1372 = scalar_lea.vmem [#allocation5], 16
        %v1373 = vld [vmem:[%s1372] sm:$0xff]
        %v1374 = vadd.f32 %v1373, %v1371
        %v1375 = vld [vmem:[#allocation3] sm:$0xff]
        %v1376 = vmul.f32 %v1182, %v1375
        %v1377 = vmul.f32 %v1189, %v1374
        %v1378 = vadd.f32 %v1376, %v1377
        %v1379 = vld [vmem:[#allocation2] sm:$0xff]
        %v1380 = vmul.f32 %v1198, %v1379
        %v1381 = vmul.f32 %v1205, %v1378
        %v1382 = vadd.f32 %v1380, %v1381
        %vm1383 = vcmp.gt.f32.partialorder %v1382, 0.5
        %v1384 = vsel %vm1383, 1, 0
        %v1385 = vcvt.s32.f32 %v1384
        %v1386 = vpack.c.bf16 %v1385, %v1385
        %1387 = vst [vmem:[#allocation3] sm:$0xff] %v1378
        %1388 = vst [vmem:[#allocation2] sm:$0xff] %v1382
        %1389 = vst [vmem:[#allocation4] sm:$0xf] %v1386
        %s1390 = scalar_lea.vmem %s602, 16 [#allocation14]
        %1391 = vst [vmem:[%s1390] sm:$0xff] %v1382
        %s1392 = scalar_lea.vmem %s609, 8 [#allocation15]
        %1393 = vst [vmem:[%s1392] sm:$0xf] %v1386
        %v1394 = vld [vmem:[#allocation4] sm:$0xf]
        %1395 = vmatprep.subr.bf16.mxu0 %v1057
        %1396 = vmatpush1.bf16.msra.mxu0 %v1056
        %1397 = vmatprep.subr.bf16.mxu0 %v1059
        %1398 = vmatpush1.bf16.msra.mxu0 %v1058
        %1399 = vmatprep.subr.bf16.mxu0 %v1061
        %1400 = vmatpush1.bf16.msra.mxu0 %v1060
        %1401 = vmatprep.subr.bf16.mxu0 %v1063
        %1402 = vmatpush1.bf16.msra.mxu0 %v1062
        %1403 = vmatprep.subr.bf16.mxu0 %v1065
        %1404 = vmatpush1.bf16.msra.mxu0 %v1064
        %1405 = vmatprep.subr.bf16.mxu0 %v1067
        %1406 = vmatpush1.bf16.msra.mxu0 %v1066
        %1407 = vmatprep.subr.bf16.mxu0 %v1069
        %1408 = vmatpush1.bf16.msra.mxu0 %v1068
        %1409 = vmatprep.subr.bf16.mxu0 %v1071
        %1410 = vmatpush1.bf16.msra.mxu0 %v1070
        %1411 = vmatprep.subr.bf16.mxu0 0
        %1412 = vmatpush1.bf16.msra.mxu0 0
        %1413 = vmatprep.subr.bf16.mxu0 0
        %1414 = vmatpush1.bf16.msra.mxu0 0
        %1415 = vmatprep.subr.bf16.mxu0 0
        %1416 = vmatpush1.bf16.msra.mxu0 0
        %1417 = vmatprep.subr.bf16.mxu0 0
        %1418 = vmatpush1.bf16.msra.mxu0 0
        %1419 = vmatprep.subr.bf16.mxu0 0
        %1420 = vmatpush1.bf16.msra.mxu0 0
        %1421 = vmatprep.subr.bf16.mxu0 0
        %1422 = vmatpush1.bf16.msra.mxu0 0
        %1423 = vmatprep.subr.bf16.mxu0 0
        %1424 = vmatpush1.bf16.msra.mxu0 0
        %1425 = vmatprep.subr.bf16.mxu0 0
        %1426 = vmatpush1.bf16.msra.mxu0 0
        %1427 = vmatprep.mubr.bf16.mxu0 0
        %1428 = vmatmul.mubr.bf16.gmra.mrb[0].mxu0 %v1394
        %v1429 = vpop.f32.mrb[0].mxu0
        %v1430 = vadd.f32 %v1001, %v1429
        %v1431 = vpop.f32.mrb[0].mxu0
        %v1432 = vadd.f32 %v1005, %v1431
        %v1433 = vpop.f32.mrb[0].mxu0
        %v1434 = vpop.f32.mrb[0].mxu0
        %1435 = vdwg.mxu0
        %v1436 = vadd.f32 %v1430, %v1432
        %1437 = vadd.xlane.f32.xlu0 %v1436
        %v1438 = vpop.xlane.xlu0 %1437
        %v1439 = vmul.f32 %v1438, 0.00390625
        %v1440 = vmul.f32 %v1430, %v1430
        %v1441 = vmul.f32 %v1432, %v1432
        %v1442 = vadd.f32 %v1440, %v1441
        %1443 = vadd.xlane.f32.xlu0 %v1442
        %v1444 = vpop.xlane.xlu0 %1443
        %v1445 = vmul.f32 %v1444, 0.00390625
        %v1446 = vmul.f32 %v1439, %v1439
        %v1447 = vsub.f32 %v1445, %v1446
        %v1448 = vmax.f32 %v1447, 0.0
        %v1449 = vsub.f32 %v1430, %v1439
        %v1450 = vsub.f32 %v1432, %v1439
        %v1451 = vadd.f32 %v1448, 1e-05
        %v1452 = vrsqrt.pop %v1451
        %v1453 = vmul.f32 %v1449, %v1452
        %v1454 = vmul.f32 %v1450, %v1452
        %v1455 = vmul.f32 %v1453, %v1152
        %v1456 = vmul.f32 %v1454, %v1156
        %v1457 = vadd.f32 %v1455, %v1165
        %v1458 = vadd.f32 %v1456, %v1169
        %v1459 = vadd.f32 %v1457, %v1458
        %s1460 = scalar_lea.vmem [#allocation5], 24
        %v1461 = vld [vmem:[%s1460] sm:$0xff]
        %v1462 = vadd.f32 %v1461, %v1459
        %v1463 = vld [vmem:[#allocation3] sm:$0xff]
        %v1464 = vmul.f32 %v1182, %v1463
        %v1465 = vmul.f32 %v1189, %v1462
        %v1466 = vadd.f32 %v1464, %v1465
        %v1467 = vld [vmem:[#allocation2] sm:$0xff]
        %v1468 = vmul.f32 %v1198, %v1467
        %v1469 = vmul.f32 %v1205, %v1466
        %v1470 = vadd.f32 %v1468, %v1469
        %vm1471 = vcmp.gt.f32.partialorder %v1470, 0.5
        %v1472 = vsel %vm1471, 1, 0
        %v1473 = vcvt.s32.f32 %v1472
        %v1474 = vpack.c.bf16 %v1473, %v1473
        %1475 = vst [vmem:[#allocation3] sm:$0xff] %v1466
        %1476 = vst [vmem:[#allocation2] sm:$0xff] %v1470
        %1477 = vst [vmem:[#allocation4] sm:$0xf] %v1474
        %s1478 = scalar_lea.vmem %s602, 24 [#allocation14]
        %1479 = vst [vmem:[%s1478] sm:$0xff] %v1470
        %s1480 = scalar_lea.vmem %s609, 12 [#allocation15]
        %1481 = vst [vmem:[%s1480] sm:$0xf] %v1474
        %v1482 = vld [vmem:[#allocation4] sm:$0xf]
        %1483 = vmatprep.subr.bf16.mxu0 %v1057
        %1484 = vmatpush1.bf16.msra.mxu0 %v1056
        %1485 = vmatprep.subr.bf16.mxu0 %v1059
        %1486 = vmatpush1.bf16.msra.mxu0 %v1058
        %1487 = vmatprep.subr.bf16.mxu0 %v1061
        %1488 = vmatpush1.bf16.msra.mxu0 %v1060
        %1489 = vmatprep.subr.bf16.mxu0 %v1063
        %1490 = vmatpush1.bf16.msra.mxu0 %v1062
        %1491 = vmatprep.subr.bf16.mxu0 %v1065
        %1492 = vmatpush1.bf16.msra.mxu0 %v1064
        %1493 = vmatprep.subr.bf16.mxu0 %v1067
        %1494 = vmatpush1.bf16.msra.mxu0 %v1066
        %1495 = vmatprep.subr.bf16.mxu0 %v1069
        %1496 = vmatpush1.bf16.msra.mxu0 %v1068
        %1497 = vmatprep.subr.bf16.mxu0 %v1071
        %1498 = vmatpush1.bf16.msra.mxu0 %v1070
        %1499 = vmatprep.subr.bf16.mxu0 0
        %1500 = vmatpush1.bf16.msra.mxu0 0
        %1501 = vmatprep.subr.bf16.mxu0 0
        %1502 = vmatpush1.bf16.msra.mxu0 0
        %1503 = vmatprep.subr.bf16.mxu0 0
        %1504 = vmatpush1.bf16.msra.mxu0 0
        %1505 = vmatprep.subr.bf16.mxu0 0
        %1506 = vmatpush1.bf16.msra.mxu0 0
        %1507 = vmatprep.subr.bf16.mxu0 0
        %1508 = vmatpush1.bf16.msra.mxu0 0
        %1509 = vmatprep.subr.bf16.mxu0 0
        %1510 = vmatpush1.bf16.msra.mxu0 0
        %1511 = vmatprep.subr.bf16.mxu0 0
        %1512 = vmatpush1.bf16.msra.mxu0 0
        %1513 = vmatprep.subr.bf16.mxu0 0
        %1514 = vmatpush1.bf16.msra.mxu0 0
        %1515 = vmatprep.mubr.bf16.mxu0 0
        %1516 = vmatmul.mubr.bf16.gmra.mrb[0].mxu0 %v1482
        %v1517 = vpop.f32.mrb[0].mxu0
        %v1518 = vadd.f32 %v1001, %v1517
        %v1519 = vpop.f32.mrb[0].mxu0
        %v1520 = vadd.f32 %v1005, %v1519
        %v1521 = vpop.f32.mrb[0].mxu0
        %v1522 = vpop.f32.mrb[0].mxu0
        %1523 = vdwg.mxu0
        %v1524 = vadd.f32 %v1518, %v1520
        %1525 = vadd.xlane.f32.xlu0 %v1524
        %v1526 = vpop.xlane.xlu0 %1525
        %v1527 = vmul.f32 %v1526, 0.00390625
        %v1528 = vmul.f32 %v1518, %v1518
        %v1529 = vmul.f32 %v1520, %v1520
        %v1530 = vadd.f32 %v1528, %v1529
        %1531 = vadd.xlane.f32.xlu0 %v1530
        %v1532 = vpop.xlane.xlu0 %1531
        %v1533 = vmul.f32 %v1532, 0.00390625
        %v1534 = vmul.f32 %v1527, %v1527
        %v1535 = vsub.f32 %v1533, %v1534
        %v1536 = vmax.f32 %v1535, 0.0
        %v1537 = vsub.f32 %v1518, %v1527
        %v1538 = vsub.f32 %v1520, %v1527
        %v1539 = vadd.f32 %v1536, 1e-05
        %v1540 = vrsqrt.pop %v1539
        %v1541 = vmul.f32 %v1537, %v1540
        %v1542 = vmul.f32 %v1538, %v1540
        %v1543 = vmul.f32 %v1541, %v1152
        %v1544 = vmul.f32 %v1542, %v1156
        %v1545 = vadd.f32 %v1543, %v1165
        %v1546 = vadd.f32 %v1544, %v1169
        %v1547 = vadd.f32 %v1545, %v1546
        %s1548 = scalar_lea.vmem [#allocation5], 32
        %v1549 = vld [vmem:[%s1548] sm:$0xff]
        %v1550 = vadd.f32 %v1549, %v1547
        %v1551 = vld [vmem:[#allocation3] sm:$0xff]
        %v1552 = vmul.f32 %v1182, %v1551
        %v1553 = vmul.f32 %v1189, %v1550
        %v1554 = vadd.f32 %v1552, %v1553
        %v1555 = vld [vmem:[#allocation2] sm:$0xff]
        %v1556 = vmul.f32 %v1198, %v1555
        %v1557 = vmul.f32 %v1205, %v1554
        %v1558 = vadd.f32 %v1556, %v1557
        %vm1559 = vcmp.gt.f32.partialorder %v1558, 0.5
        %v1560 = vsel %vm1559, 1, 0
        %v1561 = vcvt.s32.f32 %v1560
        %v1562 = vpack.c.bf16 %v1561, %v1561
        %1563 = vst [vmem:[#allocation3] sm:$0xff] %v1554
        %1564 = vst [vmem:[#allocation2] sm:$0xff] %v1558
        %1565 = vst [vmem:[#allocation4] sm:$0xf] %v1562
        %s1566 = scalar_lea.vmem %s602, 32 [#allocation14]
        %1567 = vst [vmem:[%s1566] sm:$0xff] %v1558
        %s1568 = scalar_lea.vmem %s609, 16 [#allocation15]
        %1569 = vst [vmem:[%s1568] sm:$0xf] %v1562
        %v1570 = vld [vmem:[#allocation4] sm:$0xf]
        %1571 = vmatprep.subr.bf16.mxu0 %v1057
        %1572 = vmatpush1.bf16.msra.mxu0 %v1056
        %1573 = vmatprep.subr.bf16.mxu0 %v1059
        %1574 = vmatpush1.bf16.msra.mxu0 %v1058
        %1575 = vmatprep.subr.bf16.mxu0 %v1061
        %1576 = vmatpush1.bf16.msra.mxu0 %v1060
        %1577 = vmatprep.subr.bf16.mxu0 %v1063
        %1578 = vmatpush1.bf16.msra.mxu0 %v1062
        %1579 = vmatprep.subr.bf16.mxu0 %v1065
        %1580 = vmatpush1.bf16.msra.mxu0 %v1064
        %1581 = vmatprep.subr.bf16.mxu0 %v1067
        %1582 = vmatpush1.bf16.msra.mxu0 %v1066
        %1583 = vmatprep.subr.bf16.mxu0 %v1069
        %1584 = vmatpush1.bf16.msra.mxu0 %v1068
        %1585 = vmatprep.subr.bf16.mxu0 %v1071
        %1586 = vmatpush1.bf16.msra.mxu0 %v1070
        %1587 = vmatprep.subr.bf16.mxu0 0
        %1588 = vmatpush1.bf16.msra.mxu0 0
        %1589 = vmatprep.subr.bf16.mxu0 0
        %1590 = vmatpush1.bf16.msra.mxu0 0
        %1591 = vmatprep.subr.bf16.mxu0 0
        %1592 = vmatpush1.bf16.msra.mxu0 0
        %1593 = vmatprep.subr.bf16.mxu0 0
        %1594 = vmatpush1.bf16.msra.mxu0 0
        %1595 = vmatprep.subr.bf16.mxu0 0
        %1596 = vmatpush1.bf16.msra.mxu0 0
        %1597 = vmatprep.subr.bf16.mxu0 0
        %1598 = vmatpush1.bf16.msra.mxu0 0
        %1599 = vmatprep.subr.bf16.mxu0 0
        %1600 = vmatpush1.bf16.msra.mxu0 0
        %1601 = vmatprep.subr.bf16.mxu0 0
        %1602 = vmatpush1.bf16.msra.mxu0 0
        %1603 = vmatprep.mubr.bf16.mxu0 0
        %1604 = vmatmul.mubr.bf16.gmra.mrb[0].mxu0 %v1570
        %v1605 = vpop.f32.mrb[0].mxu0
        %v1606 = vadd.f32 %v1001, %v1605
        %v1607 = vpop.f32.mrb[0].mxu0
        %v1608 = vadd.f32 %v1005, %v1607
        %v1609 = vpop.f32.mrb[0].mxu0
        %v1610 = vpop.f32.mrb[0].mxu0
        %1611 = vdwg.mxu0
        %v1612 = vadd.f32 %v1606, %v1608
        %1613 = vadd.xlane.f32.xlu0 %v1612
        %v1614 = vpop.xlane.xlu0 %1613
        %v1615 = vmul.f32 %v1614, 0.00390625
        %v1616 = vmul.f32 %v1606, %v1606
        %v1617 = vmul.f32 %v1608, %v1608
        %v1618 = vadd.f32 %v1616, %v1617
        %1619 = vadd.xlane.f32.xlu0 %v1618
        %v1620 = vpop.xlane.xlu0 %1619
        %v1621 = vmul.f32 %v1620, 0.00390625
        %v1622 = vmul.f32 %v1615, %v1615
        %v1623 = vsub.f32 %v1621, %v1622
        %v1624 = vmax.f32 %v1623, 0.0
        %v1625 = vsub.f32 %v1606, %v1615
        %v1626 = vsub.f32 %v1608, %v1615
        %v1627 = vadd.f32 %v1624, 1e-05
        %v1628 = vrsqrt.pop %v1627
        %v1629 = vmul.f32 %v1625, %v1628
        %v1630 = vmul.f32 %v1626, %v1628
        %v1631 = vmul.f32 %v1629, %v1152
        %v1632 = vmul.f32 %v1630, %v1156
        %v1633 = vadd.f32 %v1631, %v1165
        %v1634 = vadd.f32 %v1632, %v1169
        %v1635 = vadd.f32 %v1633, %v1634
        %s1636 = scalar_lea.vmem [#allocation5], 40
        %v1637 = vld [vmem:[%s1636] sm:$0xff]
        %v1638 = vadd.f32 %v1637, %v1635
        %v1639 = vld [vmem:[#allocation3] sm:$0xff]
        %v1640 = vmul.f32 %v1182, %v1639
        %v1641 = vmul.f32 %v1189, %v1638
        %v1642 = vadd.f32 %v1640, %v1641
        %v1643 = vld [vmem:[#allocation2] sm:$0xff]
        %v1644 = vmul.f32 %v1198, %v1643
        %v1645 = vmul.f32 %v1205, %v1642
        %v1646 = vadd.f32 %v1644, %v1645
        %vm1647 = vcmp.gt.f32.partialorder %v1646, 0.5
        %v1648 = vsel %vm1647, 1, 0
        %v1649 = vcvt.s32.f32 %v1648
        %v1650 = vpack.c.bf16 %v1649, %v1649
        %1651 = vst [vmem:[#allocation3] sm:$0xff] %v1642
        %1652 = vst [vmem:[#allocation2] sm:$0xff] %v1646
        %1653 = vst [vmem:[#allocation4] sm:$0xf] %v1650
        %s1654 = scalar_lea.vmem %s602, 40 [#allocation14]
        %1655 = vst [vmem:[%s1654] sm:$0xff] %v1646
        %s1656 = scalar_lea.vmem %s609, 20 [#allocation15]
        %1657 = vst [vmem:[%s1656] sm:$0xf] %v1650
        %v1658 = vld [vmem:[#allocation4] sm:$0xf]
        %1659 = vmatprep.subr.bf16.mxu0 %v1057
        %1660 = vmatpush1.bf16.msra.mxu0 %v1056
        %1661 = vmatprep.subr.bf16.mxu0 %v1059
        %1662 = vmatpush1.bf16.msra.mxu0 %v1058
        %1663 = vmatprep.subr.bf16.mxu0 %v1061
        %1664 = vmatpush1.bf16.msra.mxu0 %v1060
        %1665 = vmatprep.subr.bf16.mxu0 %v1063
        %1666 = vmatpush1.bf16.msra.mxu0 %v1062
        %1667 = vmatprep.subr.bf16.mxu0 %v1065
        %1668 = vmatpush1.bf16.msra.mxu0 %v1064
        %1669 = vmatprep.subr.bf16.mxu0 %v1067
        %1670 = vmatpush1.bf16.msra.mxu0 %v1066
        %1671 = vmatprep.subr.bf16.mxu0 %v1069
        %1672 = vmatpush1.bf16.msra.mxu0 %v1068
        %1673 = vmatprep.subr.bf16.mxu0 %v1071
        %1674 = vmatpush1.bf16.msra.mxu0 %v1070
        %1675 = vmatprep.subr.bf16.mxu0 0
        %1676 = vmatpush1.bf16.msra.mxu0 0
        %1677 = vmatprep.subr.bf16.mxu0 0
        %1678 = vmatpush1.bf16.msra.mxu0 0
        %1679 = vmatprep.subr.bf16.mxu0 0
        %1680 = vmatpush1.bf16.msra.mxu0 0
        %1681 = vmatprep.subr.bf16.mxu0 0
        %1682 = vmatpush1.bf16.msra.mxu0 0
        %1683 = vmatprep.subr.bf16.mxu0 0
        %1684 = vmatpush1.bf16.msra.mxu0 0
        %1685 = vmatprep.subr.bf16.mxu0 0
        %1686 = vmatpush1.bf16.msra.mxu0 0
        %1687 = vmatprep.subr.bf16.mxu0 0
        %1688 = vmatpush1.bf16.msra.mxu0 0
        %1689 = vmatprep.subr.bf16.mxu0 0
        %1690 = vmatpush1.bf16.msra.mxu0 0
        %1691 = vmatprep.mubr.bf16.mxu0 0
        %1692 = vmatmul.mubr.bf16.gmra.mrb[0].mxu0 %v1658
        %v1693 = vpop.f32.mrb[0].mxu0
        %v1694 = vadd.f32 %v1001, %v1693
        %v1695 = vpop.f32.mrb[0].mxu0
        %v1696 = vadd.f32 %v1005, %v1695
        %v1697 = vpop.f32.mrb[0].mxu0
        %v1698 = vpop.f32.mrb[0].mxu0
        %1699 = vdwg.mxu0
        %v1700 = vadd.f32 %v1694, %v1696
        %1701 = vadd.xlane.f32.xlu0 %v1700
        %v1702 = vpop.xlane.xlu0 %1701
        %v1703 = vmul.f32 %v1702, 0.00390625
        %v1704 = vmul.f32 %v1694, %v1694
        %v1705 = vmul.f32 %v1696, %v1696
        %v1706 = vadd.f32 %v1704, %v1705
        %1707 = vadd.xlane.f32.xlu0 %v1706
        %v1708 = vpop.xlane.xlu0 %1707
        %v1709 = vmul.f32 %v1708, 0.00390625
        %v1710 = vmul.f32 %v1703, %v1703
        %v1711 = vsub.f32 %v1709, %v1710
        %v1712 = vmax.f32 %v1711, 0.0
        %v1713 = vsub.f32 %v1694, %v1703
        %v1714 = vsub.f32 %v1696, %v1703
        %v1715 = vadd.f32 %v1712, 1e-05
        %v1716 = vrsqrt.pop %v1715
        %v1717 = vmul.f32 %v1713, %v1716
        %v1718 = vmul.f32 %v1714, %v1716
        %v1719 = vmul.f32 %v1717, %v1152
        %v1720 = vmul.f32 %v1718, %v1156
        %v1721 = vadd.f32 %v1719, %v1165
        %v1722 = vadd.f32 %v1720, %v1169
        %v1723 = vadd.f32 %v1721, %v1722
        %s1724 = scalar_lea.vmem [#allocation5], 48
        %v1725 = vld [vmem:[%s1724] sm:$0xff]
        %v1726 = vadd.f32 %v1725, %v1723
        %v1727 = vld [vmem:[#allocation3] sm:$0xff]
        %v1728 = vmul.f32 %v1182, %v1727
        %v1729 = vmul.f32 %v1189, %v1726
        %v1730 = vadd.f32 %v1728, %v1729
        %v1731 = vld [vmem:[#allocation2] sm:$0xff]
        %v1732 = vmul.f32 %v1198, %v1731
        %v1733 = vmul.f32 %v1205, %v1730
        %v1734 = vadd.f32 %v1732, %v1733
        %vm1735 = vcmp.gt.f32.partialorder %v1734, 0.5
        %v1736 = vsel %vm1735, 1, 0
        %v1737 = vcvt.s32.f32 %v1736
        %v1738 = vpack.c.bf16 %v1737, %v1737
        %1739 = vst [vmem:[#allocation3] sm:$0xff] %v1730
        %1740 = vst [vmem:[#allocation2] sm:$0xff] %v1734
        %1741 = vst [vmem:[#allocation4] sm:$0xf] %v1738
        %s1742 = scalar_lea.vmem %s602, 48 [#allocation14]
        %1743 = vst [vmem:[%s1742] sm:$0xff] %v1734
        %s1744 = scalar_lea.vmem %s609, 24 [#allocation15]
        %1745 = vst [vmem:[%s1744] sm:$0xf] %v1738
        %v1746 = vld [vmem:[#allocation4] sm:$0xf]
        %1747 = vmatprep.subr.bf16.mxu0 %v1057
        %1748 = vmatpush1.bf16.msra.mxu0 %v1056
        %1749 = vmatprep.subr.bf16.mxu0 %v1059
        %1750 = vmatpush1.bf16.msra.mxu0 %v1058
        %1751 = vmatprep.subr.bf16.mxu0 %v1061
        %1752 = vmatpush1.bf16.msra.mxu0 %v1060
        %1753 = vmatprep.subr.bf16.mxu0 %v1063
        %1754 = vmatpush1.bf16.msra.mxu0 %v1062
        %1755 = vmatprep.subr.bf16.mxu0 %v1065
        %1756 = vmatpush1.bf16.msra.mxu0 %v1064
        %1757 = vmatprep.subr.bf16.mxu0 %v1067
        %1758 = vmatpush1.bf16.msra.mxu0 %v1066
        %1759 = vmatprep.subr.bf16.mxu0 %v1069
        %1760 = vmatpush1.bf16.msra.mxu0 %v1068
        %1761 = vmatprep.subr.bf16.mxu0 %v1071
        %1762 = vmatpush1.bf16.msra.mxu0 %v1070
        %1763 = vmatprep.subr.bf16.mxu0 0
        %1764 = vmatpush1.bf16.msra.mxu0 0
        %1765 = vmatprep.subr.bf16.mxu0 0
        %1766 = vmatpush1.bf16.msra.mxu0 0
        %1767 = vmatprep.subr.bf16.mxu0 0
        %1768 = vmatpush1.bf16.msra.mxu0 0
        %1769 = vmatprep.subr.bf16.mxu0 0
        %1770 = vmatpush1.bf16.msra.mxu0 0
        %1771 = vmatprep.subr.bf16.mxu0 0
        %1772 = vmatpush1.bf16.msra.mxu0 0
        %1773 = vmatprep.subr.bf16.mxu0 0
        %1774 = vmatpush1.bf16.msra.mxu0 0
        %1775 = vmatprep.subr.bf16.mxu0 0
        %1776 = vmatpush1.bf16.msra.mxu0 0
        %1777 = vmatprep.subr.bf16.mxu0 0
        %1778 = vmatpush1.bf16.msra.mxu0 0
        %1779 = vmatprep.mubr.bf16.mxu0 0
        %1780 = vmatmul.mubr.bf16.gmra.mrb[0].mxu0 %v1746
        %v1781 = vpop.f32.mrb[0].mxu0
        %v1782 = vadd.f32 %v1001, %v1781
        %v1783 = vpop.f32.mrb[0].mxu0
        %v1784 = vadd.f32 %v1005, %v1783
        %v1785 = vpop.f32.mrb[0].mxu0
        %v1786 = vpop.f32.mrb[0].mxu0
        %1787 = vdwg.mxu0
        %v1788 = vadd.f32 %v1782, %v1784
        %1789 = vadd.xlane.f32.xlu0 %v1788
        %v1790 = vpop.xlane.xlu0 %1789
        %v1791 = vmul.f32 %v1790, 0.00390625
        %v1792 = vmul.f32 %v1782, %v1782
        %v1793 = vmul.f32 %v1784, %v1784
        %v1794 = vadd.f32 %v1792, %v1793
        %1795 = vadd.xlane.f32.xlu0 %v1794
        %v1796 = vpop.xlane.xlu0 %1795
        %v1797 = vmul.f32 %v1796, 0.00390625
        %v1798 = vmul.f32 %v1791, %v1791
        %v1799 = vsub.f32 %v1797, %v1798
        %v1800 = vmax.f32 %v1799, 0.0
        %v1801 = vsub.f32 %v1782, %v1791
        %v1802 = vsub.f32 %v1784, %v1791
        %v1803 = vadd.f32 %v1800, 1e-05
        %v1804 = vrsqrt.pop %v1803
        %v1805 = vmul.f32 %v1801, %v1804
        %v1806 = vmul.f32 %v1802, %v1804
        %v1807 = vmul.f32 %v1805, %v1152
        %v1808 = vmul.f32 %v1806, %v1156
        %v1809 = vadd.f32 %v1807, %v1165
        %v1810 = vadd.f32 %v1808, %v1169
        %v1811 = vadd.f32 %v1809, %v1810
        %s1812 = scalar_lea.vmem [#allocation5], 56
        %v1813 = vld [vmem:[%s1812] sm:$0xff]
        %v1814 = vadd.f32 %v1813, %v1811
        %v1815 = vld [vmem:[#allocation3] sm:$0xff]
        %v1816 = vmul.f32 %v1182, %v1815
        %v1817 = vmul.f32 %v1189, %v1814
        %v1818 = vadd.f32 %v1816, %v1817
        %v1819 = vld [vmem:[#allocation2] sm:$0xff]
        %v1820 = vmul.f32 %v1198, %v1819
        %v1821 = vmul.f32 %v1205, %v1818
        %v1822 = vadd.f32 %v1820, %v1821
        %vm1823 = vcmp.gt.f32.partialorder %v1822, 0.5
        %v1824 = vsel %vm1823, 1, 0
        %v1825 = vcvt.s32.f32 %v1824
        %v1826 = vpack.c.bf16 %v1825, %v1825
        %1827 = vst [vmem:[#allocation3] sm:$0xff] %v1818
        %1828 = vst [vmem:[#allocation2] sm:$0xff] %v1822
        %1829 = vst [vmem:[#allocation4] sm:$0xf] %v1826
        %s1830 = scalar_lea.vmem %s602, 56 [#allocation14]
        %1831 = vst [vmem:[%s1830] sm:$0xff] %v1822
        %s1832 = scalar_lea.vmem %s609, 28 [#allocation15]
        %1833 = vst [vmem:[%s1832] sm:$0xf] %v1826
        %s1834 = sand.u32 %s368, 1
        %s1835 = scalar_lea.sflag [#allocation8], %s1834
        %s1836 = sand.u32 %s368, 1
        %s1837 = smul.addr %s1836, 64
        %s1838 = scalar_lea.vmem [#allocation14], %s1837
        %s1839 = sand.u32 %s396, 1
        %s1840 = scalar_lea.sflag [#allocation16], %s1839
        %s1841 = sand.u32 %s396, 1
        %s1842 = smul.addr %s1841, 32
        %s1843 = scalar_lea.vmem [#allocation15], %s1842
        // Predicated region
        $region97: #{tpu_custom_call.1} parent=75 // pred_check
          %p1844 = pneg %p378
        $region98: #{tpu_custom_call.1} parent=75 // pred_check_branch
          %1846 = sbr.rel (%p1844) target = $region100
        $region99: #{tpu_custom_call.1} parent=75 // pred_region
          %s1847 = smul.u32 8, %s45
          %s1849 = ssub.s32 1024, 1024
          %1850 = vsyncadd %s1835, %s1849
          %s1851 = smul.addr %s1847, 2
          %s1852 = sadd.s32 %s44, %s1851
          %s1853 = smul.addr %s1852, 128
          %s1854 = scalar_lea.hbm %s14, %s1853
          %s1855 = sshll.u32 %s1838, 4
          %s1856 = int_to_ptr.vmem [resolvable:$true] %s1855
          %1861 = dma.vmem_to_hbm [thread:$0]  %s1856, 1024, %s1854, %s1835, 128, 256, 8
        $region100: #{tpu_custom_call.1} parent=75 // pred_fallthru
          _
        // Predicated region
        $region101: #{tpu_custom_call.1} parent=75 // pred_check
          %p1862 = pneg %p406
        $region102: #{tpu_custom_call.1} parent=75 // pred_check_branch
          %1864 = sbr.rel (%p1862) target = $region104
        $region103: #{tpu_custom_call.1} parent=75 // pred_region
          %s1865 = smul.u32 8, %s45
          %s1867 = ssub.s32 512, 512
          %1868 = vsyncadd %s1840, %s1867
          %s1869 = smul.addr %s1865, 2
          %s1870 = sadd.s32 %s44, %s1869
          %s1871 = smul.addr %s1870, 64
          %s1872 = scalar_lea.hbm %s15, %s1871
          %s1873 = sshll.u32 %s1843, 4
          %s1874 = int_to_ptr.vmem [resolvable:$true] %s1873
          %1879 = dma.vmem_to_hbm [thread:$0]  %s1874, 512, %s1872, %s1840, 64, 128, 4
        $region104: #{tpu_custom_call.1} parent=75 // pred_fallthru
          _
      $region76: #{tpu_custom_call.1} parent=5 // pred_fallthru
        _
      %p1880 = scmp.le.s32.totalorder 2, %s35
      // Predicated region
      $region105: #{tpu_custom_call.1} parent=5 // pred_check
        %p1881 = pneg %p1880
      $region106: #{tpu_custom_call.1} parent=5 // pred_check_branch
        %1883 = sbr.rel (%p1881) target = $region108
      $region107: #{tpu_custom_call.1} parent=5 // pred_region
        %s1884 = ssub.s32 %s35, 2
        // Predicated region
        $region109: #{tpu_custom_call.1} parent=107 // pred_check
          %p1885 = pneg %p384
        $region110: #{tpu_custom_call.1} parent=107 // pred_check_branch
          %1887 = sbr.rel (%p1885) target = $region112
        $region111: #{tpu_custom_call.1} parent=107 // pred_region
          %s1888 = sand.u32 %s369, 1
          %s1889 = scalar_lea.sflag [#allocation8], %s1888
          %s1890 = sand.u32 %s369, 1
          %s1891 = smul.addr %s1890, 64
          %s1892 = scalar_lea.vmem [#allocation14], %s1891
          %1893 = dma.done %s1889, 1024
        $region112: #{tpu_custom_call.1} parent=107 // pred_fallthru
          _
        // Predicated region
        $region113: #{tpu_custom_call.1} parent=107 // pred_check
          %p1894 = pneg %p412
        $region114: #{tpu_custom_call.1} parent=107 // pred_check_branch
          %1896 = sbr.rel (%p1894) target = $region116
        $region115: #{tpu_custom_call.1} parent=107 // pred_region
          %s1897 = sand.u32 %s397, 1
          %s1898 = scalar_lea.sflag [#allocation16], %s1897
          %s1899 = sand.u32 %s397, 1
          %s1900 = smul.addr %s1899, 32
          %s1901 = scalar_lea.vmem [#allocation15], %s1900
          %1902 = dma.done %s1898, 512
        $region116: #{tpu_custom_call.1} parent=107 // pred_fallthru
          _
      $region108: #{tpu_custom_call.1} parent=5 // pred_fallthru
        _
    $region6: #{tpu_custom_call.1} parent=1 // loop_footer
      %s39 = sadd.s32 1, %s35
    $region7: #{tpu_custom_call.1} parent=1 // loop_footer_branch
      %34 = sbr.rel target = $region3
    $region8: #{tpu_custom_call.1} parent=1 // loop_exit
      _
    %1903 = vsyncpa [#allocation7], 1
    %s1904 = scalar_lea.sflag [#allocation7], 1
    %1905 = vsyncpa %s1904, 1
    %1906 = vsyncpa [#allocation10], 1
    %s1907 = scalar_lea.sflag [#allocation10], 1
    %1908 = vsyncpa %s1907, 1
    %1909 = vsyncpa [#allocation13], 1
    %1910 = vsyncpa [#allocation8], 1
    %s1911 = scalar_lea.sflag [#allocation8], 1
    %1912 = vsyncpa %s1911, 1
    %1913 = vsyncpa [#allocation16], 1
    %s1914 = scalar_lea.sflag [#allocation16], 1
    %1915 = vsyncpa %s1914, 1

</llo_original>
